<compile_context>
chip_gen: v7x
topology: tpu7x:2x2x1
jax: 0.10.0
libtpu: 0.0.40
codegen_flags: <defaults>
</compile_context>

<pallas_src>
import math

import jax
import jax.numpy as jnp
from jax.experimental import pallas as pl
from jax.experimental.pallas import tpu as pltpu

# ---------------- small, deterministic hyper-parameters ----------------
B = 2                      # batch
IMG_C = 3                  # image channels
H_Z, W_Z = 16, 16          # template image
H_X, W_X = 32, 32          # search image
STRIDE = 4                 # simplified backbone stride
NUM_CHANNELS = 8           # backbone.num_channels
HIDDEN = 32                # transformer.d_model
NHEADS = 4
DH = HIDDEN // NHEADS
DIM_FFN = 64
NQ = 1                     # num_queries (STARK-S uses 1)
FEAT_SZ_S = W_X // STRIDE  # box_head.feat_sz == 8
FEAT_LEN_S = FEAT_SZ_S ** 2
PATCH_DIM = IMG_C * STRIDE * STRIDE   # 48


# ============ Pallas kernel: backbone + transformer + corner head =============
def _stark_fused_kernel(
        # per-batch data
        patches_ref, pos_ref, bias_ref,
        # backbone patch-embed fused with bottleneck 1x1 conv
        bb_w, bb_b,
        # shared constants
        qe_ref, coord_ref,
        # encoder layer
        e_wq, e_bq, e_wk, e_bk, e_wv, e_bv, e_wo, e_bo,
        e_ln1,
        e_wf1, e_bf1, e_wf2, e_bf2,
        e_ln2,
        # decoder self-attention
        s_wq, s_bq, s_wk, s_bk, s_wv, s_bv, s_wo, s_bo,
        d_ln1,
        # decoder cross-attention
        c_wq, c_bq, c_wk, c_bk, c_wv, c_bv, c_wo, c_bo,
        d_ln2,
        # decoder FFN + norms
        d_wf1, d_bf1, d_wf2, d_bf2,
        d_ln3, d_norm,
        # corner head
        wc, bc,
        # outputs
        box_ref, hs_ref):
    f32 = jnp.float32
    bf16 = jnp.bfloat16

    def lin(x, w_ref, b_ref):
        return jnp.dot(x.astype(bf16), w_ref[...],
                       preferred_element_type=f32) + b_ref[...]

    def layer_norm(x, ln_ref):
        mu = jnp.mean(x, axis=-1, keepdims=True)
        var = jnp.mean(jnp.square(x - mu), axis=-1, keepdims=True)
        inv = jax.lax.rsqrt(var + 1e-5)
        return (x - mu) * inv * ln_ref[0:1, :] + ln_ref[1:2, :]

    def softmax(s):
        m = jnp.max(s, axis=-1, keepdims=True)
        p = jnp.exp(s - m)
        return p * pl.reciprocal(jnp.sum(p, axis=-1, keepdims=True), approx=True)

    dims_t = (((1,), (1,)), ((), ()))   # contract last dims: A @ B^T

    def mha(q_in, k_in, v_in, wq, bq, wk, bk, wv, bv, wo, bo, bias):
        # heads live on the leading axis of the packed weights -> no lane slicing
        # NOTE: the 1/sqrt(dh) scaling is already folded into wq/bq (exact).
        q_in = q_in.astype(bf16)
        k_in = k_in.astype(bf16)
        v_in = v_in.astype(bf16)
        out = None
        for h in range(NHEADS):
            qh = jnp.dot(q_in, wq[h], preferred_element_type=f32) + bq[h]
            kh = jnp.dot(k_in, wk[h], preferred_element_type=f32) + bk[h]
            vh = jnp.dot(v_in, wv[h], preferred_element_type=f32) + bv[h]
            s = jax.lax.dot_general(qh.astype(bf16), kh.astype(bf16), dims_t,
                                    preferred_element_type=f32)
            if bias is not None:
                s = s + bias
            p = softmax(s)
            oh = jnp.dot(p.astype(bf16), vh.astype(bf16),
                         preferred_element_type=f32)
            contrib = jnp.dot(oh.astype(bf16), wo[h], preferred_element_type=f32)
            out = contrib if out is None else out + contrib
        return out + bo[...]

    # ------------ backbone patch-embed + bottleneck (exact affine fusion) ------
    # TODO(synk): real backbone is a ResNet; replaced by one patch-embed matmul
    # fused with the 1x1 bottleneck conv of STARKS.adjust().
    src = jnp.dot(patches_ref[0], bb_w[...],
                  preferred_element_type=f32) + bb_b[...]        # (L, C) f32
    pos = pos_ref[0]                       # (L, C)
    bias = bias_ref[0]                     # (1, L): 0 valid / -1e9 padded keys

    # ---------------- encoder layer (1-layer stand-in) ----------------
    # TODO(synk): real STARK transformer has 6 encoder / 6 decoder layers.
    qk_in = src + pos
    a = mha(qk_in, qk_in, src, e_wq, e_bq, e_wk, e_bk, e_wv, e_bv, e_wo, e_bo, bias)
    src = layer_norm(src + a, e_ln1)
    h1 = jnp.maximum(lin(src, e_wf1, e_bf1), 0.0)
    src = layer_norm(src + lin(h1, e_wf2, e_bf2), e_ln2)
    memory = src                           # (L, C)

    # ---------------- decoder layer ----------------
    qpos = qe_ref[...]                     # (NQ, C) query embedding
    tgt = jnp.zeros((NQ, HIDDEN), f32)

    a = mha(tgt + qpos, tgt + qpos, tgt,
            s_wq, s_bq, s_wk, s_bk, s_wv, s_bv, s_wo, s_bo, None)
    tgt = layer_norm(tgt + a, d_ln1)

    a = mha(tgt + qpos, memory + pos, memory,
            c_wq, c_bq, c_wk, c_bk, c_wv, c_bv, c_wo, c_bo, bias)
    tgt = layer_norm(tgt + a, d_ln2)

    h2 = jnp.maximum(lin(tgt, d_wf1, d_bf1), 0.0)
    tgt = layer_norm(tgt + lin(h2, d_wf2, d_bf2), d_ln3)

    hs = layer_norm(tgt, d_norm)           # (NQ, C) decoder output embeddings
    hs_ref[0] = hs.astype(hs_ref.dtype)

    # ---------------- CORNER box head (forward_box_head) ----------------
    # enc_opt = last FEAT_LEN_S tokens of encoder memory (the search features)
    enc_bf = memory[-FEAT_LEN_S:, :].astype(bf16)        # (HW, C)
    hs_bf = hs.astype(bf16)
    att = jax.lax.dot_general(hs_bf, enc_bf, dims_t,
                              preferred_element_type=f32)           # (NQ, HW)
    # TODO(synk): real Corner_Predictor is a 5-layer conv tower per branch; a
    # single 1x1 conv per branch is used here, fused algebraically with the
    # opt = enc * att outer product (exact only for 1x1 convs).
    proj_tl = jax.lax.dot_general(wc[0:1, :], enc_bf, dims_t,
                                  preferred_element_type=f32)        # (1, HW)
    proj_br = jax.lax.dot_general(wc[1:2, :], enc_bf, dims_t,
                                  preferred_element_type=f32)        # (1, HW)
    score_tl = att * proj_tl + bc[0:1, :]
    score_br = att * proj_br + bc[1:2, :]

    cx = coord_ref[0:1, :]                 # (1, HW)
    cy = coord_ref[1:2, :]

    def soft_argmax(score):
        p = softmax(score)
        return (jnp.sum(p * cx, axis=-1, keepdims=True),
                jnp.sum(p * cy, axis=-1, keepdims=True))

    xtl, ytl = soft_argmax(score_tl)
    xbr, ybr = soft_argmax(score_br)
    # box_xyxy_to_cxcywh
    cxc = (xtl + xbr) * 0.5
    cyc = (ytl + ybr) * 0.5
    wbx = xbr - xtl
    hbx = ybr - ytl
    lane = jax.lax.broadcasted_iota(jnp.int32, (NQ, 4), 1)
    box = (jnp.where(lane == 0, cxc, 0.0) + jnp.where(lane == 1, cyc, 0.0)
           + jnp.where(lane == 2, wbx, 0.0) + jnp.where(lane == 3, hbx, 0.0))
    box_ref[0] = box.astype(box_ref.dtype)


def pallas_stark_fused(patches, pos, bias, tf_weights):
    """patches: (B, L, 48) bf16; pos: (B, L, C) f32; bias: (B, 1, L) f32.

    Returns (boxes (B, NQ, 4), hs (B, NQ, C)) from ONE Pallas launch.
    """
    Bb, L, P = patches.shape
    C = pos.shape[-1]

    def const_spec(a):
        if a.ndim == 2:
            return pl.BlockSpec(a.shape, lambda b: (0, 0))
        return pl.BlockSpec(a.shape, lambda b: (0, 0, 0))

    in_specs = [
        pl.BlockSpec((1, L, P), lambda b: (b, 0, 0)),
        pl.BlockSpec((1, L, C), lambda b: (b, 0, 0)),
        pl.BlockSpec((1, 1, L), lambda b: (b, 0, 0)),
    ] + [const_spec(w) for w in tf_weights]

    out_shape = (jax.ShapeDtypeStruct((Bb, NQ, 4), jnp.float32),
                 jax.ShapeDtypeStruct((Bb, NQ, C), jnp.float32))
    out_specs = (pl.BlockSpec((1, NQ, 4), lambda b: (b, 0, 0)),
                 pl.BlockSpec((1, NQ, C), lambda b: (b, 0, 0)))

    return pl.pallas_call(
        _stark_fused_kernel,
        out_shape=out_shape,
        grid=(Bb,),
        in_specs=in_specs,
        out_specs=out_specs,
        compiler_params=pltpu.CompilerParams(
            dimension_semantics=("parallel",)),   # batch shards over v7x's 2 TCs
    )(patches, pos, bias, *tf_weights)


# ============================== JAX glue =====================================
def extract_patches(img):
    Bb, C, H, W = img.shape
    h, w = H // STRIDE, W // STRIDE
    p = (img.reshape(Bb, C, h, STRIDE, w, STRIDE)
            .transpose(0, 2, 4, 1, 3, 5)
            .reshape(Bb, h * w, C * STRIDE * STRIDE))
    return p, h, w


def sine_pos_embed(mask_ds):
    """mask_ds: (B, h, w) bool -> (B, h*w, HIDDEN), channels-last."""
    Bm, h, w = mask_ds.shape
    num_pos_feats = HIDDEN // 2
    not_mask = (~mask_ds).astype(jnp.float32)
    y_embed = jnp.cumsum(not_mask, axis=1)
    x_embed = jnp.cumsum(not_mask, axis=2)
    eps = 1e-6
    scale = 2.0 * math.pi
    y_embed = y_embed / (y_embed[:, -1:, :] + eps) * scale
    x_embed = x_embed / (x_embed[:, :, -1:] + eps) * scale
    dim_t = jnp.arange(num_pos_feats, dtype=jnp.float32)
    dim_t = 10000.0 ** (2.0 * jnp.floor(dim_t / 2.0) / num_pos_feats)
    pos_x = x_embed[..., None] / dim_t
    pos_y = y_embed[..., None] / dim_t
    pos_x = jnp.stack([jnp.sin(pos_x[..., 0::2]), jnp.cos(pos_x[..., 1::2])],
                      axis=-1).reshape(Bm, h, w, num_pos_feats)
    pos_y = jnp.stack([jnp.sin(pos_y[..., 0::2]), jnp.cos(pos_y[..., 1::2])],
                      axis=-1).reshape(Bm, h, w, num_pos_feats)
    pos = jnp.concatenate([pos_y, pos_x], axis=-1)          # (B, h, w, HIDDEN)
    return pos.reshape(Bm, h * w, HIDDEN)


def stark_forward_backbone(frames, params):
    """mode='backbone' for a list of (img, mask) frames.

    The backbone patch-embed (stand-in) and the STARKS bottleneck 1x1 conv are
    an exact affine map per token; that matmul is deferred into the fused
    transformer kernel, so this stage only prepares patch rows / masks / pos.
    """
    del params
    # TODO(synk): real backbone is a ResNet; replaced by one fused patch-embed matmul.
    seqs = []
    for img, mask in frames:
        p, h, w = extract_patches(img)                            # (B, hw, 48)
        mask_ds = mask[:, ::STRIDE, ::STRIDE]
        pos = sine_pos_embed(mask_ds)                             # adjust(): pos_vec
        seqs.append({"patches": p.astype(jnp.bfloat16),           # adjust(): feat_vec (pre-affine)
                     "mask": mask_ds.reshape(img.shape[0], h * w),  # adjust(): mask_vec
                     "pos": pos})
    return seqs


def merge_template_search(seqs):
    return {
        "patches": jnp.concatenate([s["patches"] for s in seqs], axis=1),  # (B, L, 48)
        "mask": jnp.concatenate([s["mask"] for s in seqs], axis=1),        # (B, L)
        "pos": jnp.concatenate([s["pos"] for s in seqs], axis=1),          # (B, L, C)
    }


def stark_forward_transformer(seq_dict, params):
    """mode='transformer': backbone affine + encoder + decoder + CORNER head fused."""
    patches, pos, mask = seq_dict["patches"], seq_dict["pos"], seq_dict["mask"]
    bias = jnp.where(mask, -1e9, 0.0).astype(jnp.float32)[:, None, :]   # (B, 1, L)
    boxes, hs = pallas_stark_fused(patches, pos, bias, params["tf_weights"])
    out = {"pred_boxes": boxes}            # (B, Nq, 4) cxcywh
    output_embed = hs[None]                # (1, B, Nq, C)
    return out, boxes, output_embed


@jax.jit
def stark_forward(params, img_z, mask_z, img_x, mask_x):
    seq_z, seq_x = stark_forward_backbone([(img_z, mask_z), (img_x, mask_x)], params)
    seq_dict = merge_template_search([seq_z, seq_x])      # template first
    return stark_forward_transformer(seq_dict, params)


# ---------------------------- parameter init ----------------------------------
def _linear_init(key, fan_in, fan_out):
    kw, kb = jax.random.split(key)
    s = 1.0 / math.sqrt(fan_in)
    w = jax.random.uniform(kw, (fan_in, fan_out), jnp.float32, -s, s)
    b = jax.random.uniform(kb, (fan_out,), jnp.float32, -s, s)
    return w, b


def _attn_pack(key):
    """Per-head packed MHA weights: (H, C, dh) in-proj, (H, dh, C) out-proj.

    The 1/sqrt(dh) attention scaling is folded into W_q / b_q (exact).
    """
    ks = jax.random.split(key, 4)
    scale = 1.0 / math.sqrt(DH)
    wq, bq = _linear_init(ks[0], HIDDEN, HIDDEN)
    wq, bq = wq * scale, bq * scale
    wk, bk = _linear_init(ks[1], HIDDEN, HIDDEN)
    wv, bv = _linear_init(ks[2], HIDDEN, HIDDEN)
    wo, bo = _linear_init(ks[3], HIDDEN, HIDDEN)

    def in_heads(w, b):
        wh = w.reshape(HIDDEN, NHEADS, DH).transpose(1, 0, 2).astype(jnp.bfloat16)
        bh = b.reshape(NHEADS, 1, DH)
        return wh, bh

    wq_h, bq_h = in_heads(wq, bq)
    wk_h, bk_h = in_heads(wk, bk)
    wv_h, bv_h = in_heads(wv, bv)
    wo_h = wo.reshape(NHEADS, DH, HIDDEN).astype(jnp.bfloat16)
    return [wq_h, bq_h, wk_h, bk_h, wv_h, bv_h, wo_h, bo.reshape(1, HIDDEN)]


def _ffn_pack(key):
    k1, k2 = jax.random.split(key)
    w1, b1 = _linear_init(k1, HIDDEN, DIM_FFN)
    w2, b2 = _linear_init(k2, DIM_FFN, HIDDEN)
    return [w1.astype(jnp.bfloat16), b1.reshape(1, -1),
            w2.astype(jnp.bfloat16), b2.reshape(1, -1)]


def _ln_pack():
    return jnp.stack([jnp.ones((HIDDEN,), jnp.float32),
                      jnp.zeros((HIDDEN,), jnp.float32)], axis=0)   # (2, C)


def init_params(key):
    keys = jax.random.split(key, 10)

    # backbone patch-embed fused with the STARKS bottleneck 1x1 conv (exact affine fusion)
    wp, bp = _linear_init(keys[0], PATCH_DIM, NUM_CHANNELS)
    wb, bb = _linear_init(keys[1], NUM_CHANNELS, HIDDEN)
    w_fused = (wp @ wb).astype(jnp.bfloat16)                 # (48, 32)
    b_fused = (bp @ wb + bb).reshape(1, HIDDEN)              # (1, 32)

    query_embed = jax.random.normal(keys[2], (NQ, HIDDEN), jnp.float32)

    idx = jnp.arange(FEAT_LEN_S)
    cxv = ((idx % FEAT_SZ_S).astype(jnp.float32) + 0.5) / FEAT_SZ_S
    cyv = ((idx // FEAT_SZ_S).astype(jnp.float32) + 0.5) / FEAT_SZ_S
    coords = jnp.stack([cxv, cyv], axis=0)       # (2, HW)

    enc_attn = _attn_pack(keys[3])
    dec_self = _attn_pack(keys[4])
    dec_cross = _attn_pack(keys[5])
    enc_ffn = _ffn_pack(keys[6])
    dec_ffn = _ffn_pack(keys[7])

    # TODO(synk): real Corner_Predictor is a 5-layer 3x3 conv tower per branch;
    # a single 1x1 conv per branch + soft-argmax is used here.
    wtl, btl = _linear_init(keys[8], HIDDEN, 1)
    wbr, bbr = _linear_init(keys[9], HIDDEN, 1)
    w_corner = jnp.concatenate([wtl.T, wbr.T], axis=0).astype(jnp.bfloat16)  # (2, C)
    b_corner = jnp.stack([btl, bbr], axis=0).reshape(2, 1)                   # (2, 1)

    tf_weights = tuple(
        [w_fused, b_fused, query_embed, coords]
        + enc_attn + [_ln_pack()]
        + enc_ffn + [_ln_pack()]
        + dec_self + [_ln_pack()]
        + dec_cross + [_ln_pack()]
        + dec_ffn + [_ln_pack(), _ln_pack()]
        + [w_corner, b_corner]
    )
    return {"tf_weights": tf_weights}


# ================================ main =======================================
if __name__ == "__main__":
    key = jax.random.PRNGKey(0)
    k_params, k_z, k_x = jax.random.split(key, 3)
    params = init_params(k_params)

    img_z = jax.random.normal(k_z, (B, IMG_C, H_Z, W_Z), jnp.float32)   # template
    img_x = jax.random.normal(k_x, (B, IMG_C, H_X, W_X), jnp.float32)   # search
    mask_z = jnp.zeros((B, H_Z, W_Z), bool)
    mask_x = jnp.zeros((B, H_X, W_X), bool)

    out, outputs_coord, output_embed = stark_forward(params, img_z, mask_z,
                                                     img_x, mask_x)
    outputs_coord = jax.block_until_ready(outputs_coord)

    assert outputs_coord.shape == (B, NQ, 4)
    assert out["pred_boxes"].shape == (B, NQ, 4)
    assert output_embed.shape == (1, B, NQ, HIDDEN)
    assert bool(jnp.all(jnp.isfinite(outputs_coord)))
    print("KERNEL_OK")
</pallas_src>

<mosaic_0001>
module attributes {stable_mosaic.version = 11 : i64} {
  func.func @_stark_fused_kernel(%arg0: i32, %arg1: memref<1x80x48xbf16, #tpu.memory_space<vmem>>, %arg2: memref<1x80x32xf32, #tpu.memory_space<vmem>>, %arg3: memref<1x1x80xf32, #tpu.memory_space<vmem>>, %arg4: memref<48x32xbf16, #tpu.memory_space<vmem>>, %arg5: memref<1x32xf32, #tpu.memory_space<vmem>>, %arg6: memref<1x32xf32, #tpu.memory_space<vmem>>, %arg7: memref<2x64xf32, #tpu.memory_space<vmem>>, %arg8: memref<4x32x8xbf16, #tpu.memory_space<vmem>>, %arg9: memref<4x1x8xf32, #tpu.memory_space<vmem>>, %arg10: memref<4x32x8xbf16, #tpu.memory_space<vmem>>, %arg11: memref<4x1x8xf32, #tpu.memory_space<vmem>>, %arg12: memref<4x32x8xbf16, #tpu.memory_space<vmem>>, %arg13: memref<4x1x8xf32, #tpu.memory_space<vmem>>, %arg14: memref<4x8x32xbf16, #tpu.memory_space<vmem>>, %arg15: memref<1x32xf32, #tpu.memory_space<vmem>>, %arg16: memref<2x32xf32, #tpu.memory_space<vmem>>, %arg17: memref<32x64xbf16, #tpu.memory_space<vmem>>, %arg18: memref<1x64xf32, #tpu.memory_space<vmem>>, %arg19: memref<64x32xbf16, #tpu.memory_space<vmem>>, %arg20: memref<1x32xf32, #tpu.memory_space<vmem>>, %arg21: memref<2x32xf32, #tpu.memory_space<vmem>>, %arg22: memref<4x32x8xbf16, #tpu.memory_space<vmem>>, %arg23: memref<4x1x8xf32, #tpu.memory_space<vmem>>, %arg24: memref<4x32x8xbf16, #tpu.memory_space<vmem>>, %arg25: memref<4x1x8xf32, #tpu.memory_space<vmem>>, %arg26: memref<4x32x8xbf16, #tpu.memory_space<vmem>>, %arg27: memref<4x1x8xf32, #tpu.memory_space<vmem>>, %arg28: memref<4x8x32xbf16, #tpu.memory_space<vmem>>, %arg29: memref<1x32xf32, #tpu.memory_space<vmem>>, %arg30: memref<2x32xf32, #tpu.memory_space<vmem>>, %arg31: memref<4x32x8xbf16, #tpu.memory_space<vmem>>, %arg32: memref<4x1x8xf32, #tpu.memory_space<vmem>>, %arg33: memref<4x32x8xbf16, #tpu.memory_space<vmem>>, %arg34: memref<4x1x8xf32, #tpu.memory_space<vmem>>, %arg35: memref<4x32x8xbf16, #tpu.memory_space<vmem>>, %arg36: memref<4x1x8xf32, #tpu.memory_space<vmem>>, %arg37: memref<4x8x32xbf16, #tpu.memory_space<vmem>>, %arg38: memref<1x32xf32, #tpu.memory_space<vmem>>, %arg39: memref<2x32xf32, #tpu.memory_space<vmem>>, %arg40: memref<32x64xbf16, #tpu.memory_space<vmem>>, %arg41: memref<1x64xf32, #tpu.memory_space<vmem>>, %arg42: memref<64x32xbf16, #tpu.memory_space<vmem>>, %arg43: memref<1x32xf32, #tpu.memory_space<vmem>>, %arg44: memref<2x32xf32, #tpu.memory_space<vmem>>, %arg45: memref<2x32xf32, #tpu.memory_space<vmem>>, %arg46: memref<2x32xbf16, #tpu.memory_space<vmem>>, %arg47: memref<2x1xf32, #tpu.memory_space<vmem>>, %arg48: memref<1x1x4xf32, #tpu.memory_space<vmem>>, %arg49: memref<1x1x32xf32, #tpu.memory_space<vmem>>) attributes {dimension_semantics = [#tpu.dimension_semantics<parallel>], iteration_bounds = array<i64: 2>, scalar_prefetch = 0 : i64, scratch_operands = 0 : i64, tpu.core_type = #tpu.core_type<tc>, window_params = [{transform_indices = @transform_0, window_bounds = array<i64: 1, 80, 48>}, {transform_indices = @transform_1, window_bounds = array<i64: 1, 80, 32>}, {transform_indices = @transform_2, window_bounds = array<i64: 1, 1, 80>}, {pipeline_mode = #tpu.pipeline_mode<synchronous>, transform_indices = @transform_3, window_bounds = array<i64: 48, 32>}, {pipeline_mode = #tpu.pipeline_mode<synchronous>, transform_indices = @transform_4, window_bounds = array<i64: 1, 32>}, {pipeline_mode = #tpu.pipeline_mode<synchronous>, transform_indices = @transform_5, window_bounds = array<i64: 1, 32>}, {pipeline_mode = #tpu.pipeline_mode<synchronous>, transform_indices = @transform_6, window_bounds = array<i64: 2, 64>}, {pipeline_mode = #tpu.pipeline_mode<synchronous>, transform_indices = @transform_7, window_bounds = array<i64: 4, 32, 8>}, {pipeline_mode = #tpu.pipeline_mode<synchronous>, transform_indices = @transform_8, window_bounds = array<i64: 4, 1, 8>}, {pipeline_mode = #tpu.pipeline_mode<synchronous>, transform_indices = @transform_9, window_bounds = array<i64: 4, 32, 8>}, {pipeline_mode = #tpu.pipeline_mode<synchronous>, transform_indices = @transform_10, window_bounds = array<i64: 4, 1, 8>}, {pipeline_mode = #tpu.pipeline_mode<synchronous>, transform_indices = @transform_11, window_bounds = array<i64: 4, 32, 8>}, {pipeline_mode = #tpu.pipeline_mode<synchronous>, transform_indices = @transform_12, window_bounds = array<i64: 4, 1, 8>}, {pipeline_mode = #tpu.pipeline_mode<synchronous>, transform_indices = @transform_13, window_bounds = array<i64: 4, 8, 32>}, {pipeline_mode = #tpu.pipeline_mode<synchronous>, transform_indices = @transform_14, window_bounds = array<i64: 1, 32>}, {pipeline_mode = #tpu.pipeline_mode<synchronous>, transform_indices = @transform_15, window_bounds = array<i64: 2, 32>}, {pipeline_mode = #tpu.pipeline_mode<synchronous>, transform_indices = @transform_16, window_bounds = array<i64: 32, 64>}, {pipeline_mode = #tpu.pipeline_mode<synchronous>, transform_indices = @transform_17, window_bounds = array<i64: 1, 64>}, {pipeline_mode = #tpu.pipeline_mode<synchronous>, transform_indices = @transform_18, window_bounds = array<i64: 64, 32>}, {pipeline_mode = #tpu.pipeline_mode<synchronous>, transform_indices = @transform_19, window_bounds = array<i64: 1, 32>}, {pipeline_mode = #tpu.pipeline_mode<synchronous>, transform_indices = @transform_20, window_bounds = array<i64: 2, 32>}, {pipeline_mode = #tpu.pipeline_mode<synchronous>, transform_indices = @transform_21, window_bounds = array<i64: 4, 32, 8>}, {pipeline_mode = #tpu.pipeline_mode<synchronous>, transform_indices = @transform_22, window_bounds = array<i64: 4, 1, 8>}, {pipeline_mode = #tpu.pipeline_mode<synchronous>, transform_indices = @transform_23, window_bounds = array<i64: 4, 32, 8>}, {pipeline_mode = #tpu.pipeline_mode<synchronous>, transform_indices = @transform_24, window_bounds = array<i64: 4, 1, 8>}, {pipeline_mode = #tpu.pipeline_mode<synchronous>, transform_indices = @transform_25, window_bounds = array<i64: 4, 32, 8>}, {pipeline_mode = #tpu.pipeline_mode<synchronous>, transform_indices = @transform_26, window_bounds = array<i64: 4, 1, 8>}, {pipeline_mode = #tpu.pipeline_mode<synchronous>, transform_indices = @transform_27, window_bounds = array<i64: 4, 8, 32>}, {pipeline_mode = #tpu.pipeline_mode<synchronous>, transform_indices = @transform_28, window_bounds = array<i64: 1, 32>}, {pipeline_mode = #tpu.pipeline_mode<synchronous>, transform_indices = @transform_29, window_bounds = array<i64: 2, 32>}, {pipeline_mode = #tpu.pipeline_mode<synchronous>, transform_indices = @transform_30, window_bounds = array<i64: 4, 32, 8>}, {pipeline_mode = #tpu.pipeline_mode<synchronous>, transform_indices = @transform_31, window_bounds = array<i64: 4, 1, 8>}, {pipeline_mode = #tpu.pipeline_mode<synchronous>, transform_indices = @transform_32, window_bounds = array<i64: 4, 32, 8>}, {pipeline_mode = #tpu.pipeline_mode<synchronous>, transform_indices = @transform_33, window_bounds = array<i64: 4, 1, 8>}, {pipeline_mode = #tpu.pipeline_mode<synchronous>, transform_indices = @transform_34, window_bounds = array<i64: 4, 32, 8>}, {pipeline_mode = #tpu.pipeline_mode<synchronous>, transform_indices = @transform_35, window_bounds = array<i64: 4, 1, 8>}, {pipeline_mode = #tpu.pipeline_mode<synchronous>, transform_indices = @transform_36, window_bounds = array<i64: 4, 8, 32>}, {pipeline_mode = #tpu.pipeline_mode<synchronous>, transform_indices = @transform_37, window_bounds = array<i64: 1, 32>}, {pipeline_mode = #tpu.pipeline_mode<synchronous>, transform_indices = @transform_38, window_bounds = array<i64: 2, 32>}, {pipeline_mode = #tpu.pipeline_mode<synchronous>, transform_indices = @transform_39, window_bounds = array<i64: 32, 64>}, {pipeline_mode = #tpu.pipeline_mode<synchronous>, transform_indices = @transform_40, window_bounds = array<i64: 1, 64>}, {pipeline_mode = #tpu.pipeline_mode<synchronous>, transform_indices = @transform_41, window_bounds = array<i64: 64, 32>}, {pipeline_mode = #tpu.pipeline_mode<synchronous>, transform_indices = @transform_42, window_bounds = array<i64: 1, 32>}, {pipeline_mode = #tpu.pipeline_mode<synchronous>, transform_indices = @transform_43, window_bounds = array<i64: 2, 32>}, {pipeline_mode = #tpu.pipeline_mode<synchronous>, transform_indices = @transform_44, window_bounds = array<i64: 2, 32>}, {pipeline_mode = #tpu.pipeline_mode<synchronous>, transform_indices = @transform_45, window_bounds = array<i64: 2, 32>}, {pipeline_mode = #tpu.pipeline_mode<synchronous>, transform_indices = @transform_46, window_bounds = array<i64: 2, 1>}, {transform_indices = @transform_47, window_bounds = array<i64: 1, 1, 4>}, {transform_indices = @transform_48, window_bounds = array<i64: 1, 1, 32>}]} {
    %c0 = arith.constant 0 : index
    %c0_0 = arith.constant 0 : index
    %c0_1 = arith.constant 0 : index
    %0 = vector.load %arg1[%c0, %c0_0, %c0_1] : memref<1x80x48xbf16, #tpu.memory_space<vmem>>, vector<1x80x48xbf16>
    %1 = vector.shape_cast %0 : vector<1x80x48xbf16> to vector<80x48xbf16>
    %c0_2 = arith.constant 0 : index
    %c0_3 = arith.constant 0 : index
    %2 = vector.load %arg4[%c0_2, %c0_3] : memref<48x32xbf16, #tpu.memory_space<vmem>>, vector<48x32xbf16>
    %cst = arith.constant dense<0.000000e+00> : vector<80x32xf32>
    %3 = tpu.matmul %1, %2, %cst {dimension_numbers = #tpu.dot_dimension_numbers<[1], [0], [0], [1], [0, 0, 1, 1], [], []>} : vector<80x48xbf16>, vector<48x32xbf16>, vector<80x32xf32> -> vector<80x32xf32>
    %c0_4 = arith.constant 0 : index
    %c0_5 = arith.constant 0 : index
    %4 = vector.load %arg5[%c0_4, %c0_5] : memref<1x32xf32, #tpu.memory_space<vmem>>, vector<1x32xf32>
    %5 = vector.broadcast %4 : vector<1x32xf32> to vector<80x32xf32>
    %6 = arith.addf %3, %5 : vector<80x32xf32>
    %c0_6 = arith.constant 0 : index
    %c0_7 = arith.constant 0 : index
    %c0_8 = arith.constant 0 : index
    %7 = vector.load %arg2[%c0_6, %c0_7, %c0_8] : memref<1x80x32xf32, #tpu.memory_space<vmem>>, vector<1x80x32xf32>
    %8 = vector.shape_cast %7 : vector<1x80x32xf32> to vector<80x32xf32>
    %c0_9 = arith.constant 0 : index
    %c0_10 = arith.constant 0 : index
    %c0_11 = arith.constant 0 : index
    %9 = vector.load %arg3[%c0_9, %c0_10, %c0_11] : memref<1x1x80xf32, #tpu.memory_space<vmem>>, vector<1x1x80xf32>
    %10 = vector.shape_cast %9 : vector<1x1x80xf32> to vector<1x80xf32>
    %11 = arith.addf %6, %8 : vector<80x32xf32>
    %12 = arith.truncf %11 : vector<80x32xf32> to vector<80x32xbf16>
    %13 = arith.truncf %11 : vector<80x32xf32> to vector<80x32xbf16>
    %14 = arith.truncf %6 : vector<80x32xf32> to vector<80x32xbf16>
    %c0_12 = arith.constant 0 : index
    %c0_13 = arith.constant 0 : index
    %c0_14 = arith.constant 0 : index
    %15 = vector.load %arg8[%c0_12, %c0_13, %c0_14] : memref<4x32x8xbf16, #tpu.memory_space<vmem>>, vector<1x32x8xbf16>
    %16 = vector.shape_cast %15 : vector<1x32x8xbf16> to vector<32x8xbf16>
    %cst_15 = arith.constant dense<0.000000e+00> : vector<80x8xf32>
    %17 = tpu.matmul %12, %16, %cst_15 {dimension_numbers = #tpu.dot_dimension_numbers<[1], [0], [0], [1], [0, 0, 1, 1], [], []>} : vector<80x32xbf16>, vector<32x8xbf16>, vector<80x8xf32> -> vector<80x8xf32>
    %c0_16 = arith.constant 0 : index
    %c0_17 = arith.constant 0 : index
    %c0_18 = arith.constant 0 : index
    %18 = vector.load %arg9[%c0_16, %c0_17, %c0_18] : memref<4x1x8xf32, #tpu.memory_space<vmem>>, vector<1x1x8xf32>
    %19 = vector.shape_cast %18 : vector<1x1x8xf32> to vector<1x8xf32>
    %20 = vector.broadcast %19 : vector<1x8xf32> to vector<80x8xf32>
    %21 = arith.addf %17, %20 : vector<80x8xf32>
    %c0_19 = arith.constant 0 : index
    %c0_20 = arith.constant 0 : index
    %c0_21 = arith.constant 0 : index
    %22 = vector.load %arg10[%c0_19, %c0_20, %c0_21] : memref<4x32x8xbf16, #tpu.memory_space<vmem>>, vector<1x32x8xbf16>
    %23 = vector.shape_cast %22 : vector<1x32x8xbf16> to vector<32x8xbf16>
    %cst_22 = arith.constant dense<0.000000e+00> : vector<80x8xf32>
    %24 = tpu.matmul %13, %23, %cst_22 {dimension_numbers = #tpu.dot_dimension_numbers<[1], [0], [0], [1], [0, 0, 1, 1], [], []>} : vector<80x32xbf16>, vector<32x8xbf16>, vector<80x8xf32> -> vector<80x8xf32>
    %c0_23 = arith.constant 0 : index
    %c0_24 = arith.constant 0 : index
    %c0_25 = arith.constant 0 : index
    %25 = vector.load %arg11[%c0_23, %c0_24, %c0_25] : memref<4x1x8xf32, #tpu.memory_space<vmem>>, vector<1x1x8xf32>
    %26 = vector.shape_cast %25 : vector<1x1x8xf32> to vector<1x8xf32>
    %27 = vector.broadcast %26 : vector<1x8xf32> to vector<80x8xf32>
    %28 = arith.addf %24, %27 : vector<80x8xf32>
    %c0_26 = arith.constant 0 : index
    %c0_27 = arith.constant 0 : index
    %c0_28 = arith.constant 0 : index
    %29 = vector.load %arg12[%c0_26, %c0_27, %c0_28] : memref<4x32x8xbf16, #tpu.memory_space<vmem>>, vector<1x32x8xbf16>
    %30 = vector.shape_cast %29 : vector<1x32x8xbf16> to vector<32x8xbf16>
    %cst_29 = arith.constant dense<0.000000e+00> : vector<80x8xf32>
    %31 = tpu.matmul %14, %30, %cst_29 {dimension_numbers = #tpu.dot_dimension_numbers<[1], [0], [0], [1], [0, 0, 1, 1], [], []>} : vector<80x32xbf16>, vector<32x8xbf16>, vector<80x8xf32> -> vector<80x8xf32>
    %c0_30 = arith.constant 0 : index
    %c0_31 = arith.constant 0 : index
    %c0_32 = arith.constant 0 : index
    %32 = vector.load %arg13[%c0_30, %c0_31, %c0_32] : memref<4x1x8xf32, #tpu.memory_space<vmem>>, vector<1x1x8xf32>
    %33 = vector.shape_cast %32 : vector<1x1x8xf32> to vector<1x8xf32>
    %34 = vector.broadcast %33 : vector<1x8xf32> to vector<80x8xf32>
    %35 = arith.addf %31, %34 : vector<80x8xf32>
    %36 = arith.truncf %21 : vector<80x8xf32> to vector<80x8xbf16>
    %37 = arith.truncf %28 : vector<80x8xf32> to vector<80x8xbf16>
    %cst_33 = arith.constant dense<0.000000e+00> : vector<80x80xf32>
    %38 = tpu.matmul %36, %37, %cst_33 {dimension_numbers = #tpu.dot_dimension_numbers<[1], [1], [0], [0], [0, 0, 1, 0], [], []>} : vector<80x8xbf16>, vector<80x8xbf16>, vector<80x80xf32> -> vector<80x80xf32>
    %39 = vector.broadcast %10 : vector<1x80xf32> to vector<80x80xf32>
    %40 = arith.addf %38, %39 : vector<80x80xf32>
    %cst_34 = arith.constant dense<0xFF800000> : vector<80xf32>
    %41 = vector.multi_reduction <maximumf>, %40, %cst_34 [1] : vector<80x80xf32> to vector<80xf32>
    %42 = vector.shape_cast %41 : vector<80xf32> to vector<80x1xf32>
    %43 = vector.broadcast %42 : vector<80x1xf32> to vector<80x80xf32>
    %44 = arith.subf %40, %43 : vector<80x80xf32>
    %45 = math.exp %44 : vector<80x80xf32>
    %cst_35 = arith.constant dense<0.000000e+00> : vector<80xf32>
    %46 = vector.multi_reduction <add>, %45, %cst_35 [1] : vector<80x80xf32> to vector<80xf32>
    %47 = vector.shape_cast %46 : vector<80xf32> to vector<80x1xf32>
    %48 = tpu.reciprocal %47 {approx = true} : vector<80x1xf32> -> vector<80x1xf32>
    %49 = vector.broadcast %48 : vector<80x1xf32> to vector<80x80xf32>
    %50 = arith.mulf %45, %49 : vector<80x80xf32>
    %51 = arith.truncf %50 : vector<80x80xf32> to vector<80x80xbf16>
    %52 = arith.truncf %35 : vector<80x8xf32> to vector<80x8xbf16>
    %cst_36 = arith.constant dense<0.000000e+00> : vector<80x8xf32>
    %53 = tpu.matmul %51, %52, %cst_36 {dimension_numbers = #tpu.dot_dimension_numbers<[1], [0], [0], [1], [0, 0, 1, 1], [], []>} : vector<80x80xbf16>, vector<80x8xbf16>, vector<80x8xf32> -> vector<80x8xf32>
    %54 = arith.truncf %53 : vector<80x8xf32> to vector<80x8xbf16>
    %c0_37 = arith.constant 0 : index
    %c0_38 = arith.constant 0 : index
    %c0_39 = arith.constant 0 : index
    %55 = vector.load %arg14[%c0_37, %c0_38, %c0_39] : memref<4x8x32xbf16, #tpu.memory_space<vmem>>, vector<1x8x32xbf16>
    %56 = vector.shape_cast %55 : vector<1x8x32xbf16> to vector<8x32xbf16>
    %cst_40 = arith.constant dense<0.000000e+00> : vector<80x32xf32>
    %57 = tpu.matmul %54, %56, %cst_40 {dimension_numbers = #tpu.dot_dimension_numbers<[1], [0], [0], [1], [0, 0, 1, 1], [], []>} : vector<80x8xbf16>, vector<8x32xbf16>, vector<80x32xf32> -> vector<80x32xf32>
    %c1 = arith.constant 1 : index
    %c0_41 = arith.constant 0 : index
    %c0_42 = arith.constant 0 : index
    %58 = vector.load %arg8[%c1, %c0_41, %c0_42] : memref<4x32x8xbf16, #tpu.memory_space<vmem>>, vector<1x32x8xbf16>
    %59 = vector.shape_cast %58 : vector<1x32x8xbf16> to vector<32x8xbf16>
    %cst_43 = arith.constant dense<0.000000e+00> : vector<80x8xf32>
    %60 = tpu.matmul %12, %59, %cst_43 {dimension_numbers = #tpu.dot_dimension_numbers<[1], [0], [0], [1], [0, 0, 1, 1], [], []>} : vector<80x32xbf16>, vector<32x8xbf16>, vector<80x8xf32> -> vector<80x8xf32>
    %c1_44 = arith.constant 1 : index
    %c0_45 = arith.constant 0 : index
    %c0_46 = arith.constant 0 : index
    %61 = vector.load %arg9[%c1_44, %c0_45, %c0_46] : memref<4x1x8xf32, #tpu.memory_space<vmem>>, vector<1x1x8xf32>
    %62 = vector.shape_cast %61 : vector<1x1x8xf32> to vector<1x8xf32>
    %63 = vector.broadcast %62 : vector<1x8xf32> to vector<80x8xf32>
    %64 = arith.addf %60, %63 : vector<80x8xf32>
    %c1_47 = arith.constant 1 : index
    %c0_48 = arith.constant 0 : index
    %c0_49 = arith.constant 0 : index
    %65 = vector.load %arg10[%c1_47, %c0_48, %c0_49] : memref<4x32x8xbf16, #tpu.memory_space<vmem>>, vector<1x32x8xbf16>
    %66 = vector.shape_cast %65 : vector<1x32x8xbf16> to vector<32x8xbf16>
    %cst_50 = arith.constant dense<0.000000e+00> : vector<80x8xf32>
    %67 = tpu.matmul %13, %66, %cst_50 {dimension_numbers = #tpu.dot_dimension_numbers<[1], [0], [0], [1], [0, 0, 1, 1], [], []>} : vector<80x32xbf16>, vector<32x8xbf16>, vector<80x8xf32> -> vector<80x8xf32>
    %c1_51 = arith.constant 1 : index
    %c0_52 = arith.constant 0 : index
    %c0_53 = arith.constant 0 : index
    %68 = vector.load %arg11[%c1_51, %c0_52, %c0_53] : memref<4x1x8xf32, #tpu.memory_space<vmem>>, vector<1x1x8xf32>
    %69 = vector.shape_cast %68 : vector<1x1x8xf32> to vector<1x8xf32>
    %70 = vector.broadcast %69 : vector<1x8xf32> to vector<80x8xf32>
    %71 = arith.addf %67, %70 : vector<80x8xf32>
    %c1_54 = arith.constant 1 : index
    %c0_55 = arith.constant 0 : index
    %c0_56 = arith.constant 0 : index
    %72 = vector.load %arg12[%c1_54, %c0_55, %c0_56] : memref<4x32x8xbf16, #tpu.memory_space<vmem>>, vector<1x32x8xbf16>
    %73 = vector.shape_cast %72 : vector<1x32x8xbf16> to vector<32x8xbf16>
    %cst_57 = arith.constant dense<0.000000e+00> : vector<80x8xf32>
    %74 = tpu.matmul %14, %73, %cst_57 {dimension_numbers = #tpu.dot_dimension_numbers<[1], [0], [0], [1], [0, 0, 1, 1], [], []>} : vector<80x32xbf16>, vector<32x8xbf16>, vector<80x8xf32> -> vector<80x8xf32>
    %c1_58 = arith.constant 1 : index
    %c0_59 = arith.constant 0 : index
    %c0_60 = arith.constant 0 : index
    %75 = vector.load %arg13[%c1_58, %c0_59, %c0_60] : memref<4x1x8xf32, #tpu.memory_space<vmem>>, vector<1x1x8xf32>
    %76 = vector.shape_cast %75 : vector<1x1x8xf32> to vector<1x8xf32>
    %77 = vector.broadcast %76 : vector<1x8xf32> to vector<80x8xf32>
    %78 = arith.addf %74, %77 : vector<80x8xf32>
    %79 = arith.truncf %64 : vector<80x8xf32> to vector<80x8xbf16>
    %80 = arith.truncf %71 : vector<80x8xf32> to vector<80x8xbf16>
    %cst_61 = arith.constant dense<0.000000e+00> : vector<80x80xf32>
    %81 = tpu.matmul %79, %80, %cst_61 {dimension_numbers = #tpu.dot_dimension_numbers<[1], [1], [0], [0], [0, 0, 1, 0], [], []>} : vector<80x8xbf16>, vector<80x8xbf16>, vector<80x80xf32> -> vector<80x80xf32>
    %82 = vector.broadcast %10 : vector<1x80xf32> to vector<80x80xf32>
    %83 = arith.addf %81, %82 : vector<80x80xf32>
    %cst_62 = arith.constant dense<0xFF800000> : vector<80xf32>
    %84 = vector.multi_reduction <maximumf>, %83, %cst_62 [1] : vector<80x80xf32> to vector<80xf32>
    %85 = vector.shape_cast %84 : vector<80xf32> to vector<80x1xf32>
    %86 = vector.broadcast %85 : vector<80x1xf32> to vector<80x80xf32>
    %87 = arith.subf %83, %86 : vector<80x80xf32>
    %88 = math.exp %87 : vector<80x80xf32>
    %cst_63 = arith.constant dense<0.000000e+00> : vector<80xf32>
    %89 = vector.multi_reduction <add>, %88, %cst_63 [1] : vector<80x80xf32> to vector<80xf32>
    %90 = vector.shape_cast %89 : vector<80xf32> to vector<80x1xf32>
    %91 = tpu.reciprocal %90 {approx = true} : vector<80x1xf32> -> vector<80x1xf32>
    %92 = vector.broadcast %91 : vector<80x1xf32> to vector<80x80xf32>
    %93 = arith.mulf %88, %92 : vector<80x80xf32>
    %94 = arith.truncf %93 : vector<80x80xf32> to vector<80x80xbf16>
    %95 = arith.truncf %78 : vector<80x8xf32> to vector<80x8xbf16>
    %cst_64 = arith.constant dense<0.000000e+00> : vector<80x8xf32>
    %96 = tpu.matmul %94, %95, %cst_64 {dimension_numbers = #tpu.dot_dimension_numbers<[1], [0], [0], [1], [0, 0, 1, 1], [], []>} : vector<80x80xbf16>, vector<80x8xbf16>, vector<80x8xf32> -> vector<80x8xf32>
    %97 = arith.truncf %96 : vector<80x8xf32> to vector<80x8xbf16>
    %c1_65 = arith.constant 1 : index
    %c0_66 = arith.constant 0 : index
    %c0_67 = arith.constant 0 : index
    %98 = vector.load %arg14[%c1_65, %c0_66, %c0_67] : memref<4x8x32xbf16, #tpu.memory_space<vmem>>, vector<1x8x32xbf16>
    %99 = vector.shape_cast %98 : vector<1x8x32xbf16> to vector<8x32xbf16>
    %cst_68 = arith.constant dense<0.000000e+00> : vector<80x32xf32>
    %100 = tpu.matmul %97, %99, %cst_68 {dimension_numbers = #tpu.dot_dimension_numbers<[1], [0], [0], [1], [0, 0, 1, 1], [], []>} : vector<80x8xbf16>, vector<8x32xbf16>, vector<80x32xf32> -> vector<80x32xf32>
    %101 = arith.addf %57, %100 : vector<80x32xf32>
    %c2 = arith.constant 2 : index
    %c0_69 = arith.constant 0 : index
    %c0_70 = arith.constant 0 : index
    %102 = vector.load %arg8[%c2, %c0_69, %c0_70] : memref<4x32x8xbf16, #tpu.memory_space<vmem>>, vector<1x32x8xbf16>
    %103 = vector.shape_cast %102 : vector<1x32x8xbf16> to vector<32x8xbf16>
    %cst_71 = arith.constant dense<0.000000e+00> : vector<80x8xf32>
    %104 = tpu.matmul %12, %103, %cst_71 {dimension_numbers = #tpu.dot_dimension_numbers<[1], [0], [0], [1], [0, 0, 1, 1], [], []>} : vector<80x32xbf16>, vector<32x8xbf16>, vector<80x8xf32> -> vector<80x8xf32>
    %c2_72 = arith.constant 2 : index
    %c0_73 = arith.constant 0 : index
    %c0_74 = arith.constant 0 : index
    %105 = vector.load %arg9[%c2_72, %c0_73, %c0_74] : memref<4x1x8xf32, #tpu.memory_space<vmem>>, vector<1x1x8xf32>
    %106 = vector.shape_cast %105 : vector<1x1x8xf32> to vector<1x8xf32>
    %107 = vector.broadcast %106 : vector<1x8xf32> to vector<80x8xf32>
    %108 = arith.addf %104, %107 : vector<80x8xf32>
    %c2_75 = arith.constant 2 : index
    %c0_76 = arith.constant 0 : index
    %c0_77 = arith.constant 0 : index
    %109 = vector.load %arg10[%c2_75, %c0_76, %c0_77] : memref<4x32x8xbf16, #tpu.memory_space<vmem>>, vector<1x32x8xbf16>
    %110 = vector.shape_cast %109 : vector<1x32x8xbf16> to vector<32x8xbf16>
    %cst_78 = arith.constant dense<0.000000e+00> : vector<80x8xf32>
    %111 = tpu.matmul %13, %110, %cst_78 {dimension_numbers = #tpu.dot_dimension_numbers<[1], [0], [0], [1], [0, 0, 1, 1], [], []>} : vector<80x32xbf16>, vector<32x8xbf16>, vector<80x8xf32> -> vector<80x8xf32>
    %c2_79 = arith.constant 2 : index
    %c0_80 = arith.constant 0 : index
    %c0_81 = arith.constant 0 : index
    %112 = vector.load %arg11[%c2_79, %c0_80, %c0_81] : memref<4x1x8xf32, #tpu.memory_space<vmem>>, vector<1x1x8xf32>
    %113 = vector.shape_cast %112 : vector<1x1x8xf32> to vector<1x8xf32>
    %114 = vector.broadcast %113 : vector<1x8xf32> to vector<80x8xf32>
    %115 = arith.addf %111, %114 : vector<80x8xf32>
    %c2_82 = arith.constant 2 : index
    %c0_83 = arith.constant 0 : index
    %c0_84 = arith.constant 0 : index
    %116 = vector.load %arg12[%c2_82, %c0_83, %c0_84] : memref<4x32x8xbf16, #tpu.memory_space<vmem>>, vector<1x32x8xbf16>
    %117 = vector.shape_cast %116 : vector<1x32x8xbf16> to vector<32x8xbf16>
    %cst_85 = arith.constant dense<0.000000e+00> : vector<80x8xf32>
    %118 = tpu.matmul %14, %117, %cst_85 {dimension_numbers = #tpu.dot_dimension_numbers<[1], [0], [0], [1], [0, 0, 1, 1], [], []>} : vector<80x32xbf16>, vector<32x8xbf16>, vector<80x8xf32> -> vector<80x8xf32>
    %c2_86 = arith.constant 2 : index
    %c0_87 = arith.constant 0 : index
    %c0_88 = arith.constant 0 : index
    %119 = vector.load %arg13[%c2_86, %c0_87, %c0_88] : memref<4x1x8xf32, #tpu.memory_space<vmem>>, vector<1x1x8xf32>
    %120 = vector.shape_cast %119 : vector<1x1x8xf32> to vector<1x8xf32>
    %121 = vector.broadcast %120 : vector<1x8xf32> to vector<80x8xf32>
    %122 = arith.addf %118, %121 : vector<80x8xf32>
    %123 = arith.truncf %108 : vector<80x8xf32> to vector<80x8xbf16>
    %124 = arith.truncf %115 : vector<80x8xf32> to vector<80x8xbf16>
    %cst_89 = arith.constant dense<0.000000e+00> : vector<80x80xf32>
    %125 = tpu.matmul %123, %124, %cst_89 {dimension_numbers = #tpu.dot_dimension_numbers<[1], [1], [0], [0], [0, 0, 1, 0], [], []>} : vector<80x8xbf16>, vector<80x8xbf16>, vector<80x80xf32> -> vector<80x80xf32>
    %126 = vector.broadcast %10 : vector<1x80xf32> to vector<80x80xf32>
    %127 = arith.addf %125, %126 : vector<80x80xf32>
    %cst_90 = arith.constant dense<0xFF800000> : vector<80xf32>
    %128 = vector.multi_reduction <maximumf>, %127, %cst_90 [1] : vector<80x80xf32> to vector<80xf32>
    %129 = vector.shape_cast %128 : vector<80xf32> to vector<80x1xf32>
    %130 = vector.broadcast %129 : vector<80x1xf32> to vector<80x80xf32>
    %131 = arith.subf %127, %130 : vector<80x80xf32>
    %132 = math.exp %131 : vector<80x80xf32>
    %cst_91 = arith.constant dense<0.000000e+00> : vector<80xf32>
    %133 = vector.multi_reduction <add>, %132, %cst_91 [1] : vector<80x80xf32> to vector<80xf32>
    %134 = vector.shape_cast %133 : vector<80xf32> to vector<80x1xf32>
    %135 = tpu.reciprocal %134 {approx = true} : vector<80x1xf32> -> vector<80x1xf32>
    %136 = vector.broadcast %135 : vector<80x1xf32> to vector<80x80xf32>
    %137 = arith.mulf %132, %136 : vector<80x80xf32>
    %138 = arith.truncf %137 : vector<80x80xf32> to vector<80x80xbf16>
    %139 = arith.truncf %122 : vector<80x8xf32> to vector<80x8xbf16>
    %cst_92 = arith.constant dense<0.000000e+00> : vector<80x8xf32>
    %140 = tpu.matmul %138, %139, %cst_92 {dimension_numbers = #tpu.dot_dimension_numbers<[1], [0], [0], [1], [0, 0, 1, 1], [], []>} : vector<80x80xbf16>, vector<80x8xbf16>, vector<80x8xf32> -> vector<80x8xf32>
    %141 = arith.truncf %140 : vector<80x8xf32> to vector<80x8xbf16>
    %c2_93 = arith.constant 2 : index
    %c0_94 = arith.constant 0 : index
    %c0_95 = arith.constant 0 : index
    %142 = vector.load %arg14[%c2_93, %c0_94, %c0_95] : memref<4x8x32xbf16, #tpu.memory_space<vmem>>, vector<1x8x32xbf16>
    %143 = vector.shape_cast %142 : vector<1x8x32xbf16> to vector<8x32xbf16>
    %cst_96 = arith.constant dense<0.000000e+00> : vector<80x32xf32>
    %144 = tpu.matmul %141, %143, %cst_96 {dimension_numbers = #tpu.dot_dimension_numbers<[1], [0], [0], [1], [0, 0, 1, 1], [], []>} : vector<80x8xbf16>, vector<8x32xbf16>, vector<80x32xf32> -> vector<80x32xf32>
    %145 = arith.addf %101, %144 : vector<80x32xf32>
    %c3 = arith.constant 3 : index
    %c0_97 = arith.constant 0 : index
    %c0_98 = arith.constant 0 : index
    %146 = vector.load %arg8[%c3, %c0_97, %c0_98] : memref<4x32x8xbf16, #tpu.memory_space<vmem>>, vector<1x32x8xbf16>
    %147 = vector.shape_cast %146 : vector<1x32x8xbf16> to vector<32x8xbf16>
    %cst_99 = arith.constant dense<0.000000e+00> : vector<80x8xf32>
    %148 = tpu.matmul %12, %147, %cst_99 {dimension_numbers = #tpu.dot_dimension_numbers<[1], [0], [0], [1], [0, 0, 1, 1], [], []>} : vector<80x32xbf16>, vector<32x8xbf16>, vector<80x8xf32> -> vector<80x8xf32>
    %c3_100 = arith.constant 3 : index
    %c0_101 = arith.constant 0 : index
    %c0_102 = arith.constant 0 : index
    %149 = vector.load %arg9[%c3_100, %c0_101, %c0_102] : memref<4x1x8xf32, #tpu.memory_space<vmem>>, vector<1x1x8xf32>
    %150 = vector.shape_cast %149 : vector<1x1x8xf32> to vector<1x8xf32>
    %151 = vector.broadcast %150 : vector<1x8xf32> to vector<80x8xf32>
    %152 = arith.addf %148, %151 : vector<80x8xf32>
    %c3_103 = arith.constant 3 : index
    %c0_104 = arith.constant 0 : index
    %c0_105 = arith.constant 0 : index
    %153 = vector.load %arg10[%c3_103, %c0_104, %c0_105] : memref<4x32x8xbf16, #tpu.memory_space<vmem>>, vector<1x32x8xbf16>
    %154 = vector.shape_cast %153 : vector<1x32x8xbf16> to vector<32x8xbf16>
    %cst_106 = arith.constant dense<0.000000e+00> : vector<80x8xf32>
    %155 = tpu.matmul %13, %154, %cst_106 {dimension_numbers = #tpu.dot_dimension_numbers<[1], [0], [0], [1], [0, 0, 1, 1], [], []>} : vector<80x32xbf16>, vector<32x8xbf16>, vector<80x8xf32> -> vector<80x8xf32>
    %c3_107 = arith.constant 3 : index
    %c0_108 = arith.constant 0 : index
    %c0_109 = arith.constant 0 : index
    %156 = vector.load %arg11[%c3_107, %c0_108, %c0_109] : memref<4x1x8xf32, #tpu.memory_space<vmem>>, vector<1x1x8xf32>
    %157 = vector.shape_cast %156 : vector<1x1x8xf32> to vector<1x8xf32>
    %158 = vector.broadcast %157 : vector<1x8xf32> to vector<80x8xf32>
    %159 = arith.addf %155, %158 : vector<80x8xf32>
    %c3_110 = arith.constant 3 : index
    %c0_111 = arith.constant 0 : index
    %c0_112 = arith.constant 0 : index
    %160 = vector.load %arg12[%c3_110, %c0_111, %c0_112] : memref<4x32x8xbf16, #tpu.memory_space<vmem>>, vector<1x32x8xbf16>
    %161 = vector.shape_cast %160 : vector<1x32x8xbf16> to vector<32x8xbf16>
    %cst_113 = arith.constant dense<0.000000e+00> : vector<80x8xf32>
    %162 = tpu.matmul %14, %161, %cst_113 {dimension_numbers = #tpu.dot_dimension_numbers<[1], [0], [0], [1], [0, 0, 1, 1], [], []>} : vector<80x32xbf16>, vector<32x8xbf16>, vector<80x8xf32> -> vector<80x8xf32>
    %c3_114 = arith.constant 3 : index
    %c0_115 = arith.constant 0 : index
    %c0_116 = arith.constant 0 : index
    %163 = vector.load %arg13[%c3_114, %c0_115, %c0_116] : memref<4x1x8xf32, #tpu.memory_space<vmem>>, vector<1x1x8xf32>
    %164 = vector.shape_cast %163 : vector<1x1x8xf32> to vector<1x8xf32>
    %165 = vector.broadcast %164 : vector<1x8xf32> to vector<80x8xf32>
    %166 = arith.addf %162, %165 : vector<80x8xf32>
    %167 = arith.truncf %152 : vector<80x8xf32> to vector<80x8xbf16>
    %168 = arith.truncf %159 : vector<80x8xf32> to vector<80x8xbf16>
    %cst_117 = arith.constant dense<0.000000e+00> : vector<80x80xf32>
    %169 = tpu.matmul %167, %168, %cst_117 {dimension_numbers = #tpu.dot_dimension_numbers<[1], [1], [0], [0], [0, 0, 1, 0], [], []>} : vector<80x8xbf16>, vector<80x8xbf16>, vector<80x80xf32> -> vector<80x80xf32>
    %170 = vector.broadcast %10 : vector<1x80xf32> to vector<80x80xf32>
    %171 = arith.addf %169, %170 : vector<80x80xf32>
    %cst_118 = arith.constant dense<0xFF800000> : vector<80xf32>
    %172 = vector.multi_reduction <maximumf>, %171, %cst_118 [1] : vector<80x80xf32> to vector<80xf32>
    %173 = vector.shape_cast %172 : vector<80xf32> to vector<80x1xf32>
    %174 = vector.broadcast %173 : vector<80x1xf32> to vector<80x80xf32>
    %175 = arith.subf %171, %174 : vector<80x80xf32>
    %176 = math.exp %175 : vector<80x80xf32>
    %cst_119 = arith.constant dense<0.000000e+00> : vector<80xf32>
    %177 = vector.multi_reduction <add>, %176, %cst_119 [1] : vector<80x80xf32> to vector<80xf32>
    %178 = vector.shape_cast %177 : vector<80xf32> to vector<80x1xf32>
    %179 = tpu.reciprocal %178 {approx = true} : vector<80x1xf32> -> vector<80x1xf32>
    %180 = vector.broadcast %179 : vector<80x1xf32> to vector<80x80xf32>
    %181 = arith.mulf %176, %180 : vector<80x80xf32>
    %182 = arith.truncf %181 : vector<80x80xf32> to vector<80x80xbf16>
    %183 = arith.truncf %166 : vector<80x8xf32> to vector<80x8xbf16>
    %cst_120 = arith.constant dense<0.000000e+00> : vector<80x8xf32>
    %184 = tpu.matmul %182, %183, %cst_120 {dimension_numbers = #tpu.dot_dimension_numbers<[1], [0], [0], [1], [0, 0, 1, 1], [], []>} : vector<80x80xbf16>, vector<80x8xbf16>, vector<80x8xf32> -> vector<80x8xf32>
    %185 = arith.truncf %184 : vector<80x8xf32> to vector<80x8xbf16>
    %c3_121 = arith.constant 3 : index
    %c0_122 = arith.constant 0 : index
    %c0_123 = arith.constant 0 : index
    %186 = vector.load %arg14[%c3_121, %c0_122, %c0_123] : memref<4x8x32xbf16, #tpu.memory_space<vmem>>, vector<1x8x32xbf16>
    %187 = vector.shape_cast %186 : vector<1x8x32xbf16> to vector<8x32xbf16>
    %cst_124 = arith.constant dense<0.000000e+00> : vector<80x32xf32>
    %188 = tpu.matmul %185, %187, %cst_124 {dimension_numbers = #tpu.dot_dimension_numbers<[1], [0], [0], [1], [0, 0, 1, 1], [], []>} : vector<80x8xbf16>, vector<8x32xbf16>, vector<80x32xf32> -> vector<80x32xf32>
    %189 = arith.addf %145, %188 : vector<80x32xf32>
    %c0_125 = arith.constant 0 : index
    %c0_126 = arith.constant 0 : index
    %190 = vector.load %arg15[%c0_125, %c0_126] : memref<1x32xf32, #tpu.memory_space<vmem>>, vector<1x32xf32>
    %191 = vector.broadcast %190 : vector<1x32xf32> to vector<80x32xf32>
    %192 = arith.addf %189, %191 : vector<80x32xf32>
    %193 = arith.addf %6, %192 : vector<80x32xf32>
    %cst_127 = arith.constant dense<0.000000e+00> : vector<80xf32>
    %194 = vector.multi_reduction <add>, %193, %cst_127 [1] : vector<80x32xf32> to vector<80xf32>
    %195 = vector.shape_cast %194 : vector<80xf32> to vector<80x1xf32>
    %cst_128 = arith.constant 3.200000e+01 : f32
    %196 = vector.broadcast %cst_128 : f32 to vector<80x1xf32>
    %197 = arith.divf %195, %196 : vector<80x1xf32>
    %198 = vector.broadcast %197 : vector<80x1xf32> to vector<80x32xf32>
    %199 = arith.subf %193, %198 : vector<80x32xf32>
    %200 = arith.mulf %199, %199 : vector<80x32xf32>
    %cst_129 = arith.constant dense<0.000000e+00> : vector<80xf32>
    %201 = vector.multi_reduction <add>, %200, %cst_129 [1] : vector<80x32xf32> to vector<80xf32>
    %202 = vector.shape_cast %201 : vector<80xf32> to vector<80x1xf32>
    %cst_130 = arith.constant 3.200000e+01 : f32
    %203 = vector.broadcast %cst_130 : f32 to vector<80x1xf32>
    %204 = arith.divf %202, %203 : vector<80x1xf32>
    %cst_131 = arith.constant 9.99999974E-6 : f32
    %205 = vector.broadcast %cst_131 : f32 to vector<80x1xf32>
    %206 = arith.addf %204, %205 : vector<80x1xf32>
    %207 = math.rsqrt %206 : vector<80x1xf32>
    %208 = vector.broadcast %197 : vector<80x1xf32> to vector<80x32xf32>
    %209 = arith.subf %193, %208 : vector<80x32xf32>
    %210 = vector.broadcast %207 : vector<80x1xf32> to vector<80x32xf32>
    %211 = arith.mulf %209, %210 : vector<80x32xf32>
    %c0_132 = arith.constant 0 : index
    %c0_133 = arith.constant 0 : index
    %212 = vector.load %arg16[%c0_132, %c0_133] : memref<2x32xf32, #tpu.memory_space<vmem>>, vector<1x32xf32>
    %213 = vector.broadcast %212 : vector<1x32xf32> to vector<80x32xf32>
    %214 = arith.mulf %211, %213 : vector<80x32xf32>
    %c1_134 = arith.constant 1 : index
    %c0_135 = arith.constant 0 : index
    %215 = vector.load %arg16[%c1_134, %c0_135] : memref<2x32xf32, #tpu.memory_space<vmem>>, vector<1x32xf32>
    %216 = vector.broadcast %215 : vector<1x32xf32> to vector<80x32xf32>
    %217 = arith.addf %214, %216 : vector<80x32xf32>
    %218 = arith.truncf %217 : vector<80x32xf32> to vector<80x32xbf16>
    %c0_136 = arith.constant 0 : index
    %c0_137 = arith.constant 0 : index
    %219 = vector.load %arg17[%c0_136, %c0_137] : memref<32x64xbf16, #tpu.memory_space<vmem>>, vector<32x64xbf16>
    %cst_138 = arith.constant dense<0.000000e+00> : vector<80x64xf32>
    %220 = tpu.matmul %218, %219, %cst_138 {dimension_numbers = #tpu.dot_dimension_numbers<[1], [0], [0], [1], [0, 0, 1, 1], [], []>} : vector<80x32xbf16>, vector<32x64xbf16>, vector<80x64xf32> -> vector<80x64xf32>
    %c0_139 = arith.constant 0 : index
    %c0_140 = arith.constant 0 : index
    %221 = vector.load %arg18[%c0_139, %c0_140] : memref<1x64xf32, #tpu.memory_space<vmem>>, vector<1x64xf32>
    %222 = vector.broadcast %221 : vector<1x64xf32> to vector<80x64xf32>
    %223 = arith.addf %220, %222 : vector<80x64xf32>
    %cst_141 = arith.constant 0.000000e+00 : f32
    %224 = vector.broadcast %cst_141 : f32 to vector<80x64xf32>
    %225 = arith.maximumf %223, %224 : vector<80x64xf32>
    %226 = arith.truncf %225 : vector<80x64xf32> to vector<80x64xbf16>
    %c0_142 = arith.constant 0 : index
    %c0_143 = arith.constant 0 : index
    %227 = vector.load %arg19[%c0_142, %c0_143] : memref<64x32xbf16, #tpu.memory_space<vmem>>, vector<64x32xbf16>
    %cst_144 = arith.constant dense<0.000000e+00> : vector<80x32xf32>
    %228 = tpu.matmul %226, %227, %cst_144 {dimension_numbers = #tpu.dot_dimension_numbers<[1], [0], [0], [1], [0, 0, 1, 1], [], []>} : vector<80x64xbf16>, vector<64x32xbf16>, vector<80x32xf32> -> vector<80x32xf32>
    %c0_145 = arith.constant 0 : index
    %c0_146 = arith.constant 0 : index
    %229 = vector.load %arg20[%c0_145, %c0_146] : memref<1x32xf32, #tpu.memory_space<vmem>>, vector<1x32xf32>
    %230 = vector.broadcast %229 : vector<1x32xf32> to vector<80x32xf32>
    %231 = arith.addf %228, %230 : vector<80x32xf32>
    %232 = arith.addf %217, %231 : vector<80x32xf32>
    %cst_147 = arith.constant dense<0.000000e+00> : vector<80xf32>
    %233 = vector.multi_reduction <add>, %232, %cst_147 [1] : vector<80x32xf32> to vector<80xf32>
    %234 = vector.shape_cast %233 : vector<80xf32> to vector<80x1xf32>
    %cst_148 = arith.constant 3.200000e+01 : f32
    %235 = vector.broadcast %cst_148 : f32 to vector<80x1xf32>
    %236 = arith.divf %234, %235 : vector<80x1xf32>
    %237 = vector.broadcast %236 : vector<80x1xf32> to vector<80x32xf32>
    %238 = arith.subf %232, %237 : vector<80x32xf32>
    %239 = arith.mulf %238, %238 : vector<80x32xf32>
    %cst_149 = arith.constant dense<0.000000e+00> : vector<80xf32>
    %240 = vector.multi_reduction <add>, %239, %cst_149 [1] : vector<80x32xf32> to vector<80xf32>
    %241 = vector.shape_cast %240 : vector<80xf32> to vector<80x1xf32>
    %cst_150 = arith.constant 3.200000e+01 : f32
    %242 = vector.broadcast %cst_150 : f32 to vector<80x1xf32>
    %243 = arith.divf %241, %242 : vector<80x1xf32>
    %cst_151 = arith.constant 9.99999974E-6 : f32
    %244 = vector.broadcast %cst_151 : f32 to vector<80x1xf32>
    %245 = arith.addf %243, %244 : vector<80x1xf32>
    %246 = math.rsqrt %245 : vector<80x1xf32>
    %247 = vector.broadcast %236 : vector<80x1xf32> to vector<80x32xf32>
    %248 = arith.subf %232, %247 : vector<80x32xf32>
    %249 = vector.broadcast %246 : vector<80x1xf32> to vector<80x32xf32>
    %250 = arith.mulf %248, %249 : vector<80x32xf32>
    %c0_152 = arith.constant 0 : index
    %c0_153 = arith.constant 0 : index
    %251 = vector.load %arg21[%c0_152, %c0_153] : memref<2x32xf32, #tpu.memory_space<vmem>>, vector<1x32xf32>
    %252 = vector.broadcast %251 : vector<1x32xf32> to vector<80x32xf32>
    %253 = arith.mulf %250, %252 : vector<80x32xf32>
    %c1_154 = arith.constant 1 : index
    %c0_155 = arith.constant 0 : index
    %254 = vector.load %arg21[%c1_154, %c0_155] : memref<2x32xf32, #tpu.memory_space<vmem>>, vector<1x32xf32>
    %255 = vector.broadcast %254 : vector<1x32xf32> to vector<80x32xf32>
    %256 = arith.addf %253, %255 : vector<80x32xf32>
    %c0_156 = arith.constant 0 : index
    %c0_157 = arith.constant 0 : index
    %257 = vector.load %arg6[%c0_156, %c0_157] : memref<1x32xf32, #tpu.memory_space<vmem>>, vector<1x32xf32>
    %cst_158 = arith.constant 0.000000e+00 : f32
    %258 = vector.broadcast %cst_158 : f32 to vector<1x32xf32>
    %259 = arith.addf %258, %257 : vector<1x32xf32>
    %260 = arith.addf %258, %257 : vector<1x32xf32>
    %261 = arith.truncf %259 : vector<1x32xf32> to vector<1x32xbf16>
    %262 = arith.truncf %260 : vector<1x32xf32> to vector<1x32xbf16>
    %263 = arith.truncf %258 : vector<1x32xf32> to vector<1x32xbf16>
    %c0_159 = arith.constant 0 : index
    %c0_160 = arith.constant 0 : index
    %c0_161 = arith.constant 0 : index
    %264 = vector.load %arg22[%c0_159, %c0_160, %c0_161] : memref<4x32x8xbf16, #tpu.memory_space<vmem>>, vector<1x32x8xbf16>
    %265 = vector.shape_cast %264 : vector<1x32x8xbf16> to vector<32x8xbf16>
    %cst_162 = arith.constant dense<0.000000e+00> : vector<1x8xf32>
    %266 = tpu.matmul %261, %265, %cst_162 {dimension_numbers = #tpu.dot_dimension_numbers<[1], [0], [0], [1], [0, 0, 1, 1], [], []>} : vector<1x32xbf16>, vector<32x8xbf16>, vector<1x8xf32> -> vector<1x8xf32>
    %c0_163 = arith.constant 0 : index
    %c0_164 = arith.constant 0 : index
    %c0_165 = arith.constant 0 : index
    %267 = vector.load %arg23[%c0_163, %c0_164, %c0_165] : memref<4x1x8xf32, #tpu.memory_space<vmem>>, vector<1x1x8xf32>
    %268 = vector.shape_cast %267 : vector<1x1x8xf32> to vector<1x8xf32>
    %269 = arith.addf %266, %268 : vector<1x8xf32>
    %c0_166 = arith.constant 0 : index
    %c0_167 = arith.constant 0 : index
    %c0_168 = arith.constant 0 : index
    %270 = vector.load %arg24[%c0_166, %c0_167, %c0_168] : memref<4x32x8xbf16, #tpu.memory_space<vmem>>, vector<1x32x8xbf16>
    %271 = vector.shape_cast %270 : vector<1x32x8xbf16> to vector<32x8xbf16>
    %cst_169 = arith.constant dense<0.000000e+00> : vector<1x8xf32>
    %272 = tpu.matmul %262, %271, %cst_169 {dimension_numbers = #tpu.dot_dimension_numbers<[1], [0], [0], [1], [0, 0, 1, 1], [], []>} : vector<1x32xbf16>, vector<32x8xbf16>, vector<1x8xf32> -> vector<1x8xf32>
    %c0_170 = arith.constant 0 : index
    %c0_171 = arith.constant 0 : index
    %c0_172 = arith.constant 0 : index
    %273 = vector.load %arg25[%c0_170, %c0_171, %c0_172] : memref<4x1x8xf32, #tpu.memory_space<vmem>>, vector<1x1x8xf32>
    %274 = vector.shape_cast %273 : vector<1x1x8xf32> to vector<1x8xf32>
    %275 = arith.addf %272, %274 : vector<1x8xf32>
    %c0_173 = arith.constant 0 : index
    %c0_174 = arith.constant 0 : index
    %c0_175 = arith.constant 0 : index
    %276 = vector.load %arg26[%c0_173, %c0_174, %c0_175] : memref<4x32x8xbf16, #tpu.memory_space<vmem>>, vector<1x32x8xbf16>
    %277 = vector.shape_cast %276 : vector<1x32x8xbf16> to vector<32x8xbf16>
    %cst_176 = arith.constant dense<0.000000e+00> : vector<1x8xf32>
    %278 = tpu.matmul %263, %277, %cst_176 {dimension_numbers = #tpu.dot_dimension_numbers<[1], [0], [0], [1], [0, 0, 1, 1], [], []>} : vector<1x32xbf16>, vector<32x8xbf16>, vector<1x8xf32> -> vector<1x8xf32>
    %c0_177 = arith.constant 0 : index
    %c0_178 = arith.constant 0 : index
    %c0_179 = arith.constant 0 : index
    %279 = vector.load %arg27[%c0_177, %c0_178, %c0_179] : memref<4x1x8xf32, #tpu.memory_space<vmem>>, vector<1x1x8xf32>
    %280 = vector.shape_cast %279 : vector<1x1x8xf32> to vector<1x8xf32>
    %281 = arith.addf %278, %280 : vector<1x8xf32>
    %282 = arith.truncf %269 : vector<1x8xf32> to vector<1x8xbf16>
    %283 = arith.truncf %275 : vector<1x8xf32> to vector<1x8xbf16>
    %284 = arith.extf %282 : vector<1x8xbf16> to vector<1x8xf32>
    %285 = arith.extf %283 : vector<1x8xbf16> to vector<1x8xf32>
    %cst_180 = arith.constant dense<0.000000e+00> : vector<1xf32>
    %286 = arith.mulf %284, %285 : vector<1x8xf32>
    %287 = vector.multi_reduction <add>, %286, %cst_180 [1] : vector<1x8xf32> to vector<1xf32>
    %288 = vector.shape_cast %287 : vector<1xf32> to vector<1x1xf32>
    %cst_181 = arith.constant dense<0xFF800000> : vector<1xf32>
    %289 = vector.multi_reduction <maximumf>, %288, %cst_181 [1] : vector<1x1xf32> to vector<1xf32>
    %290 = vector.shape_cast %289 : vector<1xf32> to vector<1x1xf32>
    %291 = arith.subf %288, %290 : vector<1x1xf32>
    %292 = math.exp %291 : vector<1x1xf32>
    %cst_182 = arith.constant dense<0.000000e+00> : vector<1xf32>
    %293 = vector.multi_reduction <add>, %292, %cst_182 [1] : vector<1x1xf32> to vector<1xf32>
    %294 = vector.shape_cast %293 : vector<1xf32> to vector<1x1xf32>
    %295 = tpu.reciprocal %294 {approx = true} : vector<1x1xf32> -> vector<1x1xf32>
    %296 = arith.mulf %292, %295 : vector<1x1xf32>
    %297 = arith.truncf %296 : vector<1x1xf32> to vector<1x1xbf16>
    %298 = arith.truncf %281 : vector<1x8xf32> to vector<1x8xbf16>
    %cst_183 = arith.constant dense<0.000000e+00> : vector<1x8xf32>
    %299 = tpu.matmul %297, %298, %cst_183 {dimension_numbers = #tpu.dot_dimension_numbers<[1], [0], [0], [1], [0, 0, 1, 1], [], []>} : vector<1x1xbf16>, vector<1x8xbf16>, vector<1x8xf32> -> vector<1x8xf32>
    %300 = arith.truncf %299 : vector<1x8xf32> to vector<1x8xbf16>
    %c0_184 = arith.constant 0 : index
    %c0_185 = arith.constant 0 : index
    %c0_186 = arith.constant 0 : index
    %301 = vector.load %arg28[%c0_184, %c0_185, %c0_186] : memref<4x8x32xbf16, #tpu.memory_space<vmem>>, vector<1x8x32xbf16>
    %302 = vector.shape_cast %301 : vector<1x8x32xbf16> to vector<8x32xbf16>
    %cst_187 = arith.constant dense<0.000000e+00> : vector<1x32xf32>
    %303 = tpu.matmul %300, %302, %cst_187 {dimension_numbers = #tpu.dot_dimension_numbers<[1], [0], [0], [1], [0, 0, 1, 1], [], []>} : vector<1x8xbf16>, vector<8x32xbf16>, vector<1x32xf32> -> vector<1x32xf32>
    %c1_188 = arith.constant 1 : index
    %c0_189 = arith.constant 0 : index
    %c0_190 = arith.constant 0 : index
    %304 = vector.load %arg22[%c1_188, %c0_189, %c0_190] : memref<4x32x8xbf16, #tpu.memory_space<vmem>>, vector<1x32x8xbf16>
    %305 = vector.shape_cast %304 : vector<1x32x8xbf16> to vector<32x8xbf16>
    %cst_191 = arith.constant dense<0.000000e+00> : vector<1x8xf32>
    %306 = tpu.matmul %261, %305, %cst_191 {dimension_numbers = #tpu.dot_dimension_numbers<[1], [0], [0], [1], [0, 0, 1, 1], [], []>} : vector<1x32xbf16>, vector<32x8xbf16>, vector<1x8xf32> -> vector<1x8xf32>
    %c1_192 = arith.constant 1 : index
    %c0_193 = arith.constant 0 : index
    %c0_194 = arith.constant 0 : index
    %307 = vector.load %arg23[%c1_192, %c0_193, %c0_194] : memref<4x1x8xf32, #tpu.memory_space<vmem>>, vector<1x1x8xf32>
    %308 = vector.shape_cast %307 : vector<1x1x8xf32> to vector<1x8xf32>
    %309 = arith.addf %306, %308 : vector<1x8xf32>
    %c1_195 = arith.constant 1 : index
    %c0_196 = arith.constant 0 : index
    %c0_197 = arith.constant 0 : index
    %310 = vector.load %arg24[%c1_195, %c0_196, %c0_197] : memref<4x32x8xbf16, #tpu.memory_space<vmem>>, vector<1x32x8xbf16>
    %311 = vector.shape_cast %310 : vector<1x32x8xbf16> to vector<32x8xbf16>
    %cst_198 = arith.constant dense<0.000000e+00> : vector<1x8xf32>
    %312 = tpu.matmul %262, %311, %cst_198 {dimension_numbers = #tpu.dot_dimension_numbers<[1], [0], [0], [1], [0, 0, 1, 1], [], []>} : vector<1x32xbf16>, vector<32x8xbf16>, vector<1x8xf32> -> vector<1x8xf32>
    %c1_199 = arith.constant 1 : index
    %c0_200 = arith.constant 0 : index
    %c0_201 = arith.constant 0 : index
    %313 = vector.load %arg25[%c1_199, %c0_200, %c0_201] : memref<4x1x8xf32, #tpu.memory_space<vmem>>, vector<1x1x8xf32>
    %314 = vector.shape_cast %313 : vector<1x1x8xf32> to vector<1x8xf32>
    %315 = arith.addf %312, %314 : vector<1x8xf32>
    %c1_202 = arith.constant 1 : index
    %c0_203 = arith.constant 0 : index
    %c0_204 = arith.constant 0 : index
    %316 = vector.load %arg26[%c1_202, %c0_203, %c0_204] : memref<4x32x8xbf16, #tpu.memory_space<vmem>>, vector<1x32x8xbf16>
    %317 = vector.shape_cast %316 : vector<1x32x8xbf16> to vector<32x8xbf16>
    %cst_205 = arith.constant dense<0.000000e+00> : vector<1x8xf32>
    %318 = tpu.matmul %263, %317, %cst_205 {dimension_numbers = #tpu.dot_dimension_numbers<[1], [0], [0], [1], [0, 0, 1, 1], [], []>} : vector<1x32xbf16>, vector<32x8xbf16>, vector<1x8xf32> -> vector<1x8xf32>
    %c1_206 = arith.constant 1 : index
    %c0_207 = arith.constant 0 : index
    %c0_208 = arith.constant 0 : index
    %319 = vector.load %arg27[%c1_206, %c0_207, %c0_208] : memref<4x1x8xf32, #tpu.memory_space<vmem>>, vector<1x1x8xf32>
    %320 = vector.shape_cast %319 : vector<1x1x8xf32> to vector<1x8xf32>
    %321 = arith.addf %318, %320 : vector<1x8xf32>
    %322 = arith.truncf %309 : vector<1x8xf32> to vector<1x8xbf16>
    %323 = arith.truncf %315 : vector<1x8xf32> to vector<1x8xbf16>
    %324 = arith.extf %322 : vector<1x8xbf16> to vector<1x8xf32>
    %325 = arith.extf %323 : vector<1x8xbf16> to vector<1x8xf32>
    %cst_209 = arith.constant dense<0.000000e+00> : vector<1xf32>
    %326 = arith.mulf %324, %325 : vector<1x8xf32>
    %327 = vector.multi_reduction <add>, %326, %cst_209 [1] : vector<1x8xf32> to vector<1xf32>
    %328 = vector.shape_cast %327 : vector<1xf32> to vector<1x1xf32>
    %cst_210 = arith.constant dense<0xFF800000> : vector<1xf32>
    %329 = vector.multi_reduction <maximumf>, %328, %cst_210 [1] : vector<1x1xf32> to vector<1xf32>
    %330 = vector.shape_cast %329 : vector<1xf32> to vector<1x1xf32>
    %331 = arith.subf %328, %330 : vector<1x1xf32>
    %332 = math.exp %331 : vector<1x1xf32>
    %cst_211 = arith.constant dense<0.000000e+00> : vector<1xf32>
    %333 = vector.multi_reduction <add>, %332, %cst_211 [1] : vector<1x1xf32> to vector<1xf32>
    %334 = vector.shape_cast %333 : vector<1xf32> to vector<1x1xf32>
    %335 = tpu.reciprocal %334 {approx = true} : vector<1x1xf32> -> vector<1x1xf32>
    %336 = arith.mulf %332, %335 : vector<1x1xf32>
    %337 = arith.truncf %336 : vector<1x1xf32> to vector<1x1xbf16>
    %338 = arith.truncf %321 : vector<1x8xf32> to vector<1x8xbf16>
    %cst_212 = arith.constant dense<0.000000e+00> : vector<1x8xf32>
    %339 = tpu.matmul %337, %338, %cst_212 {dimension_numbers = #tpu.dot_dimension_numbers<[1], [0], [0], [1], [0, 0, 1, 1], [], []>} : vector<1x1xbf16>, vector<1x8xbf16>, vector<1x8xf32> -> vector<1x8xf32>
    %340 = arith.truncf %339 : vector<1x8xf32> to vector<1x8xbf16>
    %c1_213 = arith.constant 1 : index
    %c0_214 = arith.constant 0 : index
    %c0_215 = arith.constant 0 : index
    %341 = vector.load %arg28[%c1_213, %c0_214, %c0_215] : memref<4x8x32xbf16, #tpu.memory_space<vmem>>, vector<1x8x32xbf16>
    %342 = vector.shape_cast %341 : vector<1x8x32xbf16> to vector<8x32xbf16>
    %cst_216 = arith.constant dense<0.000000e+00> : vector<1x32xf32>
    %343 = tpu.matmul %340, %342, %cst_216 {dimension_numbers = #tpu.dot_dimension_numbers<[1], [0], [0], [1], [0, 0, 1, 1], [], []>} : vector<1x8xbf16>, vector<8x32xbf16>, vector<1x32xf32> -> vector<1x32xf32>
    %344 = arith.addf %303, %343 : vector<1x32xf32>
    %c2_217 = arith.constant 2 : index
    %c0_218 = arith.constant 0 : index
    %c0_219 = arith.constant 0 : index
    %345 = vector.load %arg22[%c2_217, %c0_218, %c0_219] : memref<4x32x8xbf16, #tpu.memory_space<vmem>>, vector<1x32x8xbf16>
    %346 = vector.shape_cast %345 : vector<1x32x8xbf16> to vector<32x8xbf16>
    %cst_220 = arith.constant dense<0.000000e+00> : vector<1x8xf32>
    %347 = tpu.matmul %261, %346, %cst_220 {dimension_numbers = #tpu.dot_dimension_numbers<[1], [0], [0], [1], [0, 0, 1, 1], [], []>} : vector<1x32xbf16>, vector<32x8xbf16>, vector<1x8xf32> -> vector<1x8xf32>
    %c2_221 = arith.constant 2 : index
    %c0_222 = arith.constant 0 : index
    %c0_223 = arith.constant 0 : index
    %348 = vector.load %arg23[%c2_221, %c0_222, %c0_223] : memref<4x1x8xf32, #tpu.memory_space<vmem>>, vector<1x1x8xf32>
    %349 = vector.shape_cast %348 : vector<1x1x8xf32> to vector<1x8xf32>
    %350 = arith.addf %347, %349 : vector<1x8xf32>
    %c2_224 = arith.constant 2 : index
    %c0_225 = arith.constant 0 : index
    %c0_226 = arith.constant 0 : index
    %351 = vector.load %arg24[%c2_224, %c0_225, %c0_226] : memref<4x32x8xbf16, #tpu.memory_space<vmem>>, vector<1x32x8xbf16>
    %352 = vector.shape_cast %351 : vector<1x32x8xbf16> to vector<32x8xbf16>
    %cst_227 = arith.constant dense<0.000000e+00> : vector<1x8xf32>
    %353 = tpu.matmul %262, %352, %cst_227 {dimension_numbers = #tpu.dot_dimension_numbers<[1], [0], [0], [1], [0, 0, 1, 1], [], []>} : vector<1x32xbf16>, vector<32x8xbf16>, vector<1x8xf32> -> vector<1x8xf32>
    %c2_228 = arith.constant 2 : index
    %c0_229 = arith.constant 0 : index
    %c0_230 = arith.constant 0 : index
    %354 = vector.load %arg25[%c2_228, %c0_229, %c0_230] : memref<4x1x8xf32, #tpu.memory_space<vmem>>, vector<1x1x8xf32>
    %355 = vector.shape_cast %354 : vector<1x1x8xf32> to vector<1x8xf32>
    %356 = arith.addf %353, %355 : vector<1x8xf32>
    %c2_231 = arith.constant 2 : index
    %c0_232 = arith.constant 0 : index
    %c0_233 = arith.constant 0 : index
    %357 = vector.load %arg26[%c2_231, %c0_232, %c0_233] : memref<4x32x8xbf16, #tpu.memory_space<vmem>>, vector<1x32x8xbf16>
    %358 = vector.shape_cast %357 : vector<1x32x8xbf16> to vector<32x8xbf16>
    %cst_234 = arith.constant dense<0.000000e+00> : vector<1x8xf32>
    %359 = tpu.matmul %263, %358, %cst_234 {dimension_numbers = #tpu.dot_dimension_numbers<[1], [0], [0], [1], [0, 0, 1, 1], [], []>} : vector<1x32xbf16>, vector<32x8xbf16>, vector<1x8xf32> -> vector<1x8xf32>
    %c2_235 = arith.constant 2 : index
    %c0_236 = arith.constant 0 : index
    %c0_237 = arith.constant 0 : index
    %360 = vector.load %arg27[%c2_235, %c0_236, %c0_237] : memref<4x1x8xf32, #tpu.memory_space<vmem>>, vector<1x1x8xf32>
    %361 = vector.shape_cast %360 : vector<1x1x8xf32> to vector<1x8xf32>
    %362 = arith.addf %359, %361 : vector<1x8xf32>
    %363 = arith.truncf %350 : vector<1x8xf32> to vector<1x8xbf16>
    %364 = arith.truncf %356 : vector<1x8xf32> to vector<1x8xbf16>
    %365 = arith.extf %363 : vector<1x8xbf16> to vector<1x8xf32>
    %366 = arith.extf %364 : vector<1x8xbf16> to vector<1x8xf32>
    %cst_238 = arith.constant dense<0.000000e+00> : vector<1xf32>
    %367 = arith.mulf %365, %366 : vector<1x8xf32>
    %368 = vector.multi_reduction <add>, %367, %cst_238 [1] : vector<1x8xf32> to vector<1xf32>
    %369 = vector.shape_cast %368 : vector<1xf32> to vector<1x1xf32>
    %cst_239 = arith.constant dense<0xFF800000> : vector<1xf32>
    %370 = vector.multi_reduction <maximumf>, %369, %cst_239 [1] : vector<1x1xf32> to vector<1xf32>
    %371 = vector.shape_cast %370 : vector<1xf32> to vector<1x1xf32>
    %372 = arith.subf %369, %371 : vector<1x1xf32>
    %373 = math.exp %372 : vector<1x1xf32>
    %cst_240 = arith.constant dense<0.000000e+00> : vector<1xf32>
    %374 = vector.multi_reduction <add>, %373, %cst_240 [1] : vector<1x1xf32> to vector<1xf32>
    %375 = vector.shape_cast %374 : vector<1xf32> to vector<1x1xf32>
    %376 = tpu.reciprocal %375 {approx = true} : vector<1x1xf32> -> vector<1x1xf32>
    %377 = arith.mulf %373, %376 : vector<1x1xf32>
    %378 = arith.truncf %377 : vector<1x1xf32> to vector<1x1xbf16>
    %379 = arith.truncf %362 : vector<1x8xf32> to vector<1x8xbf16>
    %cst_241 = arith.constant dense<0.000000e+00> : vector<1x8xf32>
    %380 = tpu.matmul %378, %379, %cst_241 {dimension_numbers = #tpu.dot_dimension_numbers<[1], [0], [0], [1], [0, 0, 1, 1], [], []>} : vector<1x1xbf16>, vector<1x8xbf16>, vector<1x8xf32> -> vector<1x8xf32>
    %381 = arith.truncf %380 : vector<1x8xf32> to vector<1x8xbf16>
    %c2_242 = arith.constant 2 : index
    %c0_243 = arith.constant 0 : index
    %c0_244 = arith.constant 0 : index
    %382 = vector.load %arg28[%c2_242, %c0_243, %c0_244] : memref<4x8x32xbf16, #tpu.memory_space<vmem>>, vector<1x8x32xbf16>
    %383 = vector.shape_cast %382 : vector<1x8x32xbf16> to vector<8x32xbf16>
    %cst_245 = arith.constant dense<0.000000e+00> : vector<1x32xf32>
    %384 = tpu.matmul %381, %383, %cst_245 {dimension_numbers = #tpu.dot_dimension_numbers<[1], [0], [0], [1], [0, 0, 1, 1], [], []>} : vector<1x8xbf16>, vector<8x32xbf16>, vector<1x32xf32> -> vector<1x32xf32>
    %385 = arith.addf %344, %384 : vector<1x32xf32>
    %c3_246 = arith.constant 3 : index
    %c0_247 = arith.constant 0 : index
    %c0_248 = arith.constant 0 : index
    %386 = vector.load %arg22[%c3_246, %c0_247, %c0_248] : memref<4x32x8xbf16, #tpu.memory_space<vmem>>, vector<1x32x8xbf16>
    %387 = vector.shape_cast %386 : vector<1x32x8xbf16> to vector<32x8xbf16>
    %cst_249 = arith.constant dense<0.000000e+00> : vector<1x8xf32>
    %388 = tpu.matmul %261, %387, %cst_249 {dimension_numbers = #tpu.dot_dimension_numbers<[1], [0], [0], [1], [0, 0, 1, 1], [], []>} : vector<1x32xbf16>, vector<32x8xbf16>, vector<1x8xf32> -> vector<1x8xf32>
    %c3_250 = arith.constant 3 : index
    %c0_251 = arith.constant 0 : index
    %c0_252 = arith.constant 0 : index
    %389 = vector.load %arg23[%c3_250, %c0_251, %c0_252] : memref<4x1x8xf32, #tpu.memory_space<vmem>>, vector<1x1x8xf32>
    %390 = vector.shape_cast %389 : vector<1x1x8xf32> to vector<1x8xf32>
    %391 = arith.addf %388, %390 : vector<1x8xf32>
    %c3_253 = arith.constant 3 : index
    %c0_254 = arith.constant 0 : index
    %c0_255 = arith.constant 0 : index
    %392 = vector.load %arg24[%c3_253, %c0_254, %c0_255] : memref<4x32x8xbf16, #tpu.memory_space<vmem>>, vector<1x32x8xbf16>
    %393 = vector.shape_cast %392 : vector<1x32x8xbf16> to vector<32x8xbf16>
    %cst_256 = arith.constant dense<0.000000e+00> : vector<1x8xf32>
    %394 = tpu.matmul %262, %393, %cst_256 {dimension_numbers = #tpu.dot_dimension_numbers<[1], [0], [0], [1], [0, 0, 1, 1], [], []>} : vector<1x32xbf16>, vector<32x8xbf16>, vector<1x8xf32> -> vector<1x8xf32>
    %c3_257 = arith.constant 3 : index
    %c0_258 = arith.constant 0 : index
    %c0_259 = arith.constant 0 : index
    %395 = vector.load %arg25[%c3_257, %c0_258, %c0_259] : memref<4x1x8xf32, #tpu.memory_space<vmem>>, vector<1x1x8xf32>
    %396 = vector.shape_cast %395 : vector<1x1x8xf32> to vector<1x8xf32>
    %397 = arith.addf %394, %396 : vector<1x8xf32>
    %c3_260 = arith.constant 3 : index
    %c0_261 = arith.constant 0 : index
    %c0_262 = arith.constant 0 : index
    %398 = vector.load %arg26[%c3_260, %c0_261, %c0_262] : memref<4x32x8xbf16, #tpu.memory_space<vmem>>, vector<1x32x8xbf16>
    %399 = vector.shape_cast %398 : vector<1x32x8xbf16> to vector<32x8xbf16>
    %cst_263 = arith.constant dense<0.000000e+00> : vector<1x8xf32>
    %400 = tpu.matmul %263, %399, %cst_263 {dimension_numbers = #tpu.dot_dimension_numbers<[1], [0], [0], [1], [0, 0, 1, 1], [], []>} : vector<1x32xbf16>, vector<32x8xbf16>, vector<1x8xf32> -> vector<1x8xf32>
    %c3_264 = arith.constant 3 : index
    %c0_265 = arith.constant 0 : index
    %c0_266 = arith.constant 0 : index
    %401 = vector.load %arg27[%c3_264, %c0_265, %c0_266] : memref<4x1x8xf32, #tpu.memory_space<vmem>>, vector<1x1x8xf32>
    %402 = vector.shape_cast %401 : vector<1x1x8xf32> to vector<1x8xf32>
    %403 = arith.addf %400, %402 : vector<1x8xf32>
    %404 = arith.truncf %391 : vector<1x8xf32> to vector<1x8xbf16>
    %405 = arith.truncf %397 : vector<1x8xf32> to vector<1x8xbf16>
    %406 = arith.extf %404 : vector<1x8xbf16> to vector<1x8xf32>
    %407 = arith.extf %405 : vector<1x8xbf16> to vector<1x8xf32>
    %cst_267 = arith.constant dense<0.000000e+00> : vector<1xf32>
    %408 = arith.mulf %406, %407 : vector<1x8xf32>
    %409 = vector.multi_reduction <add>, %408, %cst_267 [1] : vector<1x8xf32> to vector<1xf32>
    %410 = vector.shape_cast %409 : vector<1xf32> to vector<1x1xf32>
    %cst_268 = arith.constant dense<0xFF800000> : vector<1xf32>
    %411 = vector.multi_reduction <maximumf>, %410, %cst_268 [1] : vector<1x1xf32> to vector<1xf32>
    %412 = vector.shape_cast %411 : vector<1xf32> to vector<1x1xf32>
    %413 = arith.subf %410, %412 : vector<1x1xf32>
    %414 = math.exp %413 : vector<1x1xf32>
    %cst_269 = arith.constant dense<0.000000e+00> : vector<1xf32>
    %415 = vector.multi_reduction <add>, %414, %cst_269 [1] : vector<1x1xf32> to vector<1xf32>
    %416 = vector.shape_cast %415 : vector<1xf32> to vector<1x1xf32>
    %417 = tpu.reciprocal %416 {approx = true} : vector<1x1xf32> -> vector<1x1xf32>
    %418 = arith.mulf %414, %417 : vector<1x1xf32>
    %419 = arith.truncf %418 : vector<1x1xf32> to vector<1x1xbf16>
    %420 = arith.truncf %403 : vector<1x8xf32> to vector<1x8xbf16>
    %cst_270 = arith.constant dense<0.000000e+00> : vector<1x8xf32>
    %421 = tpu.matmul %419, %420, %cst_270 {dimension_numbers = #tpu.dot_dimension_numbers<[1], [0], [0], [1], [0, 0, 1, 1], [], []>} : vector<1x1xbf16>, vector<1x8xbf16>, vector<1x8xf32> -> vector<1x8xf32>
    %422 = arith.truncf %421 : vector<1x8xf32> to vector<1x8xbf16>
    %c3_271 = arith.constant 3 : index
    %c0_272 = arith.constant 0 : index
    %c0_273 = arith.constant 0 : index
    %423 = vector.load %arg28[%c3_271, %c0_272, %c0_273] : memref<4x8x32xbf16, #tpu.memory_space<vmem>>, vector<1x8x32xbf16>
    %424 = vector.shape_cast %423 : vector<1x8x32xbf16> to vector<8x32xbf16>
    %cst_274 = arith.constant dense<0.000000e+00> : vector<1x32xf32>
    %425 = tpu.matmul %422, %424, %cst_274 {dimension_numbers = #tpu.dot_dimension_numbers<[1], [0], [0], [1], [0, 0, 1, 1], [], []>} : vector<1x8xbf16>, vector<8x32xbf16>, vector<1x32xf32> -> vector<1x32xf32>
    %426 = arith.addf %385, %425 : vector<1x32xf32>
    %c0_275 = arith.constant 0 : index
    %c0_276 = arith.constant 0 : index
    %427 = vector.load %arg29[%c0_275, %c0_276] : memref<1x32xf32, #tpu.memory_space<vmem>>, vector<1x32xf32>
    %428 = arith.addf %426, %427 : vector<1x32xf32>
    %429 = arith.addf %258, %428 : vector<1x32xf32>
    %cst_277 = arith.constant dense<0.000000e+00> : vector<1xf32>
    %430 = vector.multi_reduction <add>, %429, %cst_277 [1] : vector<1x32xf32> to vector<1xf32>
    %431 = vector.shape_cast %430 : vector<1xf32> to vector<1x1xf32>
    %cst_278 = arith.constant 3.200000e+01 : f32
    %432 = vector.broadcast %cst_278 : f32 to vector<1x1xf32>
    %433 = arith.divf %431, %432 : vector<1x1xf32>
    %434 = vector.broadcast %433 : vector<1x1xf32> to vector<1x32xf32>
    %435 = arith.subf %429, %434 : vector<1x32xf32>
    %436 = arith.mulf %435, %435 : vector<1x32xf32>
    %cst_279 = arith.constant dense<0.000000e+00> : vector<1xf32>
    %437 = vector.multi_reduction <add>, %436, %cst_279 [1] : vector<1x32xf32> to vector<1xf32>
    %438 = vector.shape_cast %437 : vector<1xf32> to vector<1x1xf32>
    %cst_280 = arith.constant 3.200000e+01 : f32
    %439 = vector.broadcast %cst_280 : f32 to vector<1x1xf32>
    %440 = arith.divf %438, %439 : vector<1x1xf32>
    %cst_281 = arith.constant 9.99999974E-6 : f32
    %441 = vector.broadcast %cst_281 : f32 to vector<1x1xf32>
    %442 = arith.addf %440, %441 : vector<1x1xf32>
    %443 = math.rsqrt %442 : vector<1x1xf32>
    %444 = vector.broadcast %433 : vector<1x1xf32> to vector<1x32xf32>
    %445 = arith.subf %429, %444 : vector<1x32xf32>
    %446 = vector.broadcast %443 : vector<1x1xf32> to vector<1x32xf32>
    %447 = arith.mulf %445, %446 : vector<1x32xf32>
    %c0_282 = arith.constant 0 : index
    %c0_283 = arith.constant 0 : index
    %448 = vector.load %arg30[%c0_282, %c0_283] : memref<2x32xf32, #tpu.memory_space<vmem>>, vector<1x32xf32>
    %449 = arith.mulf %447, %448 : vector<1x32xf32>
    %c1_284 = arith.constant 1 : index
    %c0_285 = arith.constant 0 : index
    %450 = vector.load %arg30[%c1_284, %c0_285] : memref<2x32xf32, #tpu.memory_space<vmem>>, vector<1x32xf32>
    %451 = arith.addf %449, %450 : vector<1x32xf32>
    %452 = arith.addf %451, %257 : vector<1x32xf32>
    %453 = arith.addf %256, %8 : vector<80x32xf32>
    %454 = arith.truncf %452 : vector<1x32xf32> to vector<1x32xbf16>
    %455 = arith.truncf %453 : vector<80x32xf32> to vector<80x32xbf16>
    %456 = arith.truncf %256 : vector<80x32xf32> to vector<80x32xbf16>
    %c0_286 = arith.constant 0 : index
    %c0_287 = arith.constant 0 : index
    %c0_288 = arith.constant 0 : index
    %457 = vector.load %arg31[%c0_286, %c0_287, %c0_288] : memref<4x32x8xbf16, #tpu.memory_space<vmem>>, vector<1x32x8xbf16>
    %458 = vector.shape_cast %457 : vector<1x32x8xbf16> to vector<32x8xbf16>
    %cst_289 = arith.constant dense<0.000000e+00> : vector<1x8xf32>
    %459 = tpu.matmul %454, %458, %cst_289 {dimension_numbers = #tpu.dot_dimension_numbers<[1], [0], [0], [1], [0, 0, 1, 1], [], []>} : vector<1x32xbf16>, vector<32x8xbf16>, vector<1x8xf32> -> vector<1x8xf32>
    %c0_290 = arith.constant 0 : index
    %c0_291 = arith.constant 0 : index
    %c0_292 = arith.constant 0 : index
    %460 = vector.load %arg32[%c0_290, %c0_291, %c0_292] : memref<4x1x8xf32, #tpu.memory_space<vmem>>, vector<1x1x8xf32>
    %461 = vector.shape_cast %460 : vector<1x1x8xf32> to vector<1x8xf32>
    %462 = arith.addf %459, %461 : vector<1x8xf32>
    %c0_293 = arith.constant 0 : index
    %c0_294 = arith.constant 0 : index
    %c0_295 = arith.constant 0 : index
    %463 = vector.load %arg33[%c0_293, %c0_294, %c0_295] : memref<4x32x8xbf16, #tpu.memory_space<vmem>>, vector<1x32x8xbf16>
    %464 = vector.shape_cast %463 : vector<1x32x8xbf16> to vector<32x8xbf16>
    %cst_296 = arith.constant dense<0.000000e+00> : vector<80x8xf32>
    %465 = tpu.matmul %455, %464, %cst_296 {dimension_numbers = #tpu.dot_dimension_numbers<[1], [0], [0], [1], [0, 0, 1, 1], [], []>} : vector<80x32xbf16>, vector<32x8xbf16>, vector<80x8xf32> -> vector<80x8xf32>
    %c0_297 = arith.constant 0 : index
    %c0_298 = arith.constant 0 : index
    %c0_299 = arith.constant 0 : index
    %466 = vector.load %arg34[%c0_297, %c0_298, %c0_299] : memref<4x1x8xf32, #tpu.memory_space<vmem>>, vector<1x1x8xf32>
    %467 = vector.shape_cast %466 : vector<1x1x8xf32> to vector<1x8xf32>
    %468 = vector.broadcast %467 : vector<1x8xf32> to vector<80x8xf32>
    %469 = arith.addf %465, %468 : vector<80x8xf32>
    %c0_300 = arith.constant 0 : index
    %c0_301 = arith.constant 0 : index
    %c0_302 = arith.constant 0 : index
    %470 = vector.load %arg35[%c0_300, %c0_301, %c0_302] : memref<4x32x8xbf16, #tpu.memory_space<vmem>>, vector<1x32x8xbf16>
    %471 = vector.shape_cast %470 : vector<1x32x8xbf16> to vector<32x8xbf16>
    %cst_303 = arith.constant dense<0.000000e+00> : vector<80x8xf32>
    %472 = tpu.matmul %456, %471, %cst_303 {dimension_numbers = #tpu.dot_dimension_numbers<[1], [0], [0], [1], [0, 0, 1, 1], [], []>} : vector<80x32xbf16>, vector<32x8xbf16>, vector<80x8xf32> -> vector<80x8xf32>
    %c0_304 = arith.constant 0 : index
    %c0_305 = arith.constant 0 : index
    %c0_306 = arith.constant 0 : index
    %473 = vector.load %arg36[%c0_304, %c0_305, %c0_306] : memref<4x1x8xf32, #tpu.memory_space<vmem>>, vector<1x1x8xf32>
    %474 = vector.shape_cast %473 : vector<1x1x8xf32> to vector<1x8xf32>
    %475 = vector.broadcast %474 : vector<1x8xf32> to vector<80x8xf32>
    %476 = arith.addf %472, %475 : vector<80x8xf32>
    %477 = arith.truncf %462 : vector<1x8xf32> to vector<1x8xbf16>
    %478 = arith.truncf %469 : vector<80x8xf32> to vector<80x8xbf16>
    %cst_307 = arith.constant dense<0.000000e+00> : vector<1x80xf32>
    %479 = tpu.matmul %477, %478, %cst_307 {dimension_numbers = #tpu.dot_dimension_numbers<[1], [1], [0], [0], [0, 0, 1, 0], [], []>} : vector<1x8xbf16>, vector<80x8xbf16>, vector<1x80xf32> -> vector<1x80xf32>
    %480 = arith.addf %479, %10 : vector<1x80xf32>
    %cst_308 = arith.constant dense<0xFF800000> : vector<1xf32>
    %481 = vector.multi_reduction <maximumf>, %480, %cst_308 [1] : vector<1x80xf32> to vector<1xf32>
    %482 = vector.shape_cast %481 : vector<1xf32> to vector<1x1xf32>
    %483 = vector.broadcast %482 : vector<1x1xf32> to vector<1x80xf32>
    %484 = arith.subf %480, %483 : vector<1x80xf32>
    %485 = math.exp %484 : vector<1x80xf32>
    %cst_309 = arith.constant dense<0.000000e+00> : vector<1xf32>
    %486 = vector.multi_reduction <add>, %485, %cst_309 [1] : vector<1x80xf32> to vector<1xf32>
    %487 = vector.shape_cast %486 : vector<1xf32> to vector<1x1xf32>
    %488 = tpu.reciprocal %487 {approx = true} : vector<1x1xf32> -> vector<1x1xf32>
    %489 = vector.broadcast %488 : vector<1x1xf32> to vector<1x80xf32>
    %490 = arith.mulf %485, %489 : vector<1x80xf32>
    %491 = arith.truncf %490 : vector<1x80xf32> to vector<1x80xbf16>
    %492 = arith.truncf %476 : vector<80x8xf32> to vector<80x8xbf16>
    %cst_310 = arith.constant dense<0.000000e+00> : vector<1x8xf32>
    %493 = tpu.matmul %491, %492, %cst_310 {dimension_numbers = #tpu.dot_dimension_numbers<[1], [0], [0], [1], [0, 0, 1, 1], [], []>} : vector<1x80xbf16>, vector<80x8xbf16>, vector<1x8xf32> -> vector<1x8xf32>
    %494 = arith.truncf %493 : vector<1x8xf32> to vector<1x8xbf16>
    %c0_311 = arith.constant 0 : index
    %c0_312 = arith.constant 0 : index
    %c0_313 = arith.constant 0 : index
    %495 = vector.load %arg37[%c0_311, %c0_312, %c0_313] : memref<4x8x32xbf16, #tpu.memory_space<vmem>>, vector<1x8x32xbf16>
    %496 = vector.shape_cast %495 : vector<1x8x32xbf16> to vector<8x32xbf16>
    %cst_314 = arith.constant dense<0.000000e+00> : vector<1x32xf32>
    %497 = tpu.matmul %494, %496, %cst_314 {dimension_numbers = #tpu.dot_dimension_numbers<[1], [0], [0], [1], [0, 0, 1, 1], [], []>} : vector<1x8xbf16>, vector<8x32xbf16>, vector<1x32xf32> -> vector<1x32xf32>
    %c1_315 = arith.constant 1 : index
    %c0_316 = arith.constant 0 : index
    %c0_317 = arith.constant 0 : index
    %498 = vector.load %arg31[%c1_315, %c0_316, %c0_317] : memref<4x32x8xbf16, #tpu.memory_space<vmem>>, vector<1x32x8xbf16>
    %499 = vector.shape_cast %498 : vector<1x32x8xbf16> to vector<32x8xbf16>
    %cst_318 = arith.constant dense<0.000000e+00> : vector<1x8xf32>
    %500 = tpu.matmul %454, %499, %cst_318 {dimension_numbers = #tpu.dot_dimension_numbers<[1], [0], [0], [1], [0, 0, 1, 1], [], []>} : vector<1x32xbf16>, vector<32x8xbf16>, vector<1x8xf32> -> vector<1x8xf32>
    %c1_319 = arith.constant 1 : index
    %c0_320 = arith.constant 0 : index
    %c0_321 = arith.constant 0 : index
    %501 = vector.load %arg32[%c1_319, %c0_320, %c0_321] : memref<4x1x8xf32, #tpu.memory_space<vmem>>, vector<1x1x8xf32>
    %502 = vector.shape_cast %501 : vector<1x1x8xf32> to vector<1x8xf32>
    %503 = arith.addf %500, %502 : vector<1x8xf32>
    %c1_322 = arith.constant 1 : index
    %c0_323 = arith.constant 0 : index
    %c0_324 = arith.constant 0 : index
    %504 = vector.load %arg33[%c1_322, %c0_323, %c0_324] : memref<4x32x8xbf16, #tpu.memory_space<vmem>>, vector<1x32x8xbf16>
    %505 = vector.shape_cast %504 : vector<1x32x8xbf16> to vector<32x8xbf16>
    %cst_325 = arith.constant dense<0.000000e+00> : vector<80x8xf32>
    %506 = tpu.matmul %455, %505, %cst_325 {dimension_numbers = #tpu.dot_dimension_numbers<[1], [0], [0], [1], [0, 0, 1, 1], [], []>} : vector<80x32xbf16>, vector<32x8xbf16>, vector<80x8xf32> -> vector<80x8xf32>
    %c1_326 = arith.constant 1 : index
    %c0_327 = arith.constant 0 : index
    %c0_328 = arith.constant 0 : index
    %507 = vector.load %arg34[%c1_326, %c0_327, %c0_328] : memref<4x1x8xf32, #tpu.memory_space<vmem>>, vector<1x1x8xf32>
    %508 = vector.shape_cast %507 : vector<1x1x8xf32> to vector<1x8xf32>
    %509 = vector.broadcast %508 : vector<1x8xf32> to vector<80x8xf32>
    %510 = arith.addf %506, %509 : vector<80x8xf32>
    %c1_329 = arith.constant 1 : index
    %c0_330 = arith.constant 0 : index
    %c0_331 = arith.constant 0 : index
    %511 = vector.load %arg35[%c1_329, %c0_330, %c0_331] : memref<4x32x8xbf16, #tpu.memory_space<vmem>>, vector<1x32x8xbf16>
    %512 = vector.shape_cast %511 : vector<1x32x8xbf16> to vector<32x8xbf16>
    %cst_332 = arith.constant dense<0.000000e+00> : vector<80x8xf32>
    %513 = tpu.matmul %456, %512, %cst_332 {dimension_numbers = #tpu.dot_dimension_numbers<[1], [0], [0], [1], [0, 0, 1, 1], [], []>} : vector<80x32xbf16>, vector<32x8xbf16>, vector<80x8xf32> -> vector<80x8xf32>
    %c1_333 = arith.constant 1 : index
    %c0_334 = arith.constant 0 : index
    %c0_335 = arith.constant 0 : index
    %514 = vector.load %arg36[%c1_333, %c0_334, %c0_335] : memref<4x1x8xf32, #tpu.memory_space<vmem>>, vector<1x1x8xf32>
    %515 = vector.shape_cast %514 : vector<1x1x8xf32> to vector<1x8xf32>
    %516 = vector.broadcast %515 : vector<1x8xf32> to vector<80x8xf32>
    %517 = arith.addf %513, %516 : vector<80x8xf32>
    %518 = arith.truncf %503 : vector<1x8xf32> to vector<1x8xbf16>
    %519 = arith.truncf %510 : vector<80x8xf32> to vector<80x8xbf16>
    %cst_336 = arith.constant dense<0.000000e+00> : vector<1x80xf32>
    %520 = tpu.matmul %518, %519, %cst_336 {dimension_numbers = #tpu.dot_dimension_numbers<[1], [1], [0], [0], [0, 0, 1, 0], [], []>} : vector<1x8xbf16>, vector<80x8xbf16>, vector<1x80xf32> -> vector<1x80xf32>
    %521 = arith.addf %520, %10 : vector<1x80xf32>
    %cst_337 = arith.constant dense<0xFF800000> : vector<1xf32>
    %522 = vector.multi_reduction <maximumf>, %521, %cst_337 [1] : vector<1x80xf32> to vector<1xf32>
    %523 = vector.shape_cast %522 : vector<1xf32> to vector<1x1xf32>
    %524 = vector.broadcast %523 : vector<1x1xf32> to vector<1x80xf32>
    %525 = arith.subf %521, %524 : vector<1x80xf32>
    %526 = math.exp %525 : vector<1x80xf32>
    %cst_338 = arith.constant dense<0.000000e+00> : vector<1xf32>
    %527 = vector.multi_reduction <add>, %526, %cst_338 [1] : vector<1x80xf32> to vector<1xf32>
    %528 = vector.shape_cast %527 : vector<1xf32> to vector<1x1xf32>
    %529 = tpu.reciprocal %528 {approx = true} : vector<1x1xf32> -> vector<1x1xf32>
    %530 = vector.broadcast %529 : vector<1x1xf32> to vector<1x80xf32>
    %531 = arith.mulf %526, %530 : vector<1x80xf32>
    %532 = arith.truncf %531 : vector<1x80xf32> to vector<1x80xbf16>
    %533 = arith.truncf %517 : vector<80x8xf32> to vector<80x8xbf16>
    %cst_339 = arith.constant dense<0.000000e+00> : vector<1x8xf32>
    %534 = tpu.matmul %532, %533, %cst_339 {dimension_numbers = #tpu.dot_dimension_numbers<[1], [0], [0], [1], [0, 0, 1, 1], [], []>} : vector<1x80xbf16>, vector<80x8xbf16>, vector<1x8xf32> -> vector<1x8xf32>
    %535 = arith.truncf %534 : vector<1x8xf32> to vector<1x8xbf16>
    %c1_340 = arith.constant 1 : index
    %c0_341 = arith.constant 0 : index
    %c0_342 = arith.constant 0 : index
    %536 = vector.load %arg37[%c1_340, %c0_341, %c0_342] : memref<4x8x32xbf16, #tpu.memory_space<vmem>>, vector<1x8x32xbf16>
    %537 = vector.shape_cast %536 : vector<1x8x32xbf16> to vector<8x32xbf16>
    %cst_343 = arith.constant dense<0.000000e+00> : vector<1x32xf32>
    %538 = tpu.matmul %535, %537, %cst_343 {dimension_numbers = #tpu.dot_dimension_numbers<[1], [0], [0], [1], [0, 0, 1, 1], [], []>} : vector<1x8xbf16>, vector<8x32xbf16>, vector<1x32xf32> -> vector<1x32xf32>
    %539 = arith.addf %497, %538 : vector<1x32xf32>
    %c2_344 = arith.constant 2 : index
    %c0_345 = arith.constant 0 : index
    %c0_346 = arith.constant 0 : index
    %540 = vector.load %arg31[%c2_344, %c0_345, %c0_346] : memref<4x32x8xbf16, #tpu.memory_space<vmem>>, vector<1x32x8xbf16>
    %541 = vector.shape_cast %540 : vector<1x32x8xbf16> to vector<32x8xbf16>
    %cst_347 = arith.constant dense<0.000000e+00> : vector<1x8xf32>
    %542 = tpu.matmul %454, %541, %cst_347 {dimension_numbers = #tpu.dot_dimension_numbers<[1], [0], [0], [1], [0, 0, 1, 1], [], []>} : vector<1x32xbf16>, vector<32x8xbf16>, vector<1x8xf32> -> vector<1x8xf32>
    %c2_348 = arith.constant 2 : index
    %c0_349 = arith.constant 0 : index
    %c0_350 = arith.constant 0 : index
    %543 = vector.load %arg32[%c2_348, %c0_349, %c0_350] : memref<4x1x8xf32, #tpu.memory_space<vmem>>, vector<1x1x8xf32>
    %544 = vector.shape_cast %543 : vector<1x1x8xf32> to vector<1x8xf32>
    %545 = arith.addf %542, %544 : vector<1x8xf32>
    %c2_351 = arith.constant 2 : index
    %c0_352 = arith.constant 0 : index
    %c0_353 = arith.constant 0 : index
    %546 = vector.load %arg33[%c2_351, %c0_352, %c0_353] : memref<4x32x8xbf16, #tpu.memory_space<vmem>>, vector<1x32x8xbf16>
    %547 = vector.shape_cast %546 : vector<1x32x8xbf16> to vector<32x8xbf16>
    %cst_354 = arith.constant dense<0.000000e+00> : vector<80x8xf32>
    %548 = tpu.matmul %455, %547, %cst_354 {dimension_numbers = #tpu.dot_dimension_numbers<[1], [0], [0], [1], [0, 0, 1, 1], [], []>} : vector<80x32xbf16>, vector<32x8xbf16>, vector<80x8xf32> -> vector<80x8xf32>
    %c2_355 = arith.constant 2 : index
    %c0_356 = arith.constant 0 : index
    %c0_357 = arith.constant 0 : index
    %549 = vector.load %arg34[%c2_355, %c0_356, %c0_357] : memref<4x1x8xf32, #tpu.memory_space<vmem>>, vector<1x1x8xf32>
    %550 = vector.shape_cast %549 : vector<1x1x8xf32> to vector<1x8xf32>
    %551 = vector.broadcast %550 : vector<1x8xf32> to vector<80x8xf32>
    %552 = arith.addf %548, %551 : vector<80x8xf32>
    %c2_358 = arith.constant 2 : index
    %c0_359 = arith.constant 0 : index
    %c0_360 = arith.constant 0 : index
    %553 = vector.load %arg35[%c2_358, %c0_359, %c0_360] : memref<4x32x8xbf16, #tpu.memory_space<vmem>>, vector<1x32x8xbf16>
    %554 = vector.shape_cast %553 : vector<1x32x8xbf16> to vector<32x8xbf16>
    %cst_361 = arith.constant dense<0.000000e+00> : vector<80x8xf32>
    %555 = tpu.matmul %456, %554, %cst_361 {dimension_numbers = #tpu.dot_dimension_numbers<[1], [0], [0], [1], [0, 0, 1, 1], [], []>} : vector<80x32xbf16>, vector<32x8xbf16>, vector<80x8xf32> -> vector<80x8xf32>
    %c2_362 = arith.constant 2 : index
    %c0_363 = arith.constant 0 : index
    %c0_364 = arith.constant 0 : index
    %556 = vector.load %arg36[%c2_362, %c0_363, %c0_364] : memref<4x1x8xf32, #tpu.memory_space<vmem>>, vector<1x1x8xf32>
    %557 = vector.shape_cast %556 : vector<1x1x8xf32> to vector<1x8xf32>
    %558 = vector.broadcast %557 : vector<1x8xf32> to vector<80x8xf32>
    %559 = arith.addf %555, %558 : vector<80x8xf32>
    %560 = arith.truncf %545 : vector<1x8xf32> to vector<1x8xbf16>
    %561 = arith.truncf %552 : vector<80x8xf32> to vector<80x8xbf16>
    %cst_365 = arith.constant dense<0.000000e+00> : vector<1x80xf32>
    %562 = tpu.matmul %560, %561, %cst_365 {dimension_numbers = #tpu.dot_dimension_numbers<[1], [1], [0], [0], [0, 0, 1, 0], [], []>} : vector<1x8xbf16>, vector<80x8xbf16>, vector<1x80xf32> -> vector<1x80xf32>
    %563 = arith.addf %562, %10 : vector<1x80xf32>
    %cst_366 = arith.constant dense<0xFF800000> : vector<1xf32>
    %564 = vector.multi_reduction <maximumf>, %563, %cst_366 [1] : vector<1x80xf32> to vector<1xf32>
    %565 = vector.shape_cast %564 : vector<1xf32> to vector<1x1xf32>
    %566 = vector.broadcast %565 : vector<1x1xf32> to vector<1x80xf32>
    %567 = arith.subf %563, %566 : vector<1x80xf32>
    %568 = math.exp %567 : vector<1x80xf32>
    %cst_367 = arith.constant dense<0.000000e+00> : vector<1xf32>
    %569 = vector.multi_reduction <add>, %568, %cst_367 [1] : vector<1x80xf32> to vector<1xf32>
    %570 = vector.shape_cast %569 : vector<1xf32> to vector<1x1xf32>
    %571 = tpu.reciprocal %570 {approx = true} : vector<1x1xf32> -> vector<1x1xf32>
    %572 = vector.broadcast %571 : vector<1x1xf32> to vector<1x80xf32>
    %573 = arith.mulf %568, %572 : vector<1x80xf32>
    %574 = arith.truncf %573 : vector<1x80xf32> to vector<1x80xbf16>
    %575 = arith.truncf %559 : vector<80x8xf32> to vector<80x8xbf16>
    %cst_368 = arith.constant dense<0.000000e+00> : vector<1x8xf32>
    %576 = tpu.matmul %574, %575, %cst_368 {dimension_numbers = #tpu.dot_dimension_numbers<[1], [0], [0], [1], [0, 0, 1, 1], [], []>} : vector<1x80xbf16>, vector<80x8xbf16>, vector<1x8xf32> -> vector<1x8xf32>
    %577 = arith.truncf %576 : vector<1x8xf32> to vector<1x8xbf16>
    %c2_369 = arith.constant 2 : index
    %c0_370 = arith.constant 0 : index
    %c0_371 = arith.constant 0 : index
    %578 = vector.load %arg37[%c2_369, %c0_370, %c0_371] : memref<4x8x32xbf16, #tpu.memory_space<vmem>>, vector<1x8x32xbf16>
    %579 = vector.shape_cast %578 : vector<1x8x32xbf16> to vector<8x32xbf16>
    %cst_372 = arith.constant dense<0.000000e+00> : vector<1x32xf32>
    %580 = tpu.matmul %577, %579, %cst_372 {dimension_numbers = #tpu.dot_dimension_numbers<[1], [0], [0], [1], [0, 0, 1, 1], [], []>} : vector<1x8xbf16>, vector<8x32xbf16>, vector<1x32xf32> -> vector<1x32xf32>
    %581 = arith.addf %539, %580 : vector<1x32xf32>
    %c3_373 = arith.constant 3 : index
    %c0_374 = arith.constant 0 : index
    %c0_375 = arith.constant 0 : index
    %582 = vector.load %arg31[%c3_373, %c0_374, %c0_375] : memref<4x32x8xbf16, #tpu.memory_space<vmem>>, vector<1x32x8xbf16>
    %583 = vector.shape_cast %582 : vector<1x32x8xbf16> to vector<32x8xbf16>
    %cst_376 = arith.constant dense<0.000000e+00> : vector<1x8xf32>
    %584 = tpu.matmul %454, %583, %cst_376 {dimension_numbers = #tpu.dot_dimension_numbers<[1], [0], [0], [1], [0, 0, 1, 1], [], []>} : vector<1x32xbf16>, vector<32x8xbf16>, vector<1x8xf32> -> vector<1x8xf32>
    %c3_377 = arith.constant 3 : index
    %c0_378 = arith.constant 0 : index
    %c0_379 = arith.constant 0 : index
    %585 = vector.load %arg32[%c3_377, %c0_378, %c0_379] : memref<4x1x8xf32, #tpu.memory_space<vmem>>, vector<1x1x8xf32>
    %586 = vector.shape_cast %585 : vector<1x1x8xf32> to vector<1x8xf32>
    %587 = arith.addf %584, %586 : vector<1x8xf32>
    %c3_380 = arith.constant 3 : index
    %c0_381 = arith.constant 0 : index
    %c0_382 = arith.constant 0 : index
    %588 = vector.load %arg33[%c3_380, %c0_381, %c0_382] : memref<4x32x8xbf16, #tpu.memory_space<vmem>>, vector<1x32x8xbf16>
    %589 = vector.shape_cast %588 : vector<1x32x8xbf16> to vector<32x8xbf16>
    %cst_383 = arith.constant dense<0.000000e+00> : vector<80x8xf32>
    %590 = tpu.matmul %455, %589, %cst_383 {dimension_numbers = #tpu.dot_dimension_numbers<[1], [0], [0], [1], [0, 0, 1, 1], [], []>} : vector<80x32xbf16>, vector<32x8xbf16>, vector<80x8xf32> -> vector<80x8xf32>
    %c3_384 = arith.constant 3 : index
    %c0_385 = arith.constant 0 : index
    %c0_386 = arith.constant 0 : index
    %591 = vector.load %arg34[%c3_384, %c0_385, %c0_386] : memref<4x1x8xf32, #tpu.memory_space<vmem>>, vector<1x1x8xf32>
    %592 = vector.shape_cast %591 : vector<1x1x8xf32> to vector<1x8xf32>
    %593 = vector.broadcast %592 : vector<1x8xf32> to vector<80x8xf32>
    %594 = arith.addf %590, %593 : vector<80x8xf32>
    %c3_387 = arith.constant 3 : index
    %c0_388 = arith.constant 0 : index
    %c0_389 = arith.constant 0 : index
    %595 = vector.load %arg35[%c3_387, %c0_388, %c0_389] : memref<4x32x8xbf16, #tpu.memory_space<vmem>>, vector<1x32x8xbf16>
    %596 = vector.shape_cast %595 : vector<1x32x8xbf16> to vector<32x8xbf16>
    %cst_390 = arith.constant dense<0.000000e+00> : vector<80x8xf32>
    %597 = tpu.matmul %456, %596, %cst_390 {dimension_numbers = #tpu.dot_dimension_numbers<[1], [0], [0], [1], [0, 0, 1, 1], [], []>} : vector<80x32xbf16>, vector<32x8xbf16>, vector<80x8xf32> -> vector<80x8xf32>
    %c3_391 = arith.constant 3 : index
    %c0_392 = arith.constant 0 : index
    %c0_393 = arith.constant 0 : index
    %598 = vector.load %arg36[%c3_391, %c0_392, %c0_393] : memref<4x1x8xf32, #tpu.memory_space<vmem>>, vector<1x1x8xf32>
    %599 = vector.shape_cast %598 : vector<1x1x8xf32> to vector<1x8xf32>
    %600 = vector.broadcast %599 : vector<1x8xf32> to vector<80x8xf32>
    %601 = arith.addf %597, %600 : vector<80x8xf32>
    %602 = arith.truncf %587 : vector<1x8xf32> to vector<1x8xbf16>
    %603 = arith.truncf %594 : vector<80x8xf32> to vector<80x8xbf16>
    %cst_394 = arith.constant dense<0.000000e+00> : vector<1x80xf32>
    %604 = tpu.matmul %602, %603, %cst_394 {dimension_numbers = #tpu.dot_dimension_numbers<[1], [1], [0], [0], [0, 0, 1, 0], [], []>} : vector<1x8xbf16>, vector<80x8xbf16>, vector<1x80xf32> -> vector<1x80xf32>
    %605 = arith.addf %604, %10 : vector<1x80xf32>
    %cst_395 = arith.constant dense<0xFF800000> : vector<1xf32>
    %606 = vector.multi_reduction <maximumf>, %605, %cst_395 [1] : vector<1x80xf32> to vector<1xf32>
    %607 = vector.shape_cast %606 : vector<1xf32> to vector<1x1xf32>
    %608 = vector.broadcast %607 : vector<1x1xf32> to vector<1x80xf32>
    %609 = arith.subf %605, %608 : vector<1x80xf32>
    %610 = math.exp %609 : vector<1x80xf32>
    %cst_396 = arith.constant dense<0.000000e+00> : vector<1xf32>
    %611 = vector.multi_reduction <add>, %610, %cst_396 [1] : vector<1x80xf32> to vector<1xf32>
    %612 = vector.shape_cast %611 : vector<1xf32> to vector<1x1xf32>
    %613 = tpu.reciprocal %612 {approx = true} : vector<1x1xf32> -> vector<1x1xf32>
    %614 = vector.broadcast %613 : vector<1x1xf32> to vector<1x80xf32>
    %615 = arith.mulf %610, %614 : vector<1x80xf32>
    %616 = arith.truncf %615 : vector<1x80xf32> to vector<1x80xbf16>
    %617 = arith.truncf %601 : vector<80x8xf32> to vector<80x8xbf16>
    %cst_397 = arith.constant dense<0.000000e+00> : vector<1x8xf32>
    %618 = tpu.matmul %616, %617, %cst_397 {dimension_numbers = #tpu.dot_dimension_numbers<[1], [0], [0], [1], [0, 0, 1, 1], [], []>} : vector<1x80xbf16>, vector<80x8xbf16>, vector<1x8xf32> -> vector<1x8xf32>
    %619 = arith.truncf %618 : vector<1x8xf32> to vector<1x8xbf16>
    %c3_398 = arith.constant 3 : index
    %c0_399 = arith.constant 0 : index
    %c0_400 = arith.constant 0 : index
    %620 = vector.load %arg37[%c3_398, %c0_399, %c0_400] : memref<4x8x32xbf16, #tpu.memory_space<vmem>>, vector<1x8x32xbf16>
    %621 = vector.shape_cast %620 : vector<1x8x32xbf16> to vector<8x32xbf16>
    %cst_401 = arith.constant dense<0.000000e+00> : vector<1x32xf32>
    %622 = tpu.matmul %619, %621, %cst_401 {dimension_numbers = #tpu.dot_dimension_numbers<[1], [0], [0], [1], [0, 0, 1, 1], [], []>} : vector<1x8xbf16>, vector<8x32xbf16>, vector<1x32xf32> -> vector<1x32xf32>
    %623 = arith.addf %581, %622 : vector<1x32xf32>
    %c0_402 = arith.constant 0 : index
    %c0_403 = arith.constant 0 : index
    %624 = vector.load %arg38[%c0_402, %c0_403] : memref<1x32xf32, #tpu.memory_space<vmem>>, vector<1x32xf32>
    %625 = arith.addf %623, %624 : vector<1x32xf32>
    %626 = arith.addf %451, %625 : vector<1x32xf32>
    %cst_404 = arith.constant dense<0.000000e+00> : vector<1xf32>
    %627 = vector.multi_reduction <add>, %626, %cst_404 [1] : vector<1x32xf32> to vector<1xf32>
    %628 = vector.shape_cast %627 : vector<1xf32> to vector<1x1xf32>
    %cst_405 = arith.constant 3.200000e+01 : f32
    %629 = vector.broadcast %cst_405 : f32 to vector<1x1xf32>
    %630 = arith.divf %628, %629 : vector<1x1xf32>
    %631 = vector.broadcast %630 : vector<1x1xf32> to vector<1x32xf32>
    %632 = arith.subf %626, %631 : vector<1x32xf32>
    %633 = arith.mulf %632, %632 : vector<1x32xf32>
    %cst_406 = arith.constant dense<0.000000e+00> : vector<1xf32>
    %634 = vector.multi_reduction <add>, %633, %cst_406 [1] : vector<1x32xf32> to vector<1xf32>
    %635 = vector.shape_cast %634 : vector<1xf32> to vector<1x1xf32>
    %cst_407 = arith.constant 3.200000e+01 : f32
    %636 = vector.broadcast %cst_407 : f32 to vector<1x1xf32>
    %637 = arith.divf %635, %636 : vector<1x1xf32>
    %cst_408 = arith.constant 9.99999974E-6 : f32
    %638 = vector.broadcast %cst_408 : f32 to vector<1x1xf32>
    %639 = arith.addf %637, %638 : vector<1x1xf32>
    %640 = math.rsqrt %639 : vector<1x1xf32>
    %641 = vector.broadcast %630 : vector<1x1xf32> to vector<1x32xf32>
    %642 = arith.subf %626, %641 : vector<1x32xf32>
    %643 = vector.broadcast %640 : vector<1x1xf32> to vector<1x32xf32>
    %644 = arith.mulf %642, %643 : vector<1x32xf32>
    %c0_409 = arith.constant 0 : index
    %c0_410 = arith.constant 0 : index
    %645 = vector.load %arg39[%c0_409, %c0_410] : memref<2x32xf32, #tpu.memory_space<vmem>>, vector<1x32xf32>
    %646 = arith.mulf %644, %645 : vector<1x32xf32>
    %c1_411 = arith.constant 1 : index
    %c0_412 = arith.constant 0 : index
    %647 = vector.load %arg39[%c1_411, %c0_412] : memref<2x32xf32, #tpu.memory_space<vmem>>, vector<1x32xf32>
    %648 = arith.addf %646, %647 : vector<1x32xf32>
    %649 = arith.truncf %648 : vector<1x32xf32> to vector<1x32xbf16>
    %c0_413 = arith.constant 0 : index
    %c0_414 = arith.constant 0 : index
    %650 = vector.load %arg40[%c0_413, %c0_414] : memref<32x64xbf16, #tpu.memory_space<vmem>>, vector<32x64xbf16>
    %cst_415 = arith.constant dense<0.000000e+00> : vector<1x64xf32>
    %651 = tpu.matmul %649, %650, %cst_415 {dimension_numbers = #tpu.dot_dimension_numbers<[1], [0], [0], [1], [0, 0, 1, 1], [], []>} : vector<1x32xbf16>, vector<32x64xbf16>, vector<1x64xf32> -> vector<1x64xf32>
    %c0_416 = arith.constant 0 : index
    %c0_417 = arith.constant 0 : index
    %652 = vector.load %arg41[%c0_416, %c0_417] : memref<1x64xf32, #tpu.memory_space<vmem>>, vector<1x64xf32>
    %653 = arith.addf %651, %652 : vector<1x64xf32>
    %cst_418 = arith.constant 0.000000e+00 : f32
    %654 = vector.broadcast %cst_418 : f32 to vector<1x64xf32>
    %655 = arith.maximumf %653, %654 : vector<1x64xf32>
    %656 = arith.truncf %655 : vector<1x64xf32> to vector<1x64xbf16>
    %c0_419 = arith.constant 0 : index
    %c0_420 = arith.constant 0 : index
    %657 = vector.load %arg42[%c0_419, %c0_420] : memref<64x32xbf16, #tpu.memory_space<vmem>>, vector<64x32xbf16>
    %cst_421 = arith.constant dense<0.000000e+00> : vector<1x32xf32>
    %658 = tpu.matmul %656, %657, %cst_421 {dimension_numbers = #tpu.dot_dimension_numbers<[1], [0], [0], [1], [0, 0, 1, 1], [], []>} : vector<1x64xbf16>, vector<64x32xbf16>, vector<1x32xf32> -> vector<1x32xf32>
    %c0_422 = arith.constant 0 : index
    %c0_423 = arith.constant 0 : index
    %659 = vector.load %arg43[%c0_422, %c0_423] : memref<1x32xf32, #tpu.memory_space<vmem>>, vector<1x32xf32>
    %660 = arith.addf %658, %659 : vector<1x32xf32>
    %661 = arith.addf %648, %660 : vector<1x32xf32>
    %cst_424 = arith.constant dense<0.000000e+00> : vector<1xf32>
    %662 = vector.multi_reduction <add>, %661, %cst_424 [1] : vector<1x32xf32> to vector<1xf32>
    %663 = vector.shape_cast %662 : vector<1xf32> to vector<1x1xf32>
    %cst_425 = arith.constant 3.200000e+01 : f32
    %664 = vector.broadcast %cst_425 : f32 to vector<1x1xf32>
    %665 = arith.divf %663, %664 : vector<1x1xf32>
    %666 = vector.broadcast %665 : vector<1x1xf32> to vector<1x32xf32>
    %667 = arith.subf %661, %666 : vector<1x32xf32>
    %668 = arith.mulf %667, %667 : vector<1x32xf32>
    %cst_426 = arith.constant dense<0.000000e+00> : vector<1xf32>
    %669 = vector.multi_reduction <add>, %668, %cst_426 [1] : vector<1x32xf32> to vector<1xf32>
    %670 = vector.shape_cast %669 : vector<1xf32> to vector<1x1xf32>
    %cst_427 = arith.constant 3.200000e+01 : f32
    %671 = vector.broadcast %cst_427 : f32 to vector<1x1xf32>
    %672 = arith.divf %670, %671 : vector<1x1xf32>
    %cst_428 = arith.constant 9.99999974E-6 : f32
    %673 = vector.broadcast %cst_428 : f32 to vector<1x1xf32>
    %674 = arith.addf %672, %673 : vector<1x1xf32>
    %675 = math.rsqrt %674 : vector<1x1xf32>
    %676 = vector.broadcast %665 : vector<1x1xf32> to vector<1x32xf32>
    %677 = arith.subf %661, %676 : vector<1x32xf32>
    %678 = vector.broadcast %675 : vector<1x1xf32> to vector<1x32xf32>
    %679 = arith.mulf %677, %678 : vector<1x32xf32>
    %c0_429 = arith.constant 0 : index
    %c0_430 = arith.constant 0 : index
    %680 = vector.load %arg44[%c0_429, %c0_430] : memref<2x32xf32, #tpu.memory_space<vmem>>, vector<1x32xf32>
    %681 = arith.mulf %679, %680 : vector<1x32xf32>
    %c1_431 = arith.constant 1 : index
    %c0_432 = arith.constant 0 : index
    %682 = vector.load %arg44[%c1_431, %c0_432] : memref<2x32xf32, #tpu.memory_space<vmem>>, vector<1x32xf32>
    %683 = arith.addf %681, %682 : vector<1x32xf32>
    %cst_433 = arith.constant dense<0.000000e+00> : vector<1xf32>
    %684 = vector.multi_reduction <add>, %683, %cst_433 [1] : vector<1x32xf32> to vector<1xf32>
    %685 = vector.shape_cast %684 : vector<1xf32> to vector<1x1xf32>
    %cst_434 = arith.constant 3.200000e+01 : f32
    %686 = vector.broadcast %cst_434 : f32 to vector<1x1xf32>
    %687 = arith.divf %685, %686 : vector<1x1xf32>
    %688 = vector.broadcast %687 : vector<1x1xf32> to vector<1x32xf32>
    %689 = arith.subf %683, %688 : vector<1x32xf32>
    %690 = arith.mulf %689, %689 : vector<1x32xf32>
    %cst_435 = arith.constant dense<0.000000e+00> : vector<1xf32>
    %691 = vector.multi_reduction <add>, %690, %cst_435 [1] : vector<1x32xf32> to vector<1xf32>
    %692 = vector.shape_cast %691 : vector<1xf32> to vector<1x1xf32>
    %cst_436 = arith.constant 3.200000e+01 : f32
    %693 = vector.broadcast %cst_436 : f32 to vector<1x1xf32>
    %694 = arith.divf %692, %693 : vector<1x1xf32>
    %cst_437 = arith.constant 9.99999974E-6 : f32
    %695 = vector.broadcast %cst_437 : f32 to vector<1x1xf32>
    %696 = arith.addf %694, %695 : vector<1x1xf32>
    %697 = math.rsqrt %696 : vector<1x1xf32>
    %698 = vector.broadcast %687 : vector<1x1xf32> to vector<1x32xf32>
    %699 = arith.subf %683, %698 : vector<1x32xf32>
    %700 = vector.broadcast %697 : vector<1x1xf32> to vector<1x32xf32>
    %701 = arith.mulf %699, %700 : vector<1x32xf32>
    %c0_438 = arith.constant 0 : index
    %c0_439 = arith.constant 0 : index
    %702 = vector.load %arg45[%c0_438, %c0_439] : memref<2x32xf32, #tpu.memory_space<vmem>>, vector<1x32xf32>
    %703 = arith.mulf %701, %702 : vector<1x32xf32>
    %c1_440 = arith.constant 1 : index
    %c0_441 = arith.constant 0 : index
    %704 = vector.load %arg45[%c1_440, %c0_441] : memref<2x32xf32, #tpu.memory_space<vmem>>, vector<1x32xf32>
    %705 = arith.addf %703, %704 : vector<1x32xf32>
    %c0_442 = arith.constant 0 : index
    %c0_443 = arith.constant 0 : index
    %c0_444 = arith.constant 0 : index
    %706 = vector.load %arg49[%c0_442, %c0_443, %c0_444] : memref<1x1x32xf32, #tpu.memory_space<vmem>>, vector<1x1x32xf32>
    %707 = vector.shape_cast %706 : vector<1x1x32xf32> to vector<1x32xf32>
    %708 = vector.shape_cast %705 : vector<1x32xf32> to vector<1x1x32xf32>
    tpu.vector_store %arg49[%c0_442, %c0_443, %c0_444], %708 {strides = array<i32>} : memref<1x1x32xf32, #tpu.memory_space<vmem>>, vector<1x1x32xf32>,
    %709 = vector.extract_strided_slice %256 {offsets = [16, 0], sizes = [64, 32], strides = [1, 1]} : vector<80x32xf32> to vector<64x32xf32>
    %710 = arith.truncf %709 : vector<64x32xf32> to vector<64x32xbf16>
    %711 = arith.truncf %705 : vector<1x32xf32> to vector<1x32xbf16>
    %cst_445 = arith.constant dense<0.000000e+00> : vector<1x64xf32>
    %712 = tpu.matmul %711, %710, %cst_445 {dimension_numbers = #tpu.dot_dimension_numbers<[1], [1], [0], [0], [0, 0, 1, 0], [], []>} : vector<1x32xbf16>, vector<64x32xbf16>, vector<1x64xf32> -> vector<1x64xf32>
    %c0_446 = arith.constant 0 : index
    %c0_447 = arith.constant 0 : index
    %713 = vector.load %arg46[%c0_446, %c0_447] : memref<2x32xbf16, #tpu.memory_space<vmem>>, vector<1x32xbf16>
    %cst_448 = arith.constant dense<0.000000e+00> : vector<1x64xf32>
    %714 = tpu.matmul %713, %710, %cst_448 {dimension_numbers = #tpu.dot_dimension_numbers<[1], [1], [0], [0], [0, 0, 1, 0], [], []>} : vector<1x32xbf16>, vector<64x32xbf16>, vector<1x64xf32> -> vector<1x64xf32>
    %c1_449 = arith.constant 1 : index
    %c0_450 = arith.constant 0 : index
    %715 = vector.load %arg46[%c1_449, %c0_450] : memref<2x32xbf16, #tpu.memory_space<vmem>>, vector<1x32xbf16>
    %cst_451 = arith.constant dense<0.000000e+00> : vector<1x64xf32>
    %716 = tpu.matmul %715, %710, %cst_451 {dimension_numbers = #tpu.dot_dimension_numbers<[1], [1], [0], [0], [0, 0, 1, 0], [], []>} : vector<1x32xbf16>, vector<64x32xbf16>, vector<1x64xf32> -> vector<1x64xf32>
    %717 = arith.mulf %712, %714 : vector<1x64xf32>
    %c0_452 = arith.constant 0 : index
    %c0_453 = arith.constant 0 : index
    %718 = vector.load %arg47[%c0_452, %c0_453] : memref<2x1xf32, #tpu.memory_space<vmem>>, vector<1x1xf32>
    %719 = vector.broadcast %718 : vector<1x1xf32> to vector<1x64xf32>
    %720 = arith.addf %717, %719 : vector<1x64xf32>
    %721 = arith.mulf %712, %716 : vector<1x64xf32>
    %c1_454 = arith.constant 1 : index
    %c0_455 = arith.constant 0 : index
    %722 = vector.load %arg47[%c1_454, %c0_455] : memref<2x1xf32, #tpu.memory_space<vmem>>, vector<1x1xf32>
    %723 = vector.broadcast %722 : vector<1x1xf32> to vector<1x64xf32>
    %724 = arith.addf %721, %723 : vector<1x64xf32>
    %c0_456 = arith.constant 0 : index
    %c0_457 = arith.constant 0 : index
    %725 = vector.load %arg7[%c0_456, %c0_457] : memref<2x64xf32, #tpu.memory_space<vmem>>, vector<1x64xf32>
    %c1_458 = arith.constant 1 : index
    %c0_459 = arith.constant 0 : index
    %726 = vector.load %arg7[%c1_458, %c0_459] : memref<2x64xf32, #tpu.memory_space<vmem>>, vector<1x64xf32>
    %cst_460 = arith.constant dense<0xFF800000> : vector<1xf32>
    %727 = vector.multi_reduction <maximumf>, %720, %cst_460 [1] : vector<1x64xf32> to vector<1xf32>
    %728 = vector.shape_cast %727 : vector<1xf32> to vector<1x1xf32>
    %729 = vector.broadcast %728 : vector<1x1xf32> to vector<1x64xf32>
    %730 = arith.subf %720, %729 : vector<1x64xf32>
    %731 = math.exp %730 : vector<1x64xf32>
    %cst_461 = arith.constant dense<0.000000e+00> : vector<1xf32>
    %732 = vector.multi_reduction <add>, %731, %cst_461 [1] : vector<1x64xf32> to vector<1xf32>
    %733 = vector.shape_cast %732 : vector<1xf32> to vector<1x1xf32>
    %734 = tpu.reciprocal %733 {approx = true} : vector<1x1xf32> -> vector<1x1xf32>
    %735 = vector.broadcast %734 : vector<1x1xf32> to vector<1x64xf32>
    %736 = arith.mulf %731, %735 : vector<1x64xf32>
    %737 = arith.mulf %736, %725 : vector<1x64xf32>
    %cst_462 = arith.constant dense<0.000000e+00> : vector<1xf32>
    %738 = vector.multi_reduction <add>, %737, %cst_462 [1] : vector<1x64xf32> to vector<1xf32>
    %739 = vector.shape_cast %738 : vector<1xf32> to vector<1x1xf32>
    %740 = arith.mulf %736, %726 : vector<1x64xf32>
    %cst_463 = arith.constant dense<0.000000e+00> : vector<1xf32>
    %741 = vector.multi_reduction <add>, %740, %cst_463 [1] : vector<1x64xf32> to vector<1xf32>
    %742 = vector.shape_cast %741 : vector<1xf32> to vector<1x1xf32>
    %cst_464 = arith.constant dense<0xFF800000> : vector<1xf32>
    %743 = vector.multi_reduction <maximumf>, %724, %cst_464 [1] : vector<1x64xf32> to vector<1xf32>
    %744 = vector.shape_cast %743 : vector<1xf32> to vector<1x1xf32>
    %745 = vector.broadcast %744 : vector<1x1xf32> to vector<1x64xf32>
    %746 = arith.subf %724, %745 : vector<1x64xf32>
    %747 = math.exp %746 : vector<1x64xf32>
    %cst_465 = arith.constant dense<0.000000e+00> : vector<1xf32>
    %748 = vector.multi_reduction <add>, %747, %cst_465 [1] : vector<1x64xf32> to vector<1xf32>
    %749 = vector.shape_cast %748 : vector<1xf32> to vector<1x1xf32>
    %750 = tpu.reciprocal %749 {approx = true} : vector<1x1xf32> -> vector<1x1xf32>
    %751 = vector.broadcast %750 : vector<1x1xf32> to vector<1x64xf32>
    %752 = arith.mulf %747, %751 : vector<1x64xf32>
    %753 = arith.mulf %752, %725 : vector<1x64xf32>
    %cst_466 = arith.constant dense<0.000000e+00> : vector<1xf32>
    %754 = vector.multi_reduction <add>, %753, %cst_466 [1] : vector<1x64xf32> to vector<1xf32>
    %755 = vector.shape_cast %754 : vector<1xf32> to vector<1x1xf32>
    %756 = arith.mulf %752, %726 : vector<1x64xf32>
    %cst_467 = arith.constant dense<0.000000e+00> : vector<1xf32>
    %757 = vector.multi_reduction <add>, %756, %cst_467 [1] : vector<1x64xf32> to vector<1xf32>
    %758 = vector.shape_cast %757 : vector<1xf32> to vector<1x1xf32>
    %759 = arith.addf %739, %755 : vector<1x1xf32>
    %cst_468 = arith.constant 5.000000e-01 : f32
    %760 = vector.broadcast %cst_468 : f32 to vector<1x1xf32>
    %761 = arith.mulf %759, %760 : vector<1x1xf32>
    %762 = arith.addf %742, %758 : vector<1x1xf32>
    %cst_469 = arith.constant 5.000000e-01 : f32
    %763 = vector.broadcast %cst_469 : f32 to vector<1x1xf32>
    %764 = arith.mulf %762, %763 : vector<1x1xf32>
    %765 = arith.subf %755, %739 : vector<1x1xf32>
    %766 = arith.subf %758, %742 : vector<1x1xf32>
    %767 = tpu.iota {dimensions = array<i32: 1>} : vector<1x4xi32>
    %c0_i32 = arith.constant 0 : i32
    %768 = vector.broadcast %c0_i32 : i32 to vector<1x4xi32>
    %769 = arith.cmpi eq, %767, %768 : vector<1x4xi32>
    %cst_470 = arith.constant 0.000000e+00 : f32
    %770 = vector.shape_cast %761 : vector<1x1xf32> to vector<1x1xf32>
    %771 = vector.broadcast %770 : vector<1x1xf32> to vector<1x4xf32>
    %772 = vector.broadcast %cst_470 : f32 to vector<1x4xf32>
    %773 = arith.select %769, %771, %772 : vector<1x4xi1>, vector<1x4xf32>
    %c1_i32 = arith.constant 1 : i32
    %774 = vector.broadcast %c1_i32 : i32 to vector<1x4xi32>
    %775 = arith.cmpi eq, %767, %774 : vector<1x4xi32>
    %cst_471 = arith.constant 0.000000e+00 : f32
    %776 = vector.shape_cast %764 : vector<1x1xf32> to vector<1x1xf32>
    %777 = vector.broadcast %776 : vector<1x1xf32> to vector<1x4xf32>
    %778 = vector.broadcast %cst_471 : f32 to vector<1x4xf32>
    %779 = arith.select %775, %777, %778 : vector<1x4xi1>, vector<1x4xf32>
    %780 = arith.addf %773, %779 : vector<1x4xf32>
    %c2_i32 = arith.constant 2 : i32
    %781 = vector.broadcast %c2_i32 : i32 to vector<1x4xi32>
    %782 = arith.cmpi eq, %767, %781 : vector<1x4xi32>
    %cst_472 = arith.constant 0.000000e+00 : f32
    %783 = vector.shape_cast %765 : vector<1x1xf32> to vector<1x1xf32>
    %784 = vector.broadcast %783 : vector<1x1xf32> to vector<1x4xf32>
    %785 = vector.broadcast %cst_472 : f32 to vector<1x4xf32>
    %786 = arith.select %782, %784, %785 : vector<1x4xi1>, vector<1x4xf32>
    %787 = arith.addf %780, %786 : vector<1x4xf32>
    %c3_i32 = arith.constant 3 : i32
    %788 = vector.broadcast %c3_i32 : i32 to vector<1x4xi32>
    %789 = arith.cmpi eq, %767, %788 : vector<1x4xi32>
    %cst_473 = arith.constant 0.000000e+00 : f32
    %790 = vector.shape_cast %766 : vector<1x1xf32> to vector<1x1xf32>
    %791 = vector.broadcast %790 : vector<1x1xf32> to vector<1x4xf32>
    %792 = vector.broadcast %cst_473 : f32 to vector<1x4xf32>
    %793 = arith.select %789, %791, %792 : vector<1x4xi1>, vector<1x4xf32>
    %794 = arith.addf %787, %793 : vector<1x4xf32>
    %c0_474 = arith.constant 0 : index
    %c0_475 = arith.constant 0 : index
    %c0_476 = arith.constant 0 : index
    %795 = vector.load %arg48[%c0_474, %c0_475, %c0_476] : memref<1x1x4xf32, #tpu.memory_space<vmem>>, vector<1x1x4xf32>
    %796 = vector.shape_cast %795 : vector<1x1x4xf32> to vector<1x4xf32>
    %797 = vector.shape_cast %794 : vector<1x4xf32> to vector<1x1x4xf32>
    tpu.vector_store %arg48[%c0_474, %c0_475, %c0_476], %797 {strides = array<i32>} : memref<1x1x4xf32, #tpu.memory_space<vmem>>, vector<1x1x4xf32>,
    return
  }
  func.func @transform_0(%arg0: i32) -> (i32, i32, i32) {
    %c0_i32 = arith.constant 0 : i32
    %c0_i32_0 = arith.constant 0 : i32
    %c0_i32_1 = arith.constant 0 : i32
    return %arg0, %c0_i32, %c0_i32_0 : i32, i32, i32
  }
  func.func @transform_1(%arg0: i32) -> (i32, i32, i32) {
    %c0_i32 = arith.constant 0 : i32
    %c0_i32_0 = arith.constant 0 : i32
    %c0_i32_1 = arith.constant 0 : i32
    return %arg0, %c0_i32, %c0_i32_0 : i32, i32, i32
  }
  func.func @transform_2(%arg0: i32) -> (i32, i32, i32) {
    %c0_i32 = arith.constant 0 : i32
    %c0_i32_0 = arith.constant 0 : i32
    %c0_i32_1 = arith.constant 0 : i32
    return %arg0, %c0_i32, %c0_i32_0 : i32, i32, i32
  }
  func.func @transform_3(%arg0: i32) -> (i32, i32) {
    %c0_i32 = arith.constant 0 : i32
    %c0_i32_0 = arith.constant 0 : i32
    %c0_i32_1 = arith.constant 0 : i32
    return %c0_i32, %c0_i32_0 : i32, i32
  }
  func.func @transform_4(%arg0: i32) -> (i32, i32) {
    %c0_i32 = arith.constant 0 : i32
    %c0_i32_0 = arith.constant 0 : i32
    %c0_i32_1 = arith.constant 0 : i32
    return %c0_i32, %c0_i32_0 : i32, i32
  }
  func.func @transform_5(%arg0: i32) -> (i32, i32) {
    %c0_i32 = arith.constant 0 : i32
    %c0_i32_0 = arith.constant 0 : i32
    %c0_i32_1 = arith.constant 0 : i32
    return %c0_i32, %c0_i32_0 : i32, i32
  }
  func.func @transform_6(%arg0: i32) -> (i32, i32) {
    %c0_i32 = arith.constant 0 : i32
    %c0_i32_0 = arith.constant 0 : i32
    %c0_i32_1 = arith.constant 0 : i32
    return %c0_i32, %c0_i32_0 : i32, i32
  }
  func.func @transform_7(%arg0: i32) -> (i32, i32, i32) {
    %c0_i32 = arith.constant 0 : i32
    %c0_i32_0 = arith.constant 0 : i32
    %c0_i32_1 = arith.constant 0 : i32
    %c0_i32_2 = arith.constant 0 : i32
    return %c0_i32, %c0_i32_0, %c0_i32_1 : i32, i32, i32
  }
  func.func @transform_8(%arg0: i32) -> (i32, i32, i32) {
    %c0_i32 = arith.constant 0 : i32
    %c0_i32_0 = arith.constant 0 : i32
    %c0_i32_1 = arith.constant 0 : i32
    %c0_i32_2 = arith.constant 0 : i32
    return %c0_i32, %c0_i32_0, %c0_i32_1 : i32, i32, i32
  }
  func.func @transform_9(%arg0: i32) -> (i32, i32, i32) {
    %c0_i32 = arith.constant 0 : i32
    %c0_i32_0 = arith.constant 0 : i32
    %c0_i32_1 = arith.constant 0 : i32
    %c0_i32_2 = arith.constant 0 : i32
    return %c0_i32, %c0_i32_0, %c0_i32_1 : i32, i32, i32
  }
  func.func @transform_10(%arg0: i32) -> (i32, i32, i32) {
    %c0_i32 = arith.constant 0 : i32
    %c0_i32_0 = arith.constant 0 : i32
    %c0_i32_1 = arith.constant 0 : i32
    %c0_i32_2 = arith.constant 0 : i32
    return %c0_i32, %c0_i32_0, %c0_i32_1 : i32, i32, i32
  }
  func.func @transform_11(%arg0: i32) -> (i32, i32, i32) {
    %c0_i32 = arith.constant 0 : i32
    %c0_i32_0 = arith.constant 0 : i32
    %c0_i32_1 = arith.constant 0 : i32
    %c0_i32_2 = arith.constant 0 : i32
    return %c0_i32, %c0_i32_0, %c0_i32_1 : i32, i32, i32
  }
  func.func @transform_12(%arg0: i32) -> (i32, i32, i32) {
    %c0_i32 = arith.constant 0 : i32
    %c0_i32_0 = arith.constant 0 : i32
    %c0_i32_1 = arith.constant 0 : i32
    %c0_i32_2 = arith.constant 0 : i32
    return %c0_i32, %c0_i32_0, %c0_i32_1 : i32, i32, i32
  }
  func.func @transform_13(%arg0: i32) -> (i32, i32, i32) {
    %c0_i32 = arith.constant 0 : i32
    %c0_i32_0 = arith.constant 0 : i32
    %c0_i32_1 = arith.constant 0 : i32
    %c0_i32_2 = arith.constant 0 : i32
    return %c0_i32, %c0_i32_0, %c0_i32_1 : i32, i32, i32
  }
  func.func @transform_14(%arg0: i32) -> (i32, i32) {
    %c0_i32 = arith.constant 0 : i32
    %c0_i32_0 = arith.constant 0 : i32
    %c0_i32_1 = arith.constant 0 : i32
    return %c0_i32, %c0_i32_0 : i32, i32
  }
  func.func @transform_15(%arg0: i32) -> (i32, i32) {
    %c0_i32 = arith.constant 0 : i32
    %c0_i32_0 = arith.constant 0 : i32
    %c0_i32_1 = arith.constant 0 : i32
    return %c0_i32, %c0_i32_0 : i32, i32
  }
  func.func @transform_16(%arg0: i32) -> (i32, i32) {
    %c0_i32 = arith.constant 0 : i32
    %c0_i32_0 = arith.constant 0 : i32
    %c0_i32_1 = arith.constant 0 : i32
    return %c0_i32, %c0_i32_0 : i32, i32
  }
  func.func @transform_17(%arg0: i32) -> (i32, i32) {
    %c0_i32 = arith.constant 0 : i32
    %c0_i32_0 = arith.constant 0 : i32
    %c0_i32_1 = arith.constant 0 : i32
    return %c0_i32, %c0_i32_0 : i32, i32
  }
  func.func @transform_18(%arg0: i32) -> (i32, i32) {
    %c0_i32 = arith.constant 0 : i32
    %c0_i32_0 = arith.constant 0 : i32
    %c0_i32_1 = arith.constant 0 : i32
    return %c0_i32, %c0_i32_0 : i32, i32
  }
  func.func @transform_19(%arg0: i32) -> (i32, i32) {
    %c0_i32 = arith.constant 0 : i32
    %c0_i32_0 = arith.constant 0 : i32
    %c0_i32_1 = arith.constant 0 : i32
    return %c0_i32, %c0_i32_0 : i32, i32
  }
  func.func @transform_20(%arg0: i32) -> (i32, i32) {
    %c0_i32 = arith.constant 0 : i32
    %c0_i32_0 = arith.constant 0 : i32
    %c0_i32_1 = arith.constant 0 : i32
    return %c0_i32, %c0_i32_0 : i32, i32
  }
  func.func @transform_21(%arg0: i32) -> (i32, i32, i32) {
    %c0_i32 = arith.constant 0 : i32
    %c0_i32_0 = arith.constant 0 : i32
    %c0_i32_1 = arith.constant 0 : i32
    %c0_i32_2 = arith.constant 0 : i32
    return %c0_i32, %c0_i32_0, %c0_i32_1 : i32, i32, i32
  }
  func.func @transform_22(%arg0: i32) -> (i32, i32, i32) {
    %c0_i32 = arith.constant 0 : i32
    %c0_i32_0 = arith.constant 0 : i32
    %c0_i32_1 = arith.constant 0 : i32
    %c0_i32_2 = arith.constant 0 : i32
    return %c0_i32, %c0_i32_0, %c0_i32_1 : i32, i32, i32
  }
  func.func @transform_23(%arg0: i32) -> (i32, i32, i32) {
    %c0_i32 = arith.constant 0 : i32
    %c0_i32_0 = arith.constant 0 : i32
    %c0_i32_1 = arith.constant 0 : i32
    %c0_i32_2 = arith.constant 0 : i32
    return %c0_i32, %c0_i32_0, %c0_i32_1 : i32, i32, i32
  }
  func.func @transform_24(%arg0: i32) -> (i32, i32, i32) {
    %c0_i32 = arith.constant 0 : i32
    %c0_i32_0 = arith.constant 0 : i32
    %c0_i32_1 = arith.constant 0 : i32
    %c0_i32_2 = arith.constant 0 : i32
    return %c0_i32, %c0_i32_0, %c0_i32_1 : i32, i32, i32
  }
  func.func @transform_25(%arg0: i32) -> (i32, i32, i32) {
    %c0_i32 = arith.constant 0 : i32
    %c0_i32_0 = arith.constant 0 : i32
    %c0_i32_1 = arith.constant 0 : i32
    %c0_i32_2 = arith.constant 0 : i32
    return %c0_i32, %c0_i32_0, %c0_i32_1 : i32, i32, i32
  }
  func.func @transform_26(%arg0: i32) -> (i32, i32, i32) {
    %c0_i32 = arith.constant 0 : i32
    %c0_i32_0 = arith.constant 0 : i32
    %c0_i32_1 = arith.constant 0 : i32
    %c0_i32_2 = arith.constant 0 : i32
    return %c0_i32, %c0_i32_0, %c0_i32_1 : i32, i32, i32
  }
  func.func @transform_27(%arg0: i32) -> (i32, i32, i32) {
    %c0_i32 = arith.constant 0 : i32
    %c0_i32_0 = arith.constant 0 : i32
    %c0_i32_1 = arith.constant 0 : i32
    %c0_i32_2 = arith.constant 0 : i32
    return %c0_i32, %c0_i32_0, %c0_i32_1 : i32, i32, i32
  }
  func.func @transform_28(%arg0: i32) -> (i32, i32) {
    %c0_i32 = arith.constant 0 : i32
    %c0_i32_0 = arith.constant 0 : i32
    %c0_i32_1 = arith.constant 0 : i32
    return %c0_i32, %c0_i32_0 : i32, i32
  }
  func.func @transform_29(%arg0: i32) -> (i32, i32) {
    %c0_i32 = arith.constant 0 : i32
    %c0_i32_0 = arith.constant 0 : i32
    %c0_i32_1 = arith.constant 0 : i32
    return %c0_i32, %c0_i32_0 : i32, i32
  }
  func.func @transform_30(%arg0: i32) -> (i32, i32, i32) {
    %c0_i32 = arith.constant 0 : i32
    %c0_i32_0 = arith.constant 0 : i32
    %c0_i32_1 = arith.constant 0 : i32
    %c0_i32_2 = arith.constant 0 : i32
    return %c0_i32, %c0_i32_0, %c0_i32_1 : i32, i32, i32
  }
  func.func @transform_31(%arg0: i32) -> (i32, i32, i32) {
    %c0_i32 = arith.constant 0 : i32
    %c0_i32_0 = arith.constant 0 : i32
    %c0_i32_1 = arith.constant 0 : i32
    %c0_i32_2 = arith.constant 0 : i32
    return %c0_i32, %c0_i32_0, %c0_i32_1 : i32, i32, i32
  }
  func.func @transform_32(%arg0: i32) -> (i32, i32, i32) {
    %c0_i32 = arith.constant 0 : i32
    %c0_i32_0 = arith.constant 0 : i32
    %c0_i32_1 = arith.constant 0 : i32
    %c0_i32_2 = arith.constant 0 : i32
    return %c0_i32, %c0_i32_0, %c0_i32_1 : i32, i32, i32
  }
  func.func @transform_33(%arg0: i32) -> (i32, i32, i32) {
    %c0_i32 = arith.constant 0 : i32
    %c0_i32_0 = arith.constant 0 : i32
    %c0_i32_1 = arith.constant 0 : i32
    %c0_i32_2 = arith.constant 0 : i32
    return %c0_i32, %c0_i32_0, %c0_i32_1 : i32, i32, i32
  }
  func.func @transform_34(%arg0: i32) -> (i32, i32, i32) {
    %c0_i32 = arith.constant 0 : i32
    %c0_i32_0 = arith.constant 0 : i32
    %c0_i32_1 = arith.constant 0 : i32
    %c0_i32_2 = arith.constant 0 : i32
    return %c0_i32, %c0_i32_0, %c0_i32_1 : i32, i32, i32
  }
  func.func @transform_35(%arg0: i32) -> (i32, i32, i32) {
    %c0_i32 = arith.constant 0 : i32
    %c0_i32_0 = arith.constant 0 : i32
    %c0_i32_1 = arith.constant 0 : i32
    %c0_i32_2 = arith.constant 0 : i32
    return %c0_i32, %c0_i32_0, %c0_i32_1 : i32, i32, i32
  }
  func.func @transform_36(%arg0: i32) -> (i32, i32, i32) {
    %c0_i32 = arith.constant 0 : i32
    %c0_i32_0 = arith.constant 0 : i32
    %c0_i32_1 = arith.constant 0 : i32
    %c0_i32_2 = arith.constant 0 : i32
    return %c0_i32, %c0_i32_0, %c0_i32_1 : i32, i32, i32
  }
  func.func @transform_37(%arg0: i32) -> (i32, i32) {
    %c0_i32 = arith.constant 0 : i32
    %c0_i32_0 = arith.constant 0 : i32
    %c0_i32_1 = arith.constant 0 : i32
    return %c0_i32, %c0_i32_0 : i32, i32
  }
  func.func @transform_38(%arg0: i32) -> (i32, i32) {
    %c0_i32 = arith.constant 0 : i32
    %c0_i32_0 = arith.constant 0 : i32
    %c0_i32_1 = arith.constant 0 : i32
    return %c0_i32, %c0_i32_0 : i32, i32
  }
  func.func @transform_39(%arg0: i32) -> (i32, i32) {
    %c0_i32 = arith.constant 0 : i32
    %c0_i32_0 = arith.constant 0 : i32
    %c0_i32_1 = arith.constant 0 : i32
    return %c0_i32, %c0_i32_0 : i32, i32
  }
  func.func @transform_40(%arg0: i32) -> (i32, i32) {
    %c0_i32 = arith.constant 0 : i32
    %c0_i32_0 = arith.constant 0 : i32
    %c0_i32_1 = arith.constant 0 : i32
    return %c0_i32, %c0_i32_0 : i32, i32
  }
  func.func @transform_41(%arg0: i32) -> (i32, i32) {
    %c0_i32 = arith.constant 0 : i32
    %c0_i32_0 = arith.constant 0 : i32
    %c0_i32_1 = arith.constant 0 : i32
    return %c0_i32, %c0_i32_0 : i32, i32
  }
  func.func @transform_42(%arg0: i32) -> (i32, i32) {
    %c0_i32 = arith.constant 0 : i32
    %c0_i32_0 = arith.constant 0 : i32
    %c0_i32_1 = arith.constant 0 : i32
    return %c0_i32, %c0_i32_0 : i32, i32
  }
  func.func @transform_43(%arg0: i32) -> (i32, i32) {
    %c0_i32 = arith.constant 0 : i32
    %c0_i32_0 = arith.constant 0 : i32
    %c0_i32_1 = arith.constant 0 : i32
    return %c0_i32, %c0_i32_0 : i32, i32
  }
  func.func @transform_44(%arg0: i32) -> (i32, i32) {
    %c0_i32 = arith.constant 0 : i32
    %c0_i32_0 = arith.constant 0 : i32
    %c0_i32_1 = arith.constant 0 : i32
    return %c0_i32, %c0_i32_0 : i32, i32
  }
  func.func @transform_45(%arg0: i32) -> (i32, i32) {
    %c0_i32 = arith.constant 0 : i32
    %c0_i32_0 = arith.constant 0 : i32
    %c0_i32_1 = arith.constant 0 : i32
    return %c0_i32, %c0_i32_0 : i32, i32
  }
  func.func @transform_46(%arg0: i32) -> (i32, i32) {
    %c0_i32 = arith.constant 0 : i32
    %c0_i32_0 = arith.constant 0 : i32
    %c0_i32_1 = arith.constant 0 : i32
    return %c0_i32, %c0_i32_0 : i32, i32
  }
  func.func @transform_47(%arg0: i32) -> (i32, i32, i32) {
    %c0_i32 = arith.constant 0 : i32
    %c0_i32_0 = arith.constant 0 : i32
    %c0_i32_1 = arith.constant 0 : i32
    return %arg0, %c0_i32, %c0_i32_0 : i32, i32, i32
  }
  func.func @transform_48(%arg0: i32) -> (i32, i32, i32) {
    %c0_i32 = arith.constant 0 : i32
    %c0_i32_0 = arith.constant 0 : i32
    %c0_i32_1 = arith.constant 0 : i32
    return %arg0, %c0_i32, %c0_i32_0 : i32, i32, i32
  }
}

</mosaic_0001>

<llo_original>
// kernel: stark_forward.1
$region0: #{stark_forward.1}
  #allocation0 [shape = 'u32[]', space=smem, size = 0x4, offset = 0x4, fixed_abs, tag = 'smem constant byte address 0x4 - core index']
  #allocation1 [shape = 'u32[144,128]{1,0:T(1,128)}', space=vmem, size = 0x12000, scoped, tag = 'internal scratch']
  %s0 = inlined_call_operand.smem [shape: u32[49], index: -1, kind: input, shape index: {}]
  %s1 = sld [smem:[%s0]]
  %s2 = scalar_lea.smem %s0, 1
  %s3 = sld [smem:[%s2]]
  %s4 = scalar_lea.smem %s0, 2
  %s5 = sld [smem:[%s4]]
  %s6 = scalar_lea.smem %s0, 3
  %s7 = sld [smem:[%s6]]
  %s8 = scalar_lea.smem %s0, 4
  %s9 = sld [smem:[%s8]]
  %s10 = scalar_lea.smem %s0, 5
  %s11 = sld [smem:[%s10]]
  %s12 = scalar_lea.smem %s0, 6
  %s13 = sld [smem:[%s12]]
  %s14 = scalar_lea.smem %s0, 7
  %s15 = sld [smem:[%s14]]
  %s16 = scalar_lea.smem %s0, 8
  %s17 = sld [smem:[%s16]]
  %s18 = scalar_lea.smem %s0, 9
  %s19 = sld [smem:[%s18]]
  %s20 = scalar_lea.smem %s0, 10
  %s21 = sld [smem:[%s20]]
  %s22 = scalar_lea.smem %s0, 11
  %s23 = sld [smem:[%s22]]
  %s24 = scalar_lea.smem %s0, 12
  %s25 = sld [smem:[%s24]]
  %s26 = scalar_lea.smem %s0, 13
  %s27 = sld [smem:[%s26]]
  %s28 = scalar_lea.smem %s0, 14
  %s29 = sld [smem:[%s28]]
  %s30 = scalar_lea.smem %s0, 15
  %s31 = sld [smem:[%s30]]
  %s32 = scalar_lea.smem %s0, 16
  %s33 = sld [smem:[%s32]]
  %s34 = scalar_lea.smem %s0, 17
  %s35 = sld [smem:[%s34]]
  %s36 = scalar_lea.smem %s0, 18
  %s37 = sld [smem:[%s36]]
  %s38 = scalar_lea.smem %s0, 19
  %s39 = sld [smem:[%s38]]
  %s40 = scalar_lea.smem %s0, 20
  %s41 = sld [smem:[%s40]]
  %s42 = scalar_lea.smem %s0, 21
  %s43 = sld [smem:[%s42]]
  %s44 = scalar_lea.smem %s0, 22
  %s45 = sld [smem:[%s44]]
  %s46 = scalar_lea.smem %s0, 23
  %s47 = sld [smem:[%s46]]
  %s48 = scalar_lea.smem %s0, 24
  %s49 = sld [smem:[%s48]]
  %s50 = scalar_lea.smem %s0, 25
  %s51 = sld [smem:[%s50]]
  %s52 = scalar_lea.smem %s0, 26
  %s53 = sld [smem:[%s52]]
  %s54 = scalar_lea.smem %s0, 27
  %s55 = sld [smem:[%s54]]
  %s56 = scalar_lea.smem %s0, 28
  %s57 = sld [smem:[%s56]]
  %s58 = scalar_lea.smem %s0, 29
  %s59 = sld [smem:[%s58]]
  %s60 = scalar_lea.smem %s0, 30
  %s61 = sld [smem:[%s60]]
  %s62 = scalar_lea.smem %s0, 31
  %s63 = sld [smem:[%s62]]
  %s64 = scalar_lea.smem %s0, 32
  %s65 = sld [smem:[%s64]]
  %s66 = scalar_lea.smem %s0, 33
  %s67 = sld [smem:[%s66]]
  %s68 = scalar_lea.smem %s0, 34
  %s69 = sld [smem:[%s68]]
  %s70 = scalar_lea.smem %s0, 35
  %s71 = sld [smem:[%s70]]
  %s72 = scalar_lea.smem %s0, 36
  %s73 = sld [smem:[%s72]]
  %s74 = scalar_lea.smem %s0, 37
  %s75 = sld [smem:[%s74]]
  %s76 = scalar_lea.smem %s0, 38
  %s77 = sld [smem:[%s76]]
  %s78 = scalar_lea.smem %s0, 39
  %s79 = sld [smem:[%s78]]
  %s80 = scalar_lea.smem %s0, 40
  %s81 = sld [smem:[%s80]]
  %s82 = scalar_lea.smem %s0, 41
  %s83 = sld [smem:[%s82]]
  %s84 = scalar_lea.smem %s0, 42
  %s85 = sld [smem:[%s84]]
  %s86 = scalar_lea.smem %s0, 43
  %s87 = sld [smem:[%s86]]
  %s88 = scalar_lea.smem %s0, 44
  %s89 = sld [smem:[%s88]]
  %s90 = scalar_lea.smem %s0, 45
  %s91 = sld [smem:[%s90]]
  %s92 = scalar_lea.smem %s0, 46
  %s93 = sld [smem:[%s92]]
  %s94 = scalar_lea.smem %s0, 47
  %s95 = sld [smem:[%s94]]
  %s96 = scalar_lea.smem %s0, 48
  %s97 = sld [smem:[%s96]]
  %98 = xla_tuple %s95, %s97
  %s99 = sld [smem:[#allocation0]]
  $region229: #{stark_forward.1} parent=0
    _
  %s101 = ssub.s32 1, %s99
  %s102 = scalar_select 0, %s101, %s99
  $region1: #{stark_forward.1} parent=0
    #allocation2 [shape = 'u8[1024]{0}', space=vmem, size = 0x400, scoped, tag = 'output window, operand 1']
    #allocation3 [shape = 's32[2]{0}', space=sflag, size = 0x8, scoped, tag = 'scoped memory for stark_forward.1']
    %103 = vsyncpa [#allocation3], 0
    %s104 = scalar_lea.sflag [#allocation3], 1
    %105 = vsyncpa %s104, 0
    loop: start=0, step=1, limit=4
    $region2: #{stark_forward.1} parent=1 // loop_pre_header
      _
    $region3: #{stark_forward.1} parent=1 // loop_header
      %s107 = sphi 0, %s111
      %p108 = scmp.ge.s32.totalorder %s107, 4
      %s117 = sphi 0, %s119
      %s120 = sphi 0, %s117
      %s121 = sphi 0, %s120
      %s137 = sphi 0, %s121
      %s143 = sphi 0, %s145
      %s146 = sphi 0, %s143
      %s147 = sphi 0, %s146
      %s163 = sphi 0, %s147
      %s169 = sphi 0, %s171
      %s172 = sphi 0, %s169
      %s173 = sphi 0, %s172
      %s189 = sphi 0, %s173
      %s193 = sphi 0, %s193
      %s195 = sphi 0, %s193
      %s196 = sphi 0, %s195
      %s210 = sphi 0, %s196
      %s214 = sphi 0, %s214
      %s216 = sphi 0, %s214
      %s217 = sphi 0, %s216
      %s231 = sphi 0, %s217
      %s235 = sphi 0, %s235
      %s237 = sphi 0, %s235
      %s238 = sphi 0, %s237
      %s252 = sphi 0, %s238
      %s256 = sphi 0, %s256
      %s258 = sphi 0, %s256
      %s259 = sphi 0, %s258
      %s273 = sphi 0, %s259
      %s277 = sphi 0, %s277
      %s279 = sphi 0, %s277
      %s280 = sphi 0, %s279
      %s294 = sphi 0, %s280
      %s298 = sphi 0, %s298
      %s300 = sphi 0, %s298
      %s301 = sphi 0, %s300
      %s315 = sphi 0, %s301
      %s319 = sphi 0, %s319
      %s321 = sphi 0, %s319
      %s322 = sphi 0, %s321
      %s336 = sphi 0, %s322
      %s340 = sphi 0, %s340
      %s342 = sphi 0, %s340
      %s343 = sphi 0, %s342
      %s357 = sphi 0, %s343
      %s361 = sphi 0, %s361
      %s363 = sphi 0, %s361
      %s364 = sphi 0, %s363
      %s378 = sphi 0, %s364
      %s382 = sphi 0, %s382
      %s384 = sphi 0, %s382
      %s385 = sphi 0, %s384
      %s399 = sphi 0, %s385
      %s403 = sphi 0, %s403
      %s405 = sphi 0, %s403
      %s406 = sphi 0, %s405
      %s420 = sphi 0, %s406
      %s424 = sphi 0, %s424
      %s426 = sphi 0, %s424
      %s427 = sphi 0, %s426
      %s441 = sphi 0, %s427
      %s445 = sphi 0, %s445
      %s447 = sphi 0, %s445
      %s448 = sphi 0, %s447
      %s462 = sphi 0, %s448
      %s466 = sphi 0, %s466
      %s468 = sphi 0, %s466
      %s469 = sphi 0, %s468
      %s483 = sphi 0, %s469
      %s487 = sphi 0, %s487
      %s489 = sphi 0, %s487
      %s490 = sphi 0, %s489
      %s504 = sphi 0, %s490
      %s508 = sphi 0, %s508
      %s510 = sphi 0, %s508
      %s511 = sphi 0, %s510
      %s525 = sphi 0, %s511
      %s529 = sphi 0, %s529
      %s531 = sphi 0, %s529
      %s532 = sphi 0, %s531
      %s546 = sphi 0, %s532
      %s550 = sphi 0, %s550
      %s552 = sphi 0, %s550
      %s553 = sphi 0, %s552
      %s567 = sphi 0, %s553
      %s571 = sphi 0, %s571
      %s573 = sphi 0, %s571
      %s574 = sphi 0, %s573
      %s588 = sphi 0, %s574
      %s592 = sphi 0, %s592
      %s594 = sphi 0, %s592
      %s595 = sphi 0, %s594
      %s609 = sphi 0, %s595
      %s613 = sphi 0, %s613
      %s615 = sphi 0, %s613
      %s616 = sphi 0, %s615
      %s630 = sphi 0, %s616
      %s634 = sphi 0, %s634
      %s636 = sphi 0, %s634
      %s637 = sphi 0, %s636
      %s651 = sphi 0, %s637
      %s655 = sphi 0, %s655
      %s657 = sphi 0, %s655
      %s658 = sphi 0, %s657
      %s672 = sphi 0, %s658
      %s676 = sphi 0, %s676
      %s678 = sphi 0, %s676
      %s679 = sphi 0, %s678
      %s693 = sphi 0, %s679
      %s697 = sphi 0, %s697
      %s699 = sphi 0, %s697
      %s700 = sphi 0, %s699
      %s714 = sphi 0, %s700
      %s718 = sphi 0, %s718
      %s720 = sphi 0, %s718
      %s721 = sphi 0, %s720
      %s735 = sphi 0, %s721
      %s739 = sphi 0, %s739
      %s741 = sphi 0, %s739
      %s742 = sphi 0, %s741
      %s756 = sphi 0, %s742
      %s760 = sphi 0, %s760
      %s762 = sphi 0, %s760
      %s763 = sphi 0, %s762
      %s777 = sphi 0, %s763
      %s781 = sphi 0, %s781
      %s783 = sphi 0, %s781
      %s784 = sphi 0, %s783
      %s798 = sphi 0, %s784
      %s802 = sphi 0, %s802
      %s804 = sphi 0, %s802
      %s805 = sphi 0, %s804
      %s819 = sphi 0, %s805
      %s823 = sphi 0, %s823
      %s825 = sphi 0, %s823
      %s826 = sphi 0, %s825
      %s840 = sphi 0, %s826
      %s844 = sphi 0, %s844
      %s846 = sphi 0, %s844
      %s847 = sphi 0, %s846
      %s861 = sphi 0, %s847
      %s865 = sphi 0, %s865
      %s867 = sphi 0, %s865
      %s868 = sphi 0, %s867
      %s882 = sphi 0, %s868
      %s886 = sphi 0, %s886
      %s888 = sphi 0, %s886
      %s889 = sphi 0, %s888
      %s903 = sphi 0, %s889
      %s907 = sphi 0, %s907
      %s909 = sphi 0, %s907
      %s910 = sphi 0, %s909
      %s924 = sphi 0, %s910
      %s928 = sphi 0, %s928
      %s930 = sphi 0, %s928
      %s931 = sphi 0, %s930
      %s945 = sphi 0, %s931
      %s949 = sphi 0, %s949
      %s951 = sphi 0, %s949
      %s952 = sphi 0, %s951
      %s966 = sphi 0, %s952
      %s970 = sphi 0, %s970
      %s972 = sphi 0, %s970
      %s973 = sphi 0, %s972
      %s987 = sphi 0, %s973
      %s991 = sphi 0, %s991
      %s993 = sphi 0, %s991
      %s994 = sphi 0, %s993
      %s1008 = sphi 0, %s994
      %s1012 = sphi 0, %s1012
      %s1014 = sphi 0, %s1012
      %s1015 = sphi 0, %s1014
      %s1029 = sphi 0, %s1015
      %s1033 = sphi 0, %s1033
      %s1035 = sphi 0, %s1033
      %s1036 = sphi 0, %s1035
      %s1050 = sphi 0, %s1036
      %s1054 = sphi 0, %s1054
      %s1056 = sphi 0, %s1054
      %s1057 = sphi 0, %s1056
      %s1071 = sphi 0, %s1057
      %s1075 = sphi 0, %s1075
      %s1077 = sphi 0, %s1075
      %s1078 = sphi 0, %s1077
      %s1092 = sphi 0, %s1078
      %s1096 = sphi 0, %s1096
      %s1098 = sphi 0, %s1096
      %s1099 = sphi 0, %s1098
      %s1113 = sphi 0, %s1099
      %s1119 = sphi 0, %s1121
      %s1122 = sphi 0, %s1119
      %s1123 = sphi 0, %s1122
      %s1139 = sphi 0, %s1123
      %s1145 = sphi 0, %s1147
      %s1148 = sphi 0, %s1145
      %s1149 = sphi 0, %s1148
      %s1165 = sphi 0, %s1149
    $region4: #{stark_forward.1} parent=1 // loop_header_branch
      %110 = sbr.rel (%p108) target = $region8
    $region5: #{stark_forward.1} parent=1 // loop_body
      %s112 = ssub.s32 %s107, 1
      %s113 = ssub.s32 %s107, 2
      %s114 = sadd.s32 %s107, 1
      %s115 = ssub.s32 %s107, %s114
      %p116 = scmp.eq.s32.totalorder %s115, 0
      %s118 = sadd.s32 %s117, 1
      %s119 = scalar_select %p116, %s117, %s118
      %p122 = pneg %p116
      %p123 = scmp.eq.s32.totalorder %s107, 1
      %p124 = por %p122, %p123
      %p125 = scmp.ne.s32.totalorder %s117, %s120
      %p126 = scmp.eq.s32.totalorder %s107, 0
      %p127 = por %p125, %p126
      %p128 = scmp.ne.s32.totalorder %s117, %s120
      %p129 = scmp.eq.s32.totalorder %s112, 1
      %p130 = por %p128, %p129
      %p131 = scmp.ne.s32.totalorder %s120, %s121
      %p132 = scmp.eq.s32.totalorder %s112, 0
      %p133 = por %p131, %p132
      %p134 = scmp.ne.s32.totalorder %s120, %s121
      %p135 = scmp.eq.s32.totalorder %s113, 1
      %p136 = por %p134, %p135
      %p138 = scmp.ne.s32.totalorder %s121, %s137
      %p139 = scmp.eq.s32.totalorder %s113, 0
      %p140 = por %p138, %p139
      %s141 = ssub.s32 %s107, %s114
      %p142 = scmp.eq.s32.totalorder %s141, 0
      %s144 = sadd.s32 %s143, 1
      %s145 = scalar_select %p142, %s143, %s144
      %p148 = pneg %p142
      %p149 = scmp.eq.s32.totalorder %s107, 1
      %p150 = por %p148, %p149
      %p151 = scmp.ne.s32.totalorder %s143, %s146
      %p152 = scmp.eq.s32.totalorder %s107, 0
      %p153 = por %p151, %p152
      %p154 = scmp.ne.s32.totalorder %s143, %s146
      %p155 = scmp.eq.s32.totalorder %s112, 1
      %p156 = por %p154, %p155
      %p157 = scmp.ne.s32.totalorder %s146, %s147
      %p158 = scmp.eq.s32.totalorder %s112, 0
      %p159 = por %p157, %p158
      %p160 = scmp.ne.s32.totalorder %s146, %s147
      %p161 = scmp.eq.s32.totalorder %s113, 1
      %p162 = por %p160, %p161
      %p164 = scmp.ne.s32.totalorder %s147, %s163
      %p165 = scmp.eq.s32.totalorder %s113, 0
      %p166 = por %p164, %p165
      %s167 = ssub.s32 %s107, %s114
      %p168 = scmp.eq.s32.totalorder %s167, 0
      %s170 = sadd.s32 %s169, 1
      %s171 = scalar_select %p168, %s169, %s170
      %p174 = pneg %p168
      %p175 = scmp.eq.s32.totalorder %s107, 1
      %p176 = por %p174, %p175
      %p177 = scmp.ne.s32.totalorder %s169, %s172
      %p178 = scmp.eq.s32.totalorder %s107, 0
      %p179 = por %p177, %p178
      %p180 = scmp.ne.s32.totalorder %s169, %s172
      %p181 = scmp.eq.s32.totalorder %s112, 1
      %p182 = por %p180, %p181
      %p183 = scmp.ne.s32.totalorder %s172, %s173
      %p184 = scmp.eq.s32.totalorder %s112, 0
      %p185 = por %p183, %p184
      %p186 = scmp.ne.s32.totalorder %s172, %s173
      %p187 = scmp.eq.s32.totalorder %s113, 1
      %p188 = por %p186, %p187
      %p190 = scmp.ne.s32.totalorder %s173, %s189
      %p191 = scmp.eq.s32.totalorder %s113, 0
      %p192 = por %p190, %p191
      %s194 = sadd.s32 %s193, 1
      %p197 = scmp.eq.s32.totalorder %s107, 1
      %p198 = scmp.ne.s32.totalorder %s193, %s195
      %p199 = scmp.eq.s32.totalorder %s107, 0
      %p200 = por %p198, %p199
      %p201 = scmp.ne.s32.totalorder %s193, %s195
      %p202 = scmp.eq.s32.totalorder %s112, 1
      %p203 = por %p201, %p202
      %p204 = scmp.ne.s32.totalorder %s195, %s196
      %p205 = scmp.eq.s32.totalorder %s112, 0
      %p206 = por %p204, %p205
      %p207 = scmp.ne.s32.totalorder %s195, %s196
      %p208 = scmp.eq.s32.totalorder %s113, 1
      %p209 = por %p207, %p208
      %p211 = scmp.ne.s32.totalorder %s196, %s210
      %p212 = scmp.eq.s32.totalorder %s113, 0
      %p213 = por %p211, %p212
      %s215 = sadd.s32 %s214, 1
      %p218 = scmp.eq.s32.totalorder %s107, 1
      %p219 = scmp.ne.s32.totalorder %s214, %s216
      %p220 = scmp.eq.s32.totalorder %s107, 0
      %p221 = por %p219, %p220
      %p222 = scmp.ne.s32.totalorder %s214, %s216
      %p223 = scmp.eq.s32.totalorder %s112, 1
      %p224 = por %p222, %p223
      %p225 = scmp.ne.s32.totalorder %s216, %s217
      %p226 = scmp.eq.s32.totalorder %s112, 0
      %p227 = por %p225, %p226
      %p228 = scmp.ne.s32.totalorder %s216, %s217
      %p229 = scmp.eq.s32.totalorder %s113, 1
      %p230 = por %p228, %p229
      %p232 = scmp.ne.s32.totalorder %s217, %s231
      %p233 = scmp.eq.s32.totalorder %s113, 0
      %p234 = por %p232, %p233
      %s236 = sadd.s32 %s235, 1
      %p239 = scmp.eq.s32.totalorder %s107, 1
      %p240 = scmp.ne.s32.totalorder %s235, %s237
      %p241 = scmp.eq.s32.totalorder %s107, 0
      %p242 = por %p240, %p241
      %p243 = scmp.ne.s32.totalorder %s235, %s237
      %p244 = scmp.eq.s32.totalorder %s112, 1
      %p245 = por %p243, %p244
      %p246 = scmp.ne.s32.totalorder %s237, %s238
      %p247 = scmp.eq.s32.totalorder %s112, 0
      %p248 = por %p246, %p247
      %p249 = scmp.ne.s32.totalorder %s237, %s238
      %p250 = scmp.eq.s32.totalorder %s113, 1
      %p251 = por %p249, %p250
      %p253 = scmp.ne.s32.totalorder %s238, %s252
      %p254 = scmp.eq.s32.totalorder %s113, 0
      %p255 = por %p253, %p254
      %s257 = sadd.s32 %s256, 1
      %p260 = scmp.eq.s32.totalorder %s107, 1
      %p261 = scmp.ne.s32.totalorder %s256, %s258
      %p262 = scmp.eq.s32.totalorder %s107, 0
      %p263 = por %p261, %p262
      %p264 = scmp.ne.s32.totalorder %s256, %s258
      %p265 = scmp.eq.s32.totalorder %s112, 1
      %p266 = por %p264, %p265
      %p267 = scmp.ne.s32.totalorder %s258, %s259
      %p268 = scmp.eq.s32.totalorder %s112, 0
      %p269 = por %p267, %p268
      %p270 = scmp.ne.s32.totalorder %s258, %s259
      %p271 = scmp.eq.s32.totalorder %s113, 1
      %p272 = por %p270, %p271
      %p274 = scmp.ne.s32.totalorder %s259, %s273
      %p275 = scmp.eq.s32.totalorder %s113, 0
      %p276 = por %p274, %p275
      %s278 = sadd.s32 %s277, 1
      %p281 = scmp.eq.s32.totalorder %s107, 1
      %p282 = scmp.ne.s32.totalorder %s277, %s279
      %p283 = scmp.eq.s32.totalorder %s107, 0
      %p284 = por %p282, %p283
      %p285 = scmp.ne.s32.totalorder %s277, %s279
      %p286 = scmp.eq.s32.totalorder %s112, 1
      %p287 = por %p285, %p286
      %p288 = scmp.ne.s32.totalorder %s279, %s280
      %p289 = scmp.eq.s32.totalorder %s112, 0
      %p290 = por %p288, %p289
      %p291 = scmp.ne.s32.totalorder %s279, %s280
      %p292 = scmp.eq.s32.totalorder %s113, 1
      %p293 = por %p291, %p292
      %p295 = scmp.ne.s32.totalorder %s280, %s294
      %p296 = scmp.eq.s32.totalorder %s113, 0
      %p297 = por %p295, %p296
      %s299 = sadd.s32 %s298, 1
      %p302 = scmp.eq.s32.totalorder %s107, 1
      %p303 = scmp.ne.s32.totalorder %s298, %s300
      %p304 = scmp.eq.s32.totalorder %s107, 0
      %p305 = por %p303, %p304
      %p306 = scmp.ne.s32.totalorder %s298, %s300
      %p307 = scmp.eq.s32.totalorder %s112, 1
      %p308 = por %p306, %p307
      %p309 = scmp.ne.s32.totalorder %s300, %s301
      %p310 = scmp.eq.s32.totalorder %s112, 0
      %p311 = por %p309, %p310
      %p312 = scmp.ne.s32.totalorder %s300, %s301
      %p313 = scmp.eq.s32.totalorder %s113, 1
      %p314 = por %p312, %p313
      %p316 = scmp.ne.s32.totalorder %s301, %s315
      %p317 = scmp.eq.s32.totalorder %s113, 0
      %p318 = por %p316, %p317
      %s320 = sadd.s32 %s319, 1
      %p323 = scmp.eq.s32.totalorder %s107, 1
      %p324 = scmp.ne.s32.totalorder %s319, %s321
      %p325 = scmp.eq.s32.totalorder %s107, 0
      %p326 = por %p324, %p325
      %p327 = scmp.ne.s32.totalorder %s319, %s321
      %p328 = scmp.eq.s32.totalorder %s112, 1
      %p329 = por %p327, %p328
      %p330 = scmp.ne.s32.totalorder %s321, %s322
      %p331 = scmp.eq.s32.totalorder %s112, 0
      %p332 = por %p330, %p331
      %p333 = scmp.ne.s32.totalorder %s321, %s322
      %p334 = scmp.eq.s32.totalorder %s113, 1
      %p335 = por %p333, %p334
      %p337 = scmp.ne.s32.totalorder %s322, %s336
      %p338 = scmp.eq.s32.totalorder %s113, 0
      %p339 = por %p337, %p338
      %s341 = sadd.s32 %s340, 1
      %p344 = scmp.eq.s32.totalorder %s107, 1
      %p345 = scmp.ne.s32.totalorder %s340, %s342
      %p346 = scmp.eq.s32.totalorder %s107, 0
      %p347 = por %p345, %p346
      %p348 = scmp.ne.s32.totalorder %s340, %s342
      %p349 = scmp.eq.s32.totalorder %s112, 1
      %p350 = por %p348, %p349
      %p351 = scmp.ne.s32.totalorder %s342, %s343
      %p352 = scmp.eq.s32.totalorder %s112, 0
      %p353 = por %p351, %p352
      %p354 = scmp.ne.s32.totalorder %s342, %s343
      %p355 = scmp.eq.s32.totalorder %s113, 1
      %p356 = por %p354, %p355
      %p358 = scmp.ne.s32.totalorder %s343, %s357
      %p359 = scmp.eq.s32.totalorder %s113, 0
      %p360 = por %p358, %p359
      %s362 = sadd.s32 %s361, 1
      %p365 = scmp.eq.s32.totalorder %s107, 1
      %p366 = scmp.ne.s32.totalorder %s361, %s363
      %p367 = scmp.eq.s32.totalorder %s107, 0
      %p368 = por %p366, %p367
      %p369 = scmp.ne.s32.totalorder %s361, %s363
      %p370 = scmp.eq.s32.totalorder %s112, 1
      %p371 = por %p369, %p370
      %p372 = scmp.ne.s32.totalorder %s363, %s364
      %p373 = scmp.eq.s32.totalorder %s112, 0
      %p374 = por %p372, %p373
      %p375 = scmp.ne.s32.totalorder %s363, %s364
      %p376 = scmp.eq.s32.totalorder %s113, 1
      %p377 = por %p375, %p376
      %p379 = scmp.ne.s32.totalorder %s364, %s378
      %p380 = scmp.eq.s32.totalorder %s113, 0
      %p381 = por %p379, %p380
      %s383 = sadd.s32 %s382, 1
      %p386 = scmp.eq.s32.totalorder %s107, 1
      %p387 = scmp.ne.s32.totalorder %s382, %s384
      %p388 = scmp.eq.s32.totalorder %s107, 0
      %p389 = por %p387, %p388
      %p390 = scmp.ne.s32.totalorder %s382, %s384
      %p391 = scmp.eq.s32.totalorder %s112, 1
      %p392 = por %p390, %p391
      %p393 = scmp.ne.s32.totalorder %s384, %s385
      %p394 = scmp.eq.s32.totalorder %s112, 0
      %p395 = por %p393, %p394
      %p396 = scmp.ne.s32.totalorder %s384, %s385
      %p397 = scmp.eq.s32.totalorder %s113, 1
      %p398 = por %p396, %p397
      %p400 = scmp.ne.s32.totalorder %s385, %s399
      %p401 = scmp.eq.s32.totalorder %s113, 0
      %p402 = por %p400, %p401
      %s404 = sadd.s32 %s403, 1
      %p407 = scmp.eq.s32.totalorder %s107, 1
      %p408 = scmp.ne.s32.totalorder %s403, %s405
      %p409 = scmp.eq.s32.totalorder %s107, 0
      %p410 = por %p408, %p409
      %p411 = scmp.ne.s32.totalorder %s403, %s405
      %p412 = scmp.eq.s32.totalorder %s112, 1
      %p413 = por %p411, %p412
      %p414 = scmp.ne.s32.totalorder %s405, %s406
      %p415 = scmp.eq.s32.totalorder %s112, 0
      %p416 = por %p414, %p415
      %p417 = scmp.ne.s32.totalorder %s405, %s406
      %p418 = scmp.eq.s32.totalorder %s113, 1
      %p419 = por %p417, %p418
      %p421 = scmp.ne.s32.totalorder %s406, %s420
      %p422 = scmp.eq.s32.totalorder %s113, 0
      %p423 = por %p421, %p422
      %s425 = sadd.s32 %s424, 1
      %p428 = scmp.eq.s32.totalorder %s107, 1
      %p429 = scmp.ne.s32.totalorder %s424, %s426
      %p430 = scmp.eq.s32.totalorder %s107, 0
      %p431 = por %p429, %p430
      %p432 = scmp.ne.s32.totalorder %s424, %s426
      %p433 = scmp.eq.s32.totalorder %s112, 1
      %p434 = por %p432, %p433
      %p435 = scmp.ne.s32.totalorder %s426, %s427
      %p436 = scmp.eq.s32.totalorder %s112, 0
      %p437 = por %p435, %p436
      %p438 = scmp.ne.s32.totalorder %s426, %s427
      %p439 = scmp.eq.s32.totalorder %s113, 1
      %p440 = por %p438, %p439
      %p442 = scmp.ne.s32.totalorder %s427, %s441
      %p443 = scmp.eq.s32.totalorder %s113, 0
      %p444 = por %p442, %p443
      %s446 = sadd.s32 %s445, 1
      %p449 = scmp.eq.s32.totalorder %s107, 1
      %p450 = scmp.ne.s32.totalorder %s445, %s447
      %p451 = scmp.eq.s32.totalorder %s107, 0
      %p452 = por %p450, %p451
      %p453 = scmp.ne.s32.totalorder %s445, %s447
      %p454 = scmp.eq.s32.totalorder %s112, 1
      %p455 = por %p453, %p454
      %p456 = scmp.ne.s32.totalorder %s447, %s448
      %p457 = scmp.eq.s32.totalorder %s112, 0
      %p458 = por %p456, %p457
      %p459 = scmp.ne.s32.totalorder %s447, %s448
      %p460 = scmp.eq.s32.totalorder %s113, 1
      %p461 = por %p459, %p460
      %p463 = scmp.ne.s32.totalorder %s448, %s462
      %p464 = scmp.eq.s32.totalorder %s113, 0
      %p465 = por %p463, %p464
      %s467 = sadd.s32 %s466, 1
      %p470 = scmp.eq.s32.totalorder %s107, 1
      %p471 = scmp.ne.s32.totalorder %s466, %s468
      %p472 = scmp.eq.s32.totalorder %s107, 0
      %p473 = por %p471, %p472
      %p474 = scmp.ne.s32.totalorder %s466, %s468
      %p475 = scmp.eq.s32.totalorder %s112, 1
      %p476 = por %p474, %p475
      %p477 = scmp.ne.s32.totalorder %s468, %s469
      %p478 = scmp.eq.s32.totalorder %s112, 0
      %p479 = por %p477, %p478
      %p480 = scmp.ne.s32.totalorder %s468, %s469
      %p481 = scmp.eq.s32.totalorder %s113, 1
      %p482 = por %p480, %p481
      %p484 = scmp.ne.s32.totalorder %s469, %s483
      %p485 = scmp.eq.s32.totalorder %s113, 0
      %p486 = por %p484, %p485
      %s488 = sadd.s32 %s487, 1
      %p491 = scmp.eq.s32.totalorder %s107, 1
      %p492 = scmp.ne.s32.totalorder %s487, %s489
      %p493 = scmp.eq.s32.totalorder %s107, 0
      %p494 = por %p492, %p493
      %p495 = scmp.ne.s32.totalorder %s487, %s489
      %p496 = scmp.eq.s32.totalorder %s112, 1
      %p497 = por %p495, %p496
      %p498 = scmp.ne.s32.totalorder %s489, %s490
      %p499 = scmp.eq.s32.totalorder %s112, 0
      %p500 = por %p498, %p499
      %p501 = scmp.ne.s32.totalorder %s489, %s490
      %p502 = scmp.eq.s32.totalorder %s113, 1
      %p503 = por %p501, %p502
      %p505 = scmp.ne.s32.totalorder %s490, %s504
      %p506 = scmp.eq.s32.totalorder %s113, 0
      %p507 = por %p505, %p506
      %s509 = sadd.s32 %s508, 1
      %p512 = scmp.eq.s32.totalorder %s107, 1
      %p513 = scmp.ne.s32.totalorder %s508, %s510
      %p514 = scmp.eq.s32.totalorder %s107, 0
      %p515 = por %p513, %p514
      %p516 = scmp.ne.s32.totalorder %s508, %s510
      %p517 = scmp.eq.s32.totalorder %s112, 1
      %p518 = por %p516, %p517
      %p519 = scmp.ne.s32.totalorder %s510, %s511
      %p520 = scmp.eq.s32.totalorder %s112, 0
      %p521 = por %p519, %p520
      %p522 = scmp.ne.s32.totalorder %s510, %s511
      %p523 = scmp.eq.s32.totalorder %s113, 1
      %p524 = por %p522, %p523
      %p526 = scmp.ne.s32.totalorder %s511, %s525
      %p527 = scmp.eq.s32.totalorder %s113, 0
      %p528 = por %p526, %p527
      %s530 = sadd.s32 %s529, 1
      %p533 = scmp.eq.s32.totalorder %s107, 1
      %p534 = scmp.ne.s32.totalorder %s529, %s531
      %p535 = scmp.eq.s32.totalorder %s107, 0
      %p536 = por %p534, %p535
      %p537 = scmp.ne.s32.totalorder %s529, %s531
      %p538 = scmp.eq.s32.totalorder %s112, 1
      %p539 = por %p537, %p538
      %p540 = scmp.ne.s32.totalorder %s531, %s532
      %p541 = scmp.eq.s32.totalorder %s112, 0
      %p542 = por %p540, %p541
      %p543 = scmp.ne.s32.totalorder %s531, %s532
      %p544 = scmp.eq.s32.totalorder %s113, 1
      %p545 = por %p543, %p544
      %p547 = scmp.ne.s32.totalorder %s532, %s546
      %p548 = scmp.eq.s32.totalorder %s113, 0
      %p549 = por %p547, %p548
      %s551 = sadd.s32 %s550, 1
      %p554 = scmp.eq.s32.totalorder %s107, 1
      %p555 = scmp.ne.s32.totalorder %s550, %s552
      %p556 = scmp.eq.s32.totalorder %s107, 0
      %p557 = por %p555, %p556
      %p558 = scmp.ne.s32.totalorder %s550, %s552
      %p559 = scmp.eq.s32.totalorder %s112, 1
      %p560 = por %p558, %p559
      %p561 = scmp.ne.s32.totalorder %s552, %s553
      %p562 = scmp.eq.s32.totalorder %s112, 0
      %p563 = por %p561, %p562
      %p564 = scmp.ne.s32.totalorder %s552, %s553
      %p565 = scmp.eq.s32.totalorder %s113, 1
      %p566 = por %p564, %p565
      %p568 = scmp.ne.s32.totalorder %s553, %s567
      %p569 = scmp.eq.s32.totalorder %s113, 0
      %p570 = por %p568, %p569
      %s572 = sadd.s32 %s571, 1
      %p575 = scmp.eq.s32.totalorder %s107, 1
      %p576 = scmp.ne.s32.totalorder %s571, %s573
      %p577 = scmp.eq.s32.totalorder %s107, 0
      %p578 = por %p576, %p577
      %p579 = scmp.ne.s32.totalorder %s571, %s573
      %p580 = scmp.eq.s32.totalorder %s112, 1
      %p581 = por %p579, %p580
      %p582 = scmp.ne.s32.totalorder %s573, %s574
      %p583 = scmp.eq.s32.totalorder %s112, 0
      %p584 = por %p582, %p583
      %p585 = scmp.ne.s32.totalorder %s573, %s574
      %p586 = scmp.eq.s32.totalorder %s113, 1
      %p587 = por %p585, %p586
      %p589 = scmp.ne.s32.totalorder %s574, %s588
      %p590 = scmp.eq.s32.totalorder %s113, 0
      %p591 = por %p589, %p590
      %s593 = sadd.s32 %s592, 1
      %p596 = scmp.eq.s32.totalorder %s107, 1
      %p597 = scmp.ne.s32.totalorder %s592, %s594
      %p598 = scmp.eq.s32.totalorder %s107, 0
      %p599 = por %p597, %p598
      %p600 = scmp.ne.s32.totalorder %s592, %s594
      %p601 = scmp.eq.s32.totalorder %s112, 1
      %p602 = por %p600, %p601
      %p603 = scmp.ne.s32.totalorder %s594, %s595
      %p604 = scmp.eq.s32.totalorder %s112, 0
      %p605 = por %p603, %p604
      %p606 = scmp.ne.s32.totalorder %s594, %s595
      %p607 = scmp.eq.s32.totalorder %s113, 1
      %p608 = por %p606, %p607
      %p610 = scmp.ne.s32.totalorder %s595, %s609
      %p611 = scmp.eq.s32.totalorder %s113, 0
      %p612 = por %p610, %p611
      %s614 = sadd.s32 %s613, 1
      %p617 = scmp.eq.s32.totalorder %s107, 1
      %p618 = scmp.ne.s32.totalorder %s613, %s615
      %p619 = scmp.eq.s32.totalorder %s107, 0
      %p620 = por %p618, %p619
      %p621 = scmp.ne.s32.totalorder %s613, %s615
      %p622 = scmp.eq.s32.totalorder %s112, 1
      %p623 = por %p621, %p622
      %p624 = scmp.ne.s32.totalorder %s615, %s616
      %p625 = scmp.eq.s32.totalorder %s112, 0
      %p626 = por %p624, %p625
      %p627 = scmp.ne.s32.totalorder %s615, %s616
      %p628 = scmp.eq.s32.totalorder %s113, 1
      %p629 = por %p627, %p628
      %p631 = scmp.ne.s32.totalorder %s616, %s630
      %p632 = scmp.eq.s32.totalorder %s113, 0
      %p633 = por %p631, %p632
      %s635 = sadd.s32 %s634, 1
      %p638 = scmp.eq.s32.totalorder %s107, 1
      %p639 = scmp.ne.s32.totalorder %s634, %s636
      %p640 = scmp.eq.s32.totalorder %s107, 0
      %p641 = por %p639, %p640
      %p642 = scmp.ne.s32.totalorder %s634, %s636
      %p643 = scmp.eq.s32.totalorder %s112, 1
      %p644 = por %p642, %p643
      %p645 = scmp.ne.s32.totalorder %s636, %s637
      %p646 = scmp.eq.s32.totalorder %s112, 0
      %p647 = por %p645, %p646
      %p648 = scmp.ne.s32.totalorder %s636, %s637
      %p649 = scmp.eq.s32.totalorder %s113, 1
      %p650 = por %p648, %p649
      %p652 = scmp.ne.s32.totalorder %s637, %s651
      %p653 = scmp.eq.s32.totalorder %s113, 0
      %p654 = por %p652, %p653
      %s656 = sadd.s32 %s655, 1
      %p659 = scmp.eq.s32.totalorder %s107, 1
      %p660 = scmp.ne.s32.totalorder %s655, %s657
      %p661 = scmp.eq.s32.totalorder %s107, 0
      %p662 = por %p660, %p661
      %p663 = scmp.ne.s32.totalorder %s655, %s657
      %p664 = scmp.eq.s32.totalorder %s112, 1
      %p665 = por %p663, %p664
      %p666 = scmp.ne.s32.totalorder %s657, %s658
      %p667 = scmp.eq.s32.totalorder %s112, 0
      %p668 = por %p666, %p667
      %p669 = scmp.ne.s32.totalorder %s657, %s658
      %p670 = scmp.eq.s32.totalorder %s113, 1
      %p671 = por %p669, %p670
      %p673 = scmp.ne.s32.totalorder %s658, %s672
      %p674 = scmp.eq.s32.totalorder %s113, 0
      %p675 = por %p673, %p674
      %s677 = sadd.s32 %s676, 1
      %p680 = scmp.eq.s32.totalorder %s107, 1
      %p681 = scmp.ne.s32.totalorder %s676, %s678
      %p682 = scmp.eq.s32.totalorder %s107, 0
      %p683 = por %p681, %p682
      %p684 = scmp.ne.s32.totalorder %s676, %s678
      %p685 = scmp.eq.s32.totalorder %s112, 1
      %p686 = por %p684, %p685
      %p687 = scmp.ne.s32.totalorder %s678, %s679
      %p688 = scmp.eq.s32.totalorder %s112, 0
      %p689 = por %p687, %p688
      %p690 = scmp.ne.s32.totalorder %s678, %s679
      %p691 = scmp.eq.s32.totalorder %s113, 1
      %p692 = por %p690, %p691
      %p694 = scmp.ne.s32.totalorder %s679, %s693
      %p695 = scmp.eq.s32.totalorder %s113, 0
      %p696 = por %p694, %p695
      %s698 = sadd.s32 %s697, 1
      %p701 = scmp.eq.s32.totalorder %s107, 1
      %p702 = scmp.ne.s32.totalorder %s697, %s699
      %p703 = scmp.eq.s32.totalorder %s107, 0
      %p704 = por %p702, %p703
      %p705 = scmp.ne.s32.totalorder %s697, %s699
      %p706 = scmp.eq.s32.totalorder %s112, 1
      %p707 = por %p705, %p706
      %p708 = scmp.ne.s32.totalorder %s699, %s700
      %p709 = scmp.eq.s32.totalorder %s112, 0
      %p710 = por %p708, %p709
      %p711 = scmp.ne.s32.totalorder %s699, %s700
      %p712 = scmp.eq.s32.totalorder %s113, 1
      %p713 = por %p711, %p712
      %p715 = scmp.ne.s32.totalorder %s700, %s714
      %p716 = scmp.eq.s32.totalorder %s113, 0
      %p717 = por %p715, %p716
      %s719 = sadd.s32 %s718, 1
      %p722 = scmp.eq.s32.totalorder %s107, 1
      %p723 = scmp.ne.s32.totalorder %s718, %s720
      %p724 = scmp.eq.s32.totalorder %s107, 0
      %p725 = por %p723, %p724
      %p726 = scmp.ne.s32.totalorder %s718, %s720
      %p727 = scmp.eq.s32.totalorder %s112, 1
      %p728 = por %p726, %p727
      %p729 = scmp.ne.s32.totalorder %s720, %s721
      %p730 = scmp.eq.s32.totalorder %s112, 0
      %p731 = por %p729, %p730
      %p732 = scmp.ne.s32.totalorder %s720, %s721
      %p733 = scmp.eq.s32.totalorder %s113, 1
      %p734 = por %p732, %p733
      %p736 = scmp.ne.s32.totalorder %s721, %s735
      %p737 = scmp.eq.s32.totalorder %s113, 0
      %p738 = por %p736, %p737
      %s740 = sadd.s32 %s739, 1
      %p743 = scmp.eq.s32.totalorder %s107, 1
      %p744 = scmp.ne.s32.totalorder %s739, %s741
      %p745 = scmp.eq.s32.totalorder %s107, 0
      %p746 = por %p744, %p745
      %p747 = scmp.ne.s32.totalorder %s739, %s741
      %p748 = scmp.eq.s32.totalorder %s112, 1
      %p749 = por %p747, %p748
      %p750 = scmp.ne.s32.totalorder %s741, %s742
      %p751 = scmp.eq.s32.totalorder %s112, 0
      %p752 = por %p750, %p751
      %p753 = scmp.ne.s32.totalorder %s741, %s742
      %p754 = scmp.eq.s32.totalorder %s113, 1
      %p755 = por %p753, %p754
      %p757 = scmp.ne.s32.totalorder %s742, %s756
      %p758 = scmp.eq.s32.totalorder %s113, 0
      %p759 = por %p757, %p758
      %s761 = sadd.s32 %s760, 1
      %p764 = scmp.eq.s32.totalorder %s107, 1
      %p765 = scmp.ne.s32.totalorder %s760, %s762
      %p766 = scmp.eq.s32.totalorder %s107, 0
      %p767 = por %p765, %p766
      %p768 = scmp.ne.s32.totalorder %s760, %s762
      %p769 = scmp.eq.s32.totalorder %s112, 1
      %p770 = por %p768, %p769
      %p771 = scmp.ne.s32.totalorder %s762, %s763
      %p772 = scmp.eq.s32.totalorder %s112, 0
      %p773 = por %p771, %p772
      %p774 = scmp.ne.s32.totalorder %s762, %s763
      %p775 = scmp.eq.s32.totalorder %s113, 1
      %p776 = por %p774, %p775
      %p778 = scmp.ne.s32.totalorder %s763, %s777
      %p779 = scmp.eq.s32.totalorder %s113, 0
      %p780 = por %p778, %p779
      %s782 = sadd.s32 %s781, 1
      %p785 = scmp.eq.s32.totalorder %s107, 1
      %p786 = scmp.ne.s32.totalorder %s781, %s783
      %p787 = scmp.eq.s32.totalorder %s107, 0
      %p788 = por %p786, %p787
      %p789 = scmp.ne.s32.totalorder %s781, %s783
      %p790 = scmp.eq.s32.totalorder %s112, 1
      %p791 = por %p789, %p790
      %p792 = scmp.ne.s32.totalorder %s783, %s784
      %p793 = scmp.eq.s32.totalorder %s112, 0
      %p794 = por %p792, %p793
      %p795 = scmp.ne.s32.totalorder %s783, %s784
      %p796 = scmp.eq.s32.totalorder %s113, 1
      %p797 = por %p795, %p796
      %p799 = scmp.ne.s32.totalorder %s784, %s798
      %p800 = scmp.eq.s32.totalorder %s113, 0
      %p801 = por %p799, %p800
      %s803 = sadd.s32 %s802, 1
      %p806 = scmp.eq.s32.totalorder %s107, 1
      %p807 = scmp.ne.s32.totalorder %s802, %s804
      %p808 = scmp.eq.s32.totalorder %s107, 0
      %p809 = por %p807, %p808
      %p810 = scmp.ne.s32.totalorder %s802, %s804
      %p811 = scmp.eq.s32.totalorder %s112, 1
      %p812 = por %p810, %p811
      %p813 = scmp.ne.s32.totalorder %s804, %s805
      %p814 = scmp.eq.s32.totalorder %s112, 0
      %p815 = por %p813, %p814
      %p816 = scmp.ne.s32.totalorder %s804, %s805
      %p817 = scmp.eq.s32.totalorder %s113, 1
      %p818 = por %p816, %p817
      %p820 = scmp.ne.s32.totalorder %s805, %s819
      %p821 = scmp.eq.s32.totalorder %s113, 0
      %p822 = por %p820, %p821
      %s824 = sadd.s32 %s823, 1
      %p827 = scmp.eq.s32.totalorder %s107, 1
      %p828 = scmp.ne.s32.totalorder %s823, %s825
      %p829 = scmp.eq.s32.totalorder %s107, 0
      %p830 = por %p828, %p829
      %p831 = scmp.ne.s32.totalorder %s823, %s825
      %p832 = scmp.eq.s32.totalorder %s112, 1
      %p833 = por %p831, %p832
      %p834 = scmp.ne.s32.totalorder %s825, %s826
      %p835 = scmp.eq.s32.totalorder %s112, 0
      %p836 = por %p834, %p835
      %p837 = scmp.ne.s32.totalorder %s825, %s826
      %p838 = scmp.eq.s32.totalorder %s113, 1
      %p839 = por %p837, %p838
      %p841 = scmp.ne.s32.totalorder %s826, %s840
      %p842 = scmp.eq.s32.totalorder %s113, 0
      %p843 = por %p841, %p842
      %s845 = sadd.s32 %s844, 1
      %p848 = scmp.eq.s32.totalorder %s107, 1
      %p849 = scmp.ne.s32.totalorder %s844, %s846
      %p850 = scmp.eq.s32.totalorder %s107, 0
      %p851 = por %p849, %p850
      %p852 = scmp.ne.s32.totalorder %s844, %s846
      %p853 = scmp.eq.s32.totalorder %s112, 1
      %p854 = por %p852, %p853
      %p855 = scmp.ne.s32.totalorder %s846, %s847
      %p856 = scmp.eq.s32.totalorder %s112, 0
      %p857 = por %p855, %p856
      %p858 = scmp.ne.s32.totalorder %s846, %s847
      %p859 = scmp.eq.s32.totalorder %s113, 1
      %p860 = por %p858, %p859
      %p862 = scmp.ne.s32.totalorder %s847, %s861
      %p863 = scmp.eq.s32.totalorder %s113, 0
      %p864 = por %p862, %p863
      %s866 = sadd.s32 %s865, 1
      %p869 = scmp.eq.s32.totalorder %s107, 1
      %p870 = scmp.ne.s32.totalorder %s865, %s867
      %p871 = scmp.eq.s32.totalorder %s107, 0
      %p872 = por %p870, %p871
      %p873 = scmp.ne.s32.totalorder %s865, %s867
      %p874 = scmp.eq.s32.totalorder %s112, 1
      %p875 = por %p873, %p874
      %p876 = scmp.ne.s32.totalorder %s867, %s868
      %p877 = scmp.eq.s32.totalorder %s112, 0
      %p878 = por %p876, %p877
      %p879 = scmp.ne.s32.totalorder %s867, %s868
      %p880 = scmp.eq.s32.totalorder %s113, 1
      %p881 = por %p879, %p880
      %p883 = scmp.ne.s32.totalorder %s868, %s882
      %p884 = scmp.eq.s32.totalorder %s113, 0
      %p885 = por %p883, %p884
      %s887 = sadd.s32 %s886, 1
      %p890 = scmp.eq.s32.totalorder %s107, 1
      %p891 = scmp.ne.s32.totalorder %s886, %s888
      %p892 = scmp.eq.s32.totalorder %s107, 0
      %p893 = por %p891, %p892
      %p894 = scmp.ne.s32.totalorder %s886, %s888
      %p895 = scmp.eq.s32.totalorder %s112, 1
      %p896 = por %p894, %p895
      %p897 = scmp.ne.s32.totalorder %s888, %s889
      %p898 = scmp.eq.s32.totalorder %s112, 0
      %p899 = por %p897, %p898
      %p900 = scmp.ne.s32.totalorder %s888, %s889
      %p901 = scmp.eq.s32.totalorder %s113, 1
      %p902 = por %p900, %p901
      %p904 = scmp.ne.s32.totalorder %s889, %s903
      %p905 = scmp.eq.s32.totalorder %s113, 0
      %p906 = por %p904, %p905
      %s908 = sadd.s32 %s907, 1
      %p911 = scmp.eq.s32.totalorder %s107, 1
      %p912 = scmp.ne.s32.totalorder %s907, %s909
      %p913 = scmp.eq.s32.totalorder %s107, 0
      %p914 = por %p912, %p913
      %p915 = scmp.ne.s32.totalorder %s907, %s909
      %p916 = scmp.eq.s32.totalorder %s112, 1
      %p917 = por %p915, %p916
      %p918 = scmp.ne.s32.totalorder %s909, %s910
      %p919 = scmp.eq.s32.totalorder %s112, 0
      %p920 = por %p918, %p919
      %p921 = scmp.ne.s32.totalorder %s909, %s910
      %p922 = scmp.eq.s32.totalorder %s113, 1
      %p923 = por %p921, %p922
      %p925 = scmp.ne.s32.totalorder %s910, %s924
      %p926 = scmp.eq.s32.totalorder %s113, 0
      %p927 = por %p925, %p926
      %s929 = sadd.s32 %s928, 1
      %p932 = scmp.eq.s32.totalorder %s107, 1
      %p933 = scmp.ne.s32.totalorder %s928, %s930
      %p934 = scmp.eq.s32.totalorder %s107, 0
      %p935 = por %p933, %p934
      %p936 = scmp.ne.s32.totalorder %s928, %s930
      %p937 = scmp.eq.s32.totalorder %s112, 1
      %p938 = por %p936, %p937
      %p939 = scmp.ne.s32.totalorder %s930, %s931
      %p940 = scmp.eq.s32.totalorder %s112, 0
      %p941 = por %p939, %p940
      %p942 = scmp.ne.s32.totalorder %s930, %s931
      %p943 = scmp.eq.s32.totalorder %s113, 1
      %p944 = por %p942, %p943
      %p946 = scmp.ne.s32.totalorder %s931, %s945
      %p947 = scmp.eq.s32.totalorder %s113, 0
      %p948 = por %p946, %p947
      %s950 = sadd.s32 %s949, 1
      %p953 = scmp.eq.s32.totalorder %s107, 1
      %p954 = scmp.ne.s32.totalorder %s949, %s951
      %p955 = scmp.eq.s32.totalorder %s107, 0
      %p956 = por %p954, %p955
      %p957 = scmp.ne.s32.totalorder %s949, %s951
      %p958 = scmp.eq.s32.totalorder %s112, 1
      %p959 = por %p957, %p958
      %p960 = scmp.ne.s32.totalorder %s951, %s952
      %p961 = scmp.eq.s32.totalorder %s112, 0
      %p962 = por %p960, %p961
      %p963 = scmp.ne.s32.totalorder %s951, %s952
      %p964 = scmp.eq.s32.totalorder %s113, 1
      %p965 = por %p963, %p964
      %p967 = scmp.ne.s32.totalorder %s952, %s966
      %p968 = scmp.eq.s32.totalorder %s113, 0
      %p969 = por %p967, %p968
      %s971 = sadd.s32 %s970, 1
      %p974 = scmp.eq.s32.totalorder %s107, 1
      %p975 = scmp.ne.s32.totalorder %s970, %s972
      %p976 = scmp.eq.s32.totalorder %s107, 0
      %p977 = por %p975, %p976
      %p978 = scmp.ne.s32.totalorder %s970, %s972
      %p979 = scmp.eq.s32.totalorder %s112, 1
      %p980 = por %p978, %p979
      %p981 = scmp.ne.s32.totalorder %s972, %s973
      %p982 = scmp.eq.s32.totalorder %s112, 0
      %p983 = por %p981, %p982
      %p984 = scmp.ne.s32.totalorder %s972, %s973
      %p985 = scmp.eq.s32.totalorder %s113, 1
      %p986 = por %p984, %p985
      %p988 = scmp.ne.s32.totalorder %s973, %s987
      %p989 = scmp.eq.s32.totalorder %s113, 0
      %p990 = por %p988, %p989
      %s992 = sadd.s32 %s991, 1
      %p995 = scmp.eq.s32.totalorder %s107, 1
      %p996 = scmp.ne.s32.totalorder %s991, %s993
      %p997 = scmp.eq.s32.totalorder %s107, 0
      %p998 = por %p996, %p997
      %p999 = scmp.ne.s32.totalorder %s991, %s993
      %p1000 = scmp.eq.s32.totalorder %s112, 1
      %p1001 = por %p999, %p1000
      %p1002 = scmp.ne.s32.totalorder %s993, %s994
      %p1003 = scmp.eq.s32.totalorder %s112, 0
      %p1004 = por %p1002, %p1003
      %p1005 = scmp.ne.s32.totalorder %s993, %s994
      %p1006 = scmp.eq.s32.totalorder %s113, 1
      %p1007 = por %p1005, %p1006
      %p1009 = scmp.ne.s32.totalorder %s994, %s1008
      %p1010 = scmp.eq.s32.totalorder %s113, 0
      %p1011 = por %p1009, %p1010
      %s1013 = sadd.s32 %s1012, 1
      %p1016 = scmp.eq.s32.totalorder %s107, 1
      %p1017 = scmp.ne.s32.totalorder %s1012, %s1014
      %p1018 = scmp.eq.s32.totalorder %s107, 0
      %p1019 = por %p1017, %p1018
      %p1020 = scmp.ne.s32.totalorder %s1012, %s1014
      %p1021 = scmp.eq.s32.totalorder %s112, 1
      %p1022 = por %p1020, %p1021
      %p1023 = scmp.ne.s32.totalorder %s1014, %s1015
      %p1024 = scmp.eq.s32.totalorder %s112, 0
      %p1025 = por %p1023, %p1024
      %p1026 = scmp.ne.s32.totalorder %s1014, %s1015
      %p1027 = scmp.eq.s32.totalorder %s113, 1
      %p1028 = por %p1026, %p1027
      %p1030 = scmp.ne.s32.totalorder %s1015, %s1029
      %p1031 = scmp.eq.s32.totalorder %s113, 0
      %p1032 = por %p1030, %p1031
      %s1034 = sadd.s32 %s1033, 1
      %p1037 = scmp.eq.s32.totalorder %s107, 1
      %p1038 = scmp.ne.s32.totalorder %s1033, %s1035
      %p1039 = scmp.eq.s32.totalorder %s107, 0
      %p1040 = por %p1038, %p1039
      %p1041 = scmp.ne.s32.totalorder %s1033, %s1035
      %p1042 = scmp.eq.s32.totalorder %s112, 1
      %p1043 = por %p1041, %p1042
      %p1044 = scmp.ne.s32.totalorder %s1035, %s1036
      %p1045 = scmp.eq.s32.totalorder %s112, 0
      %p1046 = por %p1044, %p1045
      %p1047 = scmp.ne.s32.totalorder %s1035, %s1036
      %p1048 = scmp.eq.s32.totalorder %s113, 1
      %p1049 = por %p1047, %p1048
      %p1051 = scmp.ne.s32.totalorder %s1036, %s1050
      %p1052 = scmp.eq.s32.totalorder %s113, 0
      %p1053 = por %p1051, %p1052
      %s1055 = sadd.s32 %s1054, 1
      %p1058 = scmp.eq.s32.totalorder %s107, 1
      %p1059 = scmp.ne.s32.totalorder %s1054, %s1056
      %p1060 = scmp.eq.s32.totalorder %s107, 0
      %p1061 = por %p1059, %p1060
      %p1062 = scmp.ne.s32.totalorder %s1054, %s1056
      %p1063 = scmp.eq.s32.totalorder %s112, 1
      %p1064 = por %p1062, %p1063
      %p1065 = scmp.ne.s32.totalorder %s1056, %s1057
      %p1066 = scmp.eq.s32.totalorder %s112, 0
      %p1067 = por %p1065, %p1066
      %p1068 = scmp.ne.s32.totalorder %s1056, %s1057
      %p1069 = scmp.eq.s32.totalorder %s113, 1
      %p1070 = por %p1068, %p1069
      %p1072 = scmp.ne.s32.totalorder %s1057, %s1071
      %p1073 = scmp.eq.s32.totalorder %s113, 0
      %p1074 = por %p1072, %p1073
      %s1076 = sadd.s32 %s1075, 1
      %p1079 = scmp.eq.s32.totalorder %s107, 1
      %p1080 = scmp.ne.s32.totalorder %s1075, %s1077
      %p1081 = scmp.eq.s32.totalorder %s107, 0
      %p1082 = por %p1080, %p1081
      %p1083 = scmp.ne.s32.totalorder %s1075, %s1077
      %p1084 = scmp.eq.s32.totalorder %s112, 1
      %p1085 = por %p1083, %p1084
      %p1086 = scmp.ne.s32.totalorder %s1077, %s1078
      %p1087 = scmp.eq.s32.totalorder %s112, 0
      %p1088 = por %p1086, %p1087
      %p1089 = scmp.ne.s32.totalorder %s1077, %s1078
      %p1090 = scmp.eq.s32.totalorder %s113, 1
      %p1091 = por %p1089, %p1090
      %p1093 = scmp.ne.s32.totalorder %s1078, %s1092
      %p1094 = scmp.eq.s32.totalorder %s113, 0
      %p1095 = por %p1093, %p1094
      %s1097 = sadd.s32 %s1096, 1
      %p1100 = scmp.eq.s32.totalorder %s107, 1
      %p1101 = scmp.ne.s32.totalorder %s1096, %s1098
      %p1102 = scmp.eq.s32.totalorder %s107, 0
      %p1103 = por %p1101, %p1102
      %p1104 = scmp.ne.s32.totalorder %s1096, %s1098
      %p1105 = scmp.eq.s32.totalorder %s112, 1
      %p1106 = por %p1104, %p1105
      %p1107 = scmp.ne.s32.totalorder %s1098, %s1099
      %p1108 = scmp.eq.s32.totalorder %s112, 0
      %p1109 = por %p1107, %p1108
      %p1110 = scmp.ne.s32.totalorder %s1098, %s1099
      %p1111 = scmp.eq.s32.totalorder %s113, 1
      %p1112 = por %p1110, %p1111
      %p1114 = scmp.ne.s32.totalorder %s1099, %s1113
      %p1115 = scmp.eq.s32.totalorder %s113, 0
      %p1116 = por %p1114, %p1115
      %s1117 = ssub.s32 %s107, %s114
      %p1118 = scmp.eq.s32.totalorder %s1117, 0
      %s1120 = sadd.s32 %s1119, 1
      %s1121 = scalar_select %p1118, %s1119, %s1120
      %p1124 = pneg %p1118
      %p1125 = scmp.eq.s32.totalorder %s107, 1
      %p1126 = por %p1124, %p1125
      %p1127 = scmp.ne.s32.totalorder %s1119, %s1122
      %p1128 = scmp.eq.s32.totalorder %s107, 0
      %p1129 = por %p1127, %p1128
      %p1130 = scmp.ne.s32.totalorder %s1119, %s1122
      %p1131 = scmp.eq.s32.totalorder %s112, 1
      %p1132 = por %p1130, %p1131
      %p1133 = scmp.ne.s32.totalorder %s1122, %s1123
      %p1134 = scmp.eq.s32.totalorder %s112, 0
      %p1135 = por %p1133, %p1134
      %p1136 = scmp.ne.s32.totalorder %s1122, %s1123
      %p1137 = scmp.eq.s32.totalorder %s113, 1
      %p1138 = por %p1136, %p1137
      %p1140 = scmp.ne.s32.totalorder %s1123, %s1139
      %p1141 = scmp.eq.s32.totalorder %s113, 0
      %p1142 = por %p1140, %p1141
      %s1143 = ssub.s32 %s107, %s114
      %p1144 = scmp.eq.s32.totalorder %s1143, 0
      %s1146 = sadd.s32 %s1145, 1
      %s1147 = scalar_select %p1144, %s1145, %s1146
      %p1150 = pneg %p1144
      %p1151 = scmp.eq.s32.totalorder %s107, 1
      %p1152 = por %p1150, %p1151
      %p1153 = scmp.ne.s32.totalorder %s1145, %s1148
      %p1154 = scmp.eq.s32.totalorder %s107, 0
      %p1155 = por %p1153, %p1154
      %p1156 = scmp.ne.s32.totalorder %s1145, %s1148
      %p1157 = scmp.eq.s32.totalorder %s112, 1
      %p1158 = por %p1156, %p1157
      %p1159 = scmp.ne.s32.totalorder %s1148, %s1149
      %p1160 = scmp.eq.s32.totalorder %s112, 0
      %p1161 = por %p1159, %p1160
      %p1162 = scmp.ne.s32.totalorder %s1148, %s1149
      %p1163 = scmp.eq.s32.totalorder %s113, 1
      %p1164 = por %p1162, %p1163
      %p1166 = scmp.ne.s32.totalorder %s1149, %s1165
      %p1167 = scmp.eq.s32.totalorder %s113, 0
      %p1168 = por %p1166, %p1167
      %p1169 = scmp.le.s32.totalorder 1, %s107
      %p1170 = scmp.lt.s32.totalorder %s107, 3
      %p1171 = pnand %p1169, %p1170
      %p1172 = pneg %p1171
      // Predicated region
      $region9: #{stark_forward.1} parent=5 // pred_check
        _
      $region10: #{stark_forward.1} parent=5 // pred_check_branch
        %1174 = sbr.rel (%p1171) target = $region12
      $region11: #{stark_forward.1} parent=5 // pred_region
        %s1175 = ssub.s32 %s107, 1
        // Predicated region
        $region13: #{stark_forward.1} parent=11 // pred_check
          %p1176 = pneg %p206
        $region14: #{stark_forward.1} parent=11 // pred_check_branch
          %1178 = sbr.rel (%p1176) target = $region16
        $region15: #{stark_forward.1} parent=11 // pred_region
          _
        $region16: #{stark_forward.1} parent=11 // pred_fallthru
          _
        // Predicated region
        $region17: #{stark_forward.1} parent=11 // pred_check
          %p1179 = pneg %p227
        $region18: #{stark_forward.1} parent=11 // pred_check_branch
          %1181 = sbr.rel (%p1179) target = $region20
        $region19: #{stark_forward.1} parent=11 // pred_region
          _
        $region20: #{stark_forward.1} parent=11 // pred_fallthru
          _
        // Predicated region
        $region21: #{stark_forward.1} parent=11 // pred_check
          %p1182 = pneg %p248
        $region22: #{stark_forward.1} parent=11 // pred_check_branch
          %1184 = sbr.rel (%p1182) target = $region24
        $region23: #{stark_forward.1} parent=11 // pred_region
          _
        $region24: #{stark_forward.1} parent=11 // pred_fallthru
          _
        // Predicated region
        $region25: #{stark_forward.1} parent=11 // pred_check
          %p1185 = pneg %p269
        $region26: #{stark_forward.1} parent=11 // pred_check_branch
          %1187 = sbr.rel (%p1185) target = $region28
        $region27: #{stark_forward.1} parent=11 // pred_region
          _
        $region28: #{stark_forward.1} parent=11 // pred_fallthru
          _
        // Predicated region
        $region29: #{stark_forward.1} parent=11 // pred_check
          %p1188 = pneg %p290
        $region30: #{stark_forward.1} parent=11 // pred_check_branch
          %1190 = sbr.rel (%p1188) target = $region32
        $region31: #{stark_forward.1} parent=11 // pred_region
          _
        $region32: #{stark_forward.1} parent=11 // pred_fallthru
          _
        // Predicated region
        $region33: #{stark_forward.1} parent=11 // pred_check
          %p1191 = pneg %p311
        $region34: #{stark_forward.1} parent=11 // pred_check_branch
          %1193 = sbr.rel (%p1191) target = $region36
        $region35: #{stark_forward.1} parent=11 // pred_region
          _
        $region36: #{stark_forward.1} parent=11 // pred_fallthru
          _
        // Predicated region
        $region37: #{stark_forward.1} parent=11 // pred_check
          %p1194 = pneg %p332
        $region38: #{stark_forward.1} parent=11 // pred_check_branch
          %1196 = sbr.rel (%p1194) target = $region40
        $region39: #{stark_forward.1} parent=11 // pred_region
          _
        $region40: #{stark_forward.1} parent=11 // pred_fallthru
          _
        // Predicated region
        $region41: #{stark_forward.1} parent=11 // pred_check
          %p1197 = pneg %p353
        $region42: #{stark_forward.1} parent=11 // pred_check_branch
          %1199 = sbr.rel (%p1197) target = $region44
        $region43: #{stark_forward.1} parent=11 // pred_region
          _
        $region44: #{stark_forward.1} parent=11 // pred_fallthru
          _
        // Predicated region
        $region45: #{stark_forward.1} parent=11 // pred_check
          %p1200 = pneg %p374
        $region46: #{stark_forward.1} parent=11 // pred_check_branch
          %1202 = sbr.rel (%p1200) target = $region48
        $region47: #{stark_forward.1} parent=11 // pred_region
          _
        $region48: #{stark_forward.1} parent=11 // pred_fallthru
          _
        // Predicated region
        $region49: #{stark_forward.1} parent=11 // pred_check
          %p1203 = pneg %p395
        $region50: #{stark_forward.1} parent=11 // pred_check_branch
          %1205 = sbr.rel (%p1203) target = $region52
        $region51: #{stark_forward.1} parent=11 // pred_region
          _
        $region52: #{stark_forward.1} parent=11 // pred_fallthru
          _
        // Predicated region
        $region53: #{stark_forward.1} parent=11 // pred_check
          %p1206 = pneg %p416
        $region54: #{stark_forward.1} parent=11 // pred_check_branch
          %1208 = sbr.rel (%p1206) target = $region56
        $region55: #{stark_forward.1} parent=11 // pred_region
          _
        $region56: #{stark_forward.1} parent=11 // pred_fallthru
          _
        // Predicated region
        $region57: #{stark_forward.1} parent=11 // pred_check
          %p1209 = pneg %p437
        $region58: #{stark_forward.1} parent=11 // pred_check_branch
          %1211 = sbr.rel (%p1209) target = $region60
        $region59: #{stark_forward.1} parent=11 // pred_region
          _
        $region60: #{stark_forward.1} parent=11 // pred_fallthru
          _
        // Predicated region
        $region61: #{stark_forward.1} parent=11 // pred_check
          %p1212 = pneg %p458
        $region62: #{stark_forward.1} parent=11 // pred_check_branch
          %1214 = sbr.rel (%p1212) target = $region64
        $region63: #{stark_forward.1} parent=11 // pred_region
          _
        $region64: #{stark_forward.1} parent=11 // pred_fallthru
          _
        // Predicated region
        $region65: #{stark_forward.1} parent=11 // pred_check
          %p1215 = pneg %p479
        $region66: #{stark_forward.1} parent=11 // pred_check_branch
          %1217 = sbr.rel (%p1215) target = $region68
        $region67: #{stark_forward.1} parent=11 // pred_region
          _
        $region68: #{stark_forward.1} parent=11 // pred_fallthru
          _
        // Predicated region
        $region69: #{stark_forward.1} parent=11 // pred_check
          %p1218 = pneg %p500
        $region70: #{stark_forward.1} parent=11 // pred_check_branch
          %1220 = sbr.rel (%p1218) target = $region72
        $region71: #{stark_forward.1} parent=11 // pred_region
          _
        $region72: #{stark_forward.1} parent=11 // pred_fallthru
          _
        // Predicated region
        $region73: #{stark_forward.1} parent=11 // pred_check
          %p1221 = pneg %p521
        $region74: #{stark_forward.1} parent=11 // pred_check_branch
          %1223 = sbr.rel (%p1221) target = $region76
        $region75: #{stark_forward.1} parent=11 // pred_region
          _
        $region76: #{stark_forward.1} parent=11 // pred_fallthru
          _
        // Predicated region
        $region77: #{stark_forward.1} parent=11 // pred_check
          %p1224 = pneg %p542
        $region78: #{stark_forward.1} parent=11 // pred_check_branch
          %1226 = sbr.rel (%p1224) target = $region80
        $region79: #{stark_forward.1} parent=11 // pred_region
          _
        $region80: #{stark_forward.1} parent=11 // pred_fallthru
          _
        // Predicated region
        $region81: #{stark_forward.1} parent=11 // pred_check
          %p1227 = pneg %p563
        $region82: #{stark_forward.1} parent=11 // pred_check_branch
          %1229 = sbr.rel (%p1227) target = $region84
        $region83: #{stark_forward.1} parent=11 // pred_region
          _
        $region84: #{stark_forward.1} parent=11 // pred_fallthru
          _
        // Predicated region
        $region85: #{stark_forward.1} parent=11 // pred_check
          %p1230 = pneg %p584
        $region86: #{stark_forward.1} parent=11 // pred_check_branch
          %1232 = sbr.rel (%p1230) target = $region88
        $region87: #{stark_forward.1} parent=11 // pred_region
          _
        $region88: #{stark_forward.1} parent=11 // pred_fallthru
          _
        // Predicated region
        $region89: #{stark_forward.1} parent=11 // pred_check
          %p1233 = pneg %p605
        $region90: #{stark_forward.1} parent=11 // pred_check_branch
          %1235 = sbr.rel (%p1233) target = $region92
        $region91: #{stark_forward.1} parent=11 // pred_region
          _
        $region92: #{stark_forward.1} parent=11 // pred_fallthru
          _
        // Predicated region
        $region93: #{stark_forward.1} parent=11 // pred_check
          %p1236 = pneg %p626
        $region94: #{stark_forward.1} parent=11 // pred_check_branch
          %1238 = sbr.rel (%p1236) target = $region96
        $region95: #{stark_forward.1} parent=11 // pred_region
          _
        $region96: #{stark_forward.1} parent=11 // pred_fallthru
          _
        // Predicated region
        $region97: #{stark_forward.1} parent=11 // pred_check
          %p1239 = pneg %p647
        $region98: #{stark_forward.1} parent=11 // pred_check_branch
          %1241 = sbr.rel (%p1239) target = $region100
        $region99: #{stark_forward.1} parent=11 // pred_region
          _
        $region100: #{stark_forward.1} parent=11 // pred_fallthru
          _
        // Predicated region
        $region101: #{stark_forward.1} parent=11 // pred_check
          %p1242 = pneg %p668
        $region102: #{stark_forward.1} parent=11 // pred_check_branch
          %1244 = sbr.rel (%p1242) target = $region104
        $region103: #{stark_forward.1} parent=11 // pred_region
          _
        $region104: #{stark_forward.1} parent=11 // pred_fallthru
          _
        // Predicated region
        $region105: #{stark_forward.1} parent=11 // pred_check
          %p1245 = pneg %p689
        $region106: #{stark_forward.1} parent=11 // pred_check_branch
          %1247 = sbr.rel (%p1245) target = $region108
        $region107: #{stark_forward.1} parent=11 // pred_region
          _
        $region108: #{stark_forward.1} parent=11 // pred_fallthru
          _
        // Predicated region
        $region109: #{stark_forward.1} parent=11 // pred_check
          %p1248 = pneg %p710
        $region110: #{stark_forward.1} parent=11 // pred_check_branch
          %1250 = sbr.rel (%p1248) target = $region112
        $region111: #{stark_forward.1} parent=11 // pred_region
          _
        $region112: #{stark_forward.1} parent=11 // pred_fallthru
          _
        // Predicated region
        $region113: #{stark_forward.1} parent=11 // pred_check
          %p1251 = pneg %p731
        $region114: #{stark_forward.1} parent=11 // pred_check_branch
          %1253 = sbr.rel (%p1251) target = $region116
        $region115: #{stark_forward.1} parent=11 // pred_region
          _
        $region116: #{stark_forward.1} parent=11 // pred_fallthru
          _
        // Predicated region
        $region117: #{stark_forward.1} parent=11 // pred_check
          %p1254 = pneg %p752
        $region118: #{stark_forward.1} parent=11 // pred_check_branch
          %1256 = sbr.rel (%p1254) target = $region120
        $region119: #{stark_forward.1} parent=11 // pred_region
          _
        $region120: #{stark_forward.1} parent=11 // pred_fallthru
          _
        // Predicated region
        $region121: #{stark_forward.1} parent=11 // pred_check
          %p1257 = pneg %p773
        $region122: #{stark_forward.1} parent=11 // pred_check_branch
          %1259 = sbr.rel (%p1257) target = $region124
        $region123: #{stark_forward.1} parent=11 // pred_region
          _
        $region124: #{stark_forward.1} parent=11 // pred_fallthru
          _
        // Predicated region
        $region125: #{stark_forward.1} parent=11 // pred_check
          %p1260 = pneg %p794
        $region126: #{stark_forward.1} parent=11 // pred_check_branch
          %1262 = sbr.rel (%p1260) target = $region128
        $region127: #{stark_forward.1} parent=11 // pred_region
          _
        $region128: #{stark_forward.1} parent=11 // pred_fallthru
          _
        // Predicated region
        $region129: #{stark_forward.1} parent=11 // pred_check
          %p1263 = pneg %p815
        $region130: #{stark_forward.1} parent=11 // pred_check_branch
          %1265 = sbr.rel (%p1263) target = $region132
        $region131: #{stark_forward.1} parent=11 // pred_region
          _
        $region132: #{stark_forward.1} parent=11 // pred_fallthru
          _
        // Predicated region
        $region133: #{stark_forward.1} parent=11 // pred_check
          %p1266 = pneg %p836
        $region134: #{stark_forward.1} parent=11 // pred_check_branch
          %1268 = sbr.rel (%p1266) target = $region136
        $region135: #{stark_forward.1} parent=11 // pred_region
          _
        $region136: #{stark_forward.1} parent=11 // pred_fallthru
          _
        // Predicated region
        $region137: #{stark_forward.1} parent=11 // pred_check
          %p1269 = pneg %p857
        $region138: #{stark_forward.1} parent=11 // pred_check_branch
          %1271 = sbr.rel (%p1269) target = $region140
        $region139: #{stark_forward.1} parent=11 // pred_region
          _
        $region140: #{stark_forward.1} parent=11 // pred_fallthru
          _
        // Predicated region
        $region141: #{stark_forward.1} parent=11 // pred_check
          %p1272 = pneg %p878
        $region142: #{stark_forward.1} parent=11 // pred_check_branch
          %1274 = sbr.rel (%p1272) target = $region144
        $region143: #{stark_forward.1} parent=11 // pred_region
          _
        $region144: #{stark_forward.1} parent=11 // pred_fallthru
          _
        // Predicated region
        $region145: #{stark_forward.1} parent=11 // pred_check
          %p1275 = pneg %p899
        $region146: #{stark_forward.1} parent=11 // pred_check_branch
          %1277 = sbr.rel (%p1275) target = $region148
        $region147: #{stark_forward.1} parent=11 // pred_region
          _
        $region148: #{stark_forward.1} parent=11 // pred_fallthru
          _
        // Predicated region
        $region149: #{stark_forward.1} parent=11 // pred_check
          %p1278 = pneg %p920
        $region150: #{stark_forward.1} parent=11 // pred_check_branch
          %1280 = sbr.rel (%p1278) target = $region152
        $region151: #{stark_forward.1} parent=11 // pred_region
          _
        $region152: #{stark_forward.1} parent=11 // pred_fallthru
          _
        // Predicated region
        $region153: #{stark_forward.1} parent=11 // pred_check
          %p1281 = pneg %p941
        $region154: #{stark_forward.1} parent=11 // pred_check_branch
          %1283 = sbr.rel (%p1281) target = $region156
        $region155: #{stark_forward.1} parent=11 // pred_region
          _
        $region156: #{stark_forward.1} parent=11 // pred_fallthru
          _
        // Predicated region
        $region157: #{stark_forward.1} parent=11 // pred_check
          %p1284 = pneg %p962
        $region158: #{stark_forward.1} parent=11 // pred_check_branch
          %1286 = sbr.rel (%p1284) target = $region160
        $region159: #{stark_forward.1} parent=11 // pred_region
          _
        $region160: #{stark_forward.1} parent=11 // pred_fallthru
          _
        // Predicated region
        $region161: #{stark_forward.1} parent=11 // pred_check
          %p1287 = pneg %p983
        $region162: #{stark_forward.1} parent=11 // pred_check_branch
          %1289 = sbr.rel (%p1287) target = $region164
        $region163: #{stark_forward.1} parent=11 // pred_region
          _
        $region164: #{stark_forward.1} parent=11 // pred_fallthru
          _
        // Predicated region
        $region165: #{stark_forward.1} parent=11 // pred_check
          %p1290 = pneg %p1004
        $region166: #{stark_forward.1} parent=11 // pred_check_branch
          %1292 = sbr.rel (%p1290) target = $region168
        $region167: #{stark_forward.1} parent=11 // pred_region
          _
        $region168: #{stark_forward.1} parent=11 // pred_fallthru
          _
        // Predicated region
        $region169: #{stark_forward.1} parent=11 // pred_check
          %p1293 = pneg %p1025
        $region170: #{stark_forward.1} parent=11 // pred_check_branch
          %1295 = sbr.rel (%p1293) target = $region172
        $region171: #{stark_forward.1} parent=11 // pred_region
          _
        $region172: #{stark_forward.1} parent=11 // pred_fallthru
          _
        // Predicated region
        $region173: #{stark_forward.1} parent=11 // pred_check
          %p1296 = pneg %p1046
        $region174: #{stark_forward.1} parent=11 // pred_check_branch
          %1298 = sbr.rel (%p1296) target = $region176
        $region175: #{stark_forward.1} parent=11 // pred_region
          _
        $region176: #{stark_forward.1} parent=11 // pred_fallthru
          _
        // Predicated region
        $region177: #{stark_forward.1} parent=11 // pred_check
          %p1299 = pneg %p1067
        $region178: #{stark_forward.1} parent=11 // pred_check_branch
          %1301 = sbr.rel (%p1299) target = $region180
        $region179: #{stark_forward.1} parent=11 // pred_region
          _
        $region180: #{stark_forward.1} parent=11 // pred_fallthru
          _
        // Predicated region
        $region181: #{stark_forward.1} parent=11 // pred_check
          %p1302 = pneg %p1088
        $region182: #{stark_forward.1} parent=11 // pred_check_branch
          %1304 = sbr.rel (%p1302) target = $region184
        $region183: #{stark_forward.1} parent=11 // pred_region
          _
        $region184: #{stark_forward.1} parent=11 // pred_fallthru
          _
        // Predicated region
        $region185: #{stark_forward.1} parent=11 // pred_check
          %p1305 = pneg %p1109
        $region186: #{stark_forward.1} parent=11 // pred_check_branch
          %1307 = sbr.rel (%p1305) target = $region188
        $region187: #{stark_forward.1} parent=11 // pred_region
          _
        $region188: #{stark_forward.1} parent=11 // pred_fallthru
          _
      $region12: #{stark_forward.1} parent=5 // pred_fallthru
        _
      %p1308 = scmp.lt.s32.totalorder %s107, 2
      // Predicated region
      $region189: #{stark_forward.1} parent=5 // pred_check
        %p1309 = pneg %p1308
      $region190: #{stark_forward.1} parent=5 // pred_check_branch
        %1311 = sbr.rel (%p1309) target = $region192
      $region191: #{stark_forward.1} parent=5 // pred_region
        // Predicated region
        $region193: #{stark_forward.1} parent=191 // pred_check
          %p1312 = pneg %p127
        $region194: #{stark_forward.1} parent=191 // pred_check_branch
          %1314 = sbr.rel (%p1312) target = $region196
        $region195: #{stark_forward.1} parent=191 // pred_region
          %p1315 = scmp.lt.s32.totalorder %s107, 1
          %s1316 = scalar_select %p1315, %s107, 1
          %s1317 = smul.addr %s1316, 10
          %s1318 = smul.addr %s1317, 4
          %s1319 = scalar_lea.vmem %s1, %s1318
        $region196: #{stark_forward.1} parent=191 // pred_fallthru
          _
        // Predicated region
        $region197: #{stark_forward.1} parent=191 // pred_check
          %p1320 = pneg %p153
        $region198: #{stark_forward.1} parent=191 // pred_check_branch
          %1322 = sbr.rel (%p1320) target = $region200
        $region199: #{stark_forward.1} parent=191 // pred_region
          %p1323 = scmp.lt.s32.totalorder %s107, 1
          %s1324 = scalar_select %p1323, %s107, 1
          %s1325 = smul.addr %s1324, 10
          %s1326 = smul.addr %s1325, 8
          %s1327 = scalar_lea.vmem %s3, %s1326
        $region200: #{stark_forward.1} parent=191 // pred_fallthru
          _
        // Predicated region
        $region201: #{stark_forward.1} parent=191 // pred_check
          %p1328 = pneg %p179
        $region202: #{stark_forward.1} parent=191 // pred_check_branch
          %1330 = sbr.rel (%p1328) target = $region204
        $region203: #{stark_forward.1} parent=191 // pred_region
          %p1331 = scmp.lt.s32.totalorder %s107, 1
          %s1332 = scalar_select %p1331, %s107, 1
          %s1333 = scalar_lea.vmem %s5, %s1332
        $region204: #{stark_forward.1} parent=191 // pred_fallthru
          _
      $region192: #{stark_forward.1} parent=5 // pred_fallthru
        _
      %p1334 = scmp.le.s32.totalorder 1, %s107
      %p1335 = scmp.lt.s32.totalorder %s107, 3
      %p1336 = pnand %p1334, %p1335
      %p1337 = pneg %p1336
      // Predicated region
      $region205: #{stark_forward.1} parent=5 // pred_check
        _
      $region206: #{stark_forward.1} parent=5 // pred_check_branch
        %1339 = sbr.rel (%p1336) target = $region208
      $region207: #{stark_forward.1} parent=5 // pred_region
        %s1340 = ssub.s32 %s107, 1
        %p1341 = scmp.lt.s32.totalorder %s112, 1
        %s1342 = scalar_select %p1341, %s112, 1
        %s1343 = smul.addr %s1342, 10
        %s1344 = smul.addr %s1343, 4
        %s1345 = scalar_lea.vmem %s1, %s1344
        %p1346 = pneg %p133
        %p1347 = pneg %p130
        %p1348 = scmp.lt.s32.totalorder %s112, 1
        %s1349 = scalar_select %p1348, %s112, 1
        %s1350 = smul.addr %s1349, 10
        %s1351 = smul.addr %s1350, 8
        %s1352 = scalar_lea.vmem %s3, %s1351
        %p1353 = pneg %p159
        %p1354 = pneg %p156
        %p1355 = scmp.lt.s32.totalorder %s112, 1
        %s1356 = scalar_select %p1355, %s112, 1
        %s1357 = scalar_lea.vmem %s5, %s1356
        %p1358 = pneg %p185
        %p1359 = pneg %p182
        %p1360 = pneg %p206
        %p1361 = pneg %p203
        %p1362 = pneg %p227
        %p1363 = pneg %p224
        %p1364 = pneg %p248
        %p1365 = pneg %p245
        %p1366 = pneg %p269
        %p1367 = pneg %p266
        %p1368 = pneg %p290
        %p1369 = pneg %p287
        %p1370 = pneg %p311
        %p1371 = pneg %p308
        %p1372 = pneg %p332
        %p1373 = pneg %p329
        %p1374 = pneg %p353
        %p1375 = pneg %p350
        %p1376 = pneg %p374
        %p1377 = pneg %p371
        %p1378 = pneg %p395
        %p1379 = pneg %p392
        %p1380 = pneg %p416
        %p1381 = pneg %p413
        %p1382 = pneg %p437
        %p1383 = pneg %p434
        %p1384 = pneg %p458
        %p1385 = pneg %p455
        %p1386 = pneg %p479
        %p1387 = pneg %p476
        %p1388 = pneg %p500
        %p1389 = pneg %p497
        %p1390 = pneg %p521
        %p1391 = pneg %p518
        %p1392 = pneg %p542
        %p1393 = pneg %p539
        %p1394 = pneg %p563
        %p1395 = pneg %p560
        %p1396 = pneg %p584
        %p1397 = pneg %p581
        %p1398 = pneg %p605
        %p1399 = pneg %p602
        %p1400 = pneg %p626
        %p1401 = pneg %p623
        %p1402 = pneg %p647
        %p1403 = pneg %p644
        %p1404 = pneg %p668
        %p1405 = pneg %p665
        %p1406 = pneg %p689
        %p1407 = pneg %p686
        %p1408 = pneg %p710
        %p1409 = pneg %p707
        %p1410 = pneg %p731
        %p1411 = pneg %p728
        %p1412 = pneg %p752
        %p1413 = pneg %p749
        %p1414 = pneg %p773
        %p1415 = pneg %p770
        %p1416 = pneg %p794
        %p1417 = pneg %p791
        %p1418 = pneg %p815
        %p1419 = pneg %p812
        %p1420 = pneg %p836
        %p1421 = pneg %p833
        %p1422 = pneg %p857
        %p1423 = pneg %p854
        %p1424 = pneg %p878
        %p1425 = pneg %p875
        %p1426 = pneg %p899
        %p1427 = pneg %p896
        %p1428 = pneg %p920
        %p1429 = pneg %p917
        %p1430 = pneg %p941
        %p1431 = pneg %p938
        %p1432 = pneg %p962
        %p1433 = pneg %p959
        %p1434 = pneg %p983
        %p1435 = pneg %p980
        %p1436 = pneg %p1004
        %p1437 = pneg %p1001
        %p1438 = pneg %p1025
        %p1439 = pneg %p1022
        %p1440 = pneg %p1046
        %p1441 = pneg %p1043
        %p1442 = pneg %p1067
        %p1443 = pneg %p1064
        %p1444 = pneg %p1088
        %p1445 = pneg %p1085
        %p1446 = pneg %p1109
        %p1447 = pneg %p1106
        %p1448 = pneg %p1135
        %p1449 = pneg %p1132
        %p1450 = scmp.lt.s32.totalorder %s112, 1
        %s1451 = scalar_select %p1450, %s112, 1
        %s1452 = scalar_lea.vmem %s95, %s1451
        %p1453 = pneg %p1161
        %p1454 = pneg %p1158
        %s1455 = sand.u32 %s1148, 1
        %s1456 = scalar_lea.sflag [#allocation3], %s1455
        %s1457 = sand.u32 %s1148, 1
        %s1458 = scalar_lea.vmem [#allocation2], %s1457
        %p1459 = scmp.lt.s32.totalorder %s112, 1
        %s1460 = scalar_select %p1459, %s112, 1
        %s1461 = smul.addr %s1460, 10
        %s1462 = smul.addr %s1461, 4
        %s1463 = scalar_lea.vmem %s1, %s1462
        %p1464 = scmp.lt.s32.totalorder %s112, 1
        %s1465 = scalar_select %p1464, %s112, 1
        %s1466 = smul.addr %s1465, 10
        %s1467 = smul.addr %s1466, 8
        %s1468 = scalar_lea.vmem %s3, %s1467
        %p1469 = scmp.lt.s32.totalorder %s112, 1
        %s1470 = scalar_select %p1469, %s112, 1
        %s1471 = scalar_lea.vmem %s5, %s1470
        %p1472 = scmp.lt.s32.totalorder %s112, 1
        %s1473 = scalar_select %p1472, %s112, 1
        %s1474 = scalar_lea.vmem %s95, %s1473
        %v1476 = vld [vmem:[%s1463] sm:$0xf]
        %v1477 = vld [vmem:[%s1463 + $0x4] sm:$0xf]
        %v1478 = vld [vmem:[%s1463 + $0x8] sm:$0xf]
        %v1479 = vld [vmem:[%s1463 + $0xc] sm:$0xf]
        %v1480 = vld [vmem:[%s1463 + $0x10] sm:$0xf]
        %v1481 = vld [vmem:[%s1463 + $0x14] sm:$0xf]
        %v1482 = vld [vmem:[%s1463 + $0x18] sm:$0xf]
        %v1483 = vld [vmem:[%s1463 + $0x1c] sm:$0xf]
        %v1484 = vld [vmem:[%s1463 + $0x20] sm:$0xf]
        %v1485 = vld [vmem:[%s1463 + $0x24] sm:$0xf]
        %v1486 = vld [vmem:[%s7] sm:$0xf]
        %v1487 = vld [vmem:[%s7 + $0x4] sm:$0xf]
        %v1488 = vld [vmem:[%s7 + $0x8] sm:$0xf]
        %v1489 = vld [vmem:[%s7 + $0xc] sm:$0xf]
        %v1490 = vld [vmem:[%s7 + $0x10] sm:$0xf]
        %v1491 = vld [vmem:[%s7 + $0x14] sm:$0xf]
        %v1492 = vld [vmem:[%s9] sm:$0x1]
        %v1494 = vlaneseq
        %v1495 = vshrl.u32 %v1494, 7
        %v1496 = vsub.s32 0, %v1495
        %v1497 = vrot.slane %v1492, %v1496
        %v1509 = vunpack.c.l.b16 %v1476
        %v1510 = vunpack.c.l.b16 %v1477
        %v1511 = vunpack.c.l.b16 %v1478
        %v1512 = vunpack.c.l.b16 %v1479
        %v1513 = vunpack.c.l.b16 %v1480
        %v1514 = vunpack.c.l.b16 %v1481
        %v1515 = vunpack.c.l.b16 %v1482
        %v1516 = vunpack.c.l.b16 %v1483
        %v1517 = vunpack.c.l.b16 %v1484
        %v1518 = vunpack.c.l.b16 %v1485
        %v1519 = vpack.c.b16 %v1510, %v1509
        %v1520 = vpack.c.b16 %v1512, %v1511
        %v1521 = vpack.c.b16 %v1514, %v1513
        %v1522 = vpack.c.b16 %v1516, %v1515
        %v1523 = vpack.c.b16 %v1518, %v1517
        %v1530 = vunpack.c.l.b16 %v1486
        %v1531 = vunpack.c.l.b16 %v1487
        %v1532 = vunpack.c.l.b16 %v1488
        %v1533 = vunpack.c.l.b16 %v1489
        %v1534 = vunpack.c.l.b16 %v1490
        %v1535 = vunpack.c.l.b16 %v1491
        %v1536 = vpack.c.b16 %v1531, %v1530
        %v1537 = vpack.c.b16 %v1533, %v1532
        %v1538 = vpack.c.b16 %v1535, %v1534
        %vm1542 = vcmask 392192
        %v1544 = vsel %vm1542, %v1519, 0
        %v1547 = vsel %vm1542, %v1520, 0
        %v1550 = vsel %vm1542, %v1521, 0
        %v1553 = vsel %vm1542, %v1522, 0
        %v1556 = vsel %vm1542, %v1523, 0
        %1558 = vmatprep.subr.bf16.mxu0 0
        %1559 = vmatpush1.bf16.msra.mxu0 %v1536
        %1560 = vmatprep.subr.bf16.mxu0 0
        %1561 = vmatpush1.bf16.msra.mxu0 %v1537
        %1562 = vmatprep.subr.bf16.mxu0 0
        %1563 = vmatpush1.bf16.msra.mxu0 %v1538
        %1564 = vmatprep.subr.bf16.mxu0 0
        %1565 = vmatpush1.bf16.msra.mxu0 0
        %1566 = vmatprep.subr.bf16.mxu0 0
        %1567 = vmatpush1.bf16.msra.mxu0 0
        %1568 = vmatprep.subr.bf16.mxu0 0
        %1569 = vmatpush1.bf16.msra.mxu0 0
        %1570 = vmatprep.subr.bf16.mxu0 0
        %1571 = vmatpush1.bf16.msra.mxu0 0
        %1572 = vmatprep.subr.bf16.mxu0 0
        %1573 = vmatpush1.bf16.msra.mxu0 0
        %1574 = vmatprep.subr.bf16.mxu0 0
        %1575 = vmatpush1.bf16.msra.mxu0 0
        %1576 = vmatprep.subr.bf16.mxu0 0
        %1577 = vmatpush1.bf16.msra.mxu0 0
        %1578 = vmatprep.subr.bf16.mxu0 0
        %1579 = vmatpush1.bf16.msra.mxu0 0
        %1580 = vmatprep.subr.bf16.mxu0 0
        %1581 = vmatpush1.bf16.msra.mxu0 0
        %1582 = vmatprep.subr.bf16.mxu0 0
        %1583 = vmatpush1.bf16.msra.mxu0 0
        %1584 = vmatprep.subr.bf16.mxu0 0
        %1585 = vmatpush1.bf16.msra.mxu0 0
        %1586 = vmatprep.subr.bf16.mxu0 0
        %1587 = vmatpush1.bf16.msra.mxu0 0
        %1588 = vmatprep.subr.bf16.mxu0 0
        %1589 = vmatpush1.bf16.msra.mxu0 0
        %1590 = vmatprep.mubr.bf16.mxu0 0
        %1591 = vmatmul.mubr.bf16.gmra.mrb[0].mxu0 %v1544
        %v1592 = vpop.f32.mrb[0].mxu0
        %v1593 = vadd.f32 %v1497, %v1592
        %v1594 = vpop.f32.mrb[0].mxu0
        %v1595 = vpop.f32.mrb[0].mxu0
        %v1596 = vadd.f32 %v1497, %v1595
        %v1597 = vpop.f32.mrb[0].mxu0
        %1598 = vmatprep.mubr.bf16.mxu0 0
        %1599 = vmatmul.mubr.bf16.gmra.mrb[0].mxu0 %v1547
        %v1600 = vpop.f32.mrb[0].mxu0
        %v1601 = vadd.f32 %v1497, %v1600
        %v1602 = vpop.f32.mrb[0].mxu0
        %v1603 = vpop.f32.mrb[0].mxu0
        %v1604 = vadd.f32 %v1497, %v1603
        %v1605 = vpop.f32.mrb[0].mxu0
        %1606 = vmatprep.mubr.bf16.mxu0 0
        %1607 = vmatmul.mubr.bf16.gmra.mrb[0].mxu0 %v1550
        %v1608 = vpop.f32.mrb[0].mxu0
        %v1609 = vadd.f32 %v1497, %v1608
        %v1610 = vpop.f32.mrb[0].mxu0
        %v1611 = vpop.f32.mrb[0].mxu0
        %v1612 = vadd.f32 %v1497, %v1611
        %v1613 = vpop.f32.mrb[0].mxu0
        %1614 = vmatprep.mubr.bf16.mxu0 0
        %1615 = vmatmul.mubr.bf16.gmra.mrb[0].mxu0 %v1553
        %v1616 = vpop.f32.mrb[0].mxu0
        %v1617 = vadd.f32 %v1497, %v1616
        %v1618 = vpop.f32.mrb[0].mxu0
        %v1619 = vpop.f32.mrb[0].mxu0
        %v1620 = vadd.f32 %v1497, %v1619
        %v1621 = vpop.f32.mrb[0].mxu0
        %1622 = vmatprep.mubr.bf16.mxu0 0
        %1623 = vmatmul.mubr.bf16.gmra.mrb[0].mxu0 %v1556
        %v1624 = vpop.f32.mrb[0].mxu0
        %v1625 = vadd.f32 %v1497, %v1624
        %v1626 = vpop.f32.mrb[0].mxu0
        %v1627 = vpop.f32.mrb[0].mxu0
        %v1628 = vadd.f32 %v1497, %v1627
        %v1629 = vpop.f32.mrb[0].mxu0
        %1630 = vdwg.mxu0
        %v1631 = vld [vmem:[%s1468] sm:$0xff]
        %v1632 = vld [vmem:[%s1468 + $0x8] sm:$0xff]
        %v1633 = vld [vmem:[%s1468 + $0x10] sm:$0xff]
        %v1634 = vld [vmem:[%s1468 + $0x18] sm:$0xff]
        %v1635 = vld [vmem:[%s1468 + $0x20] sm:$0xff]
        %v1636 = vld [vmem:[%s1468 + $0x28] sm:$0xff]
        %v1637 = vld [vmem:[%s1468 + $0x30] sm:$0xff]
        %v1638 = vld [vmem:[%s1468 + $0x38] sm:$0xff]
        %v1639 = vld [vmem:[%s1468 + $0x40] sm:$0xff]
        %v1640 = vld [vmem:[%s1468 + $0x48] sm:$0xff]
        %v1641 = vld [vmem:[%s1471] sm:$0x1]
        %v1642 = vadd.f32 %v1593, %v1631
        %v1643 = vadd.f32 %v1596, %v1632
        %v1644 = vadd.f32 %v1601, %v1633
        %v1645 = vadd.f32 %v1604, %v1634
        %v1646 = vadd.f32 %v1609, %v1635
        %v1647 = vadd.f32 %v1612, %v1636
        %v1648 = vadd.f32 %v1617, %v1637
        %v1649 = vadd.f32 %v1620, %v1638
        %v1650 = vadd.f32 %v1625, %v1639
        %v1651 = vadd.f32 %v1628, %v1640
        %v1652 = vpack.c.bf16 %v1643, %v1642
        %v1653 = vpack.c.bf16 %v1645, %v1644
        %v1654 = vpack.c.bf16 %v1647, %v1646
        %v1655 = vpack.c.bf16 %v1649, %v1648
        %v1656 = vpack.c.bf16 %v1651, %v1650
        %v1657 = vpack.c.bf16 %v1596, %v1593
        %v1658 = vpack.c.bf16 %v1604, %v1601
        %v1659 = vpack.c.bf16 %v1612, %v1609
        %v1660 = vpack.c.bf16 %v1620, %v1617
        %v1661 = vpack.c.bf16 %v1628, %v1625
        %v1662 = vld [vmem:[%s15] sm:$0xf]
        %v1663 = vld [vmem:[%s15 + $0x4] sm:$0xf]
        %v1664 = vld [vmem:[%s15 + $0x8] sm:$0xf]
        %v1665 = vld [vmem:[%s15 + $0xc] sm:$0xf]
        %v1666 = vld [vmem:[%s17] sm:$0x1]
        %v1668 = vlaneseq
        %v1669 = vshrl.u32 %v1668, 7
        %v1670 = vsub.s32 0, %v1669
        %v1671 = vrot.slane %v1666, %v1670
        %v1677 = vunpack.c.l.b16 %v1662
        %v1678 = vunpack.c.l.b16 %v1663
        %v1679 = vunpack.c.l.b16 %v1664
        %v1680 = vunpack.c.l.b16 %v1665
        %v1681 = vpack.c.b16 %v1678, %v1677
        %v1682 = vpack.c.b16 %v1680, %v1679
        %vm1685 = vcmask 261120
        %v1687 = vsel %vm1685, %v1652, 0
        %v1690 = vsel %vm1685, %v1653, 0
        %v1693 = vsel %vm1685, %v1654, 0
        %v1696 = vsel %vm1685, %v1655, 0
        %v1699 = vsel %vm1685, %v1656, 0
        %1701 = vmatprep.subr.bf16.mxu0 0
        %1702 = vmatpush1.bf16.msra.mxu0 %v1681
        %1703 = vmatprep.subr.bf16.mxu0 0
        %1704 = vmatpush1.bf16.msra.mxu0 %v1682
        %1705 = vmatprep.subr.bf16.mxu0 0
        %1706 = vmatpush1.bf16.msra.mxu0 0
        %1707 = vmatprep.subr.bf16.mxu0 0
        %1708 = vmatpush1.bf16.msra.mxu0 0
        %1709 = vmatprep.subr.bf16.mxu0 0
        %1710 = vmatpush1.bf16.msra.mxu0 0
        %1711 = vmatprep.subr.bf16.mxu0 0
        %1712 = vmatpush1.bf16.msra.mxu0 0
        %1713 = vmatprep.subr.bf16.mxu0 0
        %1714 = vmatpush1.bf16.msra.mxu0 0
        %1715 = vmatprep.subr.bf16.mxu0 0
        %1716 = vmatpush1.bf16.msra.mxu0 0
        %1717 = vmatprep.subr.bf16.mxu0 0
        %1718 = vmatpush1.bf16.msra.mxu0 0
        %1719 = vmatprep.subr.bf16.mxu0 0
        %1720 = vmatpush1.bf16.msra.mxu0 0
        %1721 = vmatprep.subr.bf16.mxu0 0
        %1722 = vmatpush1.bf16.msra.mxu0 0
        %1723 = vmatprep.subr.bf16.mxu0 0
        %1724 = vmatpush1.bf16.msra.mxu0 0
        %1725 = vmatprep.subr.bf16.mxu0 0
        %1726 = vmatpush1.bf16.msra.mxu0 0
        %1727 = vmatprep.subr.bf16.mxu0 0
        %1728 = vmatpush1.bf16.msra.mxu0 0
        %1729 = vmatprep.subr.bf16.mxu0 0
        %1730 = vmatpush1.bf16.msra.mxu0 0
        %1731 = vmatprep.subr.bf16.mxu0 0
        %1732 = vmatpush1.bf16.msra.mxu0 0
        %1733 = vmatprep.mubr.bf16.mxu0 0
        %1734 = vmatmul.mubr.bf16.gmra.mrb[0].mxu0 %v1687
        %v1735 = vpop.f32.mrb[0].mxu0
        %v1736 = vadd.f32 %v1671, %v1735
        %v1737 = vpop.f32.mrb[0].mxu0
        %v1738 = vpop.f32.mrb[0].mxu0
        %v1739 = vadd.f32 %v1671, %v1738
        %v1740 = vpop.f32.mrb[0].mxu0
        %1741 = vmatprep.mubr.bf16.mxu0 0
        %1742 = vmatmul.mubr.bf16.gmra.mrb[0].mxu0 %v1690
        %v1743 = vpop.f32.mrb[0].mxu0
        %v1744 = vadd.f32 %v1671, %v1743
        %v1745 = vpop.f32.mrb[0].mxu0
        %v1746 = vpop.f32.mrb[0].mxu0
        %v1747 = vadd.f32 %v1671, %v1746
        %v1748 = vpop.f32.mrb[0].mxu0
        %1749 = vmatprep.mubr.bf16.mxu0 0
        %1750 = vmatmul.mubr.bf16.gmra.mrb[0].mxu0 %v1693
        %v1751 = vpop.f32.mrb[0].mxu0
        %v1752 = vadd.f32 %v1671, %v1751
        %v1753 = vpop.f32.mrb[0].mxu0
        %v1754 = vpop.f32.mrb[0].mxu0
        %v1755 = vadd.f32 %v1671, %v1754
        %v1756 = vpop.f32.mrb[0].mxu0
        %1757 = vmatprep.mubr.bf16.mxu0 0
        %1758 = vmatmul.mubr.bf16.gmra.mrb[0].mxu0 %v1696
        %v1759 = vpop.f32.mrb[0].mxu0
        %v1760 = vadd.f32 %v1671, %v1759
        %v1761 = vpop.f32.mrb[0].mxu0
        %v1762 = vpop.f32.mrb[0].mxu0
        %v1763 = vadd.f32 %v1671, %v1762
        %v1764 = vpop.f32.mrb[0].mxu0
        %1765 = vmatprep.mubr.bf16.mxu0 0
        %1766 = vmatmul.mubr.bf16.gmra.mrb[0].mxu0 %v1699
        %v1767 = vpop.f32.mrb[0].mxu0
        %v1768 = vadd.f32 %v1671, %v1767
        %v1769 = vpop.f32.mrb[0].mxu0
        %v1770 = vpop.f32.mrb[0].mxu0
        %v1771 = vadd.f32 %v1671, %v1770
        %v1772 = vpop.f32.mrb[0].mxu0
        %1773 = vdwg.mxu0
        %v1774 = vld [vmem:[%s19] sm:$0xf]
        %v1775 = vld [vmem:[%s19 + $0x4] sm:$0xf]
        %v1776 = vld [vmem:[%s19 + $0x8] sm:$0xf]
        %v1777 = vld [vmem:[%s19 + $0xc] sm:$0xf]
        %v1778 = vld [vmem:[%s21] sm:$0x1]
        %v1780 = vlaneseq
        %v1781 = vshrl.u32 %v1780, 7
        %v1782 = vsub.s32 0, %v1781
        %v1783 = vrot.slane %v1778, %v1782
        %v1789 = vunpack.c.l.b16 %v1774
        %v1790 = vunpack.c.l.b16 %v1775
        %v1791 = vunpack.c.l.b16 %v1776
        %v1792 = vunpack.c.l.b16 %v1777
        %v1793 = vpack.c.b16 %v1790, %v1789
        %v1794 = vpack.c.b16 %v1792, %v1791
        %1797 = vmatprep.subr.bf16.mxu0 0
        %1798 = vmatpush1.bf16.msra.mxu0 %v1793
        %1799 = vmatprep.subr.bf16.mxu0 0
        %1800 = vmatpush1.bf16.msra.mxu0 %v1794
        %1801 = vmatprep.subr.bf16.mxu0 0
        %1802 = vmatpush1.bf16.msra.mxu0 0
        %1803 = vmatprep.subr.bf16.mxu0 0
        %1804 = vmatpush1.bf16.msra.mxu0 0
        %1805 = vmatprep.subr.bf16.mxu0 0
        %1806 = vmatpush1.bf16.msra.mxu0 0
        %1807 = vmatprep.subr.bf16.mxu0 0
        %1808 = vmatpush1.bf16.msra.mxu0 0
        %1809 = vmatprep.subr.bf16.mxu0 0
        %1810 = vmatpush1.bf16.msra.mxu0 0
        %1811 = vmatprep.subr.bf16.mxu0 0
        %1812 = vmatpush1.bf16.msra.mxu0 0
        %1813 = vmatprep.subr.bf16.mxu0 0
        %1814 = vmatpush1.bf16.msra.mxu0 0
        %1815 = vmatprep.subr.bf16.mxu0 0
        %1816 = vmatpush1.bf16.msra.mxu0 0
        %1817 = vmatprep.subr.bf16.mxu0 0
        %1818 = vmatpush1.bf16.msra.mxu0 0
        %1819 = vmatprep.subr.bf16.mxu0 0
        %1820 = vmatpush1.bf16.msra.mxu0 0
        %1821 = vmatprep.subr.bf16.mxu0 0
        %1822 = vmatpush1.bf16.msra.mxu0 0
        %1823 = vmatprep.subr.bf16.mxu0 0
        %1824 = vmatpush1.bf16.msra.mxu0 0
        %1825 = vmatprep.subr.bf16.mxu0 0
        %1826 = vmatpush1.bf16.msra.mxu0 0
        %1827 = vmatprep.subr.bf16.mxu0 0
        %1828 = vmatpush1.bf16.msra.mxu0 0
        %1829 = vmatprep.mubr.bf16.mxu0 0
        %1830 = vmatmul.mubr.bf16.gmra.mrb[0].mxu0 %v1687
        %v1831 = vpop.f32.mrb[0].mxu0
        %v1832 = vadd.f32 %v1783, %v1831
        %v1833 = vpop.f32.mrb[0].mxu0
        %v1834 = vpop.f32.mrb[0].mxu0
        %v1835 = vadd.f32 %v1783, %v1834
        %v1836 = vpop.f32.mrb[0].mxu0
        %1837 = vmatprep.mubr.bf16.mxu0 0
        %1838 = vmatmul.mubr.bf16.gmra.mrb[0].mxu0 %v1690
        %v1839 = vpop.f32.mrb[0].mxu0
        %v1840 = vadd.f32 %v1783, %v1839
        %v1841 = vpop.f32.mrb[0].mxu0
        %v1842 = vpop.f32.mrb[0].mxu0
        %v1843 = vadd.f32 %v1783, %v1842
        %v1844 = vpop.f32.mrb[0].mxu0
        %1845 = vmatprep.mubr.bf16.mxu0 0
        %1846 = vmatmul.mubr.bf16.gmra.mrb[0].mxu0 %v1693
        %v1847 = vpop.f32.mrb[0].mxu0
        %v1848 = vadd.f32 %v1783, %v1847
        %v1849 = vpop.f32.mrb[0].mxu0
        %v1850 = vpop.f32.mrb[0].mxu0
        %v1851 = vadd.f32 %v1783, %v1850
        %v1852 = vpop.f32.mrb[0].mxu0
        %1853 = vmatprep.mubr.bf16.mxu0 0
        %1854 = vmatmul.mubr.bf16.gmra.mrb[0].mxu0 %v1696
        %v1855 = vpop.f32.mrb[0].mxu0
        %v1856 = vadd.f32 %v1783, %v1855
        %v1857 = vpop.f32.mrb[0].mxu0
        %v1858 = vpop.f32.mrb[0].mxu0
        %v1859 = vadd.f32 %v1783, %v1858
        %v1860 = vpop.f32.mrb[0].mxu0
        %1861 = vmatprep.mubr.bf16.mxu0 0
        %1862 = vmatmul.mubr.bf16.gmra.mrb[0].mxu0 %v1699
        %v1863 = vpop.f32.mrb[0].mxu0
        %v1864 = vadd.f32 %v1783, %v1863
        %v1865 = vpop.f32.mrb[0].mxu0
        %v1866 = vpop.f32.mrb[0].mxu0
        %v1867 = vadd.f32 %v1783, %v1866
        %v1868 = vpop.f32.mrb[0].mxu0
        %1869 = vdwg.mxu0
        %v1870 = vld [vmem:[%s23] sm:$0xf]
        %v1871 = vld [vmem:[%s23 + $0x4] sm:$0xf]
        %v1872 = vld [vmem:[%s23 + $0x8] sm:$0xf]
        %v1873 = vld [vmem:[%s23 + $0xc] sm:$0xf]
        %v1874 = vld [vmem:[%s25] sm:$0x1]
        %v1876 = vlaneseq
        %v1877 = vshrl.u32 %v1876, 7
        %v1878 = vsub.s32 0, %v1877
        %v1879 = vrot.slane %v1874, %v1878
        %v1885 = vunpack.c.l.b16 %v1870
        %v1886 = vunpack.c.l.b16 %v1871
        %v1887 = vunpack.c.l.b16 %v1872
        %v1888 = vunpack.c.l.b16 %v1873
        %v1889 = vpack.c.b16 %v1886, %v1885
        %v1890 = vpack.c.b16 %v1888, %v1887
        %v1894 = vsel %vm1685, %v1657, 0
        %v1897 = vsel %vm1685, %v1658, 0
        %v1900 = vsel %vm1685, %v1659, 0
        %v1903 = vsel %vm1685, %v1660, 0
        %v1906 = vsel %vm1685, %v1661, 0
        %1908 = vmatprep.subr.bf16.mxu0 0
        %1909 = vmatpush1.bf16.msra.mxu0 %v1889
        %1910 = vmatprep.subr.bf16.mxu0 0
        %1911 = vmatpush1.bf16.msra.mxu0 %v1890
        %1912 = vmatprep.subr.bf16.mxu0 0
        %1913 = vmatpush1.bf16.msra.mxu0 0
        %1914 = vmatprep.subr.bf16.mxu0 0
        %1915 = vmatpush1.bf16.msra.mxu0 0
        %1916 = vmatprep.subr.bf16.mxu0 0
        %1917 = vmatpush1.bf16.msra.mxu0 0
        %1918 = vmatprep.subr.bf16.mxu0 0
        %1919 = vmatpush1.bf16.msra.mxu0 0
        %1920 = vmatprep.subr.bf16.mxu0 0
        %1921 = vmatpush1.bf16.msra.mxu0 0
        %1922 = vmatprep.subr.bf16.mxu0 0
        %1923 = vmatpush1.bf16.msra.mxu0 0
        %1924 = vmatprep.subr.bf16.mxu0 0
        %1925 = vmatpush1.bf16.msra.mxu0 0
        %1926 = vmatprep.subr.bf16.mxu0 0
        %1927 = vmatpush1.bf16.msra.mxu0 0
        %1928 = vmatprep.subr.bf16.mxu0 0
        %1929 = vmatpush1.bf16.msra.mxu0 0
        %1930 = vmatprep.subr.bf16.mxu0 0
        %1931 = vmatpush1.bf16.msra.mxu0 0
        %1932 = vmatprep.subr.bf16.mxu0 0
        %1933 = vmatpush1.bf16.msra.mxu0 0
        %1934 = vmatprep.subr.bf16.mxu0 0
        %1935 = vmatpush1.bf16.msra.mxu0 0
        %1936 = vmatprep.subr.bf16.mxu0 0
        %1937 = vmatpush1.bf16.msra.mxu0 0
        %1938 = vmatprep.subr.bf16.mxu0 0
        %1939 = vmatpush1.bf16.msra.mxu0 0
        %1940 = vmatprep.mubr.bf16.mxu0 0
        %1941 = vmatmul.mubr.bf16.gmra.mrb[0].mxu0 %v1894
        %v1942 = vpop.f32.mrb[0].mxu0
        %v1943 = vadd.f32 %v1879, %v1942
        %v1944 = vpop.f32.mrb[0].mxu0
        %v1945 = vpop.f32.mrb[0].mxu0
        %v1946 = vadd.f32 %v1879, %v1945
        %v1947 = vpop.f32.mrb[0].mxu0
        %1948 = vmatprep.mubr.bf16.mxu0 0
        %1949 = vmatmul.mubr.bf16.gmra.mrb[0].mxu0 %v1897
        %v1950 = vpop.f32.mrb[0].mxu0
        %v1951 = vadd.f32 %v1879, %v1950
        %v1952 = vpop.f32.mrb[0].mxu0
        %v1953 = vpop.f32.mrb[0].mxu0
        %v1954 = vadd.f32 %v1879, %v1953
        %v1955 = vpop.f32.mrb[0].mxu0
        %1956 = vmatprep.mubr.bf16.mxu0 0
        %1957 = vmatmul.mubr.bf16.gmra.mrb[0].mxu0 %v1900
        %v1958 = vpop.f32.mrb[0].mxu0
        %v1959 = vadd.f32 %v1879, %v1958
        %v1960 = vpop.f32.mrb[0].mxu0
        %v1961 = vpop.f32.mrb[0].mxu0
        %v1962 = vadd.f32 %v1879, %v1961
        %v1963 = vpop.f32.mrb[0].mxu0
        %1964 = vmatprep.mubr.bf16.mxu0 0
        %1965 = vmatmul.mubr.bf16.gmra.mrb[0].mxu0 %v1903
        %v1966 = vpop.f32.mrb[0].mxu0
        %v1967 = vadd.f32 %v1879, %v1966
        %v1968 = vpop.f32.mrb[0].mxu0
        %v1969 = vpop.f32.mrb[0].mxu0
        %v1970 = vadd.f32 %v1879, %v1969
        %v1971 = vpop.f32.mrb[0].mxu0
        %1972 = vmatprep.mubr.bf16.mxu0 0
        %1973 = vmatmul.mubr.bf16.gmra.mrb[0].mxu0 %v1906
        %v1974 = vpop.f32.mrb[0].mxu0
        %v1975 = vadd.f32 %v1879, %v1974
        %v1976 = vpop.f32.mrb[0].mxu0
        %v1977 = vpop.f32.mrb[0].mxu0
        %v1978 = vadd.f32 %v1879, %v1977
        %v1979 = vpop.f32.mrb[0].mxu0
        %1980 = vdwg.mxu0
        %v1981 = vpack.c.bf16 %v1739, %v1736
        %v1982 = vpack.c.bf16 %v1747, %v1744
        %v1983 = vpack.c.bf16 %v1755, %v1752
        %v1984 = vpack.c.bf16 %v1763, %v1760
        %v1985 = vpack.c.bf16 %v1771, %v1768
        %v1986 = vpack.c.bf16 %v1835, %v1832
        %v1987 = vpack.c.bf16 %v1843, %v1840
        %v1988 = vpack.c.bf16 %v1851, %v1848
        %v1989 = vpack.c.bf16 %v1859, %v1856
        %v1990 = vpack.c.bf16 %v1867, %v1864
        %v1992 = vlaneseq
        %v1993 = vshrl.u32 %v1992, 7
        %v1994 = vsub.s32 0, %v1993
        %v1995 = vrot.slane %v1641, %v1994
        %vm1997 = vcmask 64512
        %v1999 = vsel %vm1997, %v1981, 0
        %v2002 = vsel %vm1997, %v1982, 0
        %v2005 = vsel %vm1997, %v1983, 0
        %v2008 = vsel %vm1997, %v1984, 0
        %v2011 = vsel %vm1997, %v1985, 0
        %v2014 = vsel %vm1997, %v1986, 0
        %v2017 = vsel %vm1997, %v1987, 0
        %v2020 = vsel %vm1997, %v1988, 0
        %v2023 = vsel %vm1997, %v1989, 0
        %v2026 = vsel %vm1997, %v1990, 0
        %2028 = vmatprep.subr.bf16.mxu0 0
        %2029 = vmatpush1.bf16.xpose.msra.mxu0 %v2014
        %2030 = vmatprep.subr.bf16.mxu0 0
        %2031 = vmatpush1.bf16.xpose.msra.mxu0 %v2017
        %2032 = vmatprep.subr.bf16.mxu0 0
        %2033 = vmatpush1.bf16.xpose.msra.mxu0 %v2020
        %2034 = vmatprep.subr.bf16.mxu0 0
        %2035 = vmatpush1.bf16.xpose.msra.mxu0 %v2023
        %2036 = vmatprep.subr.bf16.mxu0 0
        %2037 = vmatpush1.bf16.xpose.msra.mxu0 %v2026
        %2038 = vmatprep.subr.bf16.mxu0 0
        %2039 = vmatpush1.bf16.xpose.msra.mxu0 0
        %2040 = vmatprep.subr.bf16.mxu0 0
        %2041 = vmatpush1.bf16.xpose.msra.mxu0 0
        %2042 = vmatprep.subr.bf16.mxu0 0
        %2043 = vmatpush1.bf16.xpose.msra.mxu0 0
        %2044 = vmatprep.subr.bf16.mxu0 0
        %2045 = vmatpush1.bf16.xpose.msra.mxu0 0
        %2046 = vmatprep.subr.bf16.mxu0 0
        %2047 = vmatpush1.bf16.xpose.msra.mxu0 0
        %2048 = vmatprep.subr.bf16.mxu0 0
        %2049 = vmatpush1.bf16.xpose.msra.mxu0 0
        %2050 = vmatprep.subr.bf16.mxu0 0
        %2051 = vmatpush1.bf16.xpose.msra.mxu0 0
        %2052 = vmatprep.subr.bf16.mxu0 0
        %2053 = vmatpush1.bf16.xpose.msra.mxu0 0
        %2054 = vmatprep.subr.bf16.mxu0 0
        %2055 = vmatpush1.bf16.xpose.msra.mxu0 0
        %2056 = vmatprep.subr.bf16.mxu0 0
        %2057 = vmatpush1.bf16.xpose.msra.mxu0 0
        %2058 = vmatprep.subr.bf16.mxu0 0
        %2059 = vmatpush1.bf16.xpose.msra.mxu0 0
        %2060 = vmatprep.mubr.bf16.mxu0 0
        %2061 = vmatmul.mubr.bf16.gmra.mrb[0].mxu0 %v1999
        %v2062 = vpop.f32.mrb[0].mxu0
        %v2063 = vadd.f32 %v1995, %v2062
        %v2064 = vpop.f32.mrb[0].mxu0
        %v2065 = vpop.f32.mrb[0].mxu0
        %v2066 = vadd.f32 %v1995, %v2065
        %v2067 = vpop.f32.mrb[0].mxu0
        %2068 = vmatprep.mubr.bf16.mxu0 0
        %2069 = vmatmul.mubr.bf16.gmra.mrb[0].mxu0 %v2002
        %v2070 = vpop.f32.mrb[0].mxu0
        %v2071 = vadd.f32 %v1995, %v2070
        %v2072 = vpop.f32.mrb[0].mxu0
        %v2073 = vpop.f32.mrb[0].mxu0
        %v2074 = vadd.f32 %v1995, %v2073
        %v2075 = vpop.f32.mrb[0].mxu0
        %2076 = vmatprep.mubr.bf16.mxu0 0
        %2077 = vmatmul.mubr.bf16.gmra.mrb[0].mxu0 %v2005
        %v2078 = vpop.f32.mrb[0].mxu0
        %v2079 = vadd.f32 %v1995, %v2078
        %v2080 = vpop.f32.mrb[0].mxu0
        %v2081 = vpop.f32.mrb[0].mxu0
        %v2082 = vadd.f32 %v1995, %v2081
        %v2083 = vpop.f32.mrb[0].mxu0
        %2084 = vmatprep.mubr.bf16.mxu0 0
        %2085 = vmatmul.mubr.bf16.gmra.mrb[0].mxu0 %v2008
        %v2086 = vpop.f32.mrb[0].mxu0
        %v2087 = vadd.f32 %v1995, %v2086
        %v2088 = vpop.f32.mrb[0].mxu0
        %v2089 = vpop.f32.mrb[0].mxu0
        %v2090 = vadd.f32 %v1995, %v2089
        %v2091 = vpop.f32.mrb[0].mxu0
        %2092 = vmatprep.mubr.bf16.mxu0 0
        %2093 = vmatmul.mubr.bf16.gmra.mrb[0].mxu0 %v2011
        %v2094 = vpop.f32.mrb[0].mxu0
        %v2095 = vadd.f32 %v1995, %v2094
        %v2096 = vpop.f32.mrb[0].mxu0
        %v2097 = vpop.f32.mrb[0].mxu0
        %v2098 = vadd.f32 %v1995, %v2097
        %v2099 = vpop.f32.mrb[0].mxu0
        %2100 = vdwg.mxu0
        %vm2101 = vcmask 654336
        %v2102 = vsel %vm2101, %v2063, -inf
        %2103 = vmax.xlane.f32.xlu0 %v2102
        %v2104 = vpop.xlane.xlu0 %2103
        %v2105 = vsel %vm2101, %v2066, -inf
        %2106 = vmax.xlane.f32.xlu0 %v2105
        %v2107 = vpop.xlane.xlu0 %2106
        %v2108 = vsel %vm2101, %v2071, -inf
        %2109 = vmax.xlane.f32.xlu0 %v2108
        %v2110 = vpop.xlane.xlu0 %2109
        %v2111 = vsel %vm2101, %v2074, -inf
        %2112 = vmax.xlane.f32.xlu0 %v2111
        %v2113 = vpop.xlane.xlu0 %2112
        %v2114 = vsel %vm2101, %v2079, -inf
        %2115 = vmax.xlane.f32.xlu0 %v2114
        %v2116 = vpop.xlane.xlu0 %2115
        %v2117 = vsel %vm2101, %v2082, -inf
        %2118 = vmax.xlane.f32.xlu0 %v2117
        %v2119 = vpop.xlane.xlu0 %2118
        %v2120 = vsel %vm2101, %v2087, -inf
        %2121 = vmax.xlane.f32.xlu0 %v2120
        %v2122 = vpop.xlane.xlu0 %2121
        %v2123 = vsel %vm2101, %v2090, -inf
        %2124 = vmax.xlane.f32.xlu0 %v2123
        %v2125 = vpop.xlane.xlu0 %2124
        %v2126 = vsel %vm2101, %v2095, -inf
        %2127 = vmax.xlane.f32.xlu0 %v2126
        %v2128 = vpop.xlane.xlu0 %2127
        %v2129 = vsel %vm2101, %v2098, -inf
        %2130 = vmax.xlane.f32.xlu0 %v2129
        %v2131 = vpop.xlane.xlu0 %2130
        %v2132 = vsub.f32 %v2063, %v2104
        %v2133 = vsub.f32 %v2066, %v2107
        %v2134 = vsub.f32 %v2071, %v2110
        %v2135 = vsub.f32 %v2074, %v2113
        %v2136 = vsub.f32 %v2079, %v2116
        %v2137 = vsub.f32 %v2082, %v2119
        %v2138 = vsub.f32 %v2087, %v2122
        %v2139 = vsub.f32 %v2090, %v2125
        %v2140 = vsub.f32 %v2095, %v2128
        %v2141 = vsub.f32 %v2098, %v2131
        %v2142 = vmul.f32 %v2132, 1.442695
        %v2143 = vpow.pop %v2142
        %v2144 = vmul.f32 %v2133, 1.442695
        %v2145 = vpow.pop %v2144
        %v2146 = vmul.f32 %v2134, 1.442695
        %v2147 = vpow.pop %v2146
        %v2148 = vmul.f32 %v2135, 1.442695
        %v2149 = vpow.pop %v2148
        %v2150 = vmul.f32 %v2136, 1.442695
        %v2151 = vpow.pop %v2150
        %v2152 = vmul.f32 %v2137, 1.442695
        %v2153 = vpow.pop %v2152
        %v2154 = vmul.f32 %v2138, 1.442695
        %v2155 = vpow.pop %v2154
        %v2156 = vmul.f32 %v2139, 1.442695
        %v2157 = vpow.pop %v2156
        %v2158 = vmul.f32 %v2140, 1.442695
        %v2159 = vpow.pop %v2158
        %v2160 = vmul.f32 %v2141, 1.442695
        %v2161 = vpow.pop %v2160
        %v2162 = vsel %vm2101, %v2143, 0.0
        %2163 = vadd.xlane.f32.xlu0 %v2162
        %v2164 = vpop.xlane.xlu0 %2163
        %v2165 = vsel %vm2101, %v2145, 0.0
        %2166 = vadd.xlane.f32.xlu0 %v2165
        %v2167 = vpop.xlane.xlu0 %2166
        %v2168 = vsel %vm2101, %v2147, 0.0
        %2169 = vadd.xlane.f32.xlu0 %v2168
        %v2170 = vpop.xlane.xlu0 %2169
        %v2171 = vsel %vm2101, %v2149, 0.0
        %2172 = vadd.xlane.f32.xlu0 %v2171
        %v2173 = vpop.xlane.xlu0 %2172
        %v2174 = vsel %vm2101, %v2151, 0.0
        %2175 = vadd.xlane.f32.xlu0 %v2174
        %v2176 = vpop.xlane.xlu0 %2175
        %v2177 = vsel %vm2101, %v2153, 0.0
        %2178 = vadd.xlane.f32.xlu0 %v2177
        %v2179 = vpop.xlane.xlu0 %2178
        %v2180 = vsel %vm2101, %v2155, 0.0
        %2181 = vadd.xlane.f32.xlu0 %v2180
        %v2182 = vpop.xlane.xlu0 %2181
        %v2183 = vsel %vm2101, %v2157, 0.0
        %2184 = vadd.xlane.f32.xlu0 %v2183
        %v2185 = vpop.xlane.xlu0 %2184
        %v2186 = vsel %vm2101, %v2159, 0.0
        %2187 = vadd.xlane.f32.xlu0 %v2186
        %v2188 = vpop.xlane.xlu0 %2187
        %v2189 = vsel %vm2101, %v2161, 0.0
        %2190 = vadd.xlane.f32.xlu0 %v2189
        %v2191 = vpop.xlane.xlu0 %2190
        %v2192 = vrcp.pop %v2164
        %v2193 = vrcp.pop %v2167
        %v2194 = vrcp.pop %v2170
        %v2195 = vrcp.pop %v2173
        %v2196 = vrcp.pop %v2176
        %v2197 = vrcp.pop %v2179
        %v2198 = vrcp.pop %v2182
        %v2199 = vrcp.pop %v2185
        %v2200 = vrcp.pop %v2188
        %v2201 = vrcp.pop %v2191
        %v2202 = vmul.f32 %v2143, %v2192
        %v2203 = vmul.f32 %v2145, %v2193
        %v2204 = vmul.f32 %v2147, %v2194
        %v2205 = vmul.f32 %v2149, %v2195
        %v2206 = vmul.f32 %v2151, %v2196
        %v2207 = vmul.f32 %v2153, %v2197
        %v2208 = vmul.f32 %v2155, %v2198
        %v2209 = vmul.f32 %v2157, %v2199
        %v2210 = vmul.f32 %v2159, %v2200
        %v2211 = vmul.f32 %v2161, %v2201
        %v2212 = vpack.c.bf16 %v2203, %v2202
        %v2213 = vpack.c.bf16 %v2205, %v2204
        %v2214 = vpack.c.bf16 %v2207, %v2206
        %v2215 = vpack.c.bf16 %v2209, %v2208
        %v2216 = vpack.c.bf16 %v2211, %v2210
        %v2217 = vpack.c.bf16 %v1946, %v1943
        %v2218 = vpack.c.bf16 %v1954, %v1951
        %v2219 = vpack.c.bf16 %v1962, %v1959
        %v2220 = vpack.c.bf16 %v1970, %v1967
        %v2221 = vpack.c.bf16 %v1978, %v1975
        %v2223 = vsel %vm2101, %v2212, 0
        %v2226 = vsel %vm2101, %v2213, 0
        %v2229 = vsel %vm2101, %v2214, 0
        %v2232 = vsel %vm2101, %v2215, 0
        %v2235 = vsel %vm2101, %v2216, 0
        %2237 = vmatprep.subr.bf16.mxu0 0
        %2238 = vmatpush1.bf16.msra.mxu0 %v2217
        %2239 = vmatprep.subr.bf16.mxu0 0
        %2240 = vmatpush1.bf16.msra.mxu0 %v2218
        %2241 = vmatprep.subr.bf16.mxu0 0
        %2242 = vmatpush1.bf16.msra.mxu0 %v2219
        %2243 = vmatprep.subr.bf16.mxu0 0
        %2244 = vmatpush1.bf16.msra.mxu0 %v2220
        %2245 = vmatprep.subr.bf16.mxu0 0
        %2246 = vmatpush1.bf16.msra.mxu0 %v2221
        %2247 = vmatprep.subr.bf16.mxu0 0
        %2248 = vmatpush1.bf16.msra.mxu0 0
        %2249 = vmatprep.subr.bf16.mxu0 0
        %2250 = vmatpush1.bf16.msra.mxu0 0
        %2251 = vmatprep.subr.bf16.mxu0 0
        %2252 = vmatpush1.bf16.msra.mxu0 0
        %2253 = vmatprep.subr.bf16.mxu0 0
        %2254 = vmatpush1.bf16.msra.mxu0 0
        %2255 = vmatprep.subr.bf16.mxu0 0
        %2256 = vmatpush1.bf16.msra.mxu0 0
        %2257 = vmatprep.subr.bf16.mxu0 0
        %2258 = vmatpush1.bf16.msra.mxu0 0
        %2259 = vmatprep.subr.bf16.mxu0 0
        %2260 = vmatpush1.bf16.msra.mxu0 0
        %2261 = vmatprep.subr.bf16.mxu0 0
        %2262 = vmatpush1.bf16.msra.mxu0 0
        %2263 = vmatprep.subr.bf16.mxu0 0
        %2264 = vmatpush1.bf16.msra.mxu0 0
        %2265 = vmatprep.subr.bf16.mxu0 0
        %2266 = vmatpush1.bf16.msra.mxu0 0
        %2267 = vmatprep.subr.bf16.mxu0 0
        %2268 = vmatpush1.bf16.msra.mxu0 0
        %2269 = vmatprep.mubr.bf16.mxu0 0
        %2270 = vmatmul.mubr.bf16.gmra.mrb[0].mxu0 %v2223
        %v2271 = vpop.f32.mrb[0].mxu0
        %v2272 = vadd.f32 0.0, %v2271
        %v2273 = vpop.f32.mrb[0].mxu0
        %v2274 = vpop.f32.mrb[0].mxu0
        %v2275 = vadd.f32 0.0, %v2274
        %v2276 = vpop.f32.mrb[0].mxu0
        %2277 = vmatprep.mubr.bf16.mxu0 0
        %2278 = vmatmul.mubr.bf16.gmra.mrb[0].mxu0 %v2226
        %v2279 = vpop.f32.mrb[0].mxu0
        %v2280 = vadd.f32 0.0, %v2279
        %v2281 = vpop.f32.mrb[0].mxu0
        %v2282 = vpop.f32.mrb[0].mxu0
        %v2283 = vadd.f32 0.0, %v2282
        %v2284 = vpop.f32.mrb[0].mxu0
        %2285 = vmatprep.mubr.bf16.mxu0 0
        %2286 = vmatmul.mubr.bf16.gmra.mrb[0].mxu0 %v2229
        %v2287 = vpop.f32.mrb[0].mxu0
        %v2288 = vadd.f32 0.0, %v2287
        %v2289 = vpop.f32.mrb[0].mxu0
        %v2290 = vpop.f32.mrb[0].mxu0
        %v2291 = vadd.f32 0.0, %v2290
        %v2292 = vpop.f32.mrb[0].mxu0
        %2293 = vmatprep.mubr.bf16.mxu0 0
        %2294 = vmatmul.mubr.bf16.gmra.mrb[0].mxu0 %v2232
        %v2295 = vpop.f32.mrb[0].mxu0
        %v2296 = vadd.f32 0.0, %v2295
        %v2297 = vpop.f32.mrb[0].mxu0
        %v2298 = vpop.f32.mrb[0].mxu0
        %v2299 = vadd.f32 0.0, %v2298
        %v2300 = vpop.f32.mrb[0].mxu0
        %2301 = vmatprep.mubr.bf16.mxu0 0
        %2302 = vmatmul.mubr.bf16.gmra.mrb[0].mxu0 %v2235
        %v2303 = vpop.f32.mrb[0].mxu0
        %v2304 = vadd.f32 0.0, %v2303
        %v2305 = vpop.f32.mrb[0].mxu0
        %v2306 = vpop.f32.mrb[0].mxu0
        %v2307 = vadd.f32 0.0, %v2306
        %v2308 = vpop.f32.mrb[0].mxu0
        %2309 = vdwg.mxu0
        %v2310 = vpack.c.bf16 %v2275, %v2272
        %v2311 = vpack.c.bf16 %v2283, %v2280
        %v2312 = vpack.c.bf16 %v2291, %v2288
        %v2313 = vpack.c.bf16 %v2299, %v2296
        %v2314 = vpack.c.bf16 %v2307, %v2304
        %v2315 = vld [vmem:[%s27] sm:$0xf]
        %s2316 = scalar_lea.vmem %s15, 16
        %v2317 = vld [vmem:[%s2316] sm:$0xf]
        %v2318 = vld [vmem:[%s2316 + $0x4] sm:$0xf]
        %v2319 = vld [vmem:[%s2316 + $0x8] sm:$0xf]
        %v2320 = vld [vmem:[%s2316 + $0xc] sm:$0xf]
        %s2321 = scalar_lea.vmem %s17, 1
        %v2322 = vld [vmem:[%s2321] sm:$0x1]
        %v2324 = vlaneseq
        %v2325 = vshrl.u32 %v2324, 7
        %v2326 = vsub.s32 0, %v2325
        %v2327 = vrot.slane %v2322, %v2326
        %v2333 = vunpack.c.l.b16 %v2317
        %v2334 = vunpack.c.l.b16 %v2318
        %v2335 = vunpack.c.l.b16 %v2319
        %v2336 = vunpack.c.l.b16 %v2320
        %v2337 = vpack.c.b16 %v2334, %v2333
        %v2338 = vpack.c.b16 %v2336, %v2335
        %2341 = vmatprep.subr.bf16.mxu0 0
        %2342 = vmatpush1.bf16.msra.mxu0 %v2337
        %2343 = vmatprep.subr.bf16.mxu0 0
        %2344 = vmatpush1.bf16.msra.mxu0 %v2338
        %2345 = vmatprep.subr.bf16.mxu0 0
        %2346 = vmatpush1.bf16.msra.mxu0 0
        %2347 = vmatprep.subr.bf16.mxu0 0
        %2348 = vmatpush1.bf16.msra.mxu0 0
        %2349 = vmatprep.subr.bf16.mxu0 0
        %2350 = vmatpush1.bf16.msra.mxu0 0
        %2351 = vmatprep.subr.bf16.mxu0 0
        %2352 = vmatpush1.bf16.msra.mxu0 0
        %2353 = vmatprep.subr.bf16.mxu0 0
        %2354 = vmatpush1.bf16.msra.mxu0 0
        %2355 = vmatprep.subr.bf16.mxu0 0
        %2356 = vmatpush1.bf16.msra.mxu0 0
        %2357 = vmatprep.subr.bf16.mxu0 0
        %2358 = vmatpush1.bf16.msra.mxu0 0
        %2359 = vmatprep.subr.bf16.mxu0 0
        %2360 = vmatpush1.bf16.msra.mxu0 0
        %2361 = vmatprep.subr.bf16.mxu0 0
        %2362 = vmatpush1.bf16.msra.mxu0 0
        %2363 = vmatprep.subr.bf16.mxu0 0
        %2364 = vmatpush1.bf16.msra.mxu0 0
        %2365 = vmatprep.subr.bf16.mxu0 0
        %2366 = vmatpush1.bf16.msra.mxu0 0
        %2367 = vmatprep.subr.bf16.mxu0 0
        %2368 = vmatpush1.bf16.msra.mxu0 0
        %2369 = vmatprep.subr.bf16.mxu0 0
        %2370 = vmatpush1.bf16.msra.mxu0 0
        %2371 = vmatprep.subr.bf16.mxu0 0
        %2372 = vmatpush1.bf16.msra.mxu0 0
        %2373 = vmatprep.mubr.bf16.mxu0 0
        %2374 = vmatmul.mubr.bf16.gmra.mrb[0].mxu0 %v1687
        %v2375 = vpop.f32.mrb[0].mxu0
        %v2376 = vadd.f32 %v2327, %v2375
        %v2377 = vpop.f32.mrb[0].mxu0
        %v2378 = vpop.f32.mrb[0].mxu0
        %v2379 = vadd.f32 %v2327, %v2378
        %v2380 = vpop.f32.mrb[0].mxu0
        %2381 = vmatprep.mubr.bf16.mxu0 0
        %2382 = vmatmul.mubr.bf16.gmra.mrb[0].mxu0 %v1690
        %v2383 = vpop.f32.mrb[0].mxu0
        %v2384 = vadd.f32 %v2327, %v2383
        %v2385 = vpop.f32.mrb[0].mxu0
        %v2386 = vpop.f32.mrb[0].mxu0
        %v2387 = vadd.f32 %v2327, %v2386
        %v2388 = vpop.f32.mrb[0].mxu0
        %2389 = vmatprep.mubr.bf16.mxu0 0
        %2390 = vmatmul.mubr.bf16.gmra.mrb[0].mxu0 %v1693
        %v2391 = vpop.f32.mrb[0].mxu0
        %v2392 = vadd.f32 %v2327, %v2391
        %v2393 = vpop.f32.mrb[0].mxu0
        %v2394 = vpop.f32.mrb[0].mxu0
        %v2395 = vadd.f32 %v2327, %v2394
        %v2396 = vpop.f32.mrb[0].mxu0
        %2397 = vmatprep.mubr.bf16.mxu0 0
        %2398 = vmatmul.mubr.bf16.gmra.mrb[0].mxu0 %v1696
        %v2399 = vpop.f32.mrb[0].mxu0
        %v2400 = vadd.f32 %v2327, %v2399
        %v2401 = vpop.f32.mrb[0].mxu0
        %v2402 = vpop.f32.mrb[0].mxu0
        %v2403 = vadd.f32 %v2327, %v2402
        %v2404 = vpop.f32.mrb[0].mxu0
        %2405 = vmatprep.mubr.bf16.mxu0 0
        %2406 = vmatmul.mubr.bf16.gmra.mrb[0].mxu0 %v1699
        %v2407 = vpop.f32.mrb[0].mxu0
        %v2408 = vadd.f32 %v2327, %v2407
        %v2409 = vpop.f32.mrb[0].mxu0
        %v2410 = vpop.f32.mrb[0].mxu0
        %v2411 = vadd.f32 %v2327, %v2410
        %v2412 = vpop.f32.mrb[0].mxu0
        %2413 = vdwg.mxu0
        %s2414 = scalar_lea.vmem %s19, 16
        %v2415 = vld [vmem:[%s2414] sm:$0xf]
        %v2416 = vld [vmem:[%s2414 + $0x4] sm:$0xf]
        %v2417 = vld [vmem:[%s2414 + $0x8] sm:$0xf]
        %v2418 = vld [vmem:[%s2414 + $0xc] sm:$0xf]
        %s2419 = scalar_lea.vmem %s21, 1
        %v2420 = vld [vmem:[%s2419] sm:$0x1]
        %v2422 = vlaneseq
        %v2423 = vshrl.u32 %v2422, 7
        %v2424 = vsub.s32 0, %v2423
        %v2425 = vrot.slane %v2420, %v2424
        %v2431 = vunpack.c.l.b16 %v2415
        %v2432 = vunpack.c.l.b16 %v2416
        %v2433 = vunpack.c.l.b16 %v2417
        %v2434 = vunpack.c.l.b16 %v2418
        %v2435 = vpack.c.b16 %v2432, %v2431
        %v2436 = vpack.c.b16 %v2434, %v2433
        %2439 = vmatprep.subr.bf16.mxu0 0
        %2440 = vmatpush1.bf16.msra.mxu0 %v2435
        %2441 = vmatprep.subr.bf16.mxu0 0
        %2442 = vmatpush1.bf16.msra.mxu0 %v2436
        %2443 = vmatprep.subr.bf16.mxu0 0
        %2444 = vmatpush1.bf16.msra.mxu0 0
        %2445 = vmatprep.subr.bf16.mxu0 0
        %2446 = vmatpush1.bf16.msra.mxu0 0
        %2447 = vmatprep.subr.bf16.mxu0 0
        %2448 = vmatpush1.bf16.msra.mxu0 0
        %2449 = vmatprep.subr.bf16.mxu0 0
        %2450 = vmatpush1.bf16.msra.mxu0 0
        %2451 = vmatprep.subr.bf16.mxu0 0
        %2452 = vmatpush1.bf16.msra.mxu0 0
        %2453 = vmatprep.subr.bf16.mxu0 0
        %2454 = vmatpush1.bf16.msra.mxu0 0
        %2455 = vmatprep.subr.bf16.mxu0 0
        %2456 = vmatpush1.bf16.msra.mxu0 0
        %2457 = vmatprep.subr.bf16.mxu0 0
        %2458 = vmatpush1.bf16.msra.mxu0 0
        %2459 = vmatprep.subr.bf16.mxu0 0
        %2460 = vmatpush1.bf16.msra.mxu0 0
        %2461 = vmatprep.subr.bf16.mxu0 0
        %2462 = vmatpush1.bf16.msra.mxu0 0
        %2463 = vmatprep.subr.bf16.mxu0 0
        %2464 = vmatpush1.bf16.msra.mxu0 0
        %2465 = vmatprep.subr.bf16.mxu0 0
        %2466 = vmatpush1.bf16.msra.mxu0 0
        %2467 = vmatprep.subr.bf16.mxu0 0
        %2468 = vmatpush1.bf16.msra.mxu0 0
        %2469 = vmatprep.subr.bf16.mxu0 0
        %2470 = vmatpush1.bf16.msra.mxu0 0
        %2471 = vmatprep.mubr.bf16.mxu0 0
        %2472 = vmatmul.mubr.bf16.gmra.mrb[0].mxu0 %v1687
        %v2473 = vpop.f32.mrb[0].mxu0
        %v2474 = vadd.f32 %v2425, %v2473
        %v2475 = vpop.f32.mrb[0].mxu0
        %v2476 = vpop.f32.mrb[0].mxu0
        %v2477 = vadd.f32 %v2425, %v2476
        %v2478 = vpop.f32.mrb[0].mxu0
        %2479 = vmatprep.mubr.bf16.mxu0 0
        %2480 = vmatmul.mubr.bf16.gmra.mrb[0].mxu0 %v1690
        %v2481 = vpop.f32.mrb[0].mxu0
        %v2482 = vadd.f32 %v2425, %v2481
        %v2483 = vpop.f32.mrb[0].mxu0
        %v2484 = vpop.f32.mrb[0].mxu0
        %v2485 = vadd.f32 %v2425, %v2484
        %v2486 = vpop.f32.mrb[0].mxu0
        %2487 = vmatprep.mubr.bf16.mxu0 0
        %2488 = vmatmul.mubr.bf16.gmra.mrb[0].mxu0 %v1693
        %v2489 = vpop.f32.mrb[0].mxu0
        %v2490 = vadd.f32 %v2425, %v2489
        %v2491 = vpop.f32.mrb[0].mxu0
        %v2492 = vpop.f32.mrb[0].mxu0
        %v2493 = vadd.f32 %v2425, %v2492
        %v2494 = vpop.f32.mrb[0].mxu0
        %2495 = vmatprep.mubr.bf16.mxu0 0
        %2496 = vmatmul.mubr.bf16.gmra.mrb[0].mxu0 %v1696
        %v2497 = vpop.f32.mrb[0].mxu0
        %v2498 = vadd.f32 %v2425, %v2497
        %v2499 = vpop.f32.mrb[0].mxu0
        %v2500 = vpop.f32.mrb[0].mxu0
        %v2501 = vadd.f32 %v2425, %v2500
        %v2502 = vpop.f32.mrb[0].mxu0
        %2503 = vmatprep.mubr.bf16.mxu0 0
        %2504 = vmatmul.mubr.bf16.gmra.mrb[0].mxu0 %v1699
        %v2505 = vpop.f32.mrb[0].mxu0
        %v2506 = vadd.f32 %v2425, %v2505
        %v2507 = vpop.f32.mrb[0].mxu0
        %v2508 = vpop.f32.mrb[0].mxu0
        %v2509 = vadd.f32 %v2425, %v2508
        %v2510 = vpop.f32.mrb[0].mxu0
        %2511 = vdwg.mxu0
        %s2512 = scalar_lea.vmem %s23, 16
        %v2513 = vld [vmem:[%s2512] sm:$0xf]
        %v2514 = vld [vmem:[%s2512 + $0x4] sm:$0xf]
        %v2515 = vld [vmem:[%s2512 + $0x8] sm:$0xf]
        %v2516 = vld [vmem:[%s2512 + $0xc] sm:$0xf]
        %s2517 = scalar_lea.vmem %s25, 1
        %v2518 = vld [vmem:[%s2517] sm:$0x1]
        %v2520 = vlaneseq
        %v2521 = vshrl.u32 %v2520, 7
        %v2522 = vsub.s32 0, %v2521
        %v2523 = vrot.slane %v2518, %v2522
        %v2529 = vunpack.c.l.b16 %v2513
        %v2530 = vunpack.c.l.b16 %v2514
        %v2531 = vunpack.c.l.b16 %v2515
        %v2532 = vunpack.c.l.b16 %v2516
        %v2533 = vpack.c.b16 %v2530, %v2529
        %v2534 = vpack.c.b16 %v2532, %v2531
        %2537 = vmatprep.subr.bf16.mxu0 0
        %2538 = vmatpush1.bf16.msra.mxu0 %v2533
        %2539 = vmatprep.subr.bf16.mxu0 0
        %2540 = vmatpush1.bf16.msra.mxu0 %v2534
        %2541 = vmatprep.subr.bf16.mxu0 0
        %2542 = vmatpush1.bf16.msra.mxu0 0
        %2543 = vmatprep.subr.bf16.mxu0 0
        %2544 = vmatpush1.bf16.msra.mxu0 0
        %2545 = vmatprep.subr.bf16.mxu0 0
        %2546 = vmatpush1.bf16.msra.mxu0 0
        %2547 = vmatprep.subr.bf16.mxu0 0
        %2548 = vmatpush1.bf16.msra.mxu0 0
        %2549 = vmatprep.subr.bf16.mxu0 0
        %2550 = vmatpush1.bf16.msra.mxu0 0
        %2551 = vmatprep.subr.bf16.mxu0 0
        %2552 = vmatpush1.bf16.msra.mxu0 0
        %2553 = vmatprep.subr.bf16.mxu0 0
        %2554 = vmatpush1.bf16.msra.mxu0 0
        %2555 = vmatprep.subr.bf16.mxu0 0
        %2556 = vmatpush1.bf16.msra.mxu0 0
        %2557 = vmatprep.subr.bf16.mxu0 0
        %2558 = vmatpush1.bf16.msra.mxu0 0
        %2559 = vmatprep.subr.bf16.mxu0 0
        %2560 = vmatpush1.bf16.msra.mxu0 0
        %2561 = vmatprep.subr.bf16.mxu0 0
        %2562 = vmatpush1.bf16.msra.mxu0 0
        %2563 = vmatprep.subr.bf16.mxu0 0
        %2564 = vmatpush1.bf16.msra.mxu0 0
        %2565 = vmatprep.subr.bf16.mxu0 0
        %2566 = vmatpush1.bf16.msra.mxu0 0
        %2567 = vmatprep.subr.bf16.mxu0 0
        %2568 = vmatpush1.bf16.msra.mxu0 0
        %2569 = vmatprep.mubr.bf16.mxu0 0
        %2570 = vmatmul.mubr.bf16.gmra.mrb[0].mxu0 %v1894
        %v2571 = vpop.f32.mrb[0].mxu0
        %v2572 = vadd.f32 %v2523, %v2571
        %v2573 = vpop.f32.mrb[0].mxu0
        %v2574 = vpop.f32.mrb[0].mxu0
        %v2575 = vadd.f32 %v2523, %v2574
        %v2576 = vpop.f32.mrb[0].mxu0
        %2577 = vmatprep.mubr.bf16.mxu0 0
        %2578 = vmatmul.mubr.bf16.gmra.mrb[0].mxu0 %v1897
        %v2579 = vpop.f32.mrb[0].mxu0
        %v2580 = vadd.f32 %v2523, %v2579
        %v2581 = vpop.f32.mrb[0].mxu0
        %v2582 = vpop.f32.mrb[0].mxu0
        %v2583 = vadd.f32 %v2523, %v2582
        %v2584 = vpop.f32.mrb[0].mxu0
        %2585 = vmatprep.mubr.bf16.mxu0 0
        %2586 = vmatmul.mubr.bf16.gmra.mrb[0].mxu0 %v1900
        %v2587 = vpop.f32.mrb[0].mxu0
        %v2588 = vadd.f32 %v2523, %v2587
        %v2589 = vpop.f32.mrb[0].mxu0
        %v2590 = vpop.f32.mrb[0].mxu0
        %v2591 = vadd.f32 %v2523, %v2590
        %v2592 = vpop.f32.mrb[0].mxu0
        %2593 = vmatprep.mubr.bf16.mxu0 0
        %2594 = vmatmul.mubr.bf16.gmra.mrb[0].mxu0 %v1903
        %v2595 = vpop.f32.mrb[0].mxu0
        %v2596 = vadd.f32 %v2523, %v2595
        %v2597 = vpop.f32.mrb[0].mxu0
        %v2598 = vpop.f32.mrb[0].mxu0
        %v2599 = vadd.f32 %v2523, %v2598
        %v2600 = vpop.f32.mrb[0].mxu0
        %2601 = vmatprep.mubr.bf16.mxu0 0
        %2602 = vmatmul.mubr.bf16.gmra.mrb[0].mxu0 %v1906
        %v2603 = vpop.f32.mrb[0].mxu0
        %v2604 = vadd.f32 %v2523, %v2603
        %v2605 = vpop.f32.mrb[0].mxu0
        %v2606 = vpop.f32.mrb[0].mxu0
        %v2607 = vadd.f32 %v2523, %v2606
        %v2608 = vpop.f32.mrb[0].mxu0
        %2609 = vdwg.mxu0
        %v2610 = vpack.c.bf16 %v2379, %v2376
        %v2611 = vpack.c.bf16 %v2387, %v2384
        %v2612 = vpack.c.bf16 %v2395, %v2392
        %v2613 = vpack.c.bf16 %v2403, %v2400
        %v2614 = vpack.c.bf16 %v2411, %v2408
        %v2615 = vpack.c.bf16 %v2477, %v2474
        %v2616 = vpack.c.bf16 %v2485, %v2482
        %v2617 = vpack.c.bf16 %v2493, %v2490
        %v2618 = vpack.c.bf16 %v2501, %v2498
        %v2619 = vpack.c.bf16 %v2509, %v2506
        %v2621 = vsel %vm1997, %v2610, 0
        %v2624 = vsel %vm1997, %v2611, 0
        %v2627 = vsel %vm1997, %v2612, 0
        %v2630 = vsel %vm1997, %v2613, 0
        %v2633 = vsel %vm1997, %v2614, 0
        %v2636 = vsel %vm1997, %v2615, 0
        %v2639 = vsel %vm1997, %v2616, 0
        %v2642 = vsel %vm1997, %v2617, 0
        %v2645 = vsel %vm1997, %v2618, 0
        %v2648 = vsel %vm1997, %v2619, 0
        %2650 = vmatprep.subr.bf16.mxu0 0
        %2651 = vmatpush1.bf16.xpose.msra.mxu0 %v2636
        %2652 = vmatprep.subr.bf16.mxu0 0
        %2653 = vmatpush1.bf16.xpose.msra.mxu0 %v2639
        %2654 = vmatprep.subr.bf16.mxu0 0
        %2655 = vmatpush1.bf16.xpose.msra.mxu0 %v2642
        %2656 = vmatprep.subr.bf16.mxu0 0
        %2657 = vmatpush1.bf16.xpose.msra.mxu0 %v2645
        %2658 = vmatprep.subr.bf16.mxu0 0
        %2659 = vmatpush1.bf16.xpose.msra.mxu0 %v2648
        %2660 = vmatprep.subr.bf16.mxu0 0
        %2661 = vmatpush1.bf16.xpose.msra.mxu0 0
        %2662 = vmatprep.subr.bf16.mxu0 0
        %2663 = vmatpush1.bf16.xpose.msra.mxu0 0
        %2664 = vmatprep.subr.bf16.mxu0 0
        %2665 = vmatpush1.bf16.xpose.msra.mxu0 0
        %2666 = vmatprep.subr.bf16.mxu0 0
        %2667 = vmatpush1.bf16.xpose.msra.mxu0 0
        %2668 = vmatprep.subr.bf16.mxu0 0
        %2669 = vmatpush1.bf16.xpose.msra.mxu0 0
        %2670 = vmatprep.subr.bf16.mxu0 0
        %2671 = vmatpush1.bf16.xpose.msra.mxu0 0
        %2672 = vmatprep.subr.bf16.mxu0 0
        %2673 = vmatpush1.bf16.xpose.msra.mxu0 0
        %2674 = vmatprep.subr.bf16.mxu0 0
        %2675 = vmatpush1.bf16.xpose.msra.mxu0 0
        %2676 = vmatprep.subr.bf16.mxu0 0
        %2677 = vmatpush1.bf16.xpose.msra.mxu0 0
        %2678 = vmatprep.subr.bf16.mxu0 0
        %2679 = vmatpush1.bf16.xpose.msra.mxu0 0
        %2680 = vmatprep.subr.bf16.mxu0 0
        %2681 = vmatpush1.bf16.xpose.msra.mxu0 0
        %2682 = vmatprep.mubr.bf16.mxu0 0
        %2683 = vmatmul.mubr.bf16.gmra.mrb[0].mxu0 %v2621
        %v2684 = vpop.f32.mrb[0].mxu0
        %v2685 = vadd.f32 %v1995, %v2684
        %v2686 = vpop.f32.mrb[0].mxu0
        %v2687 = vpop.f32.mrb[0].mxu0
        %v2688 = vadd.f32 %v1995, %v2687
        %v2689 = vpop.f32.mrb[0].mxu0
        %2690 = vmatprep.mubr.bf16.mxu0 0
        %2691 = vmatmul.mubr.bf16.gmra.mrb[0].mxu0 %v2624
        %v2692 = vpop.f32.mrb[0].mxu0
        %v2693 = vadd.f32 %v1995, %v2692
        %v2694 = vpop.f32.mrb[0].mxu0
        %v2695 = vpop.f32.mrb[0].mxu0
        %v2696 = vadd.f32 %v1995, %v2695
        %v2697 = vpop.f32.mrb[0].mxu0
        %2698 = vmatprep.mubr.bf16.mxu0 0
        %2699 = vmatmul.mubr.bf16.gmra.mrb[0].mxu0 %v2627
        %v2700 = vpop.f32.mrb[0].mxu0
        %v2701 = vadd.f32 %v1995, %v2700
        %v2702 = vpop.f32.mrb[0].mxu0
        %v2703 = vpop.f32.mrb[0].mxu0
        %v2704 = vadd.f32 %v1995, %v2703
        %v2705 = vpop.f32.mrb[0].mxu0
        %2706 = vmatprep.mubr.bf16.mxu0 0
        %2707 = vmatmul.mubr.bf16.gmra.mrb[0].mxu0 %v2630
        %v2708 = vpop.f32.mrb[0].mxu0
        %v2709 = vadd.f32 %v1995, %v2708
        %v2710 = vpop.f32.mrb[0].mxu0
        %v2711 = vpop.f32.mrb[0].mxu0
        %v2712 = vadd.f32 %v1995, %v2711
        %v2713 = vpop.f32.mrb[0].mxu0
        %2714 = vmatprep.mubr.bf16.mxu0 0
        %2715 = vmatmul.mubr.bf16.gmra.mrb[0].mxu0 %v2633
        %v2716 = vpop.f32.mrb[0].mxu0
        %v2717 = vadd.f32 %v1995, %v2716
        %v2718 = vpop.f32.mrb[0].mxu0
        %v2719 = vpop.f32.mrb[0].mxu0
        %v2720 = vadd.f32 %v1995, %v2719
        %v2721 = vpop.f32.mrb[0].mxu0
        %2722 = vdwg.mxu0
        %v2723 = vsel %vm2101, %v2685, -inf
        %2724 = vmax.xlane.f32.xlu0 %v2723
        %v2725 = vpop.xlane.xlu0 %2724
        %v2726 = vsel %vm2101, %v2688, -inf
        %2727 = vmax.xlane.f32.xlu0 %v2726
        %v2728 = vpop.xlane.xlu0 %2727
        %v2729 = vsel %vm2101, %v2693, -inf
        %2730 = vmax.xlane.f32.xlu0 %v2729
        %v2731 = vpop.xlane.xlu0 %2730
        %v2732 = vsel %vm2101, %v2696, -inf
        %2733 = vmax.xlane.f32.xlu0 %v2732
        %v2734 = vpop.xlane.xlu0 %2733
        %v2735 = vsel %vm2101, %v2701, -inf
        %2736 = vmax.xlane.f32.xlu0 %v2735
        %v2737 = vpop.xlane.xlu0 %2736
        %v2738 = vsel %vm2101, %v2704, -inf
        %2739 = vmax.xlane.f32.xlu0 %v2738
        %v2740 = vpop.xlane.xlu0 %2739
        %v2741 = vsel %vm2101, %v2709, -inf
        %2742 = vmax.xlane.f32.xlu0 %v2741
        %v2743 = vpop.xlane.xlu0 %2742
        %v2744 = vsel %vm2101, %v2712, -inf
        %2745 = vmax.xlane.f32.xlu0 %v2744
        %v2746 = vpop.xlane.xlu0 %2745
        %v2747 = vsel %vm2101, %v2717, -inf
        %2748 = vmax.xlane.f32.xlu0 %v2747
        %v2749 = vpop.xlane.xlu0 %2748
        %v2750 = vsel %vm2101, %v2720, -inf
        %2751 = vmax.xlane.f32.xlu0 %v2750
        %v2752 = vpop.xlane.xlu0 %2751
        %v2753 = vsub.f32 %v2685, %v2725
        %v2754 = vsub.f32 %v2688, %v2728
        %v2755 = vsub.f32 %v2693, %v2731
        %v2756 = vsub.f32 %v2696, %v2734
        %v2757 = vsub.f32 %v2701, %v2737
        %v2758 = vsub.f32 %v2704, %v2740
        %v2759 = vsub.f32 %v2709, %v2743
        %v2760 = vsub.f32 %v2712, %v2746
        %v2761 = vsub.f32 %v2717, %v2749
        %v2762 = vsub.f32 %v2720, %v2752
        %v2763 = vmul.f32 %v2753, 1.442695
        %v2764 = vpow.pop %v2763
        %v2765 = vmul.f32 %v2754, 1.442695
        %v2766 = vpow.pop %v2765
        %v2767 = vmul.f32 %v2755, 1.442695
        %v2768 = vpow.pop %v2767
        %v2769 = vmul.f32 %v2756, 1.442695
        %v2770 = vpow.pop %v2769
        %v2771 = vmul.f32 %v2757, 1.442695
        %v2772 = vpow.pop %v2771
        %v2773 = vmul.f32 %v2758, 1.442695
        %v2774 = vpow.pop %v2773
        %v2775 = vmul.f32 %v2759, 1.442695
        %v2776 = vpow.pop %v2775
        %v2777 = vmul.f32 %v2760, 1.442695
        %v2778 = vpow.pop %v2777
        %v2779 = vmul.f32 %v2761, 1.442695
        %v2780 = vpow.pop %v2779
        %v2781 = vmul.f32 %v2762, 1.442695
        %v2782 = vpow.pop %v2781
        %v2783 = vsel %vm2101, %v2764, 0.0
        %2784 = vadd.xlane.f32.xlu0 %v2783
        %v2785 = vpop.xlane.xlu0 %2784
        %v2786 = vsel %vm2101, %v2766, 0.0
        %2787 = vadd.xlane.f32.xlu0 %v2786
        %v2788 = vpop.xlane.xlu0 %2787
        %v2789 = vsel %vm2101, %v2768, 0.0
        %2790 = vadd.xlane.f32.xlu0 %v2789
        %v2791 = vpop.xlane.xlu0 %2790
        %v2792 = vsel %vm2101, %v2770, 0.0
        %2793 = vadd.xlane.f32.xlu0 %v2792
        %v2794 = vpop.xlane.xlu0 %2793
        %v2795 = vsel %vm2101, %v2772, 0.0
        %2796 = vadd.xlane.f32.xlu0 %v2795
        %v2797 = vpop.xlane.xlu0 %2796
        %v2798 = vsel %vm2101, %v2774, 0.0
        %2799 = vadd.xlane.f32.xlu0 %v2798
        %v2800 = vpop.xlane.xlu0 %2799
        %v2801 = vsel %vm2101, %v2776, 0.0
        %2802 = vadd.xlane.f32.xlu0 %v2801
        %v2803 = vpop.xlane.xlu0 %2802
        %v2804 = vsel %vm2101, %v2778, 0.0
        %2805 = vadd.xlane.f32.xlu0 %v2804
        %v2806 = vpop.xlane.xlu0 %2805
        %v2807 = vsel %vm2101, %v2780, 0.0
        %2808 = vadd.xlane.f32.xlu0 %v2807
        %v2809 = vpop.xlane.xlu0 %2808
        %v2810 = vsel %vm2101, %v2782, 0.0
        %2811 = vadd.xlane.f32.xlu0 %v2810
        %v2812 = vpop.xlane.xlu0 %2811
        %v2813 = vrcp.pop %v2785
        %v2814 = vrcp.pop %v2788
        %v2815 = vrcp.pop %v2791
        %v2816 = vrcp.pop %v2794
        %v2817 = vrcp.pop %v2797
        %v2818 = vrcp.pop %v2800
        %v2819 = vrcp.pop %v2803
        %v2820 = vrcp.pop %v2806
        %v2821 = vrcp.pop %v2809
        %v2822 = vrcp.pop %v2812
        %v2823 = vmul.f32 %v2764, %v2813
        %v2824 = vmul.f32 %v2766, %v2814
        %v2825 = vmul.f32 %v2768, %v2815
        %v2826 = vmul.f32 %v2770, %v2816
        %v2827 = vmul.f32 %v2772, %v2817
        %v2828 = vmul.f32 %v2774, %v2818
        %v2829 = vmul.f32 %v2776, %v2819
        %v2830 = vmul.f32 %v2778, %v2820
        %v2831 = vmul.f32 %v2780, %v2821
        %v2832 = vmul.f32 %v2782, %v2822
        %v2833 = vpack.c.bf16 %v2824, %v2823
        %v2834 = vpack.c.bf16 %v2826, %v2825
        %v2835 = vpack.c.bf16 %v2828, %v2827
        %v2836 = vpack.c.bf16 %v2830, %v2829
        %v2837 = vpack.c.bf16 %v2832, %v2831
        %v2838 = vpack.c.bf16 %v2575, %v2572
        %v2839 = vpack.c.bf16 %v2583, %v2580
        %v2840 = vpack.c.bf16 %v2591, %v2588
        %v2841 = vpack.c.bf16 %v2599, %v2596
        %v2842 = vpack.c.bf16 %v2607, %v2604
        %v2844 = vsel %vm2101, %v2833, 0
        %v2847 = vsel %vm2101, %v2834, 0
        %v2850 = vsel %vm2101, %v2835, 0
        %v2853 = vsel %vm2101, %v2836, 0
        %v2856 = vsel %vm2101, %v2837, 0
        %2858 = vmatprep.subr.bf16.mxu0 0
        %2859 = vmatpush1.bf16.msra.mxu0 %v2838
        %2860 = vmatprep.subr.bf16.mxu0 0
        %2861 = vmatpush1.bf16.msra.mxu0 %v2839
        %2862 = vmatprep.subr.bf16.mxu0 0
        %2863 = vmatpush1.bf16.msra.mxu0 %v2840
        %2864 = vmatprep.subr.bf16.mxu0 0
        %2865 = vmatpush1.bf16.msra.mxu0 %v2841
        %2866 = vmatprep.subr.bf16.mxu0 0
        %2867 = vmatpush1.bf16.msra.mxu0 %v2842
        %2868 = vmatprep.subr.bf16.mxu0 0
        %2869 = vmatpush1.bf16.msra.mxu0 0
        %2870 = vmatprep.subr.bf16.mxu0 0
        %2871 = vmatpush1.bf16.msra.mxu0 0
        %2872 = vmatprep.subr.bf16.mxu0 0
        %2873 = vmatpush1.bf16.msra.mxu0 0
        %2874 = vmatprep.subr.bf16.mxu0 0
        %2875 = vmatpush1.bf16.msra.mxu0 0
        %2876 = vmatprep.subr.bf16.mxu0 0
        %2877 = vmatpush1.bf16.msra.mxu0 0
        %2878 = vmatprep.subr.bf16.mxu0 0
        %2879 = vmatpush1.bf16.msra.mxu0 0
        %2880 = vmatprep.subr.bf16.mxu0 0
        %2881 = vmatpush1.bf16.msra.mxu0 0
        %2882 = vmatprep.subr.bf16.mxu0 0
        %2883 = vmatpush1.bf16.msra.mxu0 0
        %2884 = vmatprep.subr.bf16.mxu0 0
        %2885 = vmatpush1.bf16.msra.mxu0 0
        %2886 = vmatprep.subr.bf16.mxu0 0
        %2887 = vmatpush1.bf16.msra.mxu0 0
        %2888 = vmatprep.subr.bf16.mxu0 0
        %2889 = vmatpush1.bf16.msra.mxu0 0
        %2890 = vmatprep.mubr.bf16.mxu0 0
        %2891 = vmatmul.mubr.bf16.gmra.mrb[0].mxu0 %v2844
        %v2892 = vpop.f32.mrb[0].mxu0
        %v2893 = vadd.f32 0.0, %v2892
        %v2894 = vpop.f32.mrb[0].mxu0
        %v2895 = vpop.f32.mrb[0].mxu0
        %v2896 = vadd.f32 0.0, %v2895
        %v2897 = vpop.f32.mrb[0].mxu0
        %2898 = vmatprep.mubr.bf16.mxu0 0
        %2899 = vmatmul.mubr.bf16.gmra.mrb[0].mxu0 %v2847
        %v2900 = vpop.f32.mrb[0].mxu0
        %v2901 = vadd.f32 0.0, %v2900
        %v2902 = vpop.f32.mrb[0].mxu0
        %v2903 = vpop.f32.mrb[0].mxu0
        %v2904 = vadd.f32 0.0, %v2903
        %v2905 = vpop.f32.mrb[0].mxu0
        %2906 = vmatprep.mubr.bf16.mxu0 0
        %2907 = vmatmul.mubr.bf16.gmra.mrb[0].mxu0 %v2850
        %v2908 = vpop.f32.mrb[0].mxu0
        %v2909 = vadd.f32 0.0, %v2908
        %v2910 = vpop.f32.mrb[0].mxu0
        %v2911 = vpop.f32.mrb[0].mxu0
        %v2912 = vadd.f32 0.0, %v2911
        %v2913 = vpop.f32.mrb[0].mxu0
        %2914 = vmatprep.mubr.bf16.mxu0 0
        %2915 = vmatmul.mubr.bf16.gmra.mrb[0].mxu0 %v2853
        %v2916 = vpop.f32.mrb[0].mxu0
        %v2917 = vadd.f32 0.0, %v2916
        %v2918 = vpop.f32.mrb[0].mxu0
        %v2919 = vpop.f32.mrb[0].mxu0
        %v2920 = vadd.f32 0.0, %v2919
        %v2921 = vpop.f32.mrb[0].mxu0
        %2922 = vmatprep.mubr.bf16.mxu0 0
        %2923 = vmatmul.mubr.bf16.gmra.mrb[0].mxu0 %v2856
        %v2924 = vpop.f32.mrb[0].mxu0
        %v2925 = vadd.f32 0.0, %v2924
        %v2926 = vpop.f32.mrb[0].mxu0
        %v2927 = vpop.f32.mrb[0].mxu0
        %v2928 = vadd.f32 0.0, %v2927
        %v2929 = vpop.f32.mrb[0].mxu0
        %2930 = vdwg.mxu0
        %v2931 = vpack.c.bf16 %v2896, %v2893
        %v2932 = vpack.c.bf16 %v2904, %v2901
        %v2933 = vpack.c.bf16 %v2912, %v2909
        %v2934 = vpack.c.bf16 %v2920, %v2917
        %v2935 = vpack.c.bf16 %v2928, %v2925
        %s2936 = scalar_lea.vmem %s27, 4
        %v2937 = vld [vmem:[%s2936] sm:$0xf]
        %v2939 = vsel %vm1997, %v2931, 0
        %v2942 = vsel %vm1997, %v2932, 0
        %v2945 = vsel %vm1997, %v2933, 0
        %v2948 = vsel %vm1997, %v2934, 0
        %v2951 = vsel %vm1997, %v2935, 0
        %vm2953 = vcmask 1043456
        %v2955 = vsel %vm2953, %v2937, 0
        %2957 = vmatprep.subr.bf16.mxu0 0
        %2958 = vmatpush1.bf16.msra.mxu0 %v2955
        %2959 = vmatprep.subr.bf16.mxu0 0
        %2960 = vmatpush1.bf16.msra.mxu0 0
        %2961 = vmatprep.subr.bf16.mxu0 0
        %2962 = vmatpush1.bf16.msra.mxu0 0
        %2963 = vmatprep.subr.bf16.mxu0 0
        %2964 = vmatpush1.bf16.msra.mxu0 0
        %2965 = vmatprep.subr.bf16.mxu0 0
        %2966 = vmatpush1.bf16.msra.mxu0 0
        %2967 = vmatprep.subr.bf16.mxu0 0
        %2968 = vmatpush1.bf16.msra.mxu0 0
        %2969 = vmatprep.subr.bf16.mxu0 0
        %2970 = vmatpush1.bf16.msra.mxu0 0
        %2971 = vmatprep.subr.bf16.mxu0 0
        %2972 = vmatpush1.bf16.msra.mxu0 0
        %2973 = vmatprep.subr.bf16.mxu0 0
        %2974 = vmatpush1.bf16.msra.mxu0 0
        %2975 = vmatprep.subr.bf16.mxu0 0
        %2976 = vmatpush1.bf16.msra.mxu0 0
        %2977 = vmatprep.subr.bf16.mxu0 0
        %2978 = vmatpush1.bf16.msra.mxu0 0
        %2979 = vmatprep.subr.bf16.mxu0 0
        %2980 = vmatpush1.bf16.msra.mxu0 0
        %2981 = vmatprep.subr.bf16.mxu0 0
        %2982 = vmatpush1.bf16.msra.mxu0 0
        %2983 = vmatprep.subr.bf16.mxu0 0
        %2984 = vmatpush1.bf16.msra.mxu0 0
        %2985 = vmatprep.subr.bf16.mxu0 0
        %2986 = vmatpush1.bf16.msra.mxu0 0
        %2987 = vmatprep.subr.bf16.mxu0 0
        %2988 = vmatpush1.bf16.msra.mxu0 0
        %2989 = vmatprep.mubr.bf16.mxu0 0
        %2990 = vmatmul.mubr.bf16.gmra.mrb[0].mxu0 %v2939
        %v2991 = vpop.f32.mrb[0].mxu0
        %v2992 = vadd.f32 0.0, %v2991
        %v2993 = vpop.f32.mrb[0].mxu0
        %v2994 = vpop.f32.mrb[0].mxu0
        %v2995 = vadd.f32 0.0, %v2994
        %v2996 = vpop.f32.mrb[0].mxu0
        %2997 = vmatprep.mubr.bf16.mxu0 0
        %2998 = vmatmul.mubr.bf16.gmra.mrb[0].mxu0 %v2942
        %v2999 = vpop.f32.mrb[0].mxu0
        %v3000 = vadd.f32 0.0, %v2999
        %v3001 = vpop.f32.mrb[0].mxu0
        %v3002 = vpop.f32.mrb[0].mxu0
        %v3003 = vadd.f32 0.0, %v3002
        %v3004 = vpop.f32.mrb[0].mxu0
        %3005 = vmatprep.mubr.bf16.mxu0 0
        %3006 = vmatmul.mubr.bf16.gmra.mrb[0].mxu0 %v2945
        %v3007 = vpop.f32.mrb[0].mxu0
        %v3008 = vadd.f32 0.0, %v3007
        %v3009 = vpop.f32.mrb[0].mxu0
        %v3010 = vpop.f32.mrb[0].mxu0
        %v3011 = vadd.f32 0.0, %v3010
        %v3012 = vpop.f32.mrb[0].mxu0
        %3013 = vmatprep.mubr.bf16.mxu0 0
        %3014 = vmatmul.mubr.bf16.gmra.mrb[0].mxu0 %v2948
        %v3015 = vpop.f32.mrb[0].mxu0
        %v3016 = vadd.f32 0.0, %v3015
        %v3017 = vpop.f32.mrb[0].mxu0
        %v3018 = vpop.f32.mrb[0].mxu0
        %v3019 = vadd.f32 0.0, %v3018
        %v3020 = vpop.f32.mrb[0].mxu0
        %3021 = vmatprep.mubr.bf16.mxu0 0
        %3022 = vmatmul.mubr.bf16.gmra.mrb[0].mxu0 %v2951
        %v3023 = vpop.f32.mrb[0].mxu0
        %v3024 = vadd.f32 0.0, %v3023
        %v3025 = vpop.f32.mrb[0].mxu0
        %v3026 = vpop.f32.mrb[0].mxu0
        %v3027 = vadd.f32 0.0, %v3026
        %v3028 = vpop.f32.mrb[0].mxu0
        %3029 = vdwg.mxu0
        %v3031 = vsel %vm1997, %v2310, 0
        %v3034 = vsel %vm1997, %v2311, 0
        %v3037 = vsel %vm1997, %v2312, 0
        %v3040 = vsel %vm1997, %v2313, 0
        %v3043 = vsel %vm1997, %v2314, 0
        %v3046 = vsel %vm2953, %v2315, 0
        %3048 = vmatprep.subr.bf16.mxu0 0
        %3049 = vmatpush1.bf16.msra.mxu0 %v3046
        %3050 = vmatprep.subr.bf16.mxu0 0
        %3051 = vmatpush1.bf16.msra.mxu0 0
        %3052 = vmatprep.subr.bf16.mxu0 0
        %3053 = vmatpush1.bf16.msra.mxu0 0
        %3054 = vmatprep.subr.bf16.mxu0 0
        %3055 = vmatpush1.bf16.msra.mxu0 0
        %3056 = vmatprep.subr.bf16.mxu0 0
        %3057 = vmatpush1.bf16.msra.mxu0 0
        %3058 = vmatprep.subr.bf16.mxu0 0
        %3059 = vmatpush1.bf16.msra.mxu0 0
        %3060 = vmatprep.subr.bf16.mxu0 0
        %3061 = vmatpush1.bf16.msra.mxu0 0
        %3062 = vmatprep.subr.bf16.mxu0 0
        %3063 = vmatpush1.bf16.msra.mxu0 0
        %3064 = vmatprep.subr.bf16.mxu0 0
        %3065 = vmatpush1.bf16.msra.mxu0 0
        %3066 = vmatprep.subr.bf16.mxu0 0
        %3067 = vmatpush1.bf16.msra.mxu0 0
        %3068 = vmatprep.subr.bf16.mxu0 0
        %3069 = vmatpush1.bf16.msra.mxu0 0
        %3070 = vmatprep.subr.bf16.mxu0 0
        %3071 = vmatpush1.bf16.msra.mxu0 0
        %3072 = vmatprep.subr.bf16.mxu0 0
        %3073 = vmatpush1.bf16.msra.mxu0 0
        %3074 = vmatprep.subr.bf16.mxu0 0
        %3075 = vmatpush1.bf16.msra.mxu0 0
        %3076 = vmatprep.subr.bf16.mxu0 0
        %3077 = vmatpush1.bf16.msra.mxu0 0
        %3078 = vmatprep.subr.bf16.mxu0 0
        %3079 = vmatpush1.bf16.msra.mxu0 0
        %3080 = vmatprep.mubr.bf16.mxu0 0
        %3081 = vmatmul.mubr.bf16.gmra.mrb[0].mxu0 %v3031
        %v3082 = vpop.f32.mrb[0].mxu0
        %v3083 = vadd.f32 %v2992, %v3082
        %v3084 = vpop.f32.mrb[0].mxu0
        %v3085 = vpop.f32.mrb[0].mxu0
        %v3086 = vadd.f32 %v2995, %v3085
        %v3087 = vpop.f32.mrb[0].mxu0
        %3088 = vmatprep.mubr.bf16.mxu0 0
        %3089 = vmatmul.mubr.bf16.gmra.mrb[0].mxu0 %v3034
        %v3090 = vpop.f32.mrb[0].mxu0
        %v3091 = vadd.f32 %v3000, %v3090
        %v3092 = vpop.f32.mrb[0].mxu0
        %v3093 = vpop.f32.mrb[0].mxu0
        %v3094 = vadd.f32 %v3003, %v3093
        %v3095 = vpop.f32.mrb[0].mxu0
        %3096 = vmatprep.mubr.bf16.mxu0 0
        %3097 = vmatmul.mubr.bf16.gmra.mrb[0].mxu0 %v3037
        %v3098 = vpop.f32.mrb[0].mxu0
        %v3099 = vadd.f32 %v3008, %v3098
        %v3100 = vpop.f32.mrb[0].mxu0
        %v3101 = vpop.f32.mrb[0].mxu0
        %v3102 = vadd.f32 %v3011, %v3101
        %v3103 = vpop.f32.mrb[0].mxu0
        %3104 = vmatprep.mubr.bf16.mxu0 0
        %3105 = vmatmul.mubr.bf16.gmra.mrb[0].mxu0 %v3040
        %v3106 = vpop.f32.mrb[0].mxu0
        %v3107 = vadd.f32 %v3016, %v3106
        %v3108 = vpop.f32.mrb[0].mxu0
        %v3109 = vpop.f32.mrb[0].mxu0
        %v3110 = vadd.f32 %v3019, %v3109
        %v3111 = vpop.f32.mrb[0].mxu0
        %3112 = vmatprep.mubr.bf16.mxu0 0
        %3113 = vmatmul.mubr.bf16.gmra.mrb[0].mxu0 %v3043
        %v3114 = vpop.f32.mrb[0].mxu0
        %v3115 = vadd.f32 %v3024, %v3114
        %v3116 = vpop.f32.mrb[0].mxu0
        %v3117 = vpop.f32.mrb[0].mxu0
        %v3118 = vadd.f32 %v3027, %v3117
        %v3119 = vpop.f32.mrb[0].mxu0
        %3120 = vdwg.mxu0
        %s3121 = scalar_lea.vmem %s15, 32
        %v3122 = vld [vmem:[%s3121] sm:$0xf]
        %v3123 = vld [vmem:[%s3121 + $0x4] sm:$0xf]
        %v3124 = vld [vmem:[%s3121 + $0x8] sm:$0xf]
        %v3125 = vld [vmem:[%s3121 + $0xc] sm:$0xf]
        %s3126 = scalar_lea.vmem %s17, 2
        %v3127 = vld [vmem:[%s3126] sm:$0x1]
        %v3129 = vlaneseq
        %v3130 = vshrl.u32 %v3129, 7
        %v3131 = vsub.s32 0, %v3130
        %v3132 = vrot.slane %v3127, %v3131
        %v3138 = vunpack.c.l.b16 %v3122
        %v3139 = vunpack.c.l.b16 %v3123
        %v3140 = vunpack.c.l.b16 %v3124
        %v3141 = vunpack.c.l.b16 %v3125
        %v3142 = vpack.c.b16 %v3139, %v3138
        %v3143 = vpack.c.b16 %v3141, %v3140
        %3146 = vmatprep.subr.bf16.mxu0 0
        %3147 = vmatpush1.bf16.msra.mxu0 %v3142
        %3148 = vmatprep.subr.bf16.mxu0 0
        %3149 = vmatpush1.bf16.msra.mxu0 %v3143
        %3150 = vmatprep.subr.bf16.mxu0 0
        %3151 = vmatpush1.bf16.msra.mxu0 0
        %3152 = vmatprep.subr.bf16.mxu0 0
        %3153 = vmatpush1.bf16.msra.mxu0 0
        %3154 = vmatprep.subr.bf16.mxu0 0
        %3155 = vmatpush1.bf16.msra.mxu0 0
        %3156 = vmatprep.subr.bf16.mxu0 0
        %3157 = vmatpush1.bf16.msra.mxu0 0
        %3158 = vmatprep.subr.bf16.mxu0 0
        %3159 = vmatpush1.bf16.msra.mxu0 0
        %3160 = vmatprep.subr.bf16.mxu0 0
        %3161 = vmatpush1.bf16.msra.mxu0 0
        %3162 = vmatprep.subr.bf16.mxu0 0
        %3163 = vmatpush1.bf16.msra.mxu0 0
        %3164 = vmatprep.subr.bf16.mxu0 0
        %3165 = vmatpush1.bf16.msra.mxu0 0
        %3166 = vmatprep.subr.bf16.mxu0 0
        %3167 = vmatpush1.bf16.msra.mxu0 0
        %3168 = vmatprep.subr.bf16.mxu0 0
        %3169 = vmatpush1.bf16.msra.mxu0 0
        %3170 = vmatprep.subr.bf16.mxu0 0
        %3171 = vmatpush1.bf16.msra.mxu0 0
        %3172 = vmatprep.subr.bf16.mxu0 0
        %3173 = vmatpush1.bf16.msra.mxu0 0
        %3174 = vmatprep.subr.bf16.mxu0 0
        %3175 = vmatpush1.bf16.msra.mxu0 0
        %3176 = vmatprep.subr.bf16.mxu0 0
        %3177 = vmatpush1.bf16.msra.mxu0 0
        %3178 = vmatprep.mubr.bf16.mxu0 0
        %3179 = vmatmul.mubr.bf16.gmra.mrb[0].mxu0 %v1687
        %v3180 = vpop.f32.mrb[0].mxu0
        %v3181 = vadd.f32 %v3132, %v3180
        %v3182 = vpop.f32.mrb[0].mxu0
        %v3183 = vpop.f32.mrb[0].mxu0
        %v3184 = vadd.f32 %v3132, %v3183
        %v3185 = vpop.f32.mrb[0].mxu0
        %3186 = vmatprep.mubr.bf16.mxu0 0
        %3187 = vmatmul.mubr.bf16.gmra.mrb[0].mxu0 %v1690
        %v3188 = vpop.f32.mrb[0].mxu0
        %v3189 = vadd.f32 %v3132, %v3188
        %v3190 = vpop.f32.mrb[0].mxu0
        %v3191 = vpop.f32.mrb[0].mxu0
        %v3192 = vadd.f32 %v3132, %v3191
        %v3193 = vpop.f32.mrb[0].mxu0
        %3194 = vmatprep.mubr.bf16.mxu0 0
        %3195 = vmatmul.mubr.bf16.gmra.mrb[0].mxu0 %v1693
        %v3196 = vpop.f32.mrb[0].mxu0
        %v3197 = vadd.f32 %v3132, %v3196
        %v3198 = vpop.f32.mrb[0].mxu0
        %v3199 = vpop.f32.mrb[0].mxu0
        %v3200 = vadd.f32 %v3132, %v3199
        %v3201 = vpop.f32.mrb[0].mxu0
        %3202 = vmatprep.mubr.bf16.mxu0 0
        %3203 = vmatmul.mubr.bf16.gmra.mrb[0].mxu0 %v1696
        %v3204 = vpop.f32.mrb[0].mxu0
        %v3205 = vadd.f32 %v3132, %v3204
        %v3206 = vpop.f32.mrb[0].mxu0
        %v3207 = vpop.f32.mrb[0].mxu0
        %v3208 = vadd.f32 %v3132, %v3207
        %v3209 = vpop.f32.mrb[0].mxu0
        %3210 = vmatprep.mubr.bf16.mxu0 0
        %3211 = vmatmul.mubr.bf16.gmra.mrb[0].mxu0 %v1699
        %v3212 = vpop.f32.mrb[0].mxu0
        %v3213 = vadd.f32 %v3132, %v3212
        %v3214 = vpop.f32.mrb[0].mxu0
        %v3215 = vpop.f32.mrb[0].mxu0
        %v3216 = vadd.f32 %v3132, %v3215
        %v3217 = vpop.f32.mrb[0].mxu0
        %3218 = vdwg.mxu0
        %s3219 = scalar_lea.vmem %s19, 32
        %v3220 = vld [vmem:[%s3219] sm:$0xf]
        %v3221 = vld [vmem:[%s3219 + $0x4] sm:$0xf]
        %v3222 = vld [vmem:[%s3219 + $0x8] sm:$0xf]
        %v3223 = vld [vmem:[%s3219 + $0xc] sm:$0xf]
        %s3224 = scalar_lea.vmem %s21, 2
        %v3225 = vld [vmem:[%s3224] sm:$0x1]
        %v3227 = vlaneseq
        %v3228 = vshrl.u32 %v3227, 7
        %v3229 = vsub.s32 0, %v3228
        %v3230 = vrot.slane %v3225, %v3229
        %v3236 = vunpack.c.l.b16 %v3220
        %v3237 = vunpack.c.l.b16 %v3221
        %v3238 = vunpack.c.l.b16 %v3222
        %v3239 = vunpack.c.l.b16 %v3223
        %v3240 = vpack.c.b16 %v3237, %v3236
        %v3241 = vpack.c.b16 %v3239, %v3238
        %3244 = vmatprep.subr.bf16.mxu0 0
        %3245 = vmatpush1.bf16.msra.mxu0 %v3240
        %3246 = vmatprep.subr.bf16.mxu0 0
        %3247 = vmatpush1.bf16.msra.mxu0 %v3241
        %3248 = vmatprep.subr.bf16.mxu0 0
        %3249 = vmatpush1.bf16.msra.mxu0 0
        %3250 = vmatprep.subr.bf16.mxu0 0
        %3251 = vmatpush1.bf16.msra.mxu0 0
        %3252 = vmatprep.subr.bf16.mxu0 0
        %3253 = vmatpush1.bf16.msra.mxu0 0
        %3254 = vmatprep.subr.bf16.mxu0 0
        %3255 = vmatpush1.bf16.msra.mxu0 0
        %3256 = vmatprep.subr.bf16.mxu0 0
        %3257 = vmatpush1.bf16.msra.mxu0 0
        %3258 = vmatprep.subr.bf16.mxu0 0
        %3259 = vmatpush1.bf16.msra.mxu0 0
        %3260 = vmatprep.subr.bf16.mxu0 0
        %3261 = vmatpush1.bf16.msra.mxu0 0
        %3262 = vmatprep.subr.bf16.mxu0 0
        %3263 = vmatpush1.bf16.msra.mxu0 0
        %3264 = vmatprep.subr.bf16.mxu0 0
        %3265 = vmatpush1.bf16.msra.mxu0 0
        %3266 = vmatprep.subr.bf16.mxu0 0
        %3267 = vmatpush1.bf16.msra.mxu0 0
        %3268 = vmatprep.subr.bf16.mxu0 0
        %3269 = vmatpush1.bf16.msra.mxu0 0
        %3270 = vmatprep.subr.bf16.mxu0 0
        %3271 = vmatpush1.bf16.msra.mxu0 0
        %3272 = vmatprep.subr.bf16.mxu0 0
        %3273 = vmatpush1.bf16.msra.mxu0 0
        %3274 = vmatprep.subr.bf16.mxu0 0
        %3275 = vmatpush1.bf16.msra.mxu0 0
        %3276 = vmatprep.mubr.bf16.mxu0 0
        %3277 = vmatmul.mubr.bf16.gmra.mrb[0].mxu0 %v1687
        %v3278 = vpop.f32.mrb[0].mxu0
        %v3279 = vadd.f32 %v3230, %v3278
        %v3280 = vpop.f32.mrb[0].mxu0
        %v3281 = vpop.f32.mrb[0].mxu0
        %v3282 = vadd.f32 %v3230, %v3281
        %v3283 = vpop.f32.mrb[0].mxu0
        %3284 = vmatprep.mubr.bf16.mxu0 0
        %3285 = vmatmul.mubr.bf16.gmra.mrb[0].mxu0 %v1690
        %v3286 = vpop.f32.mrb[0].mxu0
        %v3287 = vadd.f32 %v3230, %v3286
        %v3288 = vpop.f32.mrb[0].mxu0
        %v3289 = vpop.f32.mrb[0].mxu0
        %v3290 = vadd.f32 %v3230, %v3289
        %v3291 = vpop.f32.mrb[0].mxu0
        %3292 = vmatprep.mubr.bf16.mxu0 0
        %3293 = vmatmul.mubr.bf16.gmra.mrb[0].mxu0 %v1693
        %v3294 = vpop.f32.mrb[0].mxu0
        %v3295 = vadd.f32 %v3230, %v3294
        %v3296 = vpop.f32.mrb[0].mxu0
        %v3297 = vpop.f32.mrb[0].mxu0
        %v3298 = vadd.f32 %v3230, %v3297
        %v3299 = vpop.f32.mrb[0].mxu0
        %3300 = vmatprep.mubr.bf16.mxu0 0
        %3301 = vmatmul.mubr.bf16.gmra.mrb[0].mxu0 %v1696
        %v3302 = vpop.f32.mrb[0].mxu0
        %v3303 = vadd.f32 %v3230, %v3302
        %v3304 = vpop.f32.mrb[0].mxu0
        %v3305 = vpop.f32.mrb[0].mxu0
        %v3306 = vadd.f32 %v3230, %v3305
        %v3307 = vpop.f32.mrb[0].mxu0
        %3308 = vmatprep.mubr.bf16.mxu0 0
        %3309 = vmatmul.mubr.bf16.gmra.mrb[0].mxu0 %v1699
        %v3310 = vpop.f32.mrb[0].mxu0
        %v3311 = vadd.f32 %v3230, %v3310
        %v3312 = vpop.f32.mrb[0].mxu0
        %v3313 = vpop.f32.mrb[0].mxu0
        %v3314 = vadd.f32 %v3230, %v3313
        %v3315 = vpop.f32.mrb[0].mxu0
        %3316 = vdwg.mxu0
        %s3317 = scalar_lea.vmem %s23, 32
        %v3318 = vld [vmem:[%s3317] sm:$0xf]
        %v3319 = vld [vmem:[%s3317 + $0x4] sm:$0xf]
        %v3320 = vld [vmem:[%s3317 + $0x8] sm:$0xf]
        %v3321 = vld [vmem:[%s3317 + $0xc] sm:$0xf]
        %s3322 = scalar_lea.vmem %s25, 2
        %v3323 = vld [vmem:[%s3322] sm:$0x1]
        %v3325 = vlaneseq
        %v3326 = vshrl.u32 %v3325, 7
        %v3327 = vsub.s32 0, %v3326
        %v3328 = vrot.slane %v3323, %v3327
        %v3334 = vunpack.c.l.b16 %v3318
        %v3335 = vunpack.c.l.b16 %v3319
        %v3336 = vunpack.c.l.b16 %v3320
        %v3337 = vunpack.c.l.b16 %v3321
        %v3338 = vpack.c.b16 %v3335, %v3334
        %v3339 = vpack.c.b16 %v3337, %v3336
        %3342 = vmatprep.subr.bf16.mxu0 0
        %3343 = vmatpush1.bf16.msra.mxu0 %v3338
        %3344 = vmatprep.subr.bf16.mxu0 0
        %3345 = vmatpush1.bf16.msra.mxu0 %v3339
        %3346 = vmatprep.subr.bf16.mxu0 0
        %3347 = vmatpush1.bf16.msra.mxu0 0
        %3348 = vmatprep.subr.bf16.mxu0 0
        %3349 = vmatpush1.bf16.msra.mxu0 0
        %3350 = vmatprep.subr.bf16.mxu0 0
        %3351 = vmatpush1.bf16.msra.mxu0 0
        %3352 = vmatprep.subr.bf16.mxu0 0
        %3353 = vmatpush1.bf16.msra.mxu0 0
        %3354 = vmatprep.subr.bf16.mxu0 0
        %3355 = vmatpush1.bf16.msra.mxu0 0
        %3356 = vmatprep.subr.bf16.mxu0 0
        %3357 = vmatpush1.bf16.msra.mxu0 0
        %3358 = vmatprep.subr.bf16.mxu0 0
        %3359 = vmatpush1.bf16.msra.mxu0 0
        %3360 = vmatprep.subr.bf16.mxu0 0
        %3361 = vmatpush1.bf16.msra.mxu0 0
        %3362 = vmatprep.subr.bf16.mxu0 0
        %3363 = vmatpush1.bf16.msra.mxu0 0
        %3364 = vmatprep.subr.bf16.mxu0 0
        %3365 = vmatpush1.bf16.msra.mxu0 0
        %3366 = vmatprep.subr.bf16.mxu0 0
        %3367 = vmatpush1.bf16.msra.mxu0 0
        %3368 = vmatprep.subr.bf16.mxu0 0
        %3369 = vmatpush1.bf16.msra.mxu0 0
        %3370 = vmatprep.subr.bf16.mxu0 0
        %3371 = vmatpush1.bf16.msra.mxu0 0
        %3372 = vmatprep.subr.bf16.mxu0 0
        %3373 = vmatpush1.bf16.msra.mxu0 0
        %3374 = vmatprep.mubr.bf16.mxu0 0
        %3375 = vmatmul.mubr.bf16.gmra.mrb[0].mxu0 %v1894
        %v3376 = vpop.f32.mrb[0].mxu0
        %v3377 = vadd.f32 %v3328, %v3376
        %v3378 = vpop.f32.mrb[0].mxu0
        %v3379 = vpop.f32.mrb[0].mxu0
        %v3380 = vadd.f32 %v3328, %v3379
        %v3381 = vpop.f32.mrb[0].mxu0
        %3382 = vmatprep.mubr.bf16.mxu0 0
        %3383 = vmatmul.mubr.bf16.gmra.mrb[0].mxu0 %v1897
        %v3384 = vpop.f32.mrb[0].mxu0
        %v3385 = vadd.f32 %v3328, %v3384
        %v3386 = vpop.f32.mrb[0].mxu0
        %v3387 = vpop.f32.mrb[0].mxu0
        %v3388 = vadd.f32 %v3328, %v3387
        %v3389 = vpop.f32.mrb[0].mxu0
        %3390 = vmatprep.mubr.bf16.mxu0 0
        %3391 = vmatmul.mubr.bf16.gmra.mrb[0].mxu0 %v1900
        %v3392 = vpop.f32.mrb[0].mxu0
        %v3393 = vadd.f32 %v3328, %v3392
        %v3394 = vpop.f32.mrb[0].mxu0
        %v3395 = vpop.f32.mrb[0].mxu0
        %v3396 = vadd.f32 %v3328, %v3395
        %v3397 = vpop.f32.mrb[0].mxu0
        %3398 = vmatprep.mubr.bf16.mxu0 0
        %3399 = vmatmul.mubr.bf16.gmra.mrb[0].mxu0 %v1903
        %v3400 = vpop.f32.mrb[0].mxu0
        %v3401 = vadd.f32 %v3328, %v3400
        %v3402 = vpop.f32.mrb[0].mxu0
        %v3403 = vpop.f32.mrb[0].mxu0
        %v3404 = vadd.f32 %v3328, %v3403
        %v3405 = vpop.f32.mrb[0].mxu0
        %3406 = vmatprep.mubr.bf16.mxu0 0
        %3407 = vmatmul.mubr.bf16.gmra.mrb[0].mxu0 %v1906
        %v3408 = vpop.f32.mrb[0].mxu0
        %v3409 = vadd.f32 %v3328, %v3408
        %v3410 = vpop.f32.mrb[0].mxu0
        %v3411 = vpop.f32.mrb[0].mxu0
        %v3412 = vadd.f32 %v3328, %v3411
        %v3413 = vpop.f32.mrb[0].mxu0
        %3414 = vdwg.mxu0
        %v3415 = vpack.c.bf16 %v3184, %v3181
        %v3416 = vpack.c.bf16 %v3192, %v3189
        %v3417 = vpack.c.bf16 %v3200, %v3197
        %v3418 = vpack.c.bf16 %v3208, %v3205
        %v3419 = vpack.c.bf16 %v3216, %v3213
        %v3420 = vpack.c.bf16 %v3282, %v3279
        %v3421 = vpack.c.bf16 %v3290, %v3287
        %v3422 = vpack.c.bf16 %v3298, %v3295
        %v3423 = vpack.c.bf16 %v3306, %v3303
        %v3424 = vpack.c.bf16 %v3314, %v3311
        %v3426 = vsel %vm1997, %v3415, 0
        %v3429 = vsel %vm1997, %v3416, 0
        %v3432 = vsel %vm1997, %v3417, 0
        %v3435 = vsel %vm1997, %v3418, 0
        %v3438 = vsel %vm1997, %v3419, 0
        %v3441 = vsel %vm1997, %v3420, 0
        %v3444 = vsel %vm1997, %v3421, 0
        %v3447 = vsel %vm1997, %v3422, 0
        %v3450 = vsel %vm1997, %v3423, 0
        %v3453 = vsel %vm1997, %v3424, 0
        %3455 = vmatprep.subr.bf16.mxu0 0
        %3456 = vmatpush1.bf16.xpose.msra.mxu0 %v3441
        %3457 = vmatprep.subr.bf16.mxu0 0
        %3458 = vmatpush1.bf16.xpose.msra.mxu0 %v3444
        %3459 = vmatprep.subr.bf16.mxu0 0
        %3460 = vmatpush1.bf16.xpose.msra.mxu0 %v3447
        %3461 = vmatprep.subr.bf16.mxu0 0
        %3462 = vmatpush1.bf16.xpose.msra.mxu0 %v3450
        %3463 = vmatprep.subr.bf16.mxu0 0
        %3464 = vmatpush1.bf16.xpose.msra.mxu0 %v3453
        %3465 = vmatprep.subr.bf16.mxu0 0
        %3466 = vmatpush1.bf16.xpose.msra.mxu0 0
        %3467 = vmatprep.subr.bf16.mxu0 0
        %3468 = vmatpush1.bf16.xpose.msra.mxu0 0
        %3469 = vmatprep.subr.bf16.mxu0 0
        %3470 = vmatpush1.bf16.xpose.msra.mxu0 0
        %3471 = vmatprep.subr.bf16.mxu0 0
        %3472 = vmatpush1.bf16.xpose.msra.mxu0 0
        %3473 = vmatprep.subr.bf16.mxu0 0
        %3474 = vmatpush1.bf16.xpose.msra.mxu0 0
        %3475 = vmatprep.subr.bf16.mxu0 0
        %3476 = vmatpush1.bf16.xpose.msra.mxu0 0
        %3477 = vmatprep.subr.bf16.mxu0 0
        %3478 = vmatpush1.bf16.xpose.msra.mxu0 0
        %3479 = vmatprep.subr.bf16.mxu0 0
        %3480 = vmatpush1.bf16.xpose.msra.mxu0 0
        %3481 = vmatprep.subr.bf16.mxu0 0
        %3482 = vmatpush1.bf16.xpose.msra.mxu0 0
        %3483 = vmatprep.subr.bf16.mxu0 0
        %3484 = vmatpush1.bf16.xpose.msra.mxu0 0
        %3485 = vmatprep.subr.bf16.mxu0 0
        %3486 = vmatpush1.bf16.xpose.msra.mxu0 0
        %3487 = vmatprep.mubr.bf16.mxu0 0
        %3488 = vmatmul.mubr.bf16.gmra.mrb[0].mxu0 %v3426
        %v3489 = vpop.f32.mrb[0].mxu0
        %v3490 = vadd.f32 %v1995, %v3489
        %v3491 = vpop.f32.mrb[0].mxu0
        %v3492 = vpop.f32.mrb[0].mxu0
        %v3493 = vadd.f32 %v1995, %v3492
        %v3494 = vpop.f32.mrb[0].mxu0
        %3495 = vmatprep.mubr.bf16.mxu0 0
        %3496 = vmatmul.mubr.bf16.gmra.mrb[0].mxu0 %v3429
        %v3497 = vpop.f32.mrb[0].mxu0
        %v3498 = vadd.f32 %v1995, %v3497
        %v3499 = vpop.f32.mrb[0].mxu0
        %v3500 = vpop.f32.mrb[0].mxu0
        %v3501 = vadd.f32 %v1995, %v3500
        %v3502 = vpop.f32.mrb[0].mxu0
        %3503 = vmatprep.mubr.bf16.mxu0 0
        %3504 = vmatmul.mubr.bf16.gmra.mrb[0].mxu0 %v3432
        %v3505 = vpop.f32.mrb[0].mxu0
        %v3506 = vadd.f32 %v1995, %v3505
        %v3507 = vpop.f32.mrb[0].mxu0
        %v3508 = vpop.f32.mrb[0].mxu0
        %v3509 = vadd.f32 %v1995, %v3508
        %v3510 = vpop.f32.mrb[0].mxu0
        %3511 = vmatprep.mubr.bf16.mxu0 0
        %3512 = vmatmul.mubr.bf16.gmra.mrb[0].mxu0 %v3435
        %v3513 = vpop.f32.mrb[0].mxu0
        %v3514 = vadd.f32 %v1995, %v3513
        %v3515 = vpop.f32.mrb[0].mxu0
        %v3516 = vpop.f32.mrb[0].mxu0
        %v3517 = vadd.f32 %v1995, %v3516
        %v3518 = vpop.f32.mrb[0].mxu0
        %3519 = vmatprep.mubr.bf16.mxu0 0
        %3520 = vmatmul.mubr.bf16.gmra.mrb[0].mxu0 %v3438
        %v3521 = vpop.f32.mrb[0].mxu0
        %v3522 = vadd.f32 %v1995, %v3521
        %v3523 = vpop.f32.mrb[0].mxu0
        %v3524 = vpop.f32.mrb[0].mxu0
        %v3525 = vadd.f32 %v1995, %v3524
        %v3526 = vpop.f32.mrb[0].mxu0
        %3527 = vdwg.mxu0
        %v3528 = vsel %vm2101, %v3490, -inf
        %3529 = vmax.xlane.f32.xlu0 %v3528
        %v3530 = vpop.xlane.xlu0 %3529
        %v3531 = vsel %vm2101, %v3493, -inf
        %3532 = vmax.xlane.f32.xlu0 %v3531
        %v3533 = vpop.xlane.xlu0 %3532
        %v3534 = vsel %vm2101, %v3498, -inf
        %3535 = vmax.xlane.f32.xlu0 %v3534
        %v3536 = vpop.xlane.xlu0 %3535
        %v3537 = vsel %vm2101, %v3501, -inf
        %3538 = vmax.xlane.f32.xlu0 %v3537
        %v3539 = vpop.xlane.xlu0 %3538
        %v3540 = vsel %vm2101, %v3506, -inf
        %3541 = vmax.xlane.f32.xlu0 %v3540
        %v3542 = vpop.xlane.xlu0 %3541
        %v3543 = vsel %vm2101, %v3509, -inf
        %3544 = vmax.xlane.f32.xlu0 %v3543
        %v3545 = vpop.xlane.xlu0 %3544
        %v3546 = vsel %vm2101, %v3514, -inf
        %3547 = vmax.xlane.f32.xlu0 %v3546
        %v3548 = vpop.xlane.xlu0 %3547
        %v3549 = vsel %vm2101, %v3517, -inf
        %3550 = vmax.xlane.f32.xlu0 %v3549
        %v3551 = vpop.xlane.xlu0 %3550
        %v3552 = vsel %vm2101, %v3522, -inf
        %3553 = vmax.xlane.f32.xlu0 %v3552
        %v3554 = vpop.xlane.xlu0 %3553
        %v3555 = vsel %vm2101, %v3525, -inf
        %3556 = vmax.xlane.f32.xlu0 %v3555
        %v3557 = vpop.xlane.xlu0 %3556
        %v3558 = vsub.f32 %v3490, %v3530
        %v3559 = vsub.f32 %v3493, %v3533
        %v3560 = vsub.f32 %v3498, %v3536
        %v3561 = vsub.f32 %v3501, %v3539
        %v3562 = vsub.f32 %v3506, %v3542
        %v3563 = vsub.f32 %v3509, %v3545
        %v3564 = vsub.f32 %v3514, %v3548
        %v3565 = vsub.f32 %v3517, %v3551
        %v3566 = vsub.f32 %v3522, %v3554
        %v3567 = vsub.f32 %v3525, %v3557
        %v3568 = vmul.f32 %v3558, 1.442695
        %v3569 = vpow.pop %v3568
        %v3570 = vmul.f32 %v3559, 1.442695
        %v3571 = vpow.pop %v3570
        %v3572 = vmul.f32 %v3560, 1.442695
        %v3573 = vpow.pop %v3572
        %v3574 = vmul.f32 %v3561, 1.442695
        %v3575 = vpow.pop %v3574
        %v3576 = vmul.f32 %v3562, 1.442695
        %v3577 = vpow.pop %v3576
        %v3578 = vmul.f32 %v3563, 1.442695
        %v3579 = vpow.pop %v3578
        %v3580 = vmul.f32 %v3564, 1.442695
        %v3581 = vpow.pop %v3580
        %v3582 = vmul.f32 %v3565, 1.442695
        %v3583 = vpow.pop %v3582
        %v3584 = vmul.f32 %v3566, 1.442695
        %v3585 = vpow.pop %v3584
        %v3586 = vmul.f32 %v3567, 1.442695
        %v3587 = vpow.pop %v3586
        %v3588 = vsel %vm2101, %v3569, 0.0
        %3589 = vadd.xlane.f32.xlu0 %v3588
        %v3590 = vpop.xlane.xlu0 %3589
        %v3591 = vsel %vm2101, %v3571, 0.0
        %3592 = vadd.xlane.f32.xlu0 %v3591
        %v3593 = vpop.xlane.xlu0 %3592
        %v3594 = vsel %vm2101, %v3573, 0.0
        %3595 = vadd.xlane.f32.xlu0 %v3594
        %v3596 = vpop.xlane.xlu0 %3595
        %v3597 = vsel %vm2101, %v3575, 0.0
        %3598 = vadd.xlane.f32.xlu0 %v3597
        %v3599 = vpop.xlane.xlu0 %3598
        %v3600 = vsel %vm2101, %v3577, 0.0
        %3601 = vadd.xlane.f32.xlu0 %v3600
        %v3602 = vpop.xlane.xlu0 %3601
        %v3603 = vsel %vm2101, %v3579, 0.0
        %3604 = vadd.xlane.f32.xlu0 %v3603
        %v3605 = vpop.xlane.xlu0 %3604
        %v3606 = vsel %vm2101, %v3581, 0.0
        %3607 = vadd.xlane.f32.xlu0 %v3606
        %v3608 = vpop.xlane.xlu0 %3607
        %v3609 = vsel %vm2101, %v3583, 0.0
        %3610 = vadd.xlane.f32.xlu0 %v3609
        %v3611 = vpop.xlane.xlu0 %3610
        %v3612 = vsel %vm2101, %v3585, 0.0
        %3613 = vadd.xlane.f32.xlu0 %v3612
        %v3614 = vpop.xlane.xlu0 %3613
        %v3615 = vsel %vm2101, %v3587, 0.0
        %3616 = vadd.xlane.f32.xlu0 %v3615
        %v3617 = vpop.xlane.xlu0 %3616
        %v3618 = vrcp.pop %v3590
        %v3619 = vrcp.pop %v3593
        %v3620 = vrcp.pop %v3596
        %v3621 = vrcp.pop %v3599
        %v3622 = vrcp.pop %v3602
        %v3623 = vrcp.pop %v3605
        %v3624 = vrcp.pop %v3608
        %v3625 = vrcp.pop %v3611
        %v3626 = vrcp.pop %v3614
        %v3627 = vrcp.pop %v3617
        %v3628 = vmul.f32 %v3569, %v3618
        %v3629 = vmul.f32 %v3571, %v3619
        %v3630 = vmul.f32 %v3573, %v3620
        %v3631 = vmul.f32 %v3575, %v3621
        %v3632 = vmul.f32 %v3577, %v3622
        %v3633 = vmul.f32 %v3579, %v3623
        %v3634 = vmul.f32 %v3581, %v3624
        %v3635 = vmul.f32 %v3583, %v3625
        %v3636 = vmul.f32 %v3585, %v3626
        %v3637 = vmul.f32 %v3587, %v3627
        %v3638 = vpack.c.bf16 %v3629, %v3628
        %v3639 = vpack.c.bf16 %v3631, %v3630
        %v3640 = vpack.c.bf16 %v3633, %v3632
        %v3641 = vpack.c.bf16 %v3635, %v3634
        %v3642 = vpack.c.bf16 %v3637, %v3636
        %v3643 = vpack.c.bf16 %v3380, %v3377
        %v3644 = vpack.c.bf16 %v3388, %v3385
        %v3645 = vpack.c.bf16 %v3396, %v3393
        %v3646 = vpack.c.bf16 %v3404, %v3401
        %v3647 = vpack.c.bf16 %v3412, %v3409
        %v3649 = vsel %vm2101, %v3638, 0
        %v3652 = vsel %vm2101, %v3639, 0
        %v3655 = vsel %vm2101, %v3640, 0
        %v3658 = vsel %vm2101, %v3641, 0
        %v3661 = vsel %vm2101, %v3642, 0
        %3663 = vmatprep.subr.bf16.mxu0 0
        %3664 = vmatpush1.bf16.msra.mxu0 %v3643
        %3665 = vmatprep.subr.bf16.mxu0 0
        %3666 = vmatpush1.bf16.msra.mxu0 %v3644
        %3667 = vmatprep.subr.bf16.mxu0 0
        %3668 = vmatpush1.bf16.msra.mxu0 %v3645
        %3669 = vmatprep.subr.bf16.mxu0 0
        %3670 = vmatpush1.bf16.msra.mxu0 %v3646
        %3671 = vmatprep.subr.bf16.mxu0 0
        %3672 = vmatpush1.bf16.msra.mxu0 %v3647
        %3673 = vmatprep.subr.bf16.mxu0 0
        %3674 = vmatpush1.bf16.msra.mxu0 0
        %3675 = vmatprep.subr.bf16.mxu0 0
        %3676 = vmatpush1.bf16.msra.mxu0 0
        %3677 = vmatprep.subr.bf16.mxu0 0
        %3678 = vmatpush1.bf16.msra.mxu0 0
        %3679 = vmatprep.subr.bf16.mxu0 0
        %3680 = vmatpush1.bf16.msra.mxu0 0
        %3681 = vmatprep.subr.bf16.mxu0 0
        %3682 = vmatpush1.bf16.msra.mxu0 0
        %3683 = vmatprep.subr.bf16.mxu0 0
        %3684 = vmatpush1.bf16.msra.mxu0 0
        %3685 = vmatprep.subr.bf16.mxu0 0
        %3686 = vmatpush1.bf16.msra.mxu0 0
        %3687 = vmatprep.subr.bf16.mxu0 0
        %3688 = vmatpush1.bf16.msra.mxu0 0
        %3689 = vmatprep.subr.bf16.mxu0 0
        %3690 = vmatpush1.bf16.msra.mxu0 0
        %3691 = vmatprep.subr.bf16.mxu0 0
        %3692 = vmatpush1.bf16.msra.mxu0 0
        %3693 = vmatprep.subr.bf16.mxu0 0
        %3694 = vmatpush1.bf16.msra.mxu0 0
        %3695 = vmatprep.mubr.bf16.mxu0 0
        %3696 = vmatmul.mubr.bf16.gmra.mrb[0].mxu0 %v3649
        %v3697 = vpop.f32.mrb[0].mxu0
        %v3698 = vadd.f32 0.0, %v3697
        %v3699 = vpop.f32.mrb[0].mxu0
        %v3700 = vpop.f32.mrb[0].mxu0
        %v3701 = vadd.f32 0.0, %v3700
        %v3702 = vpop.f32.mrb[0].mxu0
        %3703 = vmatprep.mubr.bf16.mxu0 0
        %3704 = vmatmul.mubr.bf16.gmra.mrb[0].mxu0 %v3652
        %v3705 = vpop.f32.mrb[0].mxu0
        %v3706 = vadd.f32 0.0, %v3705
        %v3707 = vpop.f32.mrb[0].mxu0
        %v3708 = vpop.f32.mrb[0].mxu0
        %v3709 = vadd.f32 0.0, %v3708
        %v3710 = vpop.f32.mrb[0].mxu0
        %3711 = vmatprep.mubr.bf16.mxu0 0
        %3712 = vmatmul.mubr.bf16.gmra.mrb[0].mxu0 %v3655
        %v3713 = vpop.f32.mrb[0].mxu0
        %v3714 = vadd.f32 0.0, %v3713
        %v3715 = vpop.f32.mrb[0].mxu0
        %v3716 = vpop.f32.mrb[0].mxu0
        %v3717 = vadd.f32 0.0, %v3716
        %v3718 = vpop.f32.mrb[0].mxu0
        %3719 = vmatprep.mubr.bf16.mxu0 0
        %3720 = vmatmul.mubr.bf16.gmra.mrb[0].mxu0 %v3658
        %v3721 = vpop.f32.mrb[0].mxu0
        %v3722 = vadd.f32 0.0, %v3721
        %v3723 = vpop.f32.mrb[0].mxu0
        %v3724 = vpop.f32.mrb[0].mxu0
        %v3725 = vadd.f32 0.0, %v3724
        %v3726 = vpop.f32.mrb[0].mxu0
        %3727 = vmatprep.mubr.bf16.mxu0 0
        %3728 = vmatmul.mubr.bf16.gmra.mrb[0].mxu0 %v3661
        %v3729 = vpop.f32.mrb[0].mxu0
        %v3730 = vadd.f32 0.0, %v3729
        %v3731 = vpop.f32.mrb[0].mxu0
        %v3732 = vpop.f32.mrb[0].mxu0
        %v3733 = vadd.f32 0.0, %v3732
        %v3734 = vpop.f32.mrb[0].mxu0
        %3735 = vdwg.mxu0
        %v3736 = vpack.c.bf16 %v3701, %v3698
        %v3737 = vpack.c.bf16 %v3709, %v3706
        %v3738 = vpack.c.bf16 %v3717, %v3714
        %v3739 = vpack.c.bf16 %v3725, %v3722
        %v3740 = vpack.c.bf16 %v3733, %v3730
        %s3741 = scalar_lea.vmem %s27, 8
        %v3742 = vld [vmem:[%s3741] sm:$0xf]
        %v3744 = vsel %vm1997, %v3736, 0
        %v3747 = vsel %vm1997, %v3737, 0
        %v3750 = vsel %vm1997, %v3738, 0
        %v3753 = vsel %vm1997, %v3739, 0
        %v3756 = vsel %vm1997, %v3740, 0
        %v3759 = vsel %vm2953, %v3742, 0
        %3761 = vmatprep.subr.bf16.mxu0 0
        %3762 = vmatpush1.bf16.msra.mxu0 %v3759
        %3763 = vmatprep.subr.bf16.mxu0 0
        %3764 = vmatpush1.bf16.msra.mxu0 0
        %3765 = vmatprep.subr.bf16.mxu0 0
        %3766 = vmatpush1.bf16.msra.mxu0 0
        %3767 = vmatprep.subr.bf16.mxu0 0
        %3768 = vmatpush1.bf16.msra.mxu0 0
        %3769 = vmatprep.subr.bf16.mxu0 0
        %3770 = vmatpush1.bf16.msra.mxu0 0
        %3771 = vmatprep.subr.bf16.mxu0 0
        %3772 = vmatpush1.bf16.msra.mxu0 0
        %3773 = vmatprep.subr.bf16.mxu0 0
        %3774 = vmatpush1.bf16.msra.mxu0 0
        %3775 = vmatprep.subr.bf16.mxu0 0
        %3776 = vmatpush1.bf16.msra.mxu0 0
        %3777 = vmatprep.subr.bf16.mxu0 0
        %3778 = vmatpush1.bf16.msra.mxu0 0
        %3779 = vmatprep.subr.bf16.mxu0 0
        %3780 = vmatpush1.bf16.msra.mxu0 0
        %3781 = vmatprep.subr.bf16.mxu0 0
        %3782 = vmatpush1.bf16.msra.mxu0 0
        %3783 = vmatprep.subr.bf16.mxu0 0
        %3784 = vmatpush1.bf16.msra.mxu0 0
        %3785 = vmatprep.subr.bf16.mxu0 0
        %3786 = vmatpush1.bf16.msra.mxu0 0
        %3787 = vmatprep.subr.bf16.mxu0 0
        %3788 = vmatpush1.bf16.msra.mxu0 0
        %3789 = vmatprep.subr.bf16.mxu0 0
        %3790 = vmatpush1.bf16.msra.mxu0 0
        %3791 = vmatprep.subr.bf16.mxu0 0
        %3792 = vmatpush1.bf16.msra.mxu0 0
        %3793 = vmatprep.mubr.bf16.mxu0 0
        %3794 = vmatmul.mubr.bf16.gmra.mrb[0].mxu0 %v3744
        %v3795 = vpop.f32.mrb[0].mxu0
        %v3796 = vadd.f32 0.0, %v3795
        %v3797 = vpop.f32.mrb[0].mxu0
        %v3798 = vpop.f32.mrb[0].mxu0
        %v3799 = vadd.f32 0.0, %v3798
        %v3800 = vpop.f32.mrb[0].mxu0
        %3801 = vmatprep.mubr.bf16.mxu0 0
        %3802 = vmatmul.mubr.bf16.gmra.mrb[0].mxu0 %v3747
        %v3803 = vpop.f32.mrb[0].mxu0
        %v3804 = vadd.f32 0.0, %v3803
        %v3805 = vpop.f32.mrb[0].mxu0
        %v3806 = vpop.f32.mrb[0].mxu0
        %v3807 = vadd.f32 0.0, %v3806
        %v3808 = vpop.f32.mrb[0].mxu0
        %3809 = vmatprep.mubr.bf16.mxu0 0
        %3810 = vmatmul.mubr.bf16.gmra.mrb[0].mxu0 %v3750
        %v3811 = vpop.f32.mrb[0].mxu0
        %v3812 = vadd.f32 0.0, %v3811
        %v3813 = vpop.f32.mrb[0].mxu0
        %v3814 = vpop.f32.mrb[0].mxu0
        %v3815 = vadd.f32 0.0, %v3814
        %v3816 = vpop.f32.mrb[0].mxu0
        %3817 = vmatprep.mubr.bf16.mxu0 0
        %3818 = vmatmul.mubr.bf16.gmra.mrb[0].mxu0 %v3753
        %v3819 = vpop.f32.mrb[0].mxu0
        %v3820 = vadd.f32 0.0, %v3819
        %v3821 = vpop.f32.mrb[0].mxu0
        %v3822 = vpop.f32.mrb[0].mxu0
        %v3823 = vadd.f32 0.0, %v3822
        %v3824 = vpop.f32.mrb[0].mxu0
        %3825 = vmatprep.mubr.bf16.mxu0 0
        %3826 = vmatmul.mubr.bf16.gmra.mrb[0].mxu0 %v3756
        %v3827 = vpop.f32.mrb[0].mxu0
        %v3828 = vadd.f32 0.0, %v3827
        %v3829 = vpop.f32.mrb[0].mxu0
        %v3830 = vpop.f32.mrb[0].mxu0
        %v3831 = vadd.f32 0.0, %v3830
        %v3832 = vpop.f32.mrb[0].mxu0
        %3833 = vdwg.mxu0
        %v3834 = vadd.f32 %v3083, %v3796
        %v3835 = vadd.f32 %v3086, %v3799
        %v3836 = vadd.f32 %v3091, %v3804
        %v3837 = vadd.f32 %v3094, %v3807
        %v3838 = vadd.f32 %v3099, %v3812
        %v3839 = vadd.f32 %v3102, %v3815
        %v3840 = vadd.f32 %v3107, %v3820
        %v3841 = vadd.f32 %v3110, %v3823
        %v3842 = vadd.f32 %v3115, %v3828
        %v3843 = vadd.f32 %v3118, %v3831
        %s3844 = scalar_lea.vmem %s15, 48
        %v3845 = vld [vmem:[%s3844] sm:$0xf]
        %v3846 = vld [vmem:[%s3844 + $0x4] sm:$0xf]
        %v3847 = vld [vmem:[%s3844 + $0x8] sm:$0xf]
        %v3848 = vld [vmem:[%s3844 + $0xc] sm:$0xf]
        %s3849 = scalar_lea.vmem %s17, 3
        %v3850 = vld [vmem:[%s3849] sm:$0x1]
        %v3852 = vlaneseq
        %v3853 = vshrl.u32 %v3852, 7
        %v3854 = vsub.s32 0, %v3853
        %v3855 = vrot.slane %v3850, %v3854
        %v3861 = vunpack.c.l.b16 %v3845
        %v3862 = vunpack.c.l.b16 %v3846
        %v3863 = vunpack.c.l.b16 %v3847
        %v3864 = vunpack.c.l.b16 %v3848
        %v3865 = vpack.c.b16 %v3862, %v3861
        %v3866 = vpack.c.b16 %v3864, %v3863
        %3869 = vmatprep.subr.bf16.mxu0 0
        %3870 = vmatpush1.bf16.msra.mxu0 %v3865
        %3871 = vmatprep.subr.bf16.mxu0 0
        %3872 = vmatpush1.bf16.msra.mxu0 %v3866
        %3873 = vmatprep.subr.bf16.mxu0 0
        %3874 = vmatpush1.bf16.msra.mxu0 0
        %3875 = vmatprep.subr.bf16.mxu0 0
        %3876 = vmatpush1.bf16.msra.mxu0 0
        %3877 = vmatprep.subr.bf16.mxu0 0
        %3878 = vmatpush1.bf16.msra.mxu0 0
        %3879 = vmatprep.subr.bf16.mxu0 0
        %3880 = vmatpush1.bf16.msra.mxu0 0
        %3881 = vmatprep.subr.bf16.mxu0 0
        %3882 = vmatpush1.bf16.msra.mxu0 0
        %3883 = vmatprep.subr.bf16.mxu0 0
        %3884 = vmatpush1.bf16.msra.mxu0 0
        %3885 = vmatprep.subr.bf16.mxu0 0
        %3886 = vmatpush1.bf16.msra.mxu0 0
        %3887 = vmatprep.subr.bf16.mxu0 0
        %3888 = vmatpush1.bf16.msra.mxu0 0
        %3889 = vmatprep.subr.bf16.mxu0 0
        %3890 = vmatpush1.bf16.msra.mxu0 0
        %3891 = vmatprep.subr.bf16.mxu0 0
        %3892 = vmatpush1.bf16.msra.mxu0 0
        %3893 = vmatprep.subr.bf16.mxu0 0
        %3894 = vmatpush1.bf16.msra.mxu0 0
        %3895 = vmatprep.subr.bf16.mxu0 0
        %3896 = vmatpush1.bf16.msra.mxu0 0
        %3897 = vmatprep.subr.bf16.mxu0 0
        %3898 = vmatpush1.bf16.msra.mxu0 0
        %3899 = vmatprep.subr.bf16.mxu0 0
        %3900 = vmatpush1.bf16.msra.mxu0 0
        %3901 = vmatprep.mubr.bf16.mxu0 0
        %3902 = vmatmul.mubr.bf16.gmra.mrb[0].mxu0 %v1687
        %v3903 = vpop.f32.mrb[0].mxu0
        %v3904 = vadd.f32 %v3855, %v3903
        %v3905 = vpop.f32.mrb[0].mxu0
        %v3906 = vpop.f32.mrb[0].mxu0
        %v3907 = vadd.f32 %v3855, %v3906
        %v3908 = vpop.f32.mrb[0].mxu0
        %3909 = vmatprep.mubr.bf16.mxu0 0
        %3910 = vmatmul.mubr.bf16.gmra.mrb[0].mxu0 %v1690
        %v3911 = vpop.f32.mrb[0].mxu0
        %v3912 = vadd.f32 %v3855, %v3911
        %v3913 = vpop.f32.mrb[0].mxu0
        %v3914 = vpop.f32.mrb[0].mxu0
        %v3915 = vadd.f32 %v3855, %v3914
        %v3916 = vpop.f32.mrb[0].mxu0
        %3917 = vmatprep.mubr.bf16.mxu0 0
        %3918 = vmatmul.mubr.bf16.gmra.mrb[0].mxu0 %v1693
        %v3919 = vpop.f32.mrb[0].mxu0
        %v3920 = vadd.f32 %v3855, %v3919
        %v3921 = vpop.f32.mrb[0].mxu0
        %v3922 = vpop.f32.mrb[0].mxu0
        %v3923 = vadd.f32 %v3855, %v3922
        %v3924 = vpop.f32.mrb[0].mxu0
        %3925 = vmatprep.mubr.bf16.mxu0 0
        %3926 = vmatmul.mubr.bf16.gmra.mrb[0].mxu0 %v1696
        %v3927 = vpop.f32.mrb[0].mxu0
        %v3928 = vadd.f32 %v3855, %v3927
        %v3929 = vpop.f32.mrb[0].mxu0
        %v3930 = vpop.f32.mrb[0].mxu0
        %v3931 = vadd.f32 %v3855, %v3930
        %v3932 = vpop.f32.mrb[0].mxu0
        %3933 = vmatprep.mubr.bf16.mxu0 0
        %3934 = vmatmul.mubr.bf16.gmra.mrb[0].mxu0 %v1699
        %v3935 = vpop.f32.mrb[0].mxu0
        %v3936 = vadd.f32 %v3855, %v3935
        %v3937 = vpop.f32.mrb[0].mxu0
        %v3938 = vpop.f32.mrb[0].mxu0
        %v3939 = vadd.f32 %v3855, %v3938
        %v3940 = vpop.f32.mrb[0].mxu0
        %3941 = vdwg.mxu0
        %s3942 = scalar_lea.vmem %s19, 48
        %v3943 = vld [vmem:[%s3942] sm:$0xf]
        %v3944 = vld [vmem:[%s3942 + $0x4] sm:$0xf]
        %v3945 = vld [vmem:[%s3942 + $0x8] sm:$0xf]
        %v3946 = vld [vmem:[%s3942 + $0xc] sm:$0xf]
        %s3947 = scalar_lea.vmem %s21, 3
        %v3948 = vld [vmem:[%s3947] sm:$0x1]
        %v3950 = vlaneseq
        %v3951 = vshrl.u32 %v3950, 7
        %v3952 = vsub.s32 0, %v3951
        %v3953 = vrot.slane %v3948, %v3952
        %v3959 = vunpack.c.l.b16 %v3943
        %v3960 = vunpack.c.l.b16 %v3944
        %v3961 = vunpack.c.l.b16 %v3945
        %v3962 = vunpack.c.l.b16 %v3946
        %v3963 = vpack.c.b16 %v3960, %v3959
        %v3964 = vpack.c.b16 %v3962, %v3961
        %3967 = vmatprep.subr.bf16.mxu0 0
        %3968 = vmatpush1.bf16.msra.mxu0 %v3963
        %3969 = vmatprep.subr.bf16.mxu0 0
        %3970 = vmatpush1.bf16.msra.mxu0 %v3964
        %3971 = vmatprep.subr.bf16.mxu0 0
        %3972 = vmatpush1.bf16.msra.mxu0 0
        %3973 = vmatprep.subr.bf16.mxu0 0
        %3974 = vmatpush1.bf16.msra.mxu0 0
        %3975 = vmatprep.subr.bf16.mxu0 0
        %3976 = vmatpush1.bf16.msra.mxu0 0
        %3977 = vmatprep.subr.bf16.mxu0 0
        %3978 = vmatpush1.bf16.msra.mxu0 0
        %3979 = vmatprep.subr.bf16.mxu0 0
        %3980 = vmatpush1.bf16.msra.mxu0 0
        %3981 = vmatprep.subr.bf16.mxu0 0
        %3982 = vmatpush1.bf16.msra.mxu0 0
        %3983 = vmatprep.subr.bf16.mxu0 0
        %3984 = vmatpush1.bf16.msra.mxu0 0
        %3985 = vmatprep.subr.bf16.mxu0 0
        %3986 = vmatpush1.bf16.msra.mxu0 0
        %3987 = vmatprep.subr.bf16.mxu0 0
        %3988 = vmatpush1.bf16.msra.mxu0 0
        %3989 = vmatprep.subr.bf16.mxu0 0
        %3990 = vmatpush1.bf16.msra.mxu0 0
        %3991 = vmatprep.subr.bf16.mxu0 0
        %3992 = vmatpush1.bf16.msra.mxu0 0
        %3993 = vmatprep.subr.bf16.mxu0 0
        %3994 = vmatpush1.bf16.msra.mxu0 0
        %3995 = vmatprep.subr.bf16.mxu0 0
        %3996 = vmatpush1.bf16.msra.mxu0 0
        %3997 = vmatprep.subr.bf16.mxu0 0
        %3998 = vmatpush1.bf16.msra.mxu0 0
        %3999 = vmatprep.mubr.bf16.mxu0 0
        %4000 = vmatmul.mubr.bf16.gmra.mrb[0].mxu0 %v1687
        %v4001 = vpop.f32.mrb[0].mxu0
        %v4002 = vadd.f32 %v3953, %v4001
        %v4003 = vpop.f32.mrb[0].mxu0
        %v4004 = vpop.f32.mrb[0].mxu0
        %v4005 = vadd.f32 %v3953, %v4004
        %v4006 = vpop.f32.mrb[0].mxu0
        %4007 = vmatprep.mubr.bf16.mxu0 0
        %4008 = vmatmul.mubr.bf16.gmra.mrb[0].mxu0 %v1690
        %v4009 = vpop.f32.mrb[0].mxu0
        %v4010 = vadd.f32 %v3953, %v4009
        %v4011 = vpop.f32.mrb[0].mxu0
        %v4012 = vpop.f32.mrb[0].mxu0
        %v4013 = vadd.f32 %v3953, %v4012
        %v4014 = vpop.f32.mrb[0].mxu0
        %4015 = vmatprep.mubr.bf16.mxu0 0
        %4016 = vmatmul.mubr.bf16.gmra.mrb[0].mxu0 %v1693
        %v4017 = vpop.f32.mrb[0].mxu0
        %v4018 = vadd.f32 %v3953, %v4017
        %v4019 = vpop.f32.mrb[0].mxu0
        %v4020 = vpop.f32.mrb[0].mxu0
        %v4021 = vadd.f32 %v3953, %v4020
        %v4022 = vpop.f32.mrb[0].mxu0
        %4023 = vmatprep.mubr.bf16.mxu0 0
        %4024 = vmatmul.mubr.bf16.gmra.mrb[0].mxu0 %v1696
        %v4025 = vpop.f32.mrb[0].mxu0
        %v4026 = vadd.f32 %v3953, %v4025
        %v4027 = vpop.f32.mrb[0].mxu0
        %v4028 = vpop.f32.mrb[0].mxu0
        %v4029 = vadd.f32 %v3953, %v4028
        %v4030 = vpop.f32.mrb[0].mxu0
        %4031 = vmatprep.mubr.bf16.mxu0 0
        %4032 = vmatmul.mubr.bf16.gmra.mrb[0].mxu0 %v1699
        %v4033 = vpop.f32.mrb[0].mxu0
        %v4034 = vadd.f32 %v3953, %v4033
        %v4035 = vpop.f32.mrb[0].mxu0
        %v4036 = vpop.f32.mrb[0].mxu0
        %v4037 = vadd.f32 %v3953, %v4036
        %v4038 = vpop.f32.mrb[0].mxu0
        %4039 = vdwg.mxu0
        %s4040 = scalar_lea.vmem %s23, 48
        %v4041 = vld [vmem:[%s4040] sm:$0xf]
        %v4042 = vld [vmem:[%s4040 + $0x4] sm:$0xf]
        %v4043 = vld [vmem:[%s4040 + $0x8] sm:$0xf]
        %v4044 = vld [vmem:[%s4040 + $0xc] sm:$0xf]
        %s4045 = scalar_lea.vmem %s25, 3
        %v4046 = vld [vmem:[%s4045] sm:$0x1]
        %v4048 = vlaneseq
        %v4049 = vshrl.u32 %v4048, 7
        %v4050 = vsub.s32 0, %v4049
        %v4051 = vrot.slane %v4046, %v4050
        %v4057 = vunpack.c.l.b16 %v4041
        %v4058 = vunpack.c.l.b16 %v4042
        %v4059 = vunpack.c.l.b16 %v4043
        %v4060 = vunpack.c.l.b16 %v4044
        %v4061 = vpack.c.b16 %v4058, %v4057
        %v4062 = vpack.c.b16 %v4060, %v4059
        %4065 = vmatprep.subr.bf16.mxu0 0
        %4066 = vmatpush1.bf16.msra.mxu0 %v4061
        %4067 = vmatprep.subr.bf16.mxu0 0
        %4068 = vmatpush1.bf16.msra.mxu0 %v4062
        %4069 = vmatprep.subr.bf16.mxu0 0
        %4070 = vmatpush1.bf16.msra.mxu0 0
        %4071 = vmatprep.subr.bf16.mxu0 0
        %4072 = vmatpush1.bf16.msra.mxu0 0
        %4073 = vmatprep.subr.bf16.mxu0 0
        %4074 = vmatpush1.bf16.msra.mxu0 0
        %4075 = vmatprep.subr.bf16.mxu0 0
        %4076 = vmatpush1.bf16.msra.mxu0 0
        %4077 = vmatprep.subr.bf16.mxu0 0
        %4078 = vmatpush1.bf16.msra.mxu0 0
        %4079 = vmatprep.subr.bf16.mxu0 0
        %4080 = vmatpush1.bf16.msra.mxu0 0
        %4081 = vmatprep.subr.bf16.mxu0 0
        %4082 = vmatpush1.bf16.msra.mxu0 0
        %4083 = vmatprep.subr.bf16.mxu0 0
        %4084 = vmatpush1.bf16.msra.mxu0 0
        %4085 = vmatprep.subr.bf16.mxu0 0
        %4086 = vmatpush1.bf16.msra.mxu0 0
        %4087 = vmatprep.subr.bf16.mxu0 0
        %4088 = vmatpush1.bf16.msra.mxu0 0
        %4089 = vmatprep.subr.bf16.mxu0 0
        %4090 = vmatpush1.bf16.msra.mxu0 0
        %4091 = vmatprep.subr.bf16.mxu0 0
        %4092 = vmatpush1.bf16.msra.mxu0 0
        %4093 = vmatprep.subr.bf16.mxu0 0
        %4094 = vmatpush1.bf16.msra.mxu0 0
        %4095 = vmatprep.subr.bf16.mxu0 0
        %4096 = vmatpush1.bf16.msra.mxu0 0
        %4097 = vmatprep.mubr.bf16.mxu0 0
        %4098 = vmatmul.mubr.bf16.gmra.mrb[0].mxu0 %v1894
        %v4099 = vpop.f32.mrb[0].mxu0
        %v4100 = vadd.f32 %v4051, %v4099
        %v4101 = vpop.f32.mrb[0].mxu0
        %v4102 = vpop.f32.mrb[0].mxu0
        %v4103 = vadd.f32 %v4051, %v4102
        %v4104 = vpop.f32.mrb[0].mxu0
        %4105 = vmatprep.mubr.bf16.mxu0 0
        %4106 = vmatmul.mubr.bf16.gmra.mrb[0].mxu0 %v1897
        %v4107 = vpop.f32.mrb[0].mxu0
        %v4108 = vadd.f32 %v4051, %v4107
        %v4109 = vpop.f32.mrb[0].mxu0
        %v4110 = vpop.f32.mrb[0].mxu0
        %v4111 = vadd.f32 %v4051, %v4110
        %v4112 = vpop.f32.mrb[0].mxu0
        %4113 = vmatprep.mubr.bf16.mxu0 0
        %4114 = vmatmul.mubr.bf16.gmra.mrb[0].mxu0 %v1900
        %v4115 = vpop.f32.mrb[0].mxu0
        %v4116 = vadd.f32 %v4051, %v4115
        %v4117 = vpop.f32.mrb[0].mxu0
        %v4118 = vpop.f32.mrb[0].mxu0
        %v4119 = vadd.f32 %v4051, %v4118
        %v4120 = vpop.f32.mrb[0].mxu0
        %4121 = vmatprep.mubr.bf16.mxu0 0
        %4122 = vmatmul.mubr.bf16.gmra.mrb[0].mxu0 %v1903
        %v4123 = vpop.f32.mrb[0].mxu0
        %v4124 = vadd.f32 %v4051, %v4123
        %v4125 = vpop.f32.mrb[0].mxu0
        %v4126 = vpop.f32.mrb[0].mxu0
        %v4127 = vadd.f32 %v4051, %v4126
        %v4128 = vpop.f32.mrb[0].mxu0
        %4129 = vmatprep.mubr.bf16.mxu0 0
        %4130 = vmatmul.mubr.bf16.gmra.mrb[0].mxu0 %v1906
        %v4131 = vpop.f32.mrb[0].mxu0
        %v4132 = vadd.f32 %v4051, %v4131
        %v4133 = vpop.f32.mrb[0].mxu0
        %v4134 = vpop.f32.mrb[0].mxu0
        %v4135 = vadd.f32 %v4051, %v4134
        %v4136 = vpop.f32.mrb[0].mxu0
        %4137 = vdwg.mxu0
        %v4138 = vpack.c.bf16 %v3907, %v3904
        %v4139 = vpack.c.bf16 %v3915, %v3912
        %v4140 = vpack.c.bf16 %v3923, %v3920
        %v4141 = vpack.c.bf16 %v3931, %v3928
        %v4142 = vpack.c.bf16 %v3939, %v3936
        %v4143 = vpack.c.bf16 %v4005, %v4002
        %v4144 = vpack.c.bf16 %v4013, %v4010
        %v4145 = vpack.c.bf16 %v4021, %v4018
        %v4146 = vpack.c.bf16 %v4029, %v4026
        %v4147 = vpack.c.bf16 %v4037, %v4034
        %v4149 = vsel %vm1997, %v4138, 0
        %v4152 = vsel %vm1997, %v4139, 0
        %v4155 = vsel %vm1997, %v4140, 0
        %v4158 = vsel %vm1997, %v4141, 0
        %v4161 = vsel %vm1997, %v4142, 0
        %v4164 = vsel %vm1997, %v4143, 0
        %v4167 = vsel %vm1997, %v4144, 0
        %v4170 = vsel %vm1997, %v4145, 0
        %v4173 = vsel %vm1997, %v4146, 0
        %v4176 = vsel %vm1997, %v4147, 0
        %4178 = vmatprep.subr.bf16.mxu0 0
        %4179 = vmatpush1.bf16.xpose.msra.mxu0 %v4164
        %4180 = vmatprep.subr.bf16.mxu0 0
        %4181 = vmatpush1.bf16.xpose.msra.mxu0 %v4167
        %4182 = vmatprep.subr.bf16.mxu0 0
        %4183 = vmatpush1.bf16.xpose.msra.mxu0 %v4170
        %4184 = vmatprep.subr.bf16.mxu0 0
        %4185 = vmatpush1.bf16.xpose.msra.mxu0 %v4173
        %4186 = vmatprep.subr.bf16.mxu0 0
        %4187 = vmatpush1.bf16.xpose.msra.mxu0 %v4176
        %4188 = vmatprep.subr.bf16.mxu0 0
        %4189 = vmatpush1.bf16.xpose.msra.mxu0 0
        %4190 = vmatprep.subr.bf16.mxu0 0
        %4191 = vmatpush1.bf16.xpose.msra.mxu0 0
        %4192 = vmatprep.subr.bf16.mxu0 0
        %4193 = vmatpush1.bf16.xpose.msra.mxu0 0
        %4194 = vmatprep.subr.bf16.mxu0 0
        %4195 = vmatpush1.bf16.xpose.msra.mxu0 0
        %4196 = vmatprep.subr.bf16.mxu0 0
        %4197 = vmatpush1.bf16.xpose.msra.mxu0 0
        %4198 = vmatprep.subr.bf16.mxu0 0
        %4199 = vmatpush1.bf16.xpose.msra.mxu0 0
        %4200 = vmatprep.subr.bf16.mxu0 0
        %4201 = vmatpush1.bf16.xpose.msra.mxu0 0
        %4202 = vmatprep.subr.bf16.mxu0 0
        %4203 = vmatpush1.bf16.xpose.msra.mxu0 0
        %4204 = vmatprep.subr.bf16.mxu0 0
        %4205 = vmatpush1.bf16.xpose.msra.mxu0 0
        %4206 = vmatprep.subr.bf16.mxu0 0
        %4207 = vmatpush1.bf16.xpose.msra.mxu0 0
        %4208 = vmatprep.subr.bf16.mxu0 0
        %4209 = vmatpush1.bf16.xpose.msra.mxu0 0
        %4210 = vmatprep.mubr.bf16.mxu0 0
        %4211 = vmatmul.mubr.bf16.gmra.mrb[0].mxu0 %v4149
        %v4212 = vpop.f32.mrb[0].mxu0
        %v4213 = vadd.f32 %v1995, %v4212
        %v4214 = vpop.f32.mrb[0].mxu0
        %v4215 = vpop.f32.mrb[0].mxu0
        %v4216 = vadd.f32 %v1995, %v4215
        %v4217 = vpop.f32.mrb[0].mxu0
        %4218 = vmatprep.mubr.bf16.mxu0 0
        %4219 = vmatmul.mubr.bf16.gmra.mrb[0].mxu0 %v4152
        %v4220 = vpop.f32.mrb[0].mxu0
        %v4221 = vadd.f32 %v1995, %v4220
        %v4222 = vpop.f32.mrb[0].mxu0
        %v4223 = vpop.f32.mrb[0].mxu0
        %v4224 = vadd.f32 %v1995, %v4223
        %v4225 = vpop.f32.mrb[0].mxu0
        %4226 = vmatprep.mubr.bf16.mxu0 0
        %4227 = vmatmul.mubr.bf16.gmra.mrb[0].mxu0 %v4155
        %v4228 = vpop.f32.mrb[0].mxu0
        %v4229 = vadd.f32 %v1995, %v4228
        %v4230 = vpop.f32.mrb[0].mxu0
        %v4231 = vpop.f32.mrb[0].mxu0
        %v4232 = vadd.f32 %v1995, %v4231
        %v4233 = vpop.f32.mrb[0].mxu0
        %4234 = vmatprep.mubr.bf16.mxu0 0
        %4235 = vmatmul.mubr.bf16.gmra.mrb[0].mxu0 %v4158
        %v4236 = vpop.f32.mrb[0].mxu0
        %v4237 = vadd.f32 %v1995, %v4236
        %v4238 = vpop.f32.mrb[0].mxu0
        %v4239 = vpop.f32.mrb[0].mxu0
        %v4240 = vadd.f32 %v1995, %v4239
        %v4241 = vpop.f32.mrb[0].mxu0
        %4242 = vmatprep.mubr.bf16.mxu0 0
        %4243 = vmatmul.mubr.bf16.gmra.mrb[0].mxu0 %v4161
        %v4244 = vpop.f32.mrb[0].mxu0
        %v4245 = vadd.f32 %v1995, %v4244
        %v4246 = vpop.f32.mrb[0].mxu0
        %v4247 = vpop.f32.mrb[0].mxu0
        %v4248 = vadd.f32 %v1995, %v4247
        %v4249 = vpop.f32.mrb[0].mxu0
        %4250 = vdwg.mxu0
        %v4251 = vsel %vm2101, %v4213, -inf
        %4252 = vmax.xlane.f32.xlu0 %v4251
        %v4253 = vpop.xlane.xlu0 %4252
        %v4254 = vsel %vm2101, %v4216, -inf
        %4255 = vmax.xlane.f32.xlu0 %v4254
        %v4256 = vpop.xlane.xlu0 %4255
        %v4257 = vsel %vm2101, %v4221, -inf
        %4258 = vmax.xlane.f32.xlu0 %v4257
        %v4259 = vpop.xlane.xlu0 %4258
        %v4260 = vsel %vm2101, %v4224, -inf
        %4261 = vmax.xlane.f32.xlu0 %v4260
        %v4262 = vpop.xlane.xlu0 %4261
        %v4263 = vsel %vm2101, %v4229, -inf
        %4264 = vmax.xlane.f32.xlu0 %v4263
        %v4265 = vpop.xlane.xlu0 %4264
        %v4266 = vsel %vm2101, %v4232, -inf
        %4267 = vmax.xlane.f32.xlu0 %v4266
        %v4268 = vpop.xlane.xlu0 %4267
        %v4269 = vsel %vm2101, %v4237, -inf
        %4270 = vmax.xlane.f32.xlu0 %v4269
        %v4271 = vpop.xlane.xlu0 %4270
        %v4272 = vsel %vm2101, %v4240, -inf
        %4273 = vmax.xlane.f32.xlu0 %v4272
        %v4274 = vpop.xlane.xlu0 %4273
        %v4275 = vsel %vm2101, %v4245, -inf
        %4276 = vmax.xlane.f32.xlu0 %v4275
        %v4277 = vpop.xlane.xlu0 %4276
        %v4278 = vsel %vm2101, %v4248, -inf
        %4279 = vmax.xlane.f32.xlu0 %v4278
        %v4280 = vpop.xlane.xlu0 %4279
        %v4281 = vsub.f32 %v4213, %v4253
        %v4282 = vsub.f32 %v4216, %v4256
        %v4283 = vsub.f32 %v4221, %v4259
        %v4284 = vsub.f32 %v4224, %v4262
        %v4285 = vsub.f32 %v4229, %v4265
        %v4286 = vsub.f32 %v4232, %v4268
        %v4287 = vsub.f32 %v4237, %v4271
        %v4288 = vsub.f32 %v4240, %v4274
        %v4289 = vsub.f32 %v4245, %v4277
        %v4290 = vsub.f32 %v4248, %v4280
        %v4291 = vmul.f32 %v4281, 1.442695
        %v4292 = vpow.pop %v4291
        %v4293 = vmul.f32 %v4282, 1.442695
        %v4294 = vpow.pop %v4293
        %v4295 = vmul.f32 %v4283, 1.442695
        %v4296 = vpow.pop %v4295
        %v4297 = vmul.f32 %v4284, 1.442695
        %v4298 = vpow.pop %v4297
        %v4299 = vmul.f32 %v4285, 1.442695
        %v4300 = vpow.pop %v4299
        %v4301 = vmul.f32 %v4286, 1.442695
        %v4302 = vpow.pop %v4301
        %v4303 = vmul.f32 %v4287, 1.442695
        %v4304 = vpow.pop %v4303
        %v4305 = vmul.f32 %v4288, 1.442695
        %v4306 = vpow.pop %v4305
        %v4307 = vmul.f32 %v4289, 1.442695
        %v4308 = vpow.pop %v4307
        %v4309 = vmul.f32 %v4290, 1.442695
        %v4310 = vpow.pop %v4309
        %v4311 = vsel %vm2101, %v4292, 0.0
        %4312 = vadd.xlane.f32.xlu0 %v4311
        %v4313 = vpop.xlane.xlu0 %4312
        %v4314 = vsel %vm2101, %v4294, 0.0
        %4315 = vadd.xlane.f32.xlu0 %v4314
        %v4316 = vpop.xlane.xlu0 %4315
        %v4317 = vsel %vm2101, %v4296, 0.0
        %4318 = vadd.xlane.f32.xlu0 %v4317
        %v4319 = vpop.xlane.xlu0 %4318
        %v4320 = vsel %vm2101, %v4298, 0.0
        %4321 = vadd.xlane.f32.xlu0 %v4320
        %v4322 = vpop.xlane.xlu0 %4321
        %v4323 = vsel %vm2101, %v4300, 0.0
        %4324 = vadd.xlane.f32.xlu0 %v4323
        %v4325 = vpop.xlane.xlu0 %4324
        %v4326 = vsel %vm2101, %v4302, 0.0
        %4327 = vadd.xlane.f32.xlu0 %v4326
        %v4328 = vpop.xlane.xlu0 %4327
        %v4329 = vsel %vm2101, %v4304, 0.0
        %4330 = vadd.xlane.f32.xlu0 %v4329
        %v4331 = vpop.xlane.xlu0 %4330
        %v4332 = vsel %vm2101, %v4306, 0.0
        %4333 = vadd.xlane.f32.xlu0 %v4332
        %v4334 = vpop.xlane.xlu0 %4333
        %v4335 = vsel %vm2101, %v4308, 0.0
        %4336 = vadd.xlane.f32.xlu0 %v4335
        %v4337 = vpop.xlane.xlu0 %4336
        %v4338 = vsel %vm2101, %v4310, 0.0
        %4339 = vadd.xlane.f32.xlu0 %v4338
        %v4340 = vpop.xlane.xlu0 %4339
        %v4341 = vrcp.pop %v4313
        %v4342 = vrcp.pop %v4316
        %v4343 = vrcp.pop %v4319
        %v4344 = vrcp.pop %v4322
        %v4345 = vrcp.pop %v4325
        %v4346 = vrcp.pop %v4328
        %v4347 = vrcp.pop %v4331
        %v4348 = vrcp.pop %v4334
        %v4349 = vrcp.pop %v4337
        %v4350 = vrcp.pop %v4340
        %v4351 = vmul.f32 %v4292, %v4341
        %v4352 = vmul.f32 %v4294, %v4342
        %v4353 = vmul.f32 %v4296, %v4343
        %v4354 = vmul.f32 %v4298, %v4344
        %v4355 = vmul.f32 %v4300, %v4345
        %v4356 = vmul.f32 %v4302, %v4346
        %v4357 = vmul.f32 %v4304, %v4347
        %v4358 = vmul.f32 %v4306, %v4348
        %v4359 = vmul.f32 %v4308, %v4349
        %v4360 = vmul.f32 %v4310, %v4350
        %v4361 = vpack.c.bf16 %v4352, %v4351
        %v4362 = vpack.c.bf16 %v4354, %v4353
        %v4363 = vpack.c.bf16 %v4356, %v4355
        %v4364 = vpack.c.bf16 %v4358, %v4357
        %v4365 = vpack.c.bf16 %v4360, %v4359
        %v4366 = vpack.c.bf16 %v4103, %v4100
        %v4367 = vpack.c.bf16 %v4111, %v4108
        %v4368 = vpack.c.bf16 %v4119, %v4116
        %v4369 = vpack.c.bf16 %v4127, %v4124
        %v4370 = vpack.c.bf16 %v4135, %v4132
        %v4372 = vsel %vm2101, %v4361, 0
        %v4375 = vsel %vm2101, %v4362, 0
        %v4378 = vsel %vm2101, %v4363, 0
        %v4381 = vsel %vm2101, %v4364, 0
        %v4384 = vsel %vm2101, %v4365, 0
        %4386 = vmatprep.subr.bf16.mxu0 0
        %4387 = vmatpush1.bf16.msra.mxu0 %v4366
        %4388 = vmatprep.subr.bf16.mxu0 0
        %4389 = vmatpush1.bf16.msra.mxu0 %v4367
        %4390 = vmatprep.subr.bf16.mxu0 0
        %4391 = vmatpush1.bf16.msra.mxu0 %v4368
        %4392 = vmatprep.subr.bf16.mxu0 0
        %4393 = vmatpush1.bf16.msra.mxu0 %v4369
        %4394 = vmatprep.subr.bf16.mxu0 0
        %4395 = vmatpush1.bf16.msra.mxu0 %v4370
        %4396 = vmatprep.subr.bf16.mxu0 0
        %4397 = vmatpush1.bf16.msra.mxu0 0
        %4398 = vmatprep.subr.bf16.mxu0 0
        %4399 = vmatpush1.bf16.msra.mxu0 0
        %4400 = vmatprep.subr.bf16.mxu0 0
        %4401 = vmatpush1.bf16.msra.mxu0 0
        %4402 = vmatprep.subr.bf16.mxu0 0
        %4403 = vmatpush1.bf16.msra.mxu0 0
        %4404 = vmatprep.subr.bf16.mxu0 0
        %4405 = vmatpush1.bf16.msra.mxu0 0
        %4406 = vmatprep.subr.bf16.mxu0 0
        %4407 = vmatpush1.bf16.msra.mxu0 0
        %4408 = vmatprep.subr.bf16.mxu0 0
        %4409 = vmatpush1.bf16.msra.mxu0 0
        %4410 = vmatprep.subr.bf16.mxu0 0
        %4411 = vmatpush1.bf16.msra.mxu0 0
        %4412 = vmatprep.subr.bf16.mxu0 0
        %4413 = vmatpush1.bf16.msra.mxu0 0
        %4414 = vmatprep.subr.bf16.mxu0 0
        %4415 = vmatpush1.bf16.msra.mxu0 0
        %4416 = vmatprep.subr.bf16.mxu0 0
        %4417 = vmatpush1.bf16.msra.mxu0 0
        %4418 = vmatprep.mubr.bf16.mxu0 0
        %4419 = vmatmul.mubr.bf16.gmra.mrb[0].mxu0 %v4372
        %v4420 = vpop.f32.mrb[0].mxu0
        %v4421 = vadd.f32 0.0, %v4420
        %v4422 = vpop.f32.mrb[0].mxu0
        %v4423 = vpop.f32.mrb[0].mxu0
        %v4424 = vadd.f32 0.0, %v4423
        %v4425 = vpop.f32.mrb[0].mxu0
        %4426 = vmatprep.mubr.bf16.mxu0 0
        %4427 = vmatmul.mubr.bf16.gmra.mrb[0].mxu0 %v4375
        %v4428 = vpop.f32.mrb[0].mxu0
        %v4429 = vadd.f32 0.0, %v4428
        %v4430 = vpop.f32.mrb[0].mxu0
        %v4431 = vpop.f32.mrb[0].mxu0
        %v4432 = vadd.f32 0.0, %v4431
        %v4433 = vpop.f32.mrb[0].mxu0
        %4434 = vmatprep.mubr.bf16.mxu0 0
        %4435 = vmatmul.mubr.bf16.gmra.mrb[0].mxu0 %v4378
        %v4436 = vpop.f32.mrb[0].mxu0
        %v4437 = vadd.f32 0.0, %v4436
        %v4438 = vpop.f32.mrb[0].mxu0
        %v4439 = vpop.f32.mrb[0].mxu0
        %v4440 = vadd.f32 0.0, %v4439
        %v4441 = vpop.f32.mrb[0].mxu0
        %4442 = vmatprep.mubr.bf16.mxu0 0
        %4443 = vmatmul.mubr.bf16.gmra.mrb[0].mxu0 %v4381
        %v4444 = vpop.f32.mrb[0].mxu0
        %v4445 = vadd.f32 0.0, %v4444
        %v4446 = vpop.f32.mrb[0].mxu0
        %v4447 = vpop.f32.mrb[0].mxu0
        %v4448 = vadd.f32 0.0, %v4447
        %v4449 = vpop.f32.mrb[0].mxu0
        %4450 = vmatprep.mubr.bf16.mxu0 0
        %4451 = vmatmul.mubr.bf16.gmra.mrb[0].mxu0 %v4384
        %v4452 = vpop.f32.mrb[0].mxu0
        %v4453 = vadd.f32 0.0, %v4452
        %v4454 = vpop.f32.mrb[0].mxu0
        %v4455 = vpop.f32.mrb[0].mxu0
        %v4456 = vadd.f32 0.0, %v4455
        %v4457 = vpop.f32.mrb[0].mxu0
        %4458 = vdwg.mxu0
        %v4459 = vpack.c.bf16 %v4424, %v4421
        %v4460 = vpack.c.bf16 %v4432, %v4429
        %v4461 = vpack.c.bf16 %v4440, %v4437
        %v4462 = vpack.c.bf16 %v4448, %v4445
        %v4463 = vpack.c.bf16 %v4456, %v4453
        %s4464 = scalar_lea.vmem %s27, 12
        %v4465 = vld [vmem:[%s4464] sm:$0xf]
        %v4467 = vsel %vm1997, %v4459, 0
        %v4470 = vsel %vm1997, %v4460, 0
        %v4473 = vsel %vm1997, %v4461, 0
        %v4476 = vsel %vm1997, %v4462, 0
        %v4479 = vsel %vm1997, %v4463, 0
        %v4482 = vsel %vm2953, %v4465, 0
        %4484 = vmatprep.subr.bf16.mxu0 0
        %4485 = vmatpush1.bf16.msra.mxu0 %v4482
        %4486 = vmatprep.subr.bf16.mxu0 0
        %4487 = vmatpush1.bf16.msra.mxu0 0
        %4488 = vmatprep.subr.bf16.mxu0 0
        %4489 = vmatpush1.bf16.msra.mxu0 0
        %4490 = vmatprep.subr.bf16.mxu0 0
        %4491 = vmatpush1.bf16.msra.mxu0 0
        %4492 = vmatprep.subr.bf16.mxu0 0
        %4493 = vmatpush1.bf16.msra.mxu0 0
        %4494 = vmatprep.subr.bf16.mxu0 0
        %4495 = vmatpush1.bf16.msra.mxu0 0
        %4496 = vmatprep.subr.bf16.mxu0 0
        %4497 = vmatpush1.bf16.msra.mxu0 0
        %4498 = vmatprep.subr.bf16.mxu0 0
        %4499 = vmatpush1.bf16.msra.mxu0 0
        %4500 = vmatprep.subr.bf16.mxu0 0
        %4501 = vmatpush1.bf16.msra.mxu0 0
        %4502 = vmatprep.subr.bf16.mxu0 0
        %4503 = vmatpush1.bf16.msra.mxu0 0
        %4504 = vmatprep.subr.bf16.mxu0 0
        %4505 = vmatpush1.bf16.msra.mxu0 0
        %4506 = vmatprep.subr.bf16.mxu0 0
        %4507 = vmatpush1.bf16.msra.mxu0 0
        %4508 = vmatprep.subr.bf16.mxu0 0
        %4509 = vmatpush1.bf16.msra.mxu0 0
        %4510 = vmatprep.subr.bf16.mxu0 0
        %4511 = vmatpush1.bf16.msra.mxu0 0
        %4512 = vmatprep.subr.bf16.mxu0 0
        %4513 = vmatpush1.bf16.msra.mxu0 0
        %4514 = vmatprep.subr.bf16.mxu0 0
        %4515 = vmatpush1.bf16.msra.mxu0 0
        %4516 = vmatprep.mubr.bf16.mxu0 0
        %4517 = vmatmul.mubr.bf16.gmra.mrb[0].mxu0 %v4467
        %v4518 = vpop.f32.mrb[0].mxu0
        %v4519 = vadd.f32 0.0, %v4518
        %v4520 = vpop.f32.mrb[0].mxu0
        %v4521 = vpop.f32.mrb[0].mxu0
        %v4522 = vadd.f32 0.0, %v4521
        %v4523 = vpop.f32.mrb[0].mxu0
        %4524 = vmatprep.mubr.bf16.mxu0 0
        %4525 = vmatmul.mubr.bf16.gmra.mrb[0].mxu0 %v4470
        %v4526 = vpop.f32.mrb[0].mxu0
        %v4527 = vadd.f32 0.0, %v4526
        %v4528 = vpop.f32.mrb[0].mxu0
        %v4529 = vpop.f32.mrb[0].mxu0
        %v4530 = vadd.f32 0.0, %v4529
        %v4531 = vpop.f32.mrb[0].mxu0
        %4532 = vmatprep.mubr.bf16.mxu0 0
        %4533 = vmatmul.mubr.bf16.gmra.mrb[0].mxu0 %v4473
        %v4534 = vpop.f32.mrb[0].mxu0
        %v4535 = vadd.f32 0.0, %v4534
        %v4536 = vpop.f32.mrb[0].mxu0
        %v4537 = vpop.f32.mrb[0].mxu0
        %v4538 = vadd.f32 0.0, %v4537
        %v4539 = vpop.f32.mrb[0].mxu0
        %4540 = vmatprep.mubr.bf16.mxu0 0
        %4541 = vmatmul.mubr.bf16.gmra.mrb[0].mxu0 %v4476
        %v4542 = vpop.f32.mrb[0].mxu0
        %v4543 = vadd.f32 0.0, %v4542
        %v4544 = vpop.f32.mrb[0].mxu0
        %v4545 = vpop.f32.mrb[0].mxu0
        %v4546 = vadd.f32 0.0, %v4545
        %v4547 = vpop.f32.mrb[0].mxu0
        %4548 = vmatprep.mubr.bf16.mxu0 0
        %4549 = vmatmul.mubr.bf16.gmra.mrb[0].mxu0 %v4479
        %v4550 = vpop.f32.mrb[0].mxu0
        %v4551 = vadd.f32 0.0, %v4550
        %v4552 = vpop.f32.mrb[0].mxu0
        %v4553 = vpop.f32.mrb[0].mxu0
        %v4554 = vadd.f32 0.0, %v4553
        %v4555 = vpop.f32.mrb[0].mxu0
        %4556 = vdwg.mxu0
        %v4557 = vadd.f32 %v3834, %v4519
        %v4558 = vadd.f32 %v3835, %v4522
        %v4559 = vadd.f32 %v3836, %v4527
        %v4560 = vadd.f32 %v3837, %v4530
        %v4561 = vadd.f32 %v3838, %v4535
        %v4562 = vadd.f32 %v3839, %v4538
        %v4563 = vadd.f32 %v3840, %v4543
        %v4564 = vadd.f32 %v3841, %v4546
        %v4565 = vadd.f32 %v3842, %v4551
        %v4566 = vadd.f32 %v3843, %v4554
        %v4567 = vld [vmem:[%s29] sm:$0x1]
        %v4569 = vlaneseq
        %v4570 = vshrl.u32 %v4569, 7
        %v4571 = vsub.s32 0, %v4570
        %v4572 = vrot.slane %v4567, %v4571
        %v4574 = vadd.f32 %v4557, %v4572
        %v4575 = vadd.f32 %v4558, %v4572
        %v4576 = vadd.f32 %v4559, %v4572
        %v4577 = vadd.f32 %v4560, %v4572
        %v4578 = vadd.f32 %v4561, %v4572
        %v4579 = vadd.f32 %v4562, %v4572
        %v4580 = vadd.f32 %v4563, %v4572
        %v4581 = vadd.f32 %v4564, %v4572
        %v4582 = vadd.f32 %v4565, %v4572
        %v4583 = vadd.f32 %v4566, %v4572
        %v4584 = vadd.f32 %v1593, %v4574
        %v4585 = vadd.f32 %v1596, %v4575
        %v4586 = vadd.f32 %v1601, %v4576
        %v4587 = vadd.f32 %v1604, %v4577
        %v4588 = vadd.f32 %v1609, %v4578
        %v4589 = vadd.f32 %v1612, %v4579
        %v4590 = vadd.f32 %v1617, %v4580
        %v4591 = vadd.f32 %v1620, %v4581
        %v4592 = vadd.f32 %v1625, %v4582
        %v4593 = vadd.f32 %v1628, %v4583
        %v4594 = vsel %vm1685, %v4584, 0.0
        %4595 = vadd.xlane.f32.xlu0 %v4594
        %v4596 = vpop.xlane.xlu0 %4595
        %v4597 = vsel %vm1685, %v4585, 0.0
        %4598 = vadd.xlane.f32.xlu0 %v4597
        %v4599 = vpop.xlane.xlu0 %4598
        %v4600 = vsel %vm1685, %v4586, 0.0
        %4601 = vadd.xlane.f32.xlu0 %v4600
        %v4602 = vpop.xlane.xlu0 %4601
        %v4603 = vsel %vm1685, %v4587, 0.0
        %4604 = vadd.xlane.f32.xlu0 %v4603
        %v4605 = vpop.xlane.xlu0 %4604
        %v4606 = vsel %vm1685, %v4588, 0.0
        %4607 = vadd.xlane.f32.xlu0 %v4606
        %v4608 = vpop.xlane.xlu0 %4607
        %v4609 = vsel %vm1685, %v4589, 0.0
        %4610 = vadd.xlane.f32.xlu0 %v4609
        %v4611 = vpop.xlane.xlu0 %4610
        %v4612 = vsel %vm1685, %v4590, 0.0
        %4613 = vadd.xlane.f32.xlu0 %v4612
        %v4614 = vpop.xlane.xlu0 %4613
        %v4615 = vsel %vm1685, %v4591, 0.0
        %4616 = vadd.xlane.f32.xlu0 %v4615
        %v4617 = vpop.xlane.xlu0 %4616
        %v4618 = vsel %vm1685, %v4592, 0.0
        %4619 = vadd.xlane.f32.xlu0 %v4618
        %v4620 = vpop.xlane.xlu0 %4619
        %v4621 = vsel %vm1685, %v4593, 0.0
        %4622 = vadd.xlane.f32.xlu0 %v4621
        %v4623 = vpop.xlane.xlu0 %4622
        %v4624 = vrcp.pop 32.0
        %v4625 = vmul.f32 %v4596, %v4624
        %v4626 = vmul.f32 %v4599, %v4624
        %v4627 = vmul.f32 %v4602, %v4624
        %v4628 = vmul.f32 %v4605, %v4624
        %v4629 = vmul.f32 %v4608, %v4624
        %v4630 = vmul.f32 %v4611, %v4624
        %v4631 = vmul.f32 %v4614, %v4624
        %v4632 = vmul.f32 %v4617, %v4624
        %v4633 = vmul.f32 %v4620, %v4624
        %v4634 = vmul.f32 %v4623, %v4624
        %v4635 = vsub.f32 %v4584, %v4625
        %v4636 = vsub.f32 %v4585, %v4626
        %v4637 = vsub.f32 %v4586, %v4627
        %v4638 = vsub.f32 %v4587, %v4628
        %v4639 = vsub.f32 %v4588, %v4629
        %v4640 = vsub.f32 %v4589, %v4630
        %v4641 = vsub.f32 %v4590, %v4631
        %v4642 = vsub.f32 %v4591, %v4632
        %v4643 = vsub.f32 %v4592, %v4633
        %v4644 = vsub.f32 %v4593, %v4634
        %v4645 = vmul.f32 %v4635, %v4635
        %v4646 = vmul.f32 %v4636, %v4636
        %v4647 = vmul.f32 %v4637, %v4637
        %v4648 = vmul.f32 %v4638, %v4638
        %v4649 = vmul.f32 %v4639, %v4639
        %v4650 = vmul.f32 %v4640, %v4640
        %v4651 = vmul.f32 %v4641, %v4641
        %v4652 = vmul.f32 %v4642, %v4642
        %v4653 = vmul.f32 %v4643, %v4643
        %v4654 = vmul.f32 %v4644, %v4644
        %v4655 = vsel %vm1685, %v4645, 0.0
        %4656 = vadd.xlane.f32.xlu0 %v4655
        %v4657 = vpop.xlane.xlu0 %4656
        %v4658 = vsel %vm1685, %v4646, 0.0
        %4659 = vadd.xlane.f32.xlu0 %v4658
        %v4660 = vpop.xlane.xlu0 %4659
        %v4661 = vsel %vm1685, %v4647, 0.0
        %4662 = vadd.xlane.f32.xlu0 %v4661
        %v4663 = vpop.xlane.xlu0 %4662
        %v4664 = vsel %vm1685, %v4648, 0.0
        %4665 = vadd.xlane.f32.xlu0 %v4664
        %v4666 = vpop.xlane.xlu0 %4665
        %v4667 = vsel %vm1685, %v4649, 0.0
        %4668 = vadd.xlane.f32.xlu0 %v4667
        %v4669 = vpop.xlane.xlu0 %4668
        %v4670 = vsel %vm1685, %v4650, 0.0
        %4671 = vadd.xlane.f32.xlu0 %v4670
        %v4672 = vpop.xlane.xlu0 %4671
        %v4673 = vsel %vm1685, %v4651, 0.0
        %4674 = vadd.xlane.f32.xlu0 %v4673
        %v4675 = vpop.xlane.xlu0 %4674
        %v4676 = vsel %vm1685, %v4652, 0.0
        %4677 = vadd.xlane.f32.xlu0 %v4676
        %v4678 = vpop.xlane.xlu0 %4677
        %v4679 = vsel %vm1685, %v4653, 0.0
        %4680 = vadd.xlane.f32.xlu0 %v4679
        %v4681 = vpop.xlane.xlu0 %4680
        %v4682 = vsel %vm1685, %v4654, 0.0
        %4683 = vadd.xlane.f32.xlu0 %v4682
        %v4684 = vpop.xlane.xlu0 %4683
        %v4685 = vmul.f32 %v4657, %v4624
        %v4686 = vmul.f32 %v4660, %v4624
        %v4687 = vmul.f32 %v4663, %v4624
        %v4688 = vmul.f32 %v4666, %v4624
        %v4689 = vmul.f32 %v4669, %v4624
        %v4690 = vmul.f32 %v4672, %v4624
        %v4691 = vmul.f32 %v4675, %v4624
        %v4692 = vmul.f32 %v4678, %v4624
        %v4693 = vmul.f32 %v4681, %v4624
        %v4694 = vmul.f32 %v4684, %v4624
        %v4695 = vadd.f32 %v4685, 1e-05
        %v4696 = vadd.f32 %v4686, 1e-05
        %v4697 = vadd.f32 %v4687, 1e-05
        %v4698 = vadd.f32 %v4688, 1e-05
        %v4699 = vadd.f32 %v4689, 1e-05
        %v4700 = vadd.f32 %v4690, 1e-05
        %v4701 = vadd.f32 %v4691, 1e-05
        %v4702 = vadd.f32 %v4692, 1e-05
        %v4703 = vadd.f32 %v4693, 1e-05
        %v4704 = vadd.f32 %v4694, 1e-05
        %v4705 = vrsqrt.pop %v4695
        %v4706 = vrsqrt.pop %v4696
        %v4707 = vrsqrt.pop %v4697
        %v4708 = vrsqrt.pop %v4698
        %v4709 = vrsqrt.pop %v4699
        %v4710 = vrsqrt.pop %v4700
        %v4711 = vrsqrt.pop %v4701
        %v4712 = vrsqrt.pop %v4702
        %v4713 = vrsqrt.pop %v4703
        %v4714 = vrsqrt.pop %v4704
        %v4715 = vmul.f32 %v4635, %v4705
        %v4716 = vmul.f32 %v4636, %v4706
        %v4717 = vmul.f32 %v4637, %v4707
        %v4718 = vmul.f32 %v4638, %v4708
        %v4719 = vmul.f32 %v4639, %v4709
        %v4720 = vmul.f32 %v4640, %v4710
        %v4721 = vmul.f32 %v4641, %v4711
        %v4722 = vmul.f32 %v4642, %v4712
        %v4723 = vmul.f32 %v4643, %v4713
        %v4724 = vmul.f32 %v4644, %v4714
        %v4725 = vld [vmem:[%s31] sm:$0x1]
        %v4726 = vlaneseq
        %v4727 = vshrl.u32 %v4726, 7
        %v4728 = vsub.s32 0, %v4727
        %v4729 = vrot.slane %v4725, %v4728
        %v4730 = vmul.f32 %v4715, %v4729
        %v4731 = vmul.f32 %v4716, %v4729
        %v4732 = vmul.f32 %v4717, %v4729
        %v4733 = vmul.f32 %v4718, %v4729
        %v4734 = vmul.f32 %v4719, %v4729
        %v4735 = vmul.f32 %v4720, %v4729
        %v4736 = vmul.f32 %v4721, %v4729
        %v4737 = vmul.f32 %v4722, %v4729
        %v4738 = vmul.f32 %v4723, %v4729
        %v4739 = vmul.f32 %v4724, %v4729
        %v4740 = vld [vmem:[%s31 + $0x1] sm:$0x1]
        %v4741 = vlaneseq
        %v4742 = vshrl.u32 %v4741, 7
        %v4743 = vsub.s32 0, %v4742
        %v4744 = vrot.slane %v4740, %v4743
        %v4745 = vadd.f32 %v4730, %v4744
        %v4746 = vadd.f32 %v4731, %v4744
        %v4747 = vadd.f32 %v4732, %v4744
        %v4748 = vadd.f32 %v4733, %v4744
        %v4749 = vadd.f32 %v4734, %v4744
        %v4750 = vadd.f32 %v4735, %v4744
        %v4751 = vadd.f32 %v4736, %v4744
        %v4752 = vadd.f32 %v4737, %v4744
        %v4753 = vadd.f32 %v4738, %v4744
        %v4754 = vadd.f32 %v4739, %v4744
        %v4755 = vpack.c.bf16 %v4746, %v4745
        %v4756 = vpack.c.bf16 %v4748, %v4747
        %v4757 = vpack.c.bf16 %v4750, %v4749
        %v4758 = vpack.c.bf16 %v4752, %v4751
        %v4759 = vpack.c.bf16 %v4754, %v4753
        %v4760 = vld [vmem:[%s33] sm:$0xf]
        %v4761 = vld [vmem:[%s33 + $0x4] sm:$0xf]
        %v4762 = vld [vmem:[%s33 + $0x8] sm:$0xf]
        %v4763 = vld [vmem:[%s33 + $0xc] sm:$0xf]
        %v4764 = vld [vmem:[%s35] sm:$0x1]
        %v4766 = vlaneseq
        %v4767 = vshrl.u32 %v4766, 7
        %v4768 = vsub.s32 0, %v4767
        %v4769 = vrot.slane %v4764, %v4768
        %v4775 = vunpack.c.l.b16 %v4760
        %v4776 = vunpack.c.l.b16 %v4761
        %v4777 = vunpack.c.l.b16 %v4762
        %v4778 = vunpack.c.l.b16 %v4763
        %v4779 = vpack.c.b16 %v4776, %v4775
        %v4780 = vpack.c.b16 %v4778, %v4777
        %v4784 = vsel %vm1685, %v4755, 0
        %v4787 = vsel %vm1685, %v4756, 0
        %v4790 = vsel %vm1685, %v4757, 0
        %v4793 = vsel %vm1685, %v4758, 0
        %v4796 = vsel %vm1685, %v4759, 0
        %4798 = vmatprep.subr.bf16.mxu0 0
        %4799 = vmatpush1.bf16.msra.mxu0 %v4779
        %4800 = vmatprep.subr.bf16.mxu0 0
        %4801 = vmatpush1.bf16.msra.mxu0 %v4780
        %4802 = vmatprep.subr.bf16.mxu0 0
        %4803 = vmatpush1.bf16.msra.mxu0 0
        %4804 = vmatprep.subr.bf16.mxu0 0
        %4805 = vmatpush1.bf16.msra.mxu0 0
        %4806 = vmatprep.subr.bf16.mxu0 0
        %4807 = vmatpush1.bf16.msra.mxu0 0
        %4808 = vmatprep.subr.bf16.mxu0 0
        %4809 = vmatpush1.bf16.msra.mxu0 0
        %4810 = vmatprep.subr.bf16.mxu0 0
        %4811 = vmatpush1.bf16.msra.mxu0 0
        %4812 = vmatprep.subr.bf16.mxu0 0
        %4813 = vmatpush1.bf16.msra.mxu0 0
        %4814 = vmatprep.subr.bf16.mxu0 0
        %4815 = vmatpush1.bf16.msra.mxu0 0
        %4816 = vmatprep.subr.bf16.mxu0 0
        %4817 = vmatpush1.bf16.msra.mxu0 0
        %4818 = vmatprep.subr.bf16.mxu0 0
        %4819 = vmatpush1.bf16.msra.mxu0 0
        %4820 = vmatprep.subr.bf16.mxu0 0
        %4821 = vmatpush1.bf16.msra.mxu0 0
        %4822 = vmatprep.subr.bf16.mxu0 0
        %4823 = vmatpush1.bf16.msra.mxu0 0
        %4824 = vmatprep.subr.bf16.mxu0 0
        %4825 = vmatpush1.bf16.msra.mxu0 0
        %4826 = vmatprep.subr.bf16.mxu0 0
        %4827 = vmatpush1.bf16.msra.mxu0 0
        %4828 = vmatprep.subr.bf16.mxu0 0
        %4829 = vmatpush1.bf16.msra.mxu0 0
        %4830 = vmatprep.mubr.bf16.mxu0 0
        %4831 = vmatmul.mubr.bf16.gmra.mrb[0].mxu0 %v4784
        %v4832 = vpop.f32.mrb[0].mxu0
        %v4833 = vadd.f32 %v4769, %v4832
        %v4834 = vpop.f32.mrb[0].mxu0
        %v4835 = vpop.f32.mrb[0].mxu0
        %v4836 = vadd.f32 %v4769, %v4835
        %v4837 = vpop.f32.mrb[0].mxu0
        %4838 = vmatprep.mubr.bf16.mxu0 0
        %4839 = vmatmul.mubr.bf16.gmra.mrb[0].mxu0 %v4787
        %v4840 = vpop.f32.mrb[0].mxu0
        %v4841 = vadd.f32 %v4769, %v4840
        %v4842 = vpop.f32.mrb[0].mxu0
        %v4843 = vpop.f32.mrb[0].mxu0
        %v4844 = vadd.f32 %v4769, %v4843
        %v4845 = vpop.f32.mrb[0].mxu0
        %4846 = vmatprep.mubr.bf16.mxu0 0
        %4847 = vmatmul.mubr.bf16.gmra.mrb[0].mxu0 %v4790
        %v4848 = vpop.f32.mrb[0].mxu0
        %v4849 = vadd.f32 %v4769, %v4848
        %v4850 = vpop.f32.mrb[0].mxu0
        %v4851 = vpop.f32.mrb[0].mxu0
        %v4852 = vadd.f32 %v4769, %v4851
        %v4853 = vpop.f32.mrb[0].mxu0
        %4854 = vmatprep.mubr.bf16.mxu0 0
        %4855 = vmatmul.mubr.bf16.gmra.mrb[0].mxu0 %v4793
        %v4856 = vpop.f32.mrb[0].mxu0
        %v4857 = vadd.f32 %v4769, %v4856
        %v4858 = vpop.f32.mrb[0].mxu0
        %v4859 = vpop.f32.mrb[0].mxu0
        %v4860 = vadd.f32 %v4769, %v4859
        %v4861 = vpop.f32.mrb[0].mxu0
        %4862 = vmatprep.mubr.bf16.mxu0 0
        %4863 = vmatmul.mubr.bf16.gmra.mrb[0].mxu0 %v4796
        %v4864 = vpop.f32.mrb[0].mxu0
        %v4865 = vadd.f32 %v4769, %v4864
        %v4866 = vpop.f32.mrb[0].mxu0
        %v4867 = vpop.f32.mrb[0].mxu0
        %v4868 = vadd.f32 %v4769, %v4867
        %v4869 = vpop.f32.mrb[0].mxu0
        %4870 = vdwg.mxu0
        %v4871 = vmax.f32 %v4833, 0.0
        %v4872 = vmax.f32 %v4836, 0.0
        %v4873 = vmax.f32 %v4841, 0.0
        %v4874 = vmax.f32 %v4844, 0.0
        %v4875 = vmax.f32 %v4849, 0.0
        %v4876 = vmax.f32 %v4852, 0.0
        %v4877 = vmax.f32 %v4857, 0.0
        %v4878 = vmax.f32 %v4860, 0.0
        %v4879 = vmax.f32 %v4865, 0.0
        %v4880 = vmax.f32 %v4868, 0.0
        %v4881 = vpack.c.bf16 %v4872, %v4871
        %v4882 = vpack.c.bf16 %v4874, %v4873
        %v4883 = vpack.c.bf16 %v4876, %v4875
        %v4884 = vpack.c.bf16 %v4878, %v4877
        %v4885 = vpack.c.bf16 %v4880, %v4879
        %v4886 = vld [vmem:[%s37] sm:$0xf]
        %v4887 = vld [vmem:[%s37 + $0x4] sm:$0xf]
        %v4888 = vld [vmem:[%s37 + $0x8] sm:$0xf]
        %v4889 = vld [vmem:[%s37 + $0xc] sm:$0xf]
        %v4890 = vld [vmem:[%s37 + $0x10] sm:$0xf]
        %v4891 = vld [vmem:[%s37 + $0x14] sm:$0xf]
        %v4892 = vld [vmem:[%s37 + $0x18] sm:$0xf]
        %v4893 = vld [vmem:[%s37 + $0x1c] sm:$0xf]
        %v4894 = vld [vmem:[%s39] sm:$0x1]
        %v4896 = vlaneseq
        %v4897 = vshrl.u32 %v4896, 7
        %v4898 = vsub.s32 0, %v4897
        %v4899 = vrot.slane %v4894, %v4898
        %v4909 = vunpack.c.l.b16 %v4886
        %v4910 = vunpack.c.l.b16 %v4887
        %v4911 = vunpack.c.l.b16 %v4888
        %v4912 = vunpack.c.l.b16 %v4889
        %v4913 = vunpack.c.l.b16 %v4890
        %v4914 = vunpack.c.l.b16 %v4891
        %v4915 = vunpack.c.l.b16 %v4892
        %v4916 = vunpack.c.l.b16 %v4893
        %v4917 = vpack.c.b16 %v4910, %v4909
        %v4918 = vpack.c.b16 %v4912, %v4911
        %v4919 = vpack.c.b16 %v4914, %v4913
        %v4920 = vpack.c.b16 %v4916, %v4915
        %vm4925 = vcmask 523264
        %v4927 = vsel %vm4925, %v4881, 0
        %v4930 = vsel %vm4925, %v4882, 0
        %v4933 = vsel %vm4925, %v4883, 0
        %v4936 = vsel %vm4925, %v4884, 0
        %v4939 = vsel %vm4925, %v4885, 0
        %4941 = vmatprep.subr.bf16.mxu0 0
        %4942 = vmatpush1.bf16.msra.mxu0 %v4917
        %4943 = vmatprep.subr.bf16.mxu0 0
        %4944 = vmatpush1.bf16.msra.mxu0 %v4918
        %4945 = vmatprep.subr.bf16.mxu0 0
        %4946 = vmatpush1.bf16.msra.mxu0 %v4919
        %4947 = vmatprep.subr.bf16.mxu0 0
        %4948 = vmatpush1.bf16.msra.mxu0 %v4920
        %4949 = vmatprep.subr.bf16.mxu0 0
        %4950 = vmatpush1.bf16.msra.mxu0 0
        %4951 = vmatprep.subr.bf16.mxu0 0
        %4952 = vmatpush1.bf16.msra.mxu0 0
        %4953 = vmatprep.subr.bf16.mxu0 0
        %4954 = vmatpush1.bf16.msra.mxu0 0
        %4955 = vmatprep.subr.bf16.mxu0 0
        %4956 = vmatpush1.bf16.msra.mxu0 0
        %4957 = vmatprep.subr.bf16.mxu0 0
        %4958 = vmatpush1.bf16.msra.mxu0 0
        %4959 = vmatprep.subr.bf16.mxu0 0
        %4960 = vmatpush1.bf16.msra.mxu0 0
        %4961 = vmatprep.subr.bf16.mxu0 0
        %4962 = vmatpush1.bf16.msra.mxu0 0
        %4963 = vmatprep.subr.bf16.mxu0 0
        %4964 = vmatpush1.bf16.msra.mxu0 0
        %4965 = vmatprep.subr.bf16.mxu0 0
        %4966 = vmatpush1.bf16.msra.mxu0 0
        %4967 = vmatprep.subr.bf16.mxu0 0
        %4968 = vmatpush1.bf16.msra.mxu0 0
        %4969 = vmatprep.subr.bf16.mxu0 0
        %4970 = vmatpush1.bf16.msra.mxu0 0
        %4971 = vmatprep.subr.bf16.mxu0 0
        %4972 = vmatpush1.bf16.msra.mxu0 0
        %4973 = vmatprep.mubr.bf16.mxu0 0
        %4974 = vmatmul.mubr.bf16.gmra.mrb[0].mxu0 %v4927
        %v4975 = vpop.f32.mrb[0].mxu0
        %v4976 = vadd.f32 %v4899, %v4975
        %v4977 = vpop.f32.mrb[0].mxu0
        %v4978 = vpop.f32.mrb[0].mxu0
        %v4979 = vadd.f32 %v4899, %v4978
        %v4980 = vpop.f32.mrb[0].mxu0
        %4981 = vmatprep.mubr.bf16.mxu0 0
        %4982 = vmatmul.mubr.bf16.gmra.mrb[0].mxu0 %v4930
        %v4983 = vpop.f32.mrb[0].mxu0
        %v4984 = vadd.f32 %v4899, %v4983
        %v4985 = vpop.f32.mrb[0].mxu0
        %v4986 = vpop.f32.mrb[0].mxu0
        %v4987 = vadd.f32 %v4899, %v4986
        %v4988 = vpop.f32.mrb[0].mxu0
        %4989 = vmatprep.mubr.bf16.mxu0 0
        %4990 = vmatmul.mubr.bf16.gmra.mrb[0].mxu0 %v4933
        %v4991 = vpop.f32.mrb[0].mxu0
        %v4992 = vadd.f32 %v4899, %v4991
        %v4993 = vpop.f32.mrb[0].mxu0
        %v4994 = vpop.f32.mrb[0].mxu0
        %v4995 = vadd.f32 %v4899, %v4994
        %v4996 = vpop.f32.mrb[0].mxu0
        %4997 = vmatprep.mubr.bf16.mxu0 0
        %4998 = vmatmul.mubr.bf16.gmra.mrb[0].mxu0 %v4936
        %v4999 = vpop.f32.mrb[0].mxu0
        %v5000 = vadd.f32 %v4899, %v4999
        %v5001 = vpop.f32.mrb[0].mxu0
        %v5002 = vpop.f32.mrb[0].mxu0
        %v5003 = vadd.f32 %v4899, %v5002
        %v5004 = vpop.f32.mrb[0].mxu0
        %5005 = vmatprep.mubr.bf16.mxu0 0
        %5006 = vmatmul.mubr.bf16.gmra.mrb[0].mxu0 %v4939
        %v5007 = vpop.f32.mrb[0].mxu0
        %v5008 = vadd.f32 %v4899, %v5007
        %v5009 = vpop.f32.mrb[0].mxu0
        %v5010 = vpop.f32.mrb[0].mxu0
        %v5011 = vadd.f32 %v4899, %v5010
        %v5012 = vpop.f32.mrb[0].mxu0
        %5013 = vdwg.mxu0
        %v5014 = vadd.f32 %v4745, %v4976
        %v5015 = vadd.f32 %v4746, %v4979
        %v5016 = vadd.f32 %v4747, %v4984
        %v5017 = vadd.f32 %v4748, %v4987
        %v5018 = vadd.f32 %v4749, %v4992
        %v5019 = vadd.f32 %v4750, %v4995
        %v5020 = vadd.f32 %v4751, %v5000
        %v5021 = vadd.f32 %v4752, %v5003
        %v5022 = vadd.f32 %v4753, %v5008
        %v5023 = vadd.f32 %v4754, %v5011
        %v5024 = vsel %vm1685, %v5014, 0.0
        %5025 = vadd.xlane.f32.xlu0 %v5024
        %v5026 = vpop.xlane.xlu0 %5025
        %v5027 = vsel %vm1685, %v5015, 0.0
        %5028 = vadd.xlane.f32.xlu0 %v5027
        %v5029 = vpop.xlane.xlu0 %5028
        %v5030 = vsel %vm1685, %v5016, 0.0
        %5031 = vadd.xlane.f32.xlu0 %v5030
        %v5032 = vpop.xlane.xlu0 %5031
        %v5033 = vsel %vm1685, %v5017, 0.0
        %5034 = vadd.xlane.f32.xlu0 %v5033
        %v5035 = vpop.xlane.xlu0 %5034
        %v5036 = vsel %vm1685, %v5018, 0.0
        %5037 = vadd.xlane.f32.xlu0 %v5036
        %v5038 = vpop.xlane.xlu0 %5037
        %v5039 = vsel %vm1685, %v5019, 0.0
        %5040 = vadd.xlane.f32.xlu0 %v5039
        %v5041 = vpop.xlane.xlu0 %5040
        %v5042 = vsel %vm1685, %v5020, 0.0
        %5043 = vadd.xlane.f32.xlu0 %v5042
        %v5044 = vpop.xlane.xlu0 %5043
        %v5045 = vsel %vm1685, %v5021, 0.0
        %5046 = vadd.xlane.f32.xlu0 %v5045
        %v5047 = vpop.xlane.xlu0 %5046
        %v5048 = vsel %vm1685, %v5022, 0.0
        %5049 = vadd.xlane.f32.xlu0 %v5048
        %v5050 = vpop.xlane.xlu0 %5049
        %v5051 = vsel %vm1685, %v5023, 0.0
        %5052 = vadd.xlane.f32.xlu0 %v5051
        %v5053 = vpop.xlane.xlu0 %5052
        %v5054 = vmul.f32 %v5026, %v4624
        %v5055 = vmul.f32 %v5029, %v4624
        %v5056 = vmul.f32 %v5032, %v4624
        %v5057 = vmul.f32 %v5035, %v4624
        %v5058 = vmul.f32 %v5038, %v4624
        %v5059 = vmul.f32 %v5041, %v4624
        %v5060 = vmul.f32 %v5044, %v4624
        %v5061 = vmul.f32 %v5047, %v4624
        %v5062 = vmul.f32 %v5050, %v4624
        %v5063 = vmul.f32 %v5053, %v4624
        %v5064 = vsub.f32 %v5014, %v5054
        %v5065 = vsub.f32 %v5015, %v5055
        %v5066 = vsub.f32 %v5016, %v5056
        %v5067 = vsub.f32 %v5017, %v5057
        %v5068 = vsub.f32 %v5018, %v5058
        %v5069 = vsub.f32 %v5019, %v5059
        %v5070 = vsub.f32 %v5020, %v5060
        %v5071 = vsub.f32 %v5021, %v5061
        %v5072 = vsub.f32 %v5022, %v5062
        %v5073 = vsub.f32 %v5023, %v5063
        %v5074 = vmul.f32 %v5064, %v5064
        %v5075 = vmul.f32 %v5065, %v5065
        %v5076 = vmul.f32 %v5066, %v5066
        %v5077 = vmul.f32 %v5067, %v5067
        %v5078 = vmul.f32 %v5068, %v5068
        %v5079 = vmul.f32 %v5069, %v5069
        %v5080 = vmul.f32 %v5070, %v5070
        %v5081 = vmul.f32 %v5071, %v5071
        %v5082 = vmul.f32 %v5072, %v5072
        %v5083 = vmul.f32 %v5073, %v5073
        %v5084 = vsel %vm1685, %v5074, 0.0
        %5085 = vadd.xlane.f32.xlu0 %v5084
        %v5086 = vpop.xlane.xlu0 %5085
        %v5087 = vsel %vm1685, %v5075, 0.0
        %5088 = vadd.xlane.f32.xlu0 %v5087
        %v5089 = vpop.xlane.xlu0 %5088
        %v5090 = vsel %vm1685, %v5076, 0.0
        %5091 = vadd.xlane.f32.xlu0 %v5090
        %v5092 = vpop.xlane.xlu0 %5091
        %v5093 = vsel %vm1685, %v5077, 0.0
        %5094 = vadd.xlane.f32.xlu0 %v5093
        %v5095 = vpop.xlane.xlu0 %5094
        %v5096 = vsel %vm1685, %v5078, 0.0
        %5097 = vadd.xlane.f32.xlu0 %v5096
        %v5098 = vpop.xlane.xlu0 %5097
        %v5099 = vsel %vm1685, %v5079, 0.0
        %5100 = vadd.xlane.f32.xlu0 %v5099
        %v5101 = vpop.xlane.xlu0 %5100
        %v5102 = vsel %vm1685, %v5080, 0.0
        %5103 = vadd.xlane.f32.xlu0 %v5102
        %v5104 = vpop.xlane.xlu0 %5103
        %v5105 = vsel %vm1685, %v5081, 0.0
        %5106 = vadd.xlane.f32.xlu0 %v5105
        %v5107 = vpop.xlane.xlu0 %5106
        %v5108 = vsel %vm1685, %v5082, 0.0
        %5109 = vadd.xlane.f32.xlu0 %v5108
        %v5110 = vpop.xlane.xlu0 %5109
        %v5111 = vsel %vm1685, %v5083, 0.0
        %5112 = vadd.xlane.f32.xlu0 %v5111
        %v5113 = vpop.xlane.xlu0 %5112
        %v5114 = vmul.f32 %v5086, %v4624
        %v5115 = vmul.f32 %v5089, %v4624
        %v5116 = vmul.f32 %v5092, %v4624
        %v5117 = vmul.f32 %v5095, %v4624
        %v5118 = vmul.f32 %v5098, %v4624
        %v5119 = vmul.f32 %v5101, %v4624
        %v5120 = vmul.f32 %v5104, %v4624
        %v5121 = vmul.f32 %v5107, %v4624
        %v5122 = vmul.f32 %v5110, %v4624
        %v5123 = vmul.f32 %v5113, %v4624
        %v5124 = vadd.f32 %v5114, 1e-05
        %v5125 = vadd.f32 %v5115, 1e-05
        %v5126 = vadd.f32 %v5116, 1e-05
        %v5127 = vadd.f32 %v5117, 1e-05
        %v5128 = vadd.f32 %v5118, 1e-05
        %v5129 = vadd.f32 %v5119, 1e-05
        %v5130 = vadd.f32 %v5120, 1e-05
        %v5131 = vadd.f32 %v5121, 1e-05
        %v5132 = vadd.f32 %v5122, 1e-05
        %v5133 = vadd.f32 %v5123, 1e-05
        %v5134 = vrsqrt.pop %v5124
        %v5135 = vrsqrt.pop %v5125
        %v5136 = vrsqrt.pop %v5126
        %v5137 = vrsqrt.pop %v5127
        %v5138 = vrsqrt.pop %v5128
        %v5139 = vrsqrt.pop %v5129
        %v5140 = vrsqrt.pop %v5130
        %v5141 = vrsqrt.pop %v5131
        %v5142 = vrsqrt.pop %v5132
        %v5143 = vrsqrt.pop %v5133
        %v5144 = vmul.f32 %v5064, %v5134
        %v5145 = vmul.f32 %v5065, %v5135
        %v5146 = vmul.f32 %v5066, %v5136
        %v5147 = vmul.f32 %v5067, %v5137
        %v5148 = vmul.f32 %v5068, %v5138
        %v5149 = vmul.f32 %v5069, %v5139
        %v5150 = vmul.f32 %v5070, %v5140
        %v5151 = vmul.f32 %v5071, %v5141
        %v5152 = vmul.f32 %v5072, %v5142
        %v5153 = vmul.f32 %v5073, %v5143
        %v5154 = vld [vmem:[%s41] sm:$0x1]
        %v5155 = vlaneseq
        %v5156 = vshrl.u32 %v5155, 7
        %v5157 = vsub.s32 0, %v5156
        %v5158 = vrot.slane %v5154, %v5157
        %v5159 = vmul.f32 %v5144, %v5158
        %v5160 = vmul.f32 %v5145, %v5158
        %v5161 = vmul.f32 %v5146, %v5158
        %v5162 = vmul.f32 %v5147, %v5158
        %v5163 = vmul.f32 %v5148, %v5158
        %v5164 = vmul.f32 %v5149, %v5158
        %v5165 = vmul.f32 %v5150, %v5158
        %v5166 = vmul.f32 %v5151, %v5158
        %v5167 = vmul.f32 %v5152, %v5158
        %v5168 = vmul.f32 %v5153, %v5158
        %v5169 = vld [vmem:[%s41 + $0x1] sm:$0x1]
        %v5170 = vlaneseq
        %v5171 = vshrl.u32 %v5170, 7
        %v5172 = vsub.s32 0, %v5171
        %v5173 = vrot.slane %v5169, %v5172
        %v5174 = vadd.f32 %v5159, %v5173
        %v5175 = vadd.f32 %v5160, %v5173
        %v5176 = vadd.f32 %v5161, %v5173
        %v5177 = vadd.f32 %v5162, %v5173
        %v5178 = vadd.f32 %v5163, %v5173
        %v5179 = vadd.f32 %v5164, %v5173
        %v5180 = vadd.f32 %v5165, %v5173
        %v5181 = vadd.f32 %v5166, %v5173
        %v5182 = vadd.f32 %v5167, %v5173
        %v5183 = vadd.f32 %v5168, %v5173
        %v5184 = vld [vmem:[%s11] sm:$0x1]
        %v5185 = vadd.f32 %v5184, 0.0
        %v5186 = vpack.c.bf16 %v5185, %v5185
        %v5187 = vld [vmem:[%s43] sm:$0xf]
        %v5188 = vld [vmem:[%s43 + $0x4] sm:$0xf]
        %v5189 = vld [vmem:[%s43 + $0x8] sm:$0xf]
        %v5190 = vld [vmem:[%s43 + $0xc] sm:$0xf]
        %v5191 = vld [vmem:[%s45] sm:$0x1]
        %v5196 = vunpack.c.l.b16 %v5187
        %v5197 = vunpack.c.l.b16 %v5188
        %v5198 = vunpack.c.l.b16 %v5189
        %v5199 = vunpack.c.l.b16 %v5190
        %v5200 = vpack.c.b16 %v5197, %v5196
        %v5201 = vpack.c.b16 %v5199, %v5198
        %v5205 = vsel %vm1685, %v5186, 0
        %5207 = vmatprep.subr.bf16.mxu0 0
        %5208 = vmatpush1.bf16.msra.mxu0 %v5200
        %5209 = vmatprep.subr.bf16.mxu0 0
        %5210 = vmatpush1.bf16.msra.mxu0 %v5201
        %5211 = vmatprep.subr.bf16.mxu0 0
        %5212 = vmatpush1.bf16.msra.mxu0 0
        %5213 = vmatprep.subr.bf16.mxu0 0
        %5214 = vmatpush1.bf16.msra.mxu0 0
        %5215 = vmatprep.subr.bf16.mxu0 0
        %5216 = vmatpush1.bf16.msra.mxu0 0
        %5217 = vmatprep.subr.bf16.mxu0 0
        %5218 = vmatpush1.bf16.msra.mxu0 0
        %5219 = vmatprep.subr.bf16.mxu0 0
        %5220 = vmatpush1.bf16.msra.mxu0 0
        %5221 = vmatprep.subr.bf16.mxu0 0
        %5222 = vmatpush1.bf16.msra.mxu0 0
        %5223 = vmatprep.subr.bf16.mxu0 0
        %5224 = vmatpush1.bf16.msra.mxu0 0
        %5225 = vmatprep.subr.bf16.mxu0 0
        %5226 = vmatpush1.bf16.msra.mxu0 0
        %5227 = vmatprep.subr.bf16.mxu0 0
        %5228 = vmatpush1.bf16.msra.mxu0 0
        %5229 = vmatprep.subr.bf16.mxu0 0
        %5230 = vmatpush1.bf16.msra.mxu0 0
        %5231 = vmatprep.subr.bf16.mxu0 0
        %5232 = vmatpush1.bf16.msra.mxu0 0
        %5233 = vmatprep.subr.bf16.mxu0 0
        %5234 = vmatpush1.bf16.msra.mxu0 0
        %5235 = vmatprep.subr.bf16.mxu0 0
        %5236 = vmatpush1.bf16.msra.mxu0 0
        %5237 = vmatprep.subr.bf16.mxu0 0
        %5238 = vmatpush1.bf16.msra.mxu0 0
        %5239 = vmatprep.mubr.bf16.mxu0 0
        %5240 = vmatmul.mubr.bf16.gmra.mrb[0].mxu0 %v5205
        %v5241 = vpop.f32.mrb[0].mxu0
        %v5242 = vadd.f32 %v5191, %v5241
        %v5243 = vpop.f32.mrb[0].mxu0
        %v5244 = vpop.f32.mrb[0].mxu0
        %v5245 = vpop.f32.mrb[0].mxu0
        %5246 = vdwg.mxu0
        %v5247 = vld [vmem:[%s47] sm:$0xf]
        %v5248 = vld [vmem:[%s47 + $0x4] sm:$0xf]
        %v5249 = vld [vmem:[%s47 + $0x8] sm:$0xf]
        %v5250 = vld [vmem:[%s47 + $0xc] sm:$0xf]
        %v5251 = vld [vmem:[%s49] sm:$0x1]
        %v5256 = vunpack.c.l.b16 %v5247
        %v5257 = vunpack.c.l.b16 %v5248
        %v5258 = vunpack.c.l.b16 %v5249
        %v5259 = vunpack.c.l.b16 %v5250
        %v5260 = vpack.c.b16 %v5257, %v5256
        %v5261 = vpack.c.b16 %v5259, %v5258
        %5264 = vmatprep.subr.bf16.mxu0 0
        %5265 = vmatpush1.bf16.msra.mxu0 %v5260
        %5266 = vmatprep.subr.bf16.mxu0 0
        %5267 = vmatpush1.bf16.msra.mxu0 %v5261
        %5268 = vmatprep.subr.bf16.mxu0 0
        %5269 = vmatpush1.bf16.msra.mxu0 0
        %5270 = vmatprep.subr.bf16.mxu0 0
        %5271 = vmatpush1.bf16.msra.mxu0 0
        %5272 = vmatprep.subr.bf16.mxu0 0
        %5273 = vmatpush1.bf16.msra.mxu0 0
        %5274 = vmatprep.subr.bf16.mxu0 0
        %5275 = vmatpush1.bf16.msra.mxu0 0
        %5276 = vmatprep.subr.bf16.mxu0 0
        %5277 = vmatpush1.bf16.msra.mxu0 0
        %5278 = vmatprep.subr.bf16.mxu0 0
        %5279 = vmatpush1.bf16.msra.mxu0 0
        %5280 = vmatprep.subr.bf16.mxu0 0
        %5281 = vmatpush1.bf16.msra.mxu0 0
        %5282 = vmatprep.subr.bf16.mxu0 0
        %5283 = vmatpush1.bf16.msra.mxu0 0
        %5284 = vmatprep.subr.bf16.mxu0 0
        %5285 = vmatpush1.bf16.msra.mxu0 0
        %5286 = vmatprep.subr.bf16.mxu0 0
        %5287 = vmatpush1.bf16.msra.mxu0 0
        %5288 = vmatprep.subr.bf16.mxu0 0
        %5289 = vmatpush1.bf16.msra.mxu0 0
        %5290 = vmatprep.subr.bf16.mxu0 0
        %5291 = vmatpush1.bf16.msra.mxu0 0
        %5292 = vmatprep.subr.bf16.mxu0 0
        %5293 = vmatpush1.bf16.msra.mxu0 0
        %5294 = vmatprep.subr.bf16.mxu0 0
        %5295 = vmatpush1.bf16.msra.mxu0 0
        %5296 = vmatprep.mubr.bf16.mxu0 0
        %5297 = vmatmul.mubr.bf16.gmra.mrb[0].mxu0 %v5205
        %v5298 = vpop.f32.mrb[0].mxu0
        %v5299 = vadd.f32 %v5251, %v5298
        %v5300 = vpop.f32.mrb[0].mxu0
        %v5301 = vpop.f32.mrb[0].mxu0
        %v5302 = vpop.f32.mrb[0].mxu0
        %5303 = vdwg.mxu0
        %v5304 = vld [vmem:[%s51] sm:$0xf]
        %v5305 = vld [vmem:[%s51 + $0x4] sm:$0xf]
        %v5306 = vld [vmem:[%s51 + $0x8] sm:$0xf]
        %v5307 = vld [vmem:[%s51 + $0xc] sm:$0xf]
        %v5308 = vld [vmem:[%s53] sm:$0x1]
        %v5313 = vunpack.c.l.b16 %v5304
        %v5314 = vunpack.c.l.b16 %v5305
        %v5315 = vunpack.c.l.b16 %v5306
        %v5316 = vunpack.c.l.b16 %v5307
        %v5317 = vpack.c.b16 %v5314, %v5313
        %v5318 = vpack.c.b16 %v5316, %v5315
        %v5322 = vsel %vm1685, 0, 0
        %5324 = vmatprep.subr.bf16.mxu0 0
        %5325 = vmatpush1.bf16.msra.mxu0 %v5317
        %5326 = vmatprep.subr.bf16.mxu0 0
        %5327 = vmatpush1.bf16.msra.mxu0 %v5318
        %5328 = vmatprep.subr.bf16.mxu0 0
        %5329 = vmatpush1.bf16.msra.mxu0 0
        %5330 = vmatprep.subr.bf16.mxu0 0
        %5331 = vmatpush1.bf16.msra.mxu0 0
        %5332 = vmatprep.subr.bf16.mxu0 0
        %5333 = vmatpush1.bf16.msra.mxu0 0
        %5334 = vmatprep.subr.bf16.mxu0 0
        %5335 = vmatpush1.bf16.msra.mxu0 0
        %5336 = vmatprep.subr.bf16.mxu0 0
        %5337 = vmatpush1.bf16.msra.mxu0 0
        %5338 = vmatprep.subr.bf16.mxu0 0
        %5339 = vmatpush1.bf16.msra.mxu0 0
        %5340 = vmatprep.subr.bf16.mxu0 0
        %5341 = vmatpush1.bf16.msra.mxu0 0
        %5342 = vmatprep.subr.bf16.mxu0 0
        %5343 = vmatpush1.bf16.msra.mxu0 0
        %5344 = vmatprep.subr.bf16.mxu0 0
        %5345 = vmatpush1.bf16.msra.mxu0 0
        %5346 = vmatprep.subr.bf16.mxu0 0
        %5347 = vmatpush1.bf16.msra.mxu0 0
        %5348 = vmatprep.subr.bf16.mxu0 0
        %5349 = vmatpush1.bf16.msra.mxu0 0
        %5350 = vmatprep.subr.bf16.mxu0 0
        %5351 = vmatpush1.bf16.msra.mxu0 0
        %5352 = vmatprep.subr.bf16.mxu0 0
        %5353 = vmatpush1.bf16.msra.mxu0 0
        %5354 = vmatprep.subr.bf16.mxu0 0
        %5355 = vmatpush1.bf16.msra.mxu0 0
        %5356 = vmatprep.mubr.bf16.mxu0 0
        %5357 = vmatmul.mubr.bf16.gmra.mrb[0].mxu0 %v5322
        %v5358 = vpop.f32.mrb[0].mxu0
        %v5359 = vadd.f32 %v5308, %v5358
        %v5360 = vpop.f32.mrb[0].mxu0
        %v5361 = vpop.f32.mrb[0].mxu0
        %v5362 = vpop.f32.mrb[0].mxu0
        %5363 = vdwg.mxu0
        %v5364 = vpack.c.bf16 %v5242, %v5242
        %v5365 = vpack.c.bf16 %v5299, %v5299
        %v5366 = vunpack.c.l.bf16 %v5364
        %v5367 = vunpack.c.l.bf16 %v5365
        %v5368 = vmul.f32 %v5366, %v5367
        %vm5369 = vcmask 57344
        %v5370 = vsel %vm5369, %v5368, 0.0
        %5371 = vadd.xlane.f32.xlu0 %v5370
        %v5372 = vpop.xlane.xlu0 %5371
        %v5373 = vsub.f32 %v5372, %v5372
        %v5374 = vmul.f32 %v5373, 1.442695
        %v5375 = vpow.pop %v5374
        %v5376 = vadd.f32 %v5375, 0.0
        %v5377 = vrcp.pop %v5376
        %v5378 = vmul.f32 %v5375, %v5377
        %v5379 = vpack.c.bf16 %v5378, %v5378
        %v5380 = vpack.c.bf16 %v5359, %v5359
        %vm5381 = vcmask 7168
        %v5383 = vsel %vm5381, %v5379, 0
        %vm5385 = vcmask 1040384
        %v5386 = vsel 0, 4294967295, 65535
        %v5387 = vsel %vm5385, %v5386, 0
        %v5389 = vand.u32 %v5380, %v5387
        %5391 = vmatprep.subr.bf16.mxu0 0
        %5392 = vmatpush1.bf16.msra.mxu0 %v5389
        %5393 = vmatprep.subr.bf16.mxu0 0
        %5394 = vmatpush1.bf16.msra.mxu0 0
        %5395 = vmatprep.subr.bf16.mxu0 0
        %5396 = vmatpush1.bf16.msra.mxu0 0
        %5397 = vmatprep.subr.bf16.mxu0 0
        %5398 = vmatpush1.bf16.msra.mxu0 0
        %5399 = vmatprep.subr.bf16.mxu0 0
        %5400 = vmatpush1.bf16.msra.mxu0 0
        %5401 = vmatprep.subr.bf16.mxu0 0
        %5402 = vmatpush1.bf16.msra.mxu0 0
        %5403 = vmatprep.subr.bf16.mxu0 0
        %5404 = vmatpush1.bf16.msra.mxu0 0
        %5405 = vmatprep.subr.bf16.mxu0 0
        %5406 = vmatpush1.bf16.msra.mxu0 0
        %5407 = vmatprep.subr.bf16.mxu0 0
        %5408 = vmatpush1.bf16.msra.mxu0 0
        %5409 = vmatprep.subr.bf16.mxu0 0
        %5410 = vmatpush1.bf16.msra.mxu0 0
        %5411 = vmatprep.subr.bf16.mxu0 0
        %5412 = vmatpush1.bf16.msra.mxu0 0
        %5413 = vmatprep.subr.bf16.mxu0 0
        %5414 = vmatpush1.bf16.msra.mxu0 0
        %5415 = vmatprep.subr.bf16.mxu0 0
        %5416 = vmatpush1.bf16.msra.mxu0 0
        %5417 = vmatprep.subr.bf16.mxu0 0
        %5418 = vmatpush1.bf16.msra.mxu0 0
        %5419 = vmatprep.subr.bf16.mxu0 0
        %5420 = vmatpush1.bf16.msra.mxu0 0
        %5421 = vmatprep.subr.bf16.mxu0 0
        %5422 = vmatpush1.bf16.msra.mxu0 0
        %5423 = vmatprep.mubr.bf16.mxu0 0
        %5424 = vmatmul.mubr.bf16.gmra.mrb[0].mxu0 %v5383
        %v5425 = vpop.f32.mrb[0].mxu0
        %v5426 = vadd.f32 0.0, %v5425
        %v5427 = vpop.f32.mrb[0].mxu0
        %v5428 = vpop.f32.mrb[0].mxu0
        %v5429 = vpop.f32.mrb[0].mxu0
        %5430 = vdwg.mxu0
        %v5431 = vpack.c.bf16 %v5426, %v5426
        %v5432 = vld [vmem:[%s55] sm:$0xf]
        %s5433 = scalar_lea.vmem %s43, 16
        %v5434 = vld [vmem:[%s5433] sm:$0xf]
        %v5435 = vld [vmem:[%s5433 + $0x4] sm:$0xf]
        %v5436 = vld [vmem:[%s5433 + $0x8] sm:$0xf]
        %v5437 = vld [vmem:[%s5433 + $0xc] sm:$0xf]
        %s5438 = scalar_lea.vmem %s45, 1
        %v5439 = vld [vmem:[%s5438] sm:$0x1]
        %v5444 = vunpack.c.l.b16 %v5434
        %v5445 = vunpack.c.l.b16 %v5435
        %v5446 = vunpack.c.l.b16 %v5436
        %v5447 = vunpack.c.l.b16 %v5437
        %v5448 = vpack.c.b16 %v5445, %v5444
        %v5449 = vpack.c.b16 %v5447, %v5446
        %5452 = vmatprep.subr.bf16.mxu0 0
        %5453 = vmatpush1.bf16.msra.mxu0 %v5448
        %5454 = vmatprep.subr.bf16.mxu0 0
        %5455 = vmatpush1.bf16.msra.mxu0 %v5449
        %5456 = vmatprep.subr.bf16.mxu0 0
        %5457 = vmatpush1.bf16.msra.mxu0 0
        %5458 = vmatprep.subr.bf16.mxu0 0
        %5459 = vmatpush1.bf16.msra.mxu0 0
        %5460 = vmatprep.subr.bf16.mxu0 0
        %5461 = vmatpush1.bf16.msra.mxu0 0
        %5462 = vmatprep.subr.bf16.mxu0 0
        %5463 = vmatpush1.bf16.msra.mxu0 0
        %5464 = vmatprep.subr.bf16.mxu0 0
        %5465 = vmatpush1.bf16.msra.mxu0 0
        %5466 = vmatprep.subr.bf16.mxu0 0
        %5467 = vmatpush1.bf16.msra.mxu0 0
        %5468 = vmatprep.subr.bf16.mxu0 0
        %5469 = vmatpush1.bf16.msra.mxu0 0
        %5470 = vmatprep.subr.bf16.mxu0 0
        %5471 = vmatpush1.bf16.msra.mxu0 0
        %5472 = vmatprep.subr.bf16.mxu0 0
        %5473 = vmatpush1.bf16.msra.mxu0 0
        %5474 = vmatprep.subr.bf16.mxu0 0
        %5475 = vmatpush1.bf16.msra.mxu0 0
        %5476 = vmatprep.subr.bf16.mxu0 0
        %5477 = vmatpush1.bf16.msra.mxu0 0
        %5478 = vmatprep.subr.bf16.mxu0 0
        %5479 = vmatpush1.bf16.msra.mxu0 0
        %5480 = vmatprep.subr.bf16.mxu0 0
        %5481 = vmatpush1.bf16.msra.mxu0 0
        %5482 = vmatprep.subr.bf16.mxu0 0
        %5483 = vmatpush1.bf16.msra.mxu0 0
        %5484 = vmatprep.mubr.bf16.mxu0 0
        %5485 = vmatmul.mubr.bf16.gmra.mrb[0].mxu0 %v5205
        %v5486 = vpop.f32.mrb[0].mxu0
        %v5487 = vadd.f32 %v5439, %v5486
        %v5488 = vpop.f32.mrb[0].mxu0
        %v5489 = vpop.f32.mrb[0].mxu0
        %v5490 = vpop.f32.mrb[0].mxu0
        %5491 = vdwg.mxu0
        %s5492 = scalar_lea.vmem %s47, 16
        %v5493 = vld [vmem:[%s5492] sm:$0xf]
        %v5494 = vld [vmem:[%s5492 + $0x4] sm:$0xf]
        %v5495 = vld [vmem:[%s5492 + $0x8] sm:$0xf]
        %v5496 = vld [vmem:[%s5492 + $0xc] sm:$0xf]
        %s5497 = scalar_lea.vmem %s49, 1
        %v5498 = vld [vmem:[%s5497] sm:$0x1]
        %v5503 = vunpack.c.l.b16 %v5493
        %v5504 = vunpack.c.l.b16 %v5494
        %v5505 = vunpack.c.l.b16 %v5495
        %v5506 = vunpack.c.l.b16 %v5496
        %v5507 = vpack.c.b16 %v5504, %v5503
        %v5508 = vpack.c.b16 %v5506, %v5505
        %5511 = vmatprep.subr.bf16.mxu0 0
        %5512 = vmatpush1.bf16.msra.mxu0 %v5507
        %5513 = vmatprep.subr.bf16.mxu0 0
        %5514 = vmatpush1.bf16.msra.mxu0 %v5508
        %5515 = vmatprep.subr.bf16.mxu0 0
        %5516 = vmatpush1.bf16.msra.mxu0 0
        %5517 = vmatprep.subr.bf16.mxu0 0
        %5518 = vmatpush1.bf16.msra.mxu0 0
        %5519 = vmatprep.subr.bf16.mxu0 0
        %5520 = vmatpush1.bf16.msra.mxu0 0
        %5521 = vmatprep.subr.bf16.mxu0 0
        %5522 = vmatpush1.bf16.msra.mxu0 0
        %5523 = vmatprep.subr.bf16.mxu0 0
        %5524 = vmatpush1.bf16.msra.mxu0 0
        %5525 = vmatprep.subr.bf16.mxu0 0
        %5526 = vmatpush1.bf16.msra.mxu0 0
        %5527 = vmatprep.subr.bf16.mxu0 0
        %5528 = vmatpush1.bf16.msra.mxu0 0
        %5529 = vmatprep.subr.bf16.mxu0 0
        %5530 = vmatpush1.bf16.msra.mxu0 0
        %5531 = vmatprep.subr.bf16.mxu0 0
        %5532 = vmatpush1.bf16.msra.mxu0 0
        %5533 = vmatprep.subr.bf16.mxu0 0
        %5534 = vmatpush1.bf16.msra.mxu0 0
        %5535 = vmatprep.subr.bf16.mxu0 0
        %5536 = vmatpush1.bf16.msra.mxu0 0
        %5537 = vmatprep.subr.bf16.mxu0 0
        %5538 = vmatpush1.bf16.msra.mxu0 0
        %5539 = vmatprep.subr.bf16.mxu0 0
        %5540 = vmatpush1.bf16.msra.mxu0 0
        %5541 = vmatprep.subr.bf16.mxu0 0
        %5542 = vmatpush1.bf16.msra.mxu0 0
        %5543 = vmatprep.mubr.bf16.mxu0 0
        %5544 = vmatmul.mubr.bf16.gmra.mrb[0].mxu0 %v5205
        %v5545 = vpop.f32.mrb[0].mxu0
        %v5546 = vadd.f32 %v5498, %v5545
        %v5547 = vpop.f32.mrb[0].mxu0
        %v5548 = vpop.f32.mrb[0].mxu0
        %v5549 = vpop.f32.mrb[0].mxu0
        %5550 = vdwg.mxu0
        %s5551 = scalar_lea.vmem %s51, 16
        %v5552 = vld [vmem:[%s5551] sm:$0xf]
        %v5553 = vld [vmem:[%s5551 + $0x4] sm:$0xf]
        %v5554 = vld [vmem:[%s5551 + $0x8] sm:$0xf]
        %v5555 = vld [vmem:[%s5551 + $0xc] sm:$0xf]
        %s5556 = scalar_lea.vmem %s53, 1
        %v5557 = vld [vmem:[%s5556] sm:$0x1]
        %v5562 = vunpack.c.l.b16 %v5552
        %v5563 = vunpack.c.l.b16 %v5553
        %v5564 = vunpack.c.l.b16 %v5554
        %v5565 = vunpack.c.l.b16 %v5555
        %v5566 = vpack.c.b16 %v5563, %v5562
        %v5567 = vpack.c.b16 %v5565, %v5564
        %5570 = vmatprep.subr.bf16.mxu0 0
        %5571 = vmatpush1.bf16.msra.mxu0 %v5566
        %5572 = vmatprep.subr.bf16.mxu0 0
        %5573 = vmatpush1.bf16.msra.mxu0 %v5567
        %5574 = vmatprep.subr.bf16.mxu0 0
        %5575 = vmatpush1.bf16.msra.mxu0 0
        %5576 = vmatprep.subr.bf16.mxu0 0
        %5577 = vmatpush1.bf16.msra.mxu0 0
        %5578 = vmatprep.subr.bf16.mxu0 0
        %5579 = vmatpush1.bf16.msra.mxu0 0
        %5580 = vmatprep.subr.bf16.mxu0 0
        %5581 = vmatpush1.bf16.msra.mxu0 0
        %5582 = vmatprep.subr.bf16.mxu0 0
        %5583 = vmatpush1.bf16.msra.mxu0 0
        %5584 = vmatprep.subr.bf16.mxu0 0
        %5585 = vmatpush1.bf16.msra.mxu0 0
        %5586 = vmatprep.subr.bf16.mxu0 0
        %5587 = vmatpush1.bf16.msra.mxu0 0
        %5588 = vmatprep.subr.bf16.mxu0 0
        %5589 = vmatpush1.bf16.msra.mxu0 0
        %5590 = vmatprep.subr.bf16.mxu0 0
        %5591 = vmatpush1.bf16.msra.mxu0 0
        %5592 = vmatprep.subr.bf16.mxu0 0
        %5593 = vmatpush1.bf16.msra.mxu0 0
        %5594 = vmatprep.subr.bf16.mxu0 0
        %5595 = vmatpush1.bf16.msra.mxu0 0
        %5596 = vmatprep.subr.bf16.mxu0 0
        %5597 = vmatpush1.bf16.msra.mxu0 0
        %5598 = vmatprep.subr.bf16.mxu0 0
        %5599 = vmatpush1.bf16.msra.mxu0 0
        %5600 = vmatprep.subr.bf16.mxu0 0
        %5601 = vmatpush1.bf16.msra.mxu0 0
        %5602 = vmatprep.mubr.bf16.mxu0 0
        %5603 = vmatmul.mubr.bf16.gmra.mrb[0].mxu0 %v5322
        %v5604 = vpop.f32.mrb[0].mxu0
        %v5605 = vadd.f32 %v5557, %v5604
        %v5606 = vpop.f32.mrb[0].mxu0
        %v5607 = vpop.f32.mrb[0].mxu0
        %v5608 = vpop.f32.mrb[0].mxu0
        %5609 = vdwg.mxu0
        %v5610 = vpack.c.bf16 %v5487, %v5487
        %v5611 = vpack.c.bf16 %v5546, %v5546
        %v5612 = vunpack.c.l.bf16 %v5610
        %v5613 = vunpack.c.l.bf16 %v5611
        %v5614 = vmul.f32 %v5612, %v5613
        %v5615 = vsel %vm5369, %v5614, 0.0
        %5616 = vadd.xlane.f32.xlu0 %v5615
        %v5617 = vpop.xlane.xlu0 %5616
        %v5618 = vsub.f32 %v5617, %v5617
        %v5619 = vmul.f32 %v5618, 1.442695
        %v5620 = vpow.pop %v5619
        %v5621 = vadd.f32 %v5620, 0.0
        %v5622 = vrcp.pop %v5621
        %v5623 = vmul.f32 %v5620, %v5622
        %v5624 = vpack.c.bf16 %v5623, %v5623
        %v5625 = vpack.c.bf16 %v5605, %v5605
        %v5627 = vsel %vm5381, %v5624, 0
        %v5630 = vand.u32 %v5625, %v5387
        %5632 = vmatprep.subr.bf16.mxu0 0
        %5633 = vmatpush1.bf16.msra.mxu0 %v5630
        %5634 = vmatprep.subr.bf16.mxu0 0
        %5635 = vmatpush1.bf16.msra.mxu0 0
        %5636 = vmatprep.subr.bf16.mxu0 0
        %5637 = vmatpush1.bf16.msra.mxu0 0
        %5638 = vmatprep.subr.bf16.mxu0 0
        %5639 = vmatpush1.bf16.msra.mxu0 0
        %5640 = vmatprep.subr.bf16.mxu0 0
        %5641 = vmatpush1.bf16.msra.mxu0 0
        %5642 = vmatprep.subr.bf16.mxu0 0
        %5643 = vmatpush1.bf16.msra.mxu0 0
        %5644 = vmatprep.subr.bf16.mxu0 0
        %5645 = vmatpush1.bf16.msra.mxu0 0
        %5646 = vmatprep.subr.bf16.mxu0 0
        %5647 = vmatpush1.bf16.msra.mxu0 0
        %5648 = vmatprep.subr.bf16.mxu0 0
        %5649 = vmatpush1.bf16.msra.mxu0 0
        %5650 = vmatprep.subr.bf16.mxu0 0
        %5651 = vmatpush1.bf16.msra.mxu0 0
        %5652 = vmatprep.subr.bf16.mxu0 0
        %5653 = vmatpush1.bf16.msra.mxu0 0
        %5654 = vmatprep.subr.bf16.mxu0 0
        %5655 = vmatpush1.bf16.msra.mxu0 0
        %5656 = vmatprep.subr.bf16.mxu0 0
        %5657 = vmatpush1.bf16.msra.mxu0 0
        %5658 = vmatprep.subr.bf16.mxu0 0
        %5659 = vmatpush1.bf16.msra.mxu0 0
        %5660 = vmatprep.subr.bf16.mxu0 0
        %5661 = vmatpush1.bf16.msra.mxu0 0
        %5662 = vmatprep.subr.bf16.mxu0 0
        %5663 = vmatpush1.bf16.msra.mxu0 0
        %5664 = vmatprep.mubr.bf16.mxu0 0
        %5665 = vmatmul.mubr.bf16.gmra.mrb[0].mxu0 %v5627
        %v5666 = vpop.f32.mrb[0].mxu0
        %v5667 = vadd.f32 0.0, %v5666
        %v5668 = vpop.f32.mrb[0].mxu0
        %v5669 = vpop.f32.mrb[0].mxu0
        %v5670 = vpop.f32.mrb[0].mxu0
        %5671 = vdwg.mxu0
        %v5672 = vpack.c.bf16 %v5667, %v5667
        %s5673 = scalar_lea.vmem %s55, 4
        %v5674 = vld [vmem:[%s5673] sm:$0xf]
        %v5676 = vsel %vm1997, %v5672, 0
        %v5679 = vsel %vm2953, %v5674, 0
        %5681 = vmatprep.subr.bf16.mxu0 0
        %5682 = vmatpush1.bf16.msra.mxu0 %v5679
        %5683 = vmatprep.subr.bf16.mxu0 0
        %5684 = vmatpush1.bf16.msra.mxu0 0
        %5685 = vmatprep.subr.bf16.mxu0 0
        %5686 = vmatpush1.bf16.msra.mxu0 0
        %5687 = vmatprep.subr.bf16.mxu0 0
        %5688 = vmatpush1.bf16.msra.mxu0 0
        %5689 = vmatprep.subr.bf16.mxu0 0
        %5690 = vmatpush1.bf16.msra.mxu0 0
        %5691 = vmatprep.subr.bf16.mxu0 0
        %5692 = vmatpush1.bf16.msra.mxu0 0
        %5693 = vmatprep.subr.bf16.mxu0 0
        %5694 = vmatpush1.bf16.msra.mxu0 0
        %5695 = vmatprep.subr.bf16.mxu0 0
        %5696 = vmatpush1.bf16.msra.mxu0 0
        %5697 = vmatprep.subr.bf16.mxu0 0
        %5698 = vmatpush1.bf16.msra.mxu0 0
        %5699 = vmatprep.subr.bf16.mxu0 0
        %5700 = vmatpush1.bf16.msra.mxu0 0
        %5701 = vmatprep.subr.bf16.mxu0 0
        %5702 = vmatpush1.bf16.msra.mxu0 0
        %5703 = vmatprep.subr.bf16.mxu0 0
        %5704 = vmatpush1.bf16.msra.mxu0 0
        %5705 = vmatprep.subr.bf16.mxu0 0
        %5706 = vmatpush1.bf16.msra.mxu0 0
        %5707 = vmatprep.subr.bf16.mxu0 0
        %5708 = vmatpush1.bf16.msra.mxu0 0
        %5709 = vmatprep.subr.bf16.mxu0 0
        %5710 = vmatpush1.bf16.msra.mxu0 0
        %5711 = vmatprep.subr.bf16.mxu0 0
        %5712 = vmatpush1.bf16.msra.mxu0 0
        %5713 = vmatprep.mubr.bf16.mxu0 0
        %5714 = vmatmul.mubr.bf16.gmra.mrb[0].mxu0 %v5676
        %v5715 = vpop.f32.mrb[0].mxu0
        %v5716 = vadd.f32 0.0, %v5715
        %v5717 = vpop.f32.mrb[0].mxu0
        %v5718 = vpop.f32.mrb[0].mxu0
        %v5719 = vpop.f32.mrb[0].mxu0
        %5720 = vdwg.mxu0
        %v5722 = vsel %vm1997, %v5431, 0
        %v5725 = vsel %vm2953, %v5432, 0
        %5727 = vmatprep.subr.bf16.mxu0 0
        %5728 = vmatpush1.bf16.msra.mxu0 %v5725
        %5729 = vmatprep.subr.bf16.mxu0 0
        %5730 = vmatpush1.bf16.msra.mxu0 0
        %5731 = vmatprep.subr.bf16.mxu0 0
        %5732 = vmatpush1.bf16.msra.mxu0 0
        %5733 = vmatprep.subr.bf16.mxu0 0
        %5734 = vmatpush1.bf16.msra.mxu0 0
        %5735 = vmatprep.subr.bf16.mxu0 0
        %5736 = vmatpush1.bf16.msra.mxu0 0
        %5737 = vmatprep.subr.bf16.mxu0 0
        %5738 = vmatpush1.bf16.msra.mxu0 0
        %5739 = vmatprep.subr.bf16.mxu0 0
        %5740 = vmatpush1.bf16.msra.mxu0 0
        %5741 = vmatprep.subr.bf16.mxu0 0
        %5742 = vmatpush1.bf16.msra.mxu0 0
        %5743 = vmatprep.subr.bf16.mxu0 0
        %5744 = vmatpush1.bf16.msra.mxu0 0
        %5745 = vmatprep.subr.bf16.mxu0 0
        %5746 = vmatpush1.bf16.msra.mxu0 0
        %5747 = vmatprep.subr.bf16.mxu0 0
        %5748 = vmatpush1.bf16.msra.mxu0 0
        %5749 = vmatprep.subr.bf16.mxu0 0
        %5750 = vmatpush1.bf16.msra.mxu0 0
        %5751 = vmatprep.subr.bf16.mxu0 0
        %5752 = vmatpush1.bf16.msra.mxu0 0
        %5753 = vmatprep.subr.bf16.mxu0 0
        %5754 = vmatpush1.bf16.msra.mxu0 0
        %5755 = vmatprep.subr.bf16.mxu0 0
        %5756 = vmatpush1.bf16.msra.mxu0 0
        %5757 = vmatprep.subr.bf16.mxu0 0
        %5758 = vmatpush1.bf16.msra.mxu0 0
        %5759 = vmatprep.mubr.bf16.mxu0 0
        %5760 = vmatmul.mubr.bf16.gmra.mrb[0].mxu0 %v5722
        %v5761 = vpop.f32.mrb[0].mxu0
        %v5762 = vadd.f32 %v5716, %v5761
        %v5763 = vpop.f32.mrb[0].mxu0
        %v5764 = vpop.f32.mrb[0].mxu0
        %v5765 = vpop.f32.mrb[0].mxu0
        %5766 = vdwg.mxu0
        %s5767 = scalar_lea.vmem %s43, 32
        %v5768 = vld [vmem:[%s5767] sm:$0xf]
        %v5769 = vld [vmem:[%s5767 + $0x4] sm:$0xf]
        %v5770 = vld [vmem:[%s5767 + $0x8] sm:$0xf]
        %v5771 = vld [vmem:[%s5767 + $0xc] sm:$0xf]
        %s5772 = scalar_lea.vmem %s45, 2
        %v5773 = vld [vmem:[%s5772] sm:$0x1]
        %v5778 = vunpack.c.l.b16 %v5768
        %v5779 = vunpack.c.l.b16 %v5769
        %v5780 = vunpack.c.l.b16 %v5770
        %v5781 = vunpack.c.l.b16 %v5771
        %v5782 = vpack.c.b16 %v5779, %v5778
        %v5783 = vpack.c.b16 %v5781, %v5780
        %5786 = vmatprep.subr.bf16.mxu0 0
        %5787 = vmatpush1.bf16.msra.mxu0 %v5782
        %5788 = vmatprep.subr.bf16.mxu0 0
        %5789 = vmatpush1.bf16.msra.mxu0 %v5783
        %5790 = vmatprep.subr.bf16.mxu0 0
        %5791 = vmatpush1.bf16.msra.mxu0 0
        %5792 = vmatprep.subr.bf16.mxu0 0
        %5793 = vmatpush1.bf16.msra.mxu0 0
        %5794 = vmatprep.subr.bf16.mxu0 0
        %5795 = vmatpush1.bf16.msra.mxu0 0
        %5796 = vmatprep.subr.bf16.mxu0 0
        %5797 = vmatpush1.bf16.msra.mxu0 0
        %5798 = vmatprep.subr.bf16.mxu0 0
        %5799 = vmatpush1.bf16.msra.mxu0 0
        %5800 = vmatprep.subr.bf16.mxu0 0
        %5801 = vmatpush1.bf16.msra.mxu0 0
        %5802 = vmatprep.subr.bf16.mxu0 0
        %5803 = vmatpush1.bf16.msra.mxu0 0
        %5804 = vmatprep.subr.bf16.mxu0 0
        %5805 = vmatpush1.bf16.msra.mxu0 0
        %5806 = vmatprep.subr.bf16.mxu0 0
        %5807 = vmatpush1.bf16.msra.mxu0 0
        %5808 = vmatprep.subr.bf16.mxu0 0
        %5809 = vmatpush1.bf16.msra.mxu0 0
        %5810 = vmatprep.subr.bf16.mxu0 0
        %5811 = vmatpush1.bf16.msra.mxu0 0
        %5812 = vmatprep.subr.bf16.mxu0 0
        %5813 = vmatpush1.bf16.msra.mxu0 0
        %5814 = vmatprep.subr.bf16.mxu0 0
        %5815 = vmatpush1.bf16.msra.mxu0 0
        %5816 = vmatprep.subr.bf16.mxu0 0
        %5817 = vmatpush1.bf16.msra.mxu0 0
        %5818 = vmatprep.mubr.bf16.mxu0 0
        %5819 = vmatmul.mubr.bf16.gmra.mrb[0].mxu0 %v5205
        %v5820 = vpop.f32.mrb[0].mxu0
        %v5821 = vadd.f32 %v5773, %v5820
        %v5822 = vpop.f32.mrb[0].mxu0
        %v5823 = vpop.f32.mrb[0].mxu0
        %v5824 = vpop.f32.mrb[0].mxu0
        %5825 = vdwg.mxu0
        %s5826 = scalar_lea.vmem %s47, 32
        %v5827 = vld [vmem:[%s5826] sm:$0xf]
        %v5828 = vld [vmem:[%s5826 + $0x4] sm:$0xf]
        %v5829 = vld [vmem:[%s5826 + $0x8] sm:$0xf]
        %v5830 = vld [vmem:[%s5826 + $0xc] sm:$0xf]
        %s5831 = scalar_lea.vmem %s49, 2
        %v5832 = vld [vmem:[%s5831] sm:$0x1]
        %v5837 = vunpack.c.l.b16 %v5827
        %v5838 = vunpack.c.l.b16 %v5828
        %v5839 = vunpack.c.l.b16 %v5829
        %v5840 = vunpack.c.l.b16 %v5830
        %v5841 = vpack.c.b16 %v5838, %v5837
        %v5842 = vpack.c.b16 %v5840, %v5839
        %5845 = vmatprep.subr.bf16.mxu0 0
        %5846 = vmatpush1.bf16.msra.mxu0 %v5841
        %5847 = vmatprep.subr.bf16.mxu0 0
        %5848 = vmatpush1.bf16.msra.mxu0 %v5842
        %5849 = vmatprep.subr.bf16.mxu0 0
        %5850 = vmatpush1.bf16.msra.mxu0 0
        %5851 = vmatprep.subr.bf16.mxu0 0
        %5852 = vmatpush1.bf16.msra.mxu0 0
        %5853 = vmatprep.subr.bf16.mxu0 0
        %5854 = vmatpush1.bf16.msra.mxu0 0
        %5855 = vmatprep.subr.bf16.mxu0 0
        %5856 = vmatpush1.bf16.msra.mxu0 0
        %5857 = vmatprep.subr.bf16.mxu0 0
        %5858 = vmatpush1.bf16.msra.mxu0 0
        %5859 = vmatprep.subr.bf16.mxu0 0
        %5860 = vmatpush1.bf16.msra.mxu0 0
        %5861 = vmatprep.subr.bf16.mxu0 0
        %5862 = vmatpush1.bf16.msra.mxu0 0
        %5863 = vmatprep.subr.bf16.mxu0 0
        %5864 = vmatpush1.bf16.msra.mxu0 0
        %5865 = vmatprep.subr.bf16.mxu0 0
        %5866 = vmatpush1.bf16.msra.mxu0 0
        %5867 = vmatprep.subr.bf16.mxu0 0
        %5868 = vmatpush1.bf16.msra.mxu0 0
        %5869 = vmatprep.subr.bf16.mxu0 0
        %5870 = vmatpush1.bf16.msra.mxu0 0
        %5871 = vmatprep.subr.bf16.mxu0 0
        %5872 = vmatpush1.bf16.msra.mxu0 0
        %5873 = vmatprep.subr.bf16.mxu0 0
        %5874 = vmatpush1.bf16.msra.mxu0 0
        %5875 = vmatprep.subr.bf16.mxu0 0
        %5876 = vmatpush1.bf16.msra.mxu0 0
        %5877 = vmatprep.mubr.bf16.mxu0 0
        %5878 = vmatmul.mubr.bf16.gmra.mrb[0].mxu0 %v5205
        %v5879 = vpop.f32.mrb[0].mxu0
        %v5880 = vadd.f32 %v5832, %v5879
        %v5881 = vpop.f32.mrb[0].mxu0
        %v5882 = vpop.f32.mrb[0].mxu0
        %v5883 = vpop.f32.mrb[0].mxu0
        %5884 = vdwg.mxu0
        %s5885 = scalar_lea.vmem %s51, 32
        %v5886 = vld [vmem:[%s5885] sm:$0xf]
        %v5887 = vld [vmem:[%s5885 + $0x4] sm:$0xf]
        %v5888 = vld [vmem:[%s5885 + $0x8] sm:$0xf]
        %v5889 = vld [vmem:[%s5885 + $0xc] sm:$0xf]
        %s5890 = scalar_lea.vmem %s53, 2
        %v5891 = vld [vmem:[%s5890] sm:$0x1]
        %v5896 = vunpack.c.l.b16 %v5886
        %v5897 = vunpack.c.l.b16 %v5887
        %v5898 = vunpack.c.l.b16 %v5888
        %v5899 = vunpack.c.l.b16 %v5889
        %v5900 = vpack.c.b16 %v5897, %v5896
        %v5901 = vpack.c.b16 %v5899, %v5898
        %5904 = vmatprep.subr.bf16.mxu0 0
        %5905 = vmatpush1.bf16.msra.mxu0 %v5900
        %5906 = vmatprep.subr.bf16.mxu0 0
        %5907 = vmatpush1.bf16.msra.mxu0 %v5901
        %5908 = vmatprep.subr.bf16.mxu0 0
        %5909 = vmatpush1.bf16.msra.mxu0 0
        %5910 = vmatprep.subr.bf16.mxu0 0
        %5911 = vmatpush1.bf16.msra.mxu0 0
        %5912 = vmatprep.subr.bf16.mxu0 0
        %5913 = vmatpush1.bf16.msra.mxu0 0
        %5914 = vmatprep.subr.bf16.mxu0 0
        %5915 = vmatpush1.bf16.msra.mxu0 0
        %5916 = vmatprep.subr.bf16.mxu0 0
        %5917 = vmatpush1.bf16.msra.mxu0 0
        %5918 = vmatprep.subr.bf16.mxu0 0
        %5919 = vmatpush1.bf16.msra.mxu0 0
        %5920 = vmatprep.subr.bf16.mxu0 0
        %5921 = vmatpush1.bf16.msra.mxu0 0
        %5922 = vmatprep.subr.bf16.mxu0 0
        %5923 = vmatpush1.bf16.msra.mxu0 0
        %5924 = vmatprep.subr.bf16.mxu0 0
        %5925 = vmatpush1.bf16.msra.mxu0 0
        %5926 = vmatprep.subr.bf16.mxu0 0
        %5927 = vmatpush1.bf16.msra.mxu0 0
        %5928 = vmatprep.subr.bf16.mxu0 0
        %5929 = vmatpush1.bf16.msra.mxu0 0
        %5930 = vmatprep.subr.bf16.mxu0 0
        %5931 = vmatpush1.bf16.msra.mxu0 0
        %5932 = vmatprep.subr.bf16.mxu0 0
        %5933 = vmatpush1.bf16.msra.mxu0 0
        %5934 = vmatprep.subr.bf16.mxu0 0
        %5935 = vmatpush1.bf16.msra.mxu0 0
        %5936 = vmatprep.mubr.bf16.mxu0 0
        %5937 = vmatmul.mubr.bf16.gmra.mrb[0].mxu0 %v5322
        %v5938 = vpop.f32.mrb[0].mxu0
        %v5939 = vadd.f32 %v5891, %v5938
        %v5940 = vpop.f32.mrb[0].mxu0
        %v5941 = vpop.f32.mrb[0].mxu0
        %v5942 = vpop.f32.mrb[0].mxu0
        %5943 = vdwg.mxu0
        %v5944 = vpack.c.bf16 %v5821, %v5821
        %v5945 = vpack.c.bf16 %v5880, %v5880
        %v5946 = vunpack.c.l.bf16 %v5944
        %v5947 = vunpack.c.l.bf16 %v5945
        %v5948 = vmul.f32 %v5946, %v5947
        %v5949 = vsel %vm5369, %v5948, 0.0
        %5950 = vadd.xlane.f32.xlu0 %v5949
        %v5951 = vpop.xlane.xlu0 %5950
        %v5952 = vsub.f32 %v5951, %v5951
        %v5953 = vmul.f32 %v5952, 1.442695
        %v5954 = vpow.pop %v5953
        %v5955 = vadd.f32 %v5954, 0.0
        %v5956 = vrcp.pop %v5955
        %v5957 = vmul.f32 %v5954, %v5956
        %v5958 = vpack.c.bf16 %v5957, %v5957
        %v5959 = vpack.c.bf16 %v5939, %v5939
        %v5961 = vsel %vm5381, %v5958, 0
        %v5964 = vand.u32 %v5959, %v5387
        %5966 = vmatprep.subr.bf16.mxu0 0
        %5967 = vmatpush1.bf16.msra.mxu0 %v5964
        %5968 = vmatprep.subr.bf16.mxu0 0
        %5969 = vmatpush1.bf16.msra.mxu0 0
        %5970 = vmatprep.subr.bf16.mxu0 0
        %5971 = vmatpush1.bf16.msra.mxu0 0
        %5972 = vmatprep.subr.bf16.mxu0 0
        %5973 = vmatpush1.bf16.msra.mxu0 0
        %5974 = vmatprep.subr.bf16.mxu0 0
        %5975 = vmatpush1.bf16.msra.mxu0 0
        %5976 = vmatprep.subr.bf16.mxu0 0
        %5977 = vmatpush1.bf16.msra.mxu0 0
        %5978 = vmatprep.subr.bf16.mxu0 0
        %5979 = vmatpush1.bf16.msra.mxu0 0
        %5980 = vmatprep.subr.bf16.mxu0 0
        %5981 = vmatpush1.bf16.msra.mxu0 0
        %5982 = vmatprep.subr.bf16.mxu0 0
        %5983 = vmatpush1.bf16.msra.mxu0 0
        %5984 = vmatprep.subr.bf16.mxu0 0
        %5985 = vmatpush1.bf16.msra.mxu0 0
        %5986 = vmatprep.subr.bf16.mxu0 0
        %5987 = vmatpush1.bf16.msra.mxu0 0
        %5988 = vmatprep.subr.bf16.mxu0 0
        %5989 = vmatpush1.bf16.msra.mxu0 0
        %5990 = vmatprep.subr.bf16.mxu0 0
        %5991 = vmatpush1.bf16.msra.mxu0 0
        %5992 = vmatprep.subr.bf16.mxu0 0
        %5993 = vmatpush1.bf16.msra.mxu0 0
        %5994 = vmatprep.subr.bf16.mxu0 0
        %5995 = vmatpush1.bf16.msra.mxu0 0
        %5996 = vmatprep.subr.bf16.mxu0 0
        %5997 = vmatpush1.bf16.msra.mxu0 0
        %5998 = vmatprep.mubr.bf16.mxu0 0
        %5999 = vmatmul.mubr.bf16.gmra.mrb[0].mxu0 %v5961
        %v6000 = vpop.f32.mrb[0].mxu0
        %v6001 = vadd.f32 0.0, %v6000
        %v6002 = vpop.f32.mrb[0].mxu0
        %v6003 = vpop.f32.mrb[0].mxu0
        %v6004 = vpop.f32.mrb[0].mxu0
        %6005 = vdwg.mxu0
        %v6006 = vpack.c.bf16 %v6001, %v6001
        %s6007 = scalar_lea.vmem %s55, 8
        %v6008 = vld [vmem:[%s6007] sm:$0xf]
        %v6010 = vsel %vm1997, %v6006, 0
        %v6013 = vsel %vm2953, %v6008, 0
        %6015 = vmatprep.subr.bf16.mxu0 0
        %6016 = vmatpush1.bf16.msra.mxu0 %v6013
        %6017 = vmatprep.subr.bf16.mxu0 0
        %6018 = vmatpush1.bf16.msra.mxu0 0
        %6019 = vmatprep.subr.bf16.mxu0 0
        %6020 = vmatpush1.bf16.msra.mxu0 0
        %6021 = vmatprep.subr.bf16.mxu0 0
        %6022 = vmatpush1.bf16.msra.mxu0 0
        %6023 = vmatprep.subr.bf16.mxu0 0
        %6024 = vmatpush1.bf16.msra.mxu0 0
        %6025 = vmatprep.subr.bf16.mxu0 0
        %6026 = vmatpush1.bf16.msra.mxu0 0
        %6027 = vmatprep.subr.bf16.mxu0 0
        %6028 = vmatpush1.bf16.msra.mxu0 0
        %6029 = vmatprep.subr.bf16.mxu0 0
        %6030 = vmatpush1.bf16.msra.mxu0 0
        %6031 = vmatprep.subr.bf16.mxu0 0
        %6032 = vmatpush1.bf16.msra.mxu0 0
        %6033 = vmatprep.subr.bf16.mxu0 0
        %6034 = vmatpush1.bf16.msra.mxu0 0
        %6035 = vmatprep.subr.bf16.mxu0 0
        %6036 = vmatpush1.bf16.msra.mxu0 0
        %6037 = vmatprep.subr.bf16.mxu0 0
        %6038 = vmatpush1.bf16.msra.mxu0 0
        %6039 = vmatprep.subr.bf16.mxu0 0
        %6040 = vmatpush1.bf16.msra.mxu0 0
        %6041 = vmatprep.subr.bf16.mxu0 0
        %6042 = vmatpush1.bf16.msra.mxu0 0
        %6043 = vmatprep.subr.bf16.mxu0 0
        %6044 = vmatpush1.bf16.msra.mxu0 0
        %6045 = vmatprep.subr.bf16.mxu0 0
        %6046 = vmatpush1.bf16.msra.mxu0 0
        %6047 = vmatprep.mubr.bf16.mxu0 0
        %6048 = vmatmul.mubr.bf16.gmra.mrb[0].mxu0 %v6010
        %v6049 = vpop.f32.mrb[0].mxu0
        %v6050 = vadd.f32 0.0, %v6049
        %v6051 = vpop.f32.mrb[0].mxu0
        %v6052 = vpop.f32.mrb[0].mxu0
        %v6053 = vpop.f32.mrb[0].mxu0
        %6054 = vdwg.mxu0
        %v6055 = vadd.f32 %v5762, %v6050
        %s6056 = scalar_lea.vmem %s43, 48
        %v6057 = vld [vmem:[%s6056] sm:$0xf]
        %v6058 = vld [vmem:[%s6056 + $0x4] sm:$0xf]
        %v6059 = vld [vmem:[%s6056 + $0x8] sm:$0xf]
        %v6060 = vld [vmem:[%s6056 + $0xc] sm:$0xf]
        %s6061 = scalar_lea.vmem %s45, 3
        %v6062 = vld [vmem:[%s6061] sm:$0x1]
        %v6067 = vunpack.c.l.b16 %v6057
        %v6068 = vunpack.c.l.b16 %v6058
        %v6069 = vunpack.c.l.b16 %v6059
        %v6070 = vunpack.c.l.b16 %v6060
        %v6071 = vpack.c.b16 %v6068, %v6067
        %v6072 = vpack.c.b16 %v6070, %v6069
        %6075 = vmatprep.subr.bf16.mxu0 0
        %6076 = vmatpush1.bf16.msra.mxu0 %v6071
        %6077 = vmatprep.subr.bf16.mxu0 0
        %6078 = vmatpush1.bf16.msra.mxu0 %v6072
        %6079 = vmatprep.subr.bf16.mxu0 0
        %6080 = vmatpush1.bf16.msra.mxu0 0
        %6081 = vmatprep.subr.bf16.mxu0 0
        %6082 = vmatpush1.bf16.msra.mxu0 0
        %6083 = vmatprep.subr.bf16.mxu0 0
        %6084 = vmatpush1.bf16.msra.mxu0 0
        %6085 = vmatprep.subr.bf16.mxu0 0
        %6086 = vmatpush1.bf16.msra.mxu0 0
        %6087 = vmatprep.subr.bf16.mxu0 0
        %6088 = vmatpush1.bf16.msra.mxu0 0
        %6089 = vmatprep.subr.bf16.mxu0 0
        %6090 = vmatpush1.bf16.msra.mxu0 0
        %6091 = vmatprep.subr.bf16.mxu0 0
        %6092 = vmatpush1.bf16.msra.mxu0 0
        %6093 = vmatprep.subr.bf16.mxu0 0
        %6094 = vmatpush1.bf16.msra.mxu0 0
        %6095 = vmatprep.subr.bf16.mxu0 0
        %6096 = vmatpush1.bf16.msra.mxu0 0
        %6097 = vmatprep.subr.bf16.mxu0 0
        %6098 = vmatpush1.bf16.msra.mxu0 0
        %6099 = vmatprep.subr.bf16.mxu0 0
        %6100 = vmatpush1.bf16.msra.mxu0 0
        %6101 = vmatprep.subr.bf16.mxu0 0
        %6102 = vmatpush1.bf16.msra.mxu0 0
        %6103 = vmatprep.subr.bf16.mxu0 0
        %6104 = vmatpush1.bf16.msra.mxu0 0
        %6105 = vmatprep.subr.bf16.mxu0 0
        %6106 = vmatpush1.bf16.msra.mxu0 0
        %6107 = vmatprep.mubr.bf16.mxu0 0
        %6108 = vmatmul.mubr.bf16.gmra.mrb[0].mxu0 %v5205
        %v6109 = vpop.f32.mrb[0].mxu0
        %v6110 = vadd.f32 %v6062, %v6109
        %v6111 = vpop.f32.mrb[0].mxu0
        %v6112 = vpop.f32.mrb[0].mxu0
        %v6113 = vpop.f32.mrb[0].mxu0
        %6114 = vdwg.mxu0
        %s6115 = scalar_lea.vmem %s47, 48
        %v6116 = vld [vmem:[%s6115] sm:$0xf]
        %v6117 = vld [vmem:[%s6115 + $0x4] sm:$0xf]
        %v6118 = vld [vmem:[%s6115 + $0x8] sm:$0xf]
        %v6119 = vld [vmem:[%s6115 + $0xc] sm:$0xf]
        %s6120 = scalar_lea.vmem %s49, 3
        %v6121 = vld [vmem:[%s6120] sm:$0x1]
        %v6126 = vunpack.c.l.b16 %v6116
        %v6127 = vunpack.c.l.b16 %v6117
        %v6128 = vunpack.c.l.b16 %v6118
        %v6129 = vunpack.c.l.b16 %v6119
        %v6130 = vpack.c.b16 %v6127, %v6126
        %v6131 = vpack.c.b16 %v6129, %v6128
        %6134 = vmatprep.subr.bf16.mxu0 0
        %6135 = vmatpush1.bf16.msra.mxu0 %v6130
        %6136 = vmatprep.subr.bf16.mxu0 0
        %6137 = vmatpush1.bf16.msra.mxu0 %v6131
        %6138 = vmatprep.subr.bf16.mxu0 0
        %6139 = vmatpush1.bf16.msra.mxu0 0
        %6140 = vmatprep.subr.bf16.mxu0 0
        %6141 = vmatpush1.bf16.msra.mxu0 0
        %6142 = vmatprep.subr.bf16.mxu0 0
        %6143 = vmatpush1.bf16.msra.mxu0 0
        %6144 = vmatprep.subr.bf16.mxu0 0
        %6145 = vmatpush1.bf16.msra.mxu0 0
        %6146 = vmatprep.subr.bf16.mxu0 0
        %6147 = vmatpush1.bf16.msra.mxu0 0
        %6148 = vmatprep.subr.bf16.mxu0 0
        %6149 = vmatpush1.bf16.msra.mxu0 0
        %6150 = vmatprep.subr.bf16.mxu0 0
        %6151 = vmatpush1.bf16.msra.mxu0 0
        %6152 = vmatprep.subr.bf16.mxu0 0
        %6153 = vmatpush1.bf16.msra.mxu0 0
        %6154 = vmatprep.subr.bf16.mxu0 0
        %6155 = vmatpush1.bf16.msra.mxu0 0
        %6156 = vmatprep.subr.bf16.mxu0 0
        %6157 = vmatpush1.bf16.msra.mxu0 0
        %6158 = vmatprep.subr.bf16.mxu0 0
        %6159 = vmatpush1.bf16.msra.mxu0 0
        %6160 = vmatprep.subr.bf16.mxu0 0
        %6161 = vmatpush1.bf16.msra.mxu0 0
        %6162 = vmatprep.subr.bf16.mxu0 0
        %6163 = vmatpush1.bf16.msra.mxu0 0
        %6164 = vmatprep.subr.bf16.mxu0 0
        %6165 = vmatpush1.bf16.msra.mxu0 0
        %6166 = vmatprep.mubr.bf16.mxu0 0
        %6167 = vmatmul.mubr.bf16.gmra.mrb[0].mxu0 %v5205
        %v6168 = vpop.f32.mrb[0].mxu0
        %v6169 = vadd.f32 %v6121, %v6168
        %v6170 = vpop.f32.mrb[0].mxu0
        %v6171 = vpop.f32.mrb[0].mxu0
        %v6172 = vpop.f32.mrb[0].mxu0
        %6173 = vdwg.mxu0
        %s6174 = scalar_lea.vmem %s51, 48
        %v6175 = vld [vmem:[%s6174] sm:$0xf]
        %v6176 = vld [vmem:[%s6174 + $0x4] sm:$0xf]
        %v6177 = vld [vmem:[%s6174 + $0x8] sm:$0xf]
        %v6178 = vld [vmem:[%s6174 + $0xc] sm:$0xf]
        %s6179 = scalar_lea.vmem %s53, 3
        %v6180 = vld [vmem:[%s6179] sm:$0x1]
        %v6185 = vunpack.c.l.b16 %v6175
        %v6186 = vunpack.c.l.b16 %v6176
        %v6187 = vunpack.c.l.b16 %v6177
        %v6188 = vunpack.c.l.b16 %v6178
        %v6189 = vpack.c.b16 %v6186, %v6185
        %v6190 = vpack.c.b16 %v6188, %v6187
        %6193 = vmatprep.subr.bf16.mxu0 0
        %6194 = vmatpush1.bf16.msra.mxu0 %v6189
        %6195 = vmatprep.subr.bf16.mxu0 0
        %6196 = vmatpush1.bf16.msra.mxu0 %v6190
        %6197 = vmatprep.subr.bf16.mxu0 0
        %6198 = vmatpush1.bf16.msra.mxu0 0
        %6199 = vmatprep.subr.bf16.mxu0 0
        %6200 = vmatpush1.bf16.msra.mxu0 0
        %6201 = vmatprep.subr.bf16.mxu0 0
        %6202 = vmatpush1.bf16.msra.mxu0 0
        %6203 = vmatprep.subr.bf16.mxu0 0
        %6204 = vmatpush1.bf16.msra.mxu0 0
        %6205 = vmatprep.subr.bf16.mxu0 0
        %6206 = vmatpush1.bf16.msra.mxu0 0
        %6207 = vmatprep.subr.bf16.mxu0 0
        %6208 = vmatpush1.bf16.msra.mxu0 0
        %6209 = vmatprep.subr.bf16.mxu0 0
        %6210 = vmatpush1.bf16.msra.mxu0 0
        %6211 = vmatprep.subr.bf16.mxu0 0
        %6212 = vmatpush1.bf16.msra.mxu0 0
        %6213 = vmatprep.subr.bf16.mxu0 0
        %6214 = vmatpush1.bf16.msra.mxu0 0
        %6215 = vmatprep.subr.bf16.mxu0 0
        %6216 = vmatpush1.bf16.msra.mxu0 0
        %6217 = vmatprep.subr.bf16.mxu0 0
        %6218 = vmatpush1.bf16.msra.mxu0 0
        %6219 = vmatprep.subr.bf16.mxu0 0
        %6220 = vmatpush1.bf16.msra.mxu0 0
        %6221 = vmatprep.subr.bf16.mxu0 0
        %6222 = vmatpush1.bf16.msra.mxu0 0
        %6223 = vmatprep.subr.bf16.mxu0 0
        %6224 = vmatpush1.bf16.msra.mxu0 0
        %6225 = vmatprep.mubr.bf16.mxu0 0
        %6226 = vmatmul.mubr.bf16.gmra.mrb[0].mxu0 %v5322
        %v6227 = vpop.f32.mrb[0].mxu0
        %v6228 = vadd.f32 %v6180, %v6227
        %v6229 = vpop.f32.mrb[0].mxu0
        %v6230 = vpop.f32.mrb[0].mxu0
        %v6231 = vpop.f32.mrb[0].mxu0
        %6232 = vdwg.mxu0
        %v6233 = vpack.c.bf16 %v6110, %v6110
        %v6234 = vpack.c.bf16 %v6169, %v6169
        %v6235 = vunpack.c.l.bf16 %v6233
        %v6236 = vunpack.c.l.bf16 %v6234
        %v6237 = vmul.f32 %v6235, %v6236
        %v6238 = vsel %vm5369, %v6237, 0.0
        %6239 = vadd.xlane.f32.xlu0 %v6238
        %v6240 = vpop.xlane.xlu0 %6239
        %v6241 = vsub.f32 %v6240, %v6240
        %v6242 = vmul.f32 %v6241, 1.442695
        %v6243 = vpow.pop %v6242
        %v6244 = vadd.f32 %v6243, 0.0
        %v6245 = vrcp.pop %v6244
        %v6246 = vmul.f32 %v6243, %v6245
        %v6247 = vpack.c.bf16 %v6246, %v6246
        %v6248 = vpack.c.bf16 %v6228, %v6228
        %v6250 = vsel %vm5381, %v6247, 0
        %v6253 = vand.u32 %v6248, %v5387
        %6255 = vmatprep.subr.bf16.mxu0 0
        %6256 = vmatpush1.bf16.msra.mxu0 %v6253
        %6257 = vmatprep.subr.bf16.mxu0 0
        %6258 = vmatpush1.bf16.msra.mxu0 0
        %6259 = vmatprep.subr.bf16.mxu0 0
        %6260 = vmatpush1.bf16.msra.mxu0 0
        %6261 = vmatprep.subr.bf16.mxu0 0
        %6262 = vmatpush1.bf16.msra.mxu0 0
        %6263 = vmatprep.subr.bf16.mxu0 0
        %6264 = vmatpush1.bf16.msra.mxu0 0
        %6265 = vmatprep.subr.bf16.mxu0 0
        %6266 = vmatpush1.bf16.msra.mxu0 0
        %6267 = vmatprep.subr.bf16.mxu0 0
        %6268 = vmatpush1.bf16.msra.mxu0 0
        %6269 = vmatprep.subr.bf16.mxu0 0
        %6270 = vmatpush1.bf16.msra.mxu0 0
        %6271 = vmatprep.subr.bf16.mxu0 0
        %6272 = vmatpush1.bf16.msra.mxu0 0
        %6273 = vmatprep.subr.bf16.mxu0 0
        %6274 = vmatpush1.bf16.msra.mxu0 0
        %6275 = vmatprep.subr.bf16.mxu0 0
        %6276 = vmatpush1.bf16.msra.mxu0 0
        %6277 = vmatprep.subr.bf16.mxu0 0
        %6278 = vmatpush1.bf16.msra.mxu0 0
        %6279 = vmatprep.subr.bf16.mxu0 0
        %6280 = vmatpush1.bf16.msra.mxu0 0
        %6281 = vmatprep.subr.bf16.mxu0 0
        %6282 = vmatpush1.bf16.msra.mxu0 0
        %6283 = vmatprep.subr.bf16.mxu0 0
        %6284 = vmatpush1.bf16.msra.mxu0 0
        %6285 = vmatprep.subr.bf16.mxu0 0
        %6286 = vmatpush1.bf16.msra.mxu0 0
        %6287 = vmatprep.mubr.bf16.mxu0 0
        %6288 = vmatmul.mubr.bf16.gmra.mrb[0].mxu0 %v6250
        %v6289 = vpop.f32.mrb[0].mxu0
        %v6290 = vadd.f32 0.0, %v6289
        %v6291 = vpop.f32.mrb[0].mxu0
        %v6292 = vpop.f32.mrb[0].mxu0
        %v6293 = vpop.f32.mrb[0].mxu0
        %6294 = vdwg.mxu0
        %v6295 = vpack.c.bf16 %v6290, %v6290
        %s6296 = scalar_lea.vmem %s55, 12
        %v6297 = vld [vmem:[%s6296] sm:$0xf]
        %v6299 = vsel %vm1997, %v6295, 0
        %v6302 = vsel %vm2953, %v6297, 0
        %6304 = vmatprep.subr.bf16.mxu0 0
        %6305 = vmatpush1.bf16.msra.mxu0 %v6302
        %6306 = vmatprep.subr.bf16.mxu0 0
        %6307 = vmatpush1.bf16.msra.mxu0 0
        %6308 = vmatprep.subr.bf16.mxu0 0
        %6309 = vmatpush1.bf16.msra.mxu0 0
        %6310 = vmatprep.subr.bf16.mxu0 0
        %6311 = vmatpush1.bf16.msra.mxu0 0
        %6312 = vmatprep.subr.bf16.mxu0 0
        %6313 = vmatpush1.bf16.msra.mxu0 0
        %6314 = vmatprep.subr.bf16.mxu0 0
        %6315 = vmatpush1.bf16.msra.mxu0 0
        %6316 = vmatprep.subr.bf16.mxu0 0
        %6317 = vmatpush1.bf16.msra.mxu0 0
        %6318 = vmatprep.subr.bf16.mxu0 0
        %6319 = vmatpush1.bf16.msra.mxu0 0
        %6320 = vmatprep.subr.bf16.mxu0 0
        %6321 = vmatpush1.bf16.msra.mxu0 0
        %6322 = vmatprep.subr.bf16.mxu0 0
        %6323 = vmatpush1.bf16.msra.mxu0 0
        %6324 = vmatprep.subr.bf16.mxu0 0
        %6325 = vmatpush1.bf16.msra.mxu0 0
        %6326 = vmatprep.subr.bf16.mxu0 0
        %6327 = vmatpush1.bf16.msra.mxu0 0
        %6328 = vmatprep.subr.bf16.mxu0 0
        %6329 = vmatpush1.bf16.msra.mxu0 0
        %6330 = vmatprep.subr.bf16.mxu0 0
        %6331 = vmatpush1.bf16.msra.mxu0 0
        %6332 = vmatprep.subr.bf16.mxu0 0
        %6333 = vmatpush1.bf16.msra.mxu0 0
        %6334 = vmatprep.subr.bf16.mxu0 0
        %6335 = vmatpush1.bf16.msra.mxu0 0
        %6336 = vmatprep.mubr.bf16.mxu0 0
        %6337 = vmatmul.mubr.bf16.gmra.mrb[0].mxu0 %v6299
        %v6338 = vpop.f32.mrb[0].mxu0
        %v6339 = vadd.f32 0.0, %v6338
        %v6340 = vpop.f32.mrb[0].mxu0
        %v6341 = vpop.f32.mrb[0].mxu0
        %v6342 = vpop.f32.mrb[0].mxu0
        %6343 = vdwg.mxu0
        %v6344 = vadd.f32 %v6055, %v6339
        %v6345 = vld [vmem:[%s57] sm:$0x1]
        %v6346 = vadd.f32 %v6344, %v6345
        %v6347 = vadd.f32 %v6346, 0.0
        %vm6348 = vcmask 253952
        %v6349 = vsel %vm6348, %v6347, 0.0
        %6350 = vadd.xlane.f32.xlu0 %v6349
        %v6351 = vpop.xlane.xlu0 %6350
        %v6352 = vmul.f32 %v6351, %v4624
        %v6353 = vsub.f32 %v6347, %v6352
        %v6354 = vmul.f32 %v6353, %v6353
        %v6355 = vsel %vm6348, %v6354, 0.0
        %6356 = vadd.xlane.f32.xlu0 %v6355
        %v6357 = vpop.xlane.xlu0 %6356
        %v6358 = vmul.f32 %v6357, %v4624
        %v6359 = vadd.f32 %v6358, 1e-05
        %v6360 = vrsqrt.pop %v6359
        %v6361 = vmul.f32 %v6353, %v6360
        %v6362 = vld [vmem:[%s59] sm:$0x1]
        %v6363 = vmul.f32 %v6361, %v6362
        %v6364 = vld [vmem:[%s59 + $0x1] sm:$0x1]
        %v6365 = vadd.f32 %v6363, %v6364
        %v6366 = vadd.f32 %v6365, %v5184
        %v6367 = vadd.f32 %v5174, %v1631
        %v6368 = vadd.f32 %v5175, %v1632
        %v6369 = vadd.f32 %v5176, %v1633
        %v6370 = vadd.f32 %v5177, %v1634
        %v6371 = vadd.f32 %v5178, %v1635
        %v6372 = vadd.f32 %v5179, %v1636
        %v6373 = vadd.f32 %v5180, %v1637
        %v6374 = vadd.f32 %v5181, %v1638
        %v6375 = vadd.f32 %v5182, %v1639
        %v6376 = vadd.f32 %v5183, %v1640
        %v6377 = vpack.c.bf16 %v6366, %v6366
        %v6378 = vpack.c.bf16 %v6368, %v6367
        %v6379 = vpack.c.bf16 %v6370, %v6369
        %v6380 = vpack.c.bf16 %v6372, %v6371
        %v6381 = vpack.c.bf16 %v6374, %v6373
        %v6382 = vpack.c.bf16 %v6376, %v6375
        %v6383 = vpack.c.bf16 %v5175, %v5174
        %v6384 = vpack.c.bf16 %v5177, %v5176
        %v6385 = vpack.c.bf16 %v5179, %v5178
        %v6386 = vpack.c.bf16 %v5181, %v5180
        %v6387 = vpack.c.bf16 %v5183, %v5182
        %v6388 = vld [vmem:[%s61] sm:$0xf]
        %v6389 = vld [vmem:[%s61 + $0x4] sm:$0xf]
        %v6390 = vld [vmem:[%s61 + $0x8] sm:$0xf]
        %v6391 = vld [vmem:[%s61 + $0xc] sm:$0xf]
        %v6392 = vld [vmem:[%s63] sm:$0x1]
        %v6397 = vunpack.c.l.b16 %v6388
        %v6398 = vunpack.c.l.b16 %v6389
        %v6399 = vunpack.c.l.b16 %v6390
        %v6400 = vunpack.c.l.b16 %v6391
        %v6401 = vpack.c.b16 %v6398, %v6397
        %v6402 = vpack.c.b16 %v6400, %v6399
        %v6406 = vsel %vm1685, %v6377, 0
        %6408 = vmatprep.subr.bf16.mxu0 0
        %6409 = vmatpush1.bf16.msra.mxu0 %v6401
        %6410 = vmatprep.subr.bf16.mxu0 0
        %6411 = vmatpush1.bf16.msra.mxu0 %v6402
        %6412 = vmatprep.subr.bf16.mxu0 0
        %6413 = vmatpush1.bf16.msra.mxu0 0
        %6414 = vmatprep.subr.bf16.mxu0 0
        %6415 = vmatpush1.bf16.msra.mxu0 0
        %6416 = vmatprep.subr.bf16.mxu0 0
        %6417 = vmatpush1.bf16.msra.mxu0 0
        %6418 = vmatprep.subr.bf16.mxu0 0
        %6419 = vmatpush1.bf16.msra.mxu0 0
        %6420 = vmatprep.subr.bf16.mxu0 0
        %6421 = vmatpush1.bf16.msra.mxu0 0
        %6422 = vmatprep.subr.bf16.mxu0 0
        %6423 = vmatpush1.bf16.msra.mxu0 0
        %6424 = vmatprep.subr.bf16.mxu0 0
        %6425 = vmatpush1.bf16.msra.mxu0 0
        %6426 = vmatprep.subr.bf16.mxu0 0
        %6427 = vmatpush1.bf16.msra.mxu0 0
        %6428 = vmatprep.subr.bf16.mxu0 0
        %6429 = vmatpush1.bf16.msra.mxu0 0
        %6430 = vmatprep.subr.bf16.mxu0 0
        %6431 = vmatpush1.bf16.msra.mxu0 0
        %6432 = vmatprep.subr.bf16.mxu0 0
        %6433 = vmatpush1.bf16.msra.mxu0 0
        %6434 = vmatprep.subr.bf16.mxu0 0
        %6435 = vmatpush1.bf16.msra.mxu0 0
        %6436 = vmatprep.subr.bf16.mxu0 0
        %6437 = vmatpush1.bf16.msra.mxu0 0
        %6438 = vmatprep.subr.bf16.mxu0 0
        %6439 = vmatpush1.bf16.msra.mxu0 0
        %6440 = vmatprep.mubr.bf16.mxu0 0
        %6441 = vmatmul.mubr.bf16.gmra.mrb[0].mxu0 %v6406
        %v6442 = vpop.f32.mrb[0].mxu0
        %v6443 = vadd.f32 %v6392, %v6442
        %v6444 = vpop.f32.mrb[0].mxu0
        %v6445 = vpop.f32.mrb[0].mxu0
        %v6446 = vpop.f32.mrb[0].mxu0
        %6447 = vdwg.mxu0
        %v6448 = vld [vmem:[%s65] sm:$0xf]
        %v6449 = vld [vmem:[%s65 + $0x4] sm:$0xf]
        %v6450 = vld [vmem:[%s65 + $0x8] sm:$0xf]
        %v6451 = vld [vmem:[%s65 + $0xc] sm:$0xf]
        %v6452 = vld [vmem:[%s67] sm:$0x1]
        %v6454 = vlaneseq
        %v6455 = vshrl.u32 %v6454, 7
        %v6456 = vsub.s32 0, %v6455
        %v6457 = vrot.slane %v6452, %v6456
        %v6463 = vunpack.c.l.b16 %v6448
        %v6464 = vunpack.c.l.b16 %v6449
        %v6465 = vunpack.c.l.b16 %v6450
        %v6466 = vunpack.c.l.b16 %v6451
        %v6467 = vpack.c.b16 %v6464, %v6463
        %v6468 = vpack.c.b16 %v6466, %v6465
        %v6472 = vsel %vm1685, %v6378, 0
        %v6475 = vsel %vm1685, %v6379, 0
        %v6478 = vsel %vm1685, %v6380, 0
        %v6481 = vsel %vm1685, %v6381, 0
        %v6484 = vsel %vm1685, %v6382, 0
        %6486 = vmatprep.subr.bf16.mxu0 0
        %6487 = vmatpush1.bf16.msra.mxu0 %v6467
        %6488 = vmatprep.subr.bf16.mxu0 0
        %6489 = vmatpush1.bf16.msra.mxu0 %v6468
        %6490 = vmatprep.subr.bf16.mxu0 0
        %6491 = vmatpush1.bf16.msra.mxu0 0
        %6492 = vmatprep.subr.bf16.mxu0 0
        %6493 = vmatpush1.bf16.msra.mxu0 0
        %6494 = vmatprep.subr.bf16.mxu0 0
        %6495 = vmatpush1.bf16.msra.mxu0 0
        %6496 = vmatprep.subr.bf16.mxu0 0
        %6497 = vmatpush1.bf16.msra.mxu0 0
        %6498 = vmatprep.subr.bf16.mxu0 0
        %6499 = vmatpush1.bf16.msra.mxu0 0
        %6500 = vmatprep.subr.bf16.mxu0 0
        %6501 = vmatpush1.bf16.msra.mxu0 0
        %6502 = vmatprep.subr.bf16.mxu0 0
        %6503 = vmatpush1.bf16.msra.mxu0 0
        %6504 = vmatprep.subr.bf16.mxu0 0
        %6505 = vmatpush1.bf16.msra.mxu0 0
        %6506 = vmatprep.subr.bf16.mxu0 0
        %6507 = vmatpush1.bf16.msra.mxu0 0
        %6508 = vmatprep.subr.bf16.mxu0 0
        %6509 = vmatpush1.bf16.msra.mxu0 0
        %6510 = vmatprep.subr.bf16.mxu0 0
        %6511 = vmatpush1.bf16.msra.mxu0 0
        %6512 = vmatprep.subr.bf16.mxu0 0
        %6513 = vmatpush1.bf16.msra.mxu0 0
        %6514 = vmatprep.subr.bf16.mxu0 0
        %6515 = vmatpush1.bf16.msra.mxu0 0
        %6516 = vmatprep.subr.bf16.mxu0 0
        %6517 = vmatpush1.bf16.msra.mxu0 0
        %6518 = vmatprep.mubr.bf16.mxu0 0
        %6519 = vmatmul.mubr.bf16.gmra.mrb[0].mxu0 %v6472
        %v6520 = vpop.f32.mrb[0].mxu0
        %v6521 = vadd.f32 %v6457, %v6520
        %v6522 = vpop.f32.mrb[0].mxu0
        %v6523 = vpop.f32.mrb[0].mxu0
        %v6524 = vadd.f32 %v6457, %v6523
        %v6525 = vpop.f32.mrb[0].mxu0
        %6526 = vmatprep.mubr.bf16.mxu0 0
        %6527 = vmatmul.mubr.bf16.gmra.mrb[0].mxu0 %v6475
        %v6528 = vpop.f32.mrb[0].mxu0
        %v6529 = vadd.f32 %v6457, %v6528
        %v6530 = vpop.f32.mrb[0].mxu0
        %v6531 = vpop.f32.mrb[0].mxu0
        %v6532 = vadd.f32 %v6457, %v6531
        %v6533 = vpop.f32.mrb[0].mxu0
        %6534 = vmatprep.mubr.bf16.mxu0 0
        %6535 = vmatmul.mubr.bf16.gmra.mrb[0].mxu0 %v6478
        %v6536 = vpop.f32.mrb[0].mxu0
        %v6537 = vadd.f32 %v6457, %v6536
        %v6538 = vpop.f32.mrb[0].mxu0
        %v6539 = vpop.f32.mrb[0].mxu0
        %v6540 = vadd.f32 %v6457, %v6539
        %v6541 = vpop.f32.mrb[0].mxu0
        %6542 = vmatprep.mubr.bf16.mxu0 0
        %6543 = vmatmul.mubr.bf16.gmra.mrb[0].mxu0 %v6481
        %v6544 = vpop.f32.mrb[0].mxu0
        %v6545 = vadd.f32 %v6457, %v6544
        %v6546 = vpop.f32.mrb[0].mxu0
        %v6547 = vpop.f32.mrb[0].mxu0
        %v6548 = vadd.f32 %v6457, %v6547
        %v6549 = vpop.f32.mrb[0].mxu0
        %6550 = vmatprep.mubr.bf16.mxu0 0
        %6551 = vmatmul.mubr.bf16.gmra.mrb[0].mxu0 %v6484
        %v6552 = vpop.f32.mrb[0].mxu0
        %v6553 = vadd.f32 %v6457, %v6552
        %v6554 = vpop.f32.mrb[0].mxu0
        %v6555 = vpop.f32.mrb[0].mxu0
        %v6556 = vadd.f32 %v6457, %v6555
        %v6557 = vpop.f32.mrb[0].mxu0
        %6558 = vdwg.mxu0
        %v6559 = vld [vmem:[%s69] sm:$0xf]
        %v6560 = vld [vmem:[%s69 + $0x4] sm:$0xf]
        %v6561 = vld [vmem:[%s69 + $0x8] sm:$0xf]
        %v6562 = vld [vmem:[%s69 + $0xc] sm:$0xf]
        %v6563 = vld [vmem:[%s71] sm:$0x1]
        %v6565 = vlaneseq
        %v6566 = vshrl.u32 %v6565, 7
        %v6567 = vsub.s32 0, %v6566
        %v6568 = vrot.slane %v6563, %v6567
        %v6574 = vunpack.c.l.b16 %v6559
        %v6575 = vunpack.c.l.b16 %v6560
        %v6576 = vunpack.c.l.b16 %v6561
        %v6577 = vunpack.c.l.b16 %v6562
        %v6578 = vpack.c.b16 %v6575, %v6574
        %v6579 = vpack.c.b16 %v6577, %v6576
        %v6583 = vsel %vm1685, %v6383, 0
        %v6586 = vsel %vm1685, %v6384, 0
        %v6589 = vsel %vm1685, %v6385, 0
        %v6592 = vsel %vm1685, %v6386, 0
        %v6595 = vsel %vm1685, %v6387, 0
        %6597 = vmatprep.subr.bf16.mxu0 0
        %6598 = vmatpush1.bf16.msra.mxu0 %v6578
        %6599 = vmatprep.subr.bf16.mxu0 0
        %6600 = vmatpush1.bf16.msra.mxu0 %v6579
        %6601 = vmatprep.subr.bf16.mxu0 0
        %6602 = vmatpush1.bf16.msra.mxu0 0
        %6603 = vmatprep.subr.bf16.mxu0 0
        %6604 = vmatpush1.bf16.msra.mxu0 0
        %6605 = vmatprep.subr.bf16.mxu0 0
        %6606 = vmatpush1.bf16.msra.mxu0 0
        %6607 = vmatprep.subr.bf16.mxu0 0
        %6608 = vmatpush1.bf16.msra.mxu0 0
        %6609 = vmatprep.subr.bf16.mxu0 0
        %6610 = vmatpush1.bf16.msra.mxu0 0
        %6611 = vmatprep.subr.bf16.mxu0 0
        %6612 = vmatpush1.bf16.msra.mxu0 0
        %6613 = vmatprep.subr.bf16.mxu0 0
        %6614 = vmatpush1.bf16.msra.mxu0 0
        %6615 = vmatprep.subr.bf16.mxu0 0
        %6616 = vmatpush1.bf16.msra.mxu0 0
        %6617 = vmatprep.subr.bf16.mxu0 0
        %6618 = vmatpush1.bf16.msra.mxu0 0
        %6619 = vmatprep.subr.bf16.mxu0 0
        %6620 = vmatpush1.bf16.msra.mxu0 0
        %6621 = vmatprep.subr.bf16.mxu0 0
        %6622 = vmatpush1.bf16.msra.mxu0 0
        %6623 = vmatprep.subr.bf16.mxu0 0
        %6624 = vmatpush1.bf16.msra.mxu0 0
        %6625 = vmatprep.subr.bf16.mxu0 0
        %6626 = vmatpush1.bf16.msra.mxu0 0
        %6627 = vmatprep.subr.bf16.mxu0 0
        %6628 = vmatpush1.bf16.msra.mxu0 0
        %6629 = vmatprep.mubr.bf16.mxu0 0
        %6630 = vmatmul.mubr.bf16.gmra.mrb[0].mxu0 %v6583
        %v6631 = vpop.f32.mrb[0].mxu0
        %v6632 = vadd.f32 %v6568, %v6631
        %v6633 = vpop.f32.mrb[0].mxu0
        %v6634 = vpop.f32.mrb[0].mxu0
        %v6635 = vadd.f32 %v6568, %v6634
        %v6636 = vpop.f32.mrb[0].mxu0
        %6637 = vmatprep.mubr.bf16.mxu0 0
        %6638 = vmatmul.mubr.bf16.gmra.mrb[0].mxu0 %v6586
        %v6639 = vpop.f32.mrb[0].mxu0
        %v6640 = vadd.f32 %v6568, %v6639
        %v6641 = vpop.f32.mrb[0].mxu0
        %v6642 = vpop.f32.mrb[0].mxu0
        %v6643 = vadd.f32 %v6568, %v6642
        %v6644 = vpop.f32.mrb[0].mxu0
        %6645 = vmatprep.mubr.bf16.mxu0 0
        %6646 = vmatmul.mubr.bf16.gmra.mrb[0].mxu0 %v6589
        %v6647 = vpop.f32.mrb[0].mxu0
        %v6648 = vadd.f32 %v6568, %v6647
        %v6649 = vpop.f32.mrb[0].mxu0
        %v6650 = vpop.f32.mrb[0].mxu0
        %v6651 = vadd.f32 %v6568, %v6650
        %v6652 = vpop.f32.mrb[0].mxu0
        %6653 = vmatprep.mubr.bf16.mxu0 0
        %6654 = vmatmul.mubr.bf16.gmra.mrb[0].mxu0 %v6592
        %v6655 = vpop.f32.mrb[0].mxu0
        %v6656 = vadd.f32 %v6568, %v6655
        %v6657 = vpop.f32.mrb[0].mxu0
        %v6658 = vpop.f32.mrb[0].mxu0
        %v6659 = vadd.f32 %v6568, %v6658
        %v6660 = vpop.f32.mrb[0].mxu0
        %6661 = vmatprep.mubr.bf16.mxu0 0
        %6662 = vmatmul.mubr.bf16.gmra.mrb[0].mxu0 %v6595
        %v6663 = vpop.f32.mrb[0].mxu0
        %v6664 = vadd.f32 %v6568, %v6663
        %v6665 = vpop.f32.mrb[0].mxu0
        %v6666 = vpop.f32.mrb[0].mxu0
        %v6667 = vadd.f32 %v6568, %v6666
        %v6668 = vpop.f32.mrb[0].mxu0
        %6669 = vdwg.mxu0
        %v6670 = vpack.c.bf16 %v6443, %v6443
        %v6671 = vpack.c.bf16 %v6524, %v6521
        %v6672 = vpack.c.bf16 %v6532, %v6529
        %v6673 = vpack.c.bf16 %v6540, %v6537
        %v6674 = vpack.c.bf16 %v6548, %v6545
        %v6675 = vpack.c.bf16 %v6556, %v6553
        %v6677 = vsel %vm1997, %v6670, 0
        %v6680 = vsel %vm1997, %v6671, 0
        %v6683 = vsel %vm1997, %v6672, 0
        %v6686 = vsel %vm1997, %v6673, 0
        %v6689 = vsel %vm1997, %v6674, 0
        %v6692 = vsel %vm1997, %v6675, 0
        %6694 = vmatprep.subr.bf16.mxu0 0
        %6695 = vmatpush1.bf16.xpose.msra.mxu0 %v6680
        %6696 = vmatprep.subr.bf16.mxu0 0
        %6697 = vmatpush1.bf16.xpose.msra.mxu0 %v6683
        %6698 = vmatprep.subr.bf16.mxu0 0
        %6699 = vmatpush1.bf16.xpose.msra.mxu0 %v6686
        %6700 = vmatprep.subr.bf16.mxu0 0
        %6701 = vmatpush1.bf16.xpose.msra.mxu0 %v6689
        %6702 = vmatprep.subr.bf16.mxu0 0
        %6703 = vmatpush1.bf16.xpose.msra.mxu0 %v6692
        %6704 = vmatprep.subr.bf16.mxu0 0
        %6705 = vmatpush1.bf16.xpose.msra.mxu0 0
        %6706 = vmatprep.subr.bf16.mxu0 0
        %6707 = vmatpush1.bf16.xpose.msra.mxu0 0
        %6708 = vmatprep.subr.bf16.mxu0 0
        %6709 = vmatpush1.bf16.xpose.msra.mxu0 0
        %6710 = vmatprep.subr.bf16.mxu0 0
        %6711 = vmatpush1.bf16.xpose.msra.mxu0 0
        %6712 = vmatprep.subr.bf16.mxu0 0
        %6713 = vmatpush1.bf16.xpose.msra.mxu0 0
        %6714 = vmatprep.subr.bf16.mxu0 0
        %6715 = vmatpush1.bf16.xpose.msra.mxu0 0
        %6716 = vmatprep.subr.bf16.mxu0 0
        %6717 = vmatpush1.bf16.xpose.msra.mxu0 0
        %6718 = vmatprep.subr.bf16.mxu0 0
        %6719 = vmatpush1.bf16.xpose.msra.mxu0 0
        %6720 = vmatprep.subr.bf16.mxu0 0
        %6721 = vmatpush1.bf16.xpose.msra.mxu0 0
        %6722 = vmatprep.subr.bf16.mxu0 0
        %6723 = vmatpush1.bf16.xpose.msra.mxu0 0
        %6724 = vmatprep.subr.bf16.mxu0 0
        %6725 = vmatpush1.bf16.xpose.msra.mxu0 0
        %6726 = vmatprep.mubr.bf16.mxu0 0
        %6727 = vmatmul.mubr.bf16.gmra.mrb[0].mxu0 %v6677
        %v6728 = vpop.f32.mrb[0].mxu0
        %v6729 = vadd.f32 %v1641, %v6728
        %v6730 = vpop.f32.mrb[0].mxu0
        %v6731 = vpop.f32.mrb[0].mxu0
        %v6732 = vpop.f32.mrb[0].mxu0
        %6733 = vdwg.mxu0
        %vm6734 = vcmask 647168
        %v6735 = vsel %vm6734, %v6729, -inf
        %6736 = vmax.xlane.f32.xlu0 %v6735
        %v6737 = vpop.xlane.xlu0 %6736
        %v6738 = vsub.f32 %v6729, %v6737
        %v6739 = vmul.f32 %v6738, 1.442695
        %v6740 = vpow.pop %v6739
        %v6741 = vsel %vm6734, %v6740, 0.0
        %6742 = vadd.xlane.f32.xlu0 %v6741
        %v6743 = vpop.xlane.xlu0 %6742
        %v6744 = vrcp.pop %v6743
        %v6745 = vmul.f32 %v6740, %v6744
        %v6746 = vpack.c.bf16 %v6745, %v6745
        %v6747 = vpack.c.bf16 %v6635, %v6632
        %v6748 = vpack.c.bf16 %v6643, %v6640
        %v6749 = vpack.c.bf16 %v6651, %v6648
        %v6750 = vpack.c.bf16 %v6659, %v6656
        %v6751 = vpack.c.bf16 %v6667, %v6664
        %v6753 = vsel %vm2101, %v6746, 0
        %6755 = vmatprep.subr.bf16.mxu0 0
        %6756 = vmatpush1.bf16.msra.mxu0 %v6747
        %6757 = vmatprep.subr.bf16.mxu0 0
        %6758 = vmatpush1.bf16.msra.mxu0 %v6748
        %6759 = vmatprep.subr.bf16.mxu0 0
        %6760 = vmatpush1.bf16.msra.mxu0 %v6749
        %6761 = vmatprep.subr.bf16.mxu0 0
        %6762 = vmatpush1.bf16.msra.mxu0 %v6750
        %6763 = vmatprep.subr.bf16.mxu0 0
        %6764 = vmatpush1.bf16.msra.mxu0 %v6751
        %6765 = vmatprep.subr.bf16.mxu0 0
        %6766 = vmatpush1.bf16.msra.mxu0 0
        %6767 = vmatprep.subr.bf16.mxu0 0
        %6768 = vmatpush1.bf16.msra.mxu0 0
        %6769 = vmatprep.subr.bf16.mxu0 0
        %6770 = vmatpush1.bf16.msra.mxu0 0
        %6771 = vmatprep.subr.bf16.mxu0 0
        %6772 = vmatpush1.bf16.msra.mxu0 0
        %6773 = vmatprep.subr.bf16.mxu0 0
        %6774 = vmatpush1.bf16.msra.mxu0 0
        %6775 = vmatprep.subr.bf16.mxu0 0
        %6776 = vmatpush1.bf16.msra.mxu0 0
        %6777 = vmatprep.subr.bf16.mxu0 0
        %6778 = vmatpush1.bf16.msra.mxu0 0
        %6779 = vmatprep.subr.bf16.mxu0 0
        %6780 = vmatpush1.bf16.msra.mxu0 0
        %6781 = vmatprep.subr.bf16.mxu0 0
        %6782 = vmatpush1.bf16.msra.mxu0 0
        %6783 = vmatprep.subr.bf16.mxu0 0
        %6784 = vmatpush1.bf16.msra.mxu0 0
        %6785 = vmatprep.subr.bf16.mxu0 0
        %6786 = vmatpush1.bf16.msra.mxu0 0
        %6787 = vmatprep.mubr.bf16.mxu0 0
        %6788 = vmatmul.mubr.bf16.gmra.mrb[0].mxu0 %v6753
        %v6789 = vpop.f32.mrb[0].mxu0
        %v6790 = vadd.f32 0.0, %v6789
        %v6791 = vpop.f32.mrb[0].mxu0
        %v6792 = vpop.f32.mrb[0].mxu0
        %v6793 = vpop.f32.mrb[0].mxu0
        %6794 = vdwg.mxu0
        %v6795 = vpack.c.bf16 %v6790, %v6790
        %v6796 = vld [vmem:[%s73] sm:$0xf]
        %s6797 = scalar_lea.vmem %s61, 16
        %v6798 = vld [vmem:[%s6797] sm:$0xf]
        %v6799 = vld [vmem:[%s6797 + $0x4] sm:$0xf]
        %v6800 = vld [vmem:[%s6797 + $0x8] sm:$0xf]
        %v6801 = vld [vmem:[%s6797 + $0xc] sm:$0xf]
        %s6802 = scalar_lea.vmem %s63, 1
        %v6803 = vld [vmem:[%s6802] sm:$0x1]
        %v6808 = vunpack.c.l.b16 %v6798
        %v6809 = vunpack.c.l.b16 %v6799
        %v6810 = vunpack.c.l.b16 %v6800
        %v6811 = vunpack.c.l.b16 %v6801
        %v6812 = vpack.c.b16 %v6809, %v6808
        %v6813 = vpack.c.b16 %v6811, %v6810
        %6816 = vmatprep.subr.bf16.mxu0 0
        %6817 = vmatpush1.bf16.msra.mxu0 %v6812
        %6818 = vmatprep.subr.bf16.mxu0 0
        %6819 = vmatpush1.bf16.msra.mxu0 %v6813
        %6820 = vmatprep.subr.bf16.mxu0 0
        %6821 = vmatpush1.bf16.msra.mxu0 0
        %6822 = vmatprep.subr.bf16.mxu0 0
        %6823 = vmatpush1.bf16.msra.mxu0 0
        %6824 = vmatprep.subr.bf16.mxu0 0
        %6825 = vmatpush1.bf16.msra.mxu0 0
        %6826 = vmatprep.subr.bf16.mxu0 0
        %6827 = vmatpush1.bf16.msra.mxu0 0
        %6828 = vmatprep.subr.bf16.mxu0 0
        %6829 = vmatpush1.bf16.msra.mxu0 0
        %6830 = vmatprep.subr.bf16.mxu0 0
        %6831 = vmatpush1.bf16.msra.mxu0 0
        %6832 = vmatprep.subr.bf16.mxu0 0
        %6833 = vmatpush1.bf16.msra.mxu0 0
        %6834 = vmatprep.subr.bf16.mxu0 0
        %6835 = vmatpush1.bf16.msra.mxu0 0
        %6836 = vmatprep.subr.bf16.mxu0 0
        %6837 = vmatpush1.bf16.msra.mxu0 0
        %6838 = vmatprep.subr.bf16.mxu0 0
        %6839 = vmatpush1.bf16.msra.mxu0 0
        %6840 = vmatprep.subr.bf16.mxu0 0
        %6841 = vmatpush1.bf16.msra.mxu0 0
        %6842 = vmatprep.subr.bf16.mxu0 0
        %6843 = vmatpush1.bf16.msra.mxu0 0
        %6844 = vmatprep.subr.bf16.mxu0 0
        %6845 = vmatpush1.bf16.msra.mxu0 0
        %6846 = vmatprep.subr.bf16.mxu0 0
        %6847 = vmatpush1.bf16.msra.mxu0 0
        %6848 = vmatprep.mubr.bf16.mxu0 0
        %6849 = vmatmul.mubr.bf16.gmra.mrb[0].mxu0 %v6406
        %v6850 = vpop.f32.mrb[0].mxu0
        %v6851 = vadd.f32 %v6803, %v6850
        %v6852 = vpop.f32.mrb[0].mxu0
        %v6853 = vpop.f32.mrb[0].mxu0
        %v6854 = vpop.f32.mrb[0].mxu0
        %6855 = vdwg.mxu0
        %s6856 = scalar_lea.vmem %s65, 16
        %v6857 = vld [vmem:[%s6856] sm:$0xf]
        %v6858 = vld [vmem:[%s6856 + $0x4] sm:$0xf]
        %v6859 = vld [vmem:[%s6856 + $0x8] sm:$0xf]
        %v6860 = vld [vmem:[%s6856 + $0xc] sm:$0xf]
        %s6861 = scalar_lea.vmem %s67, 1
        %v6862 = vld [vmem:[%s6861] sm:$0x1]
        %v6864 = vlaneseq
        %v6865 = vshrl.u32 %v6864, 7
        %v6866 = vsub.s32 0, %v6865
        %v6867 = vrot.slane %v6862, %v6866
        %v6873 = vunpack.c.l.b16 %v6857
        %v6874 = vunpack.c.l.b16 %v6858
        %v6875 = vunpack.c.l.b16 %v6859
        %v6876 = vunpack.c.l.b16 %v6860
        %v6877 = vpack.c.b16 %v6874, %v6873
        %v6878 = vpack.c.b16 %v6876, %v6875
        %6881 = vmatprep.subr.bf16.mxu0 0
        %6882 = vmatpush1.bf16.msra.mxu0 %v6877
        %6883 = vmatprep.subr.bf16.mxu0 0
        %6884 = vmatpush1.bf16.msra.mxu0 %v6878
        %6885 = vmatprep.subr.bf16.mxu0 0
        %6886 = vmatpush1.bf16.msra.mxu0 0
        %6887 = vmatprep.subr.bf16.mxu0 0
        %6888 = vmatpush1.bf16.msra.mxu0 0
        %6889 = vmatprep.subr.bf16.mxu0 0
        %6890 = vmatpush1.bf16.msra.mxu0 0
        %6891 = vmatprep.subr.bf16.mxu0 0
        %6892 = vmatpush1.bf16.msra.mxu0 0
        %6893 = vmatprep.subr.bf16.mxu0 0
        %6894 = vmatpush1.bf16.msra.mxu0 0
        %6895 = vmatprep.subr.bf16.mxu0 0
        %6896 = vmatpush1.bf16.msra.mxu0 0
        %6897 = vmatprep.subr.bf16.mxu0 0
        %6898 = vmatpush1.bf16.msra.mxu0 0
        %6899 = vmatprep.subr.bf16.mxu0 0
        %6900 = vmatpush1.bf16.msra.mxu0 0
        %6901 = vmatprep.subr.bf16.mxu0 0
        %6902 = vmatpush1.bf16.msra.mxu0 0
        %6903 = vmatprep.subr.bf16.mxu0 0
        %6904 = vmatpush1.bf16.msra.mxu0 0
        %6905 = vmatprep.subr.bf16.mxu0 0
        %6906 = vmatpush1.bf16.msra.mxu0 0
        %6907 = vmatprep.subr.bf16.mxu0 0
        %6908 = vmatpush1.bf16.msra.mxu0 0
        %6909 = vmatprep.subr.bf16.mxu0 0
        %6910 = vmatpush1.bf16.msra.mxu0 0
        %6911 = vmatprep.subr.bf16.mxu0 0
        %6912 = vmatpush1.bf16.msra.mxu0 0
        %6913 = vmatprep.mubr.bf16.mxu0 0
        %6914 = vmatmul.mubr.bf16.gmra.mrb[0].mxu0 %v6472
        %v6915 = vpop.f32.mrb[0].mxu0
        %v6916 = vadd.f32 %v6867, %v6915
        %v6917 = vpop.f32.mrb[0].mxu0
        %v6918 = vpop.f32.mrb[0].mxu0
        %v6919 = vadd.f32 %v6867, %v6918
        %v6920 = vpop.f32.mrb[0].mxu0
        %6921 = vmatprep.mubr.bf16.mxu0 0
        %6922 = vmatmul.mubr.bf16.gmra.mrb[0].mxu0 %v6475
        %v6923 = vpop.f32.mrb[0].mxu0
        %v6924 = vadd.f32 %v6867, %v6923
        %v6925 = vpop.f32.mrb[0].mxu0
        %v6926 = vpop.f32.mrb[0].mxu0
        %v6927 = vadd.f32 %v6867, %v6926
        %v6928 = vpop.f32.mrb[0].mxu0
        %6929 = vmatprep.mubr.bf16.mxu0 0
        %6930 = vmatmul.mubr.bf16.gmra.mrb[0].mxu0 %v6478
        %v6931 = vpop.f32.mrb[0].mxu0
        %v6932 = vadd.f32 %v6867, %v6931
        %v6933 = vpop.f32.mrb[0].mxu0
        %v6934 = vpop.f32.mrb[0].mxu0
        %v6935 = vadd.f32 %v6867, %v6934
        %v6936 = vpop.f32.mrb[0].mxu0
        %6937 = vmatprep.mubr.bf16.mxu0 0
        %6938 = vmatmul.mubr.bf16.gmra.mrb[0].mxu0 %v6481
        %v6939 = vpop.f32.mrb[0].mxu0
        %v6940 = vadd.f32 %v6867, %v6939
        %v6941 = vpop.f32.mrb[0].mxu0
        %v6942 = vpop.f32.mrb[0].mxu0
        %v6943 = vadd.f32 %v6867, %v6942
        %v6944 = vpop.f32.mrb[0].mxu0
        %6945 = vmatprep.mubr.bf16.mxu0 0
        %6946 = vmatmul.mubr.bf16.gmra.mrb[0].mxu0 %v6484
        %v6947 = vpop.f32.mrb[0].mxu0
        %v6948 = vadd.f32 %v6867, %v6947
        %v6949 = vpop.f32.mrb[0].mxu0
        %v6950 = vpop.f32.mrb[0].mxu0
        %v6951 = vadd.f32 %v6867, %v6950
        %v6952 = vpop.f32.mrb[0].mxu0
        %6953 = vdwg.mxu0
        %s6954 = scalar_lea.vmem %s69, 16
        %v6955 = vld [vmem:[%s6954] sm:$0xf]
        %v6956 = vld [vmem:[%s6954 + $0x4] sm:$0xf]
        %v6957 = vld [vmem:[%s6954 + $0x8] sm:$0xf]
        %v6958 = vld [vmem:[%s6954 + $0xc] sm:$0xf]
        %s6959 = scalar_lea.vmem %s71, 1
        %v6960 = vld [vmem:[%s6959] sm:$0x1]
        %v6962 = vlaneseq
        %v6963 = vshrl.u32 %v6962, 7
        %v6964 = vsub.s32 0, %v6963
        %v6965 = vrot.slane %v6960, %v6964
        %v6971 = vunpack.c.l.b16 %v6955
        %v6972 = vunpack.c.l.b16 %v6956
        %v6973 = vunpack.c.l.b16 %v6957
        %v6974 = vunpack.c.l.b16 %v6958
        %v6975 = vpack.c.b16 %v6972, %v6971
        %v6976 = vpack.c.b16 %v6974, %v6973
        %6979 = vmatprep.subr.bf16.mxu0 0
        %6980 = vmatpush1.bf16.msra.mxu0 %v6975
        %6981 = vmatprep.subr.bf16.mxu0 0
        %6982 = vmatpush1.bf16.msra.mxu0 %v6976
        %6983 = vmatprep.subr.bf16.mxu0 0
        %6984 = vmatpush1.bf16.msra.mxu0 0
        %6985 = vmatprep.subr.bf16.mxu0 0
        %6986 = vmatpush1.bf16.msra.mxu0 0
        %6987 = vmatprep.subr.bf16.mxu0 0
        %6988 = vmatpush1.bf16.msra.mxu0 0
        %6989 = vmatprep.subr.bf16.mxu0 0
        %6990 = vmatpush1.bf16.msra.mxu0 0
        %6991 = vmatprep.subr.bf16.mxu0 0
        %6992 = vmatpush1.bf16.msra.mxu0 0
        %6993 = vmatprep.subr.bf16.mxu0 0
        %6994 = vmatpush1.bf16.msra.mxu0 0
        %6995 = vmatprep.subr.bf16.mxu0 0
        %6996 = vmatpush1.bf16.msra.mxu0 0
        %6997 = vmatprep.subr.bf16.mxu0 0
        %6998 = vmatpush1.bf16.msra.mxu0 0
        %6999 = vmatprep.subr.bf16.mxu0 0
        %7000 = vmatpush1.bf16.msra.mxu0 0
        %7001 = vmatprep.subr.bf16.mxu0 0
        %7002 = vmatpush1.bf16.msra.mxu0 0
        %7003 = vmatprep.subr.bf16.mxu0 0
        %7004 = vmatpush1.bf16.msra.mxu0 0
        %7005 = vmatprep.subr.bf16.mxu0 0
        %7006 = vmatpush1.bf16.msra.mxu0 0
        %7007 = vmatprep.subr.bf16.mxu0 0
        %7008 = vmatpush1.bf16.msra.mxu0 0
        %7009 = vmatprep.subr.bf16.mxu0 0
        %7010 = vmatpush1.bf16.msra.mxu0 0
        %7011 = vmatprep.mubr.bf16.mxu0 0
        %7012 = vmatmul.mubr.bf16.gmra.mrb[0].mxu0 %v6583
        %v7013 = vpop.f32.mrb[0].mxu0
        %v7014 = vadd.f32 %v6965, %v7013
        %v7015 = vpop.f32.mrb[0].mxu0
        %v7016 = vpop.f32.mrb[0].mxu0
        %v7017 = vadd.f32 %v6965, %v7016
        %v7018 = vpop.f32.mrb[0].mxu0
        %7019 = vmatprep.mubr.bf16.mxu0 0
        %7020 = vmatmul.mubr.bf16.gmra.mrb[0].mxu0 %v6586
        %v7021 = vpop.f32.mrb[0].mxu0
        %v7022 = vadd.f32 %v6965, %v7021
        %v7023 = vpop.f32.mrb[0].mxu0
        %v7024 = vpop.f32.mrb[0].mxu0
        %v7025 = vadd.f32 %v6965, %v7024
        %v7026 = vpop.f32.mrb[0].mxu0
        %7027 = vmatprep.mubr.bf16.mxu0 0
        %7028 = vmatmul.mubr.bf16.gmra.mrb[0].mxu0 %v6589
        %v7029 = vpop.f32.mrb[0].mxu0
        %v7030 = vadd.f32 %v6965, %v7029
        %v7031 = vpop.f32.mrb[0].mxu0
        %v7032 = vpop.f32.mrb[0].mxu0
        %v7033 = vadd.f32 %v6965, %v7032
        %v7034 = vpop.f32.mrb[0].mxu0
        %7035 = vmatprep.mubr.bf16.mxu0 0
        %7036 = vmatmul.mubr.bf16.gmra.mrb[0].mxu0 %v6592
        %v7037 = vpop.f32.mrb[0].mxu0
        %v7038 = vadd.f32 %v6965, %v7037
        %v7039 = vpop.f32.mrb[0].mxu0
        %v7040 = vpop.f32.mrb[0].mxu0
        %v7041 = vadd.f32 %v6965, %v7040
        %v7042 = vpop.f32.mrb[0].mxu0
        %7043 = vmatprep.mubr.bf16.mxu0 0
        %7044 = vmatmul.mubr.bf16.gmra.mrb[0].mxu0 %v6595
        %v7045 = vpop.f32.mrb[0].mxu0
        %v7046 = vadd.f32 %v6965, %v7045
        %v7047 = vpop.f32.mrb[0].mxu0
        %v7048 = vpop.f32.mrb[0].mxu0
        %v7049 = vadd.f32 %v6965, %v7048
        %v7050 = vpop.f32.mrb[0].mxu0
        %7051 = vdwg.mxu0
        %v7052 = vpack.c.bf16 %v6851, %v6851
        %v7053 = vpack.c.bf16 %v6919, %v6916
        %v7054 = vpack.c.bf16 %v6927, %v6924
        %v7055 = vpack.c.bf16 %v6935, %v6932
        %v7056 = vpack.c.bf16 %v6943, %v6940
        %v7057 = vpack.c.bf16 %v6951, %v6948
        %v7059 = vsel %vm1997, %v7052, 0
        %v7062 = vsel %vm1997, %v7053, 0
        %v7065 = vsel %vm1997, %v7054, 0
        %v7068 = vsel %vm1997, %v7055, 0
        %v7071 = vsel %vm1997, %v7056, 0
        %v7074 = vsel %vm1997, %v7057, 0
        %7076 = vmatprep.subr.bf16.mxu0 0
        %7077 = vmatpush1.bf16.xpose.msra.mxu0 %v7062
        %7078 = vmatprep.subr.bf16.mxu0 0
        %7079 = vmatpush1.bf16.xpose.msra.mxu0 %v7065
        %7080 = vmatprep.subr.bf16.mxu0 0
        %7081 = vmatpush1.bf16.xpose.msra.mxu0 %v7068
        %7082 = vmatprep.subr.bf16.mxu0 0
        %7083 = vmatpush1.bf16.xpose.msra.mxu0 %v7071
        %7084 = vmatprep.subr.bf16.mxu0 0
        %7085 = vmatpush1.bf16.xpose.msra.mxu0 %v7074
        %7086 = vmatprep.subr.bf16.mxu0 0
        %7087 = vmatpush1.bf16.xpose.msra.mxu0 0
        %7088 = vmatprep.subr.bf16.mxu0 0
        %7089 = vmatpush1.bf16.xpose.msra.mxu0 0
        %7090 = vmatprep.subr.bf16.mxu0 0
        %7091 = vmatpush1.bf16.xpose.msra.mxu0 0
        %7092 = vmatprep.subr.bf16.mxu0 0
        %7093 = vmatpush1.bf16.xpose.msra.mxu0 0
        %7094 = vmatprep.subr.bf16.mxu0 0
        %7095 = vmatpush1.bf16.xpose.msra.mxu0 0
        %7096 = vmatprep.subr.bf16.mxu0 0
        %7097 = vmatpush1.bf16.xpose.msra.mxu0 0
        %7098 = vmatprep.subr.bf16.mxu0 0
        %7099 = vmatpush1.bf16.xpose.msra.mxu0 0
        %7100 = vmatprep.subr.bf16.mxu0 0
        %7101 = vmatpush1.bf16.xpose.msra.mxu0 0
        %7102 = vmatprep.subr.bf16.mxu0 0
        %7103 = vmatpush1.bf16.xpose.msra.mxu0 0
        %7104 = vmatprep.subr.bf16.mxu0 0
        %7105 = vmatpush1.bf16.xpose.msra.mxu0 0
        %7106 = vmatprep.subr.bf16.mxu0 0
        %7107 = vmatpush1.bf16.xpose.msra.mxu0 0
        %7108 = vmatprep.mubr.bf16.mxu0 0
        %7109 = vmatmul.mubr.bf16.gmra.mrb[0].mxu0 %v7059
        %v7110 = vpop.f32.mrb[0].mxu0
        %v7111 = vadd.f32 %v1641, %v7110
        %v7112 = vpop.f32.mrb[0].mxu0
        %v7113 = vpop.f32.mrb[0].mxu0
        %v7114 = vpop.f32.mrb[0].mxu0
        %7115 = vdwg.mxu0
        %v7116 = vsel %vm6734, %v7111, -inf
        %7117 = vmax.xlane.f32.xlu0 %v7116
        %v7118 = vpop.xlane.xlu0 %7117
        %v7119 = vsub.f32 %v7111, %v7118
        %v7120 = vmul.f32 %v7119, 1.442695
        %v7121 = vpow.pop %v7120
        %v7122 = vsel %vm6734, %v7121, 0.0
        %7123 = vadd.xlane.f32.xlu0 %v7122
        %v7124 = vpop.xlane.xlu0 %7123
        %v7125 = vrcp.pop %v7124
        %v7126 = vmul.f32 %v7121, %v7125
        %v7127 = vpack.c.bf16 %v7126, %v7126
        %v7128 = vpack.c.bf16 %v7017, %v7014
        %v7129 = vpack.c.bf16 %v7025, %v7022
        %v7130 = vpack.c.bf16 %v7033, %v7030
        %v7131 = vpack.c.bf16 %v7041, %v7038
        %v7132 = vpack.c.bf16 %v7049, %v7046
        %v7134 = vsel %vm2101, %v7127, 0
        %7136 = vmatprep.subr.bf16.mxu0 0
        %7137 = vmatpush1.bf16.msra.mxu0 %v7128
        %7138 = vmatprep.subr.bf16.mxu0 0
        %7139 = vmatpush1.bf16.msra.mxu0 %v7129
        %7140 = vmatprep.subr.bf16.mxu0 0
        %7141 = vmatpush1.bf16.msra.mxu0 %v7130
        %7142 = vmatprep.subr.bf16.mxu0 0
        %7143 = vmatpush1.bf16.msra.mxu0 %v7131
        %7144 = vmatprep.subr.bf16.mxu0 0
        %7145 = vmatpush1.bf16.msra.mxu0 %v7132
        %7146 = vmatprep.subr.bf16.mxu0 0
        %7147 = vmatpush1.bf16.msra.mxu0 0
        %7148 = vmatprep.subr.bf16.mxu0 0
        %7149 = vmatpush1.bf16.msra.mxu0 0
        %7150 = vmatprep.subr.bf16.mxu0 0
        %7151 = vmatpush1.bf16.msra.mxu0 0
        %7152 = vmatprep.subr.bf16.mxu0 0
        %7153 = vmatpush1.bf16.msra.mxu0 0
        %7154 = vmatprep.subr.bf16.mxu0 0
        %7155 = vmatpush1.bf16.msra.mxu0 0
        %7156 = vmatprep.subr.bf16.mxu0 0
        %7157 = vmatpush1.bf16.msra.mxu0 0
        %7158 = vmatprep.subr.bf16.mxu0 0
        %7159 = vmatpush1.bf16.msra.mxu0 0
        %7160 = vmatprep.subr.bf16.mxu0 0
        %7161 = vmatpush1.bf16.msra.mxu0 0
        %7162 = vmatprep.subr.bf16.mxu0 0
        %7163 = vmatpush1.bf16.msra.mxu0 0
        %7164 = vmatprep.subr.bf16.mxu0 0
        %7165 = vmatpush1.bf16.msra.mxu0 0
        %7166 = vmatprep.subr.bf16.mxu0 0
        %7167 = vmatpush1.bf16.msra.mxu0 0
        %7168 = vmatprep.mubr.bf16.mxu0 0
        %7169 = vmatmul.mubr.bf16.gmra.mrb[0].mxu0 %v7134
        %v7170 = vpop.f32.mrb[0].mxu0
        %v7171 = vadd.f32 0.0, %v7170
        %v7172 = vpop.f32.mrb[0].mxu0
        %v7173 = vpop.f32.mrb[0].mxu0
        %v7174 = vpop.f32.mrb[0].mxu0
        %7175 = vdwg.mxu0
        %v7176 = vpack.c.bf16 %v7171, %v7171
        %s7177 = scalar_lea.vmem %s73, 4
        %v7178 = vld [vmem:[%s7177] sm:$0xf]
        %v7180 = vsel %vm1997, %v7176, 0
        %v7183 = vsel %vm2953, %v7178, 0
        %7185 = vmatprep.subr.bf16.mxu0 0
        %7186 = vmatpush1.bf16.msra.mxu0 %v7183
        %7187 = vmatprep.subr.bf16.mxu0 0
        %7188 = vmatpush1.bf16.msra.mxu0 0
        %7189 = vmatprep.subr.bf16.mxu0 0
        %7190 = vmatpush1.bf16.msra.mxu0 0
        %7191 = vmatprep.subr.bf16.mxu0 0
        %7192 = vmatpush1.bf16.msra.mxu0 0
        %7193 = vmatprep.subr.bf16.mxu0 0
        %7194 = vmatpush1.bf16.msra.mxu0 0
        %7195 = vmatprep.subr.bf16.mxu0 0
        %7196 = vmatpush1.bf16.msra.mxu0 0
        %7197 = vmatprep.subr.bf16.mxu0 0
        %7198 = vmatpush1.bf16.msra.mxu0 0
        %7199 = vmatprep.subr.bf16.mxu0 0
        %7200 = vmatpush1.bf16.msra.mxu0 0
        %7201 = vmatprep.subr.bf16.mxu0 0
        %7202 = vmatpush1.bf16.msra.mxu0 0
        %7203 = vmatprep.subr.bf16.mxu0 0
        %7204 = vmatpush1.bf16.msra.mxu0 0
        %7205 = vmatprep.subr.bf16.mxu0 0
        %7206 = vmatpush1.bf16.msra.mxu0 0
        %7207 = vmatprep.subr.bf16.mxu0 0
        %7208 = vmatpush1.bf16.msra.mxu0 0
        %7209 = vmatprep.subr.bf16.mxu0 0
        %7210 = vmatpush1.bf16.msra.mxu0 0
        %7211 = vmatprep.subr.bf16.mxu0 0
        %7212 = vmatpush1.bf16.msra.mxu0 0
        %7213 = vmatprep.subr.bf16.mxu0 0
        %7214 = vmatpush1.bf16.msra.mxu0 0
        %7215 = vmatprep.subr.bf16.mxu0 0
        %7216 = vmatpush1.bf16.msra.mxu0 0
        %7217 = vmatprep.mubr.bf16.mxu0 0
        %7218 = vmatmul.mubr.bf16.gmra.mrb[0].mxu0 %v7180
        %v7219 = vpop.f32.mrb[0].mxu0
        %v7220 = vadd.f32 0.0, %v7219
        %v7221 = vpop.f32.mrb[0].mxu0
        %v7222 = vpop.f32.mrb[0].mxu0
        %v7223 = vpop.f32.mrb[0].mxu0
        %7224 = vdwg.mxu0
        %v7226 = vsel %vm1997, %v6795, 0
        %v7229 = vsel %vm2953, %v6796, 0
        %7231 = vmatprep.subr.bf16.mxu0 0
        %7232 = vmatpush1.bf16.msra.mxu0 %v7229
        %7233 = vmatprep.subr.bf16.mxu0 0
        %7234 = vmatpush1.bf16.msra.mxu0 0
        %7235 = vmatprep.subr.bf16.mxu0 0
        %7236 = vmatpush1.bf16.msra.mxu0 0
        %7237 = vmatprep.subr.bf16.mxu0 0
        %7238 = vmatpush1.bf16.msra.mxu0 0
        %7239 = vmatprep.subr.bf16.mxu0 0
        %7240 = vmatpush1.bf16.msra.mxu0 0
        %7241 = vmatprep.subr.bf16.mxu0 0
        %7242 = vmatpush1.bf16.msra.mxu0 0
        %7243 = vmatprep.subr.bf16.mxu0 0
        %7244 = vmatpush1.bf16.msra.mxu0 0
        %7245 = vmatprep.subr.bf16.mxu0 0
        %7246 = vmatpush1.bf16.msra.mxu0 0
        %7247 = vmatprep.subr.bf16.mxu0 0
        %7248 = vmatpush1.bf16.msra.mxu0 0
        %7249 = vmatprep.subr.bf16.mxu0 0
        %7250 = vmatpush1.bf16.msra.mxu0 0
        %7251 = vmatprep.subr.bf16.mxu0 0
        %7252 = vmatpush1.bf16.msra.mxu0 0
        %7253 = vmatprep.subr.bf16.mxu0 0
        %7254 = vmatpush1.bf16.msra.mxu0 0
        %7255 = vmatprep.subr.bf16.mxu0 0
        %7256 = vmatpush1.bf16.msra.mxu0 0
        %7257 = vmatprep.subr.bf16.mxu0 0
        %7258 = vmatpush1.bf16.msra.mxu0 0
        %7259 = vmatprep.subr.bf16.mxu0 0
        %7260 = vmatpush1.bf16.msra.mxu0 0
        %7261 = vmatprep.subr.bf16.mxu0 0
        %7262 = vmatpush1.bf16.msra.mxu0 0
        %7263 = vmatprep.mubr.bf16.mxu0 0
        %7264 = vmatmul.mubr.bf16.gmra.mrb[0].mxu0 %v7226
        %v7265 = vpop.f32.mrb[0].mxu0
        %v7266 = vadd.f32 %v7220, %v7265
        %v7267 = vpop.f32.mrb[0].mxu0
        %v7268 = vpop.f32.mrb[0].mxu0
        %v7269 = vpop.f32.mrb[0].mxu0
        %7270 = vdwg.mxu0
        %s7271 = scalar_lea.vmem %s61, 32
        %v7272 = vld [vmem:[%s7271] sm:$0xf]
        %v7273 = vld [vmem:[%s7271 + $0x4] sm:$0xf]
        %v7274 = vld [vmem:[%s7271 + $0x8] sm:$0xf]
        %v7275 = vld [vmem:[%s7271 + $0xc] sm:$0xf]
        %s7276 = scalar_lea.vmem %s63, 2
        %v7277 = vld [vmem:[%s7276] sm:$0x1]
        %v7282 = vunpack.c.l.b16 %v7272
        %v7283 = vunpack.c.l.b16 %v7273
        %v7284 = vunpack.c.l.b16 %v7274
        %v7285 = vunpack.c.l.b16 %v7275
        %v7286 = vpack.c.b16 %v7283, %v7282
        %v7287 = vpack.c.b16 %v7285, %v7284
        %7290 = vmatprep.subr.bf16.mxu0 0
        %7291 = vmatpush1.bf16.msra.mxu0 %v7286
        %7292 = vmatprep.subr.bf16.mxu0 0
        %7293 = vmatpush1.bf16.msra.mxu0 %v7287
        %7294 = vmatprep.subr.bf16.mxu0 0
        %7295 = vmatpush1.bf16.msra.mxu0 0
        %7296 = vmatprep.subr.bf16.mxu0 0
        %7297 = vmatpush1.bf16.msra.mxu0 0
        %7298 = vmatprep.subr.bf16.mxu0 0
        %7299 = vmatpush1.bf16.msra.mxu0 0
        %7300 = vmatprep.subr.bf16.mxu0 0
        %7301 = vmatpush1.bf16.msra.mxu0 0
        %7302 = vmatprep.subr.bf16.mxu0 0
        %7303 = vmatpush1.bf16.msra.mxu0 0
        %7304 = vmatprep.subr.bf16.mxu0 0
        %7305 = vmatpush1.bf16.msra.mxu0 0
        %7306 = vmatprep.subr.bf16.mxu0 0
        %7307 = vmatpush1.bf16.msra.mxu0 0
        %7308 = vmatprep.subr.bf16.mxu0 0
        %7309 = vmatpush1.bf16.msra.mxu0 0
        %7310 = vmatprep.subr.bf16.mxu0 0
        %7311 = vmatpush1.bf16.msra.mxu0 0
        %7312 = vmatprep.subr.bf16.mxu0 0
        %7313 = vmatpush1.bf16.msra.mxu0 0
        %7314 = vmatprep.subr.bf16.mxu0 0
        %7315 = vmatpush1.bf16.msra.mxu0 0
        %7316 = vmatprep.subr.bf16.mxu0 0
        %7317 = vmatpush1.bf16.msra.mxu0 0
        %7318 = vmatprep.subr.bf16.mxu0 0
        %7319 = vmatpush1.bf16.msra.mxu0 0
        %7320 = vmatprep.subr.bf16.mxu0 0
        %7321 = vmatpush1.bf16.msra.mxu0 0
        %7322 = vmatprep.mubr.bf16.mxu0 0
        %7323 = vmatmul.mubr.bf16.gmra.mrb[0].mxu0 %v6406
        %v7324 = vpop.f32.mrb[0].mxu0
        %v7325 = vadd.f32 %v7277, %v7324
        %v7326 = vpop.f32.mrb[0].mxu0
        %v7327 = vpop.f32.mrb[0].mxu0
        %v7328 = vpop.f32.mrb[0].mxu0
        %7329 = vdwg.mxu0
        %s7330 = scalar_lea.vmem %s65, 32
        %v7331 = vld [vmem:[%s7330] sm:$0xf]
        %v7332 = vld [vmem:[%s7330 + $0x4] sm:$0xf]
        %v7333 = vld [vmem:[%s7330 + $0x8] sm:$0xf]
        %v7334 = vld [vmem:[%s7330 + $0xc] sm:$0xf]
        %s7335 = scalar_lea.vmem %s67, 2
        %v7336 = vld [vmem:[%s7335] sm:$0x1]
        %v7338 = vlaneseq
        %v7339 = vshrl.u32 %v7338, 7
        %v7340 = vsub.s32 0, %v7339
        %v7341 = vrot.slane %v7336, %v7340
        %v7347 = vunpack.c.l.b16 %v7331
        %v7348 = vunpack.c.l.b16 %v7332
        %v7349 = vunpack.c.l.b16 %v7333
        %v7350 = vunpack.c.l.b16 %v7334
        %v7351 = vpack.c.b16 %v7348, %v7347
        %v7352 = vpack.c.b16 %v7350, %v7349
        %7355 = vmatprep.subr.bf16.mxu0 0
        %7356 = vmatpush1.bf16.msra.mxu0 %v7351
        %7357 = vmatprep.subr.bf16.mxu0 0
        %7358 = vmatpush1.bf16.msra.mxu0 %v7352
        %7359 = vmatprep.subr.bf16.mxu0 0
        %7360 = vmatpush1.bf16.msra.mxu0 0
        %7361 = vmatprep.subr.bf16.mxu0 0
        %7362 = vmatpush1.bf16.msra.mxu0 0
        %7363 = vmatprep.subr.bf16.mxu0 0
        %7364 = vmatpush1.bf16.msra.mxu0 0
        %7365 = vmatprep.subr.bf16.mxu0 0
        %7366 = vmatpush1.bf16.msra.mxu0 0
        %7367 = vmatprep.subr.bf16.mxu0 0
        %7368 = vmatpush1.bf16.msra.mxu0 0
        %7369 = vmatprep.subr.bf16.mxu0 0
        %7370 = vmatpush1.bf16.msra.mxu0 0
        %7371 = vmatprep.subr.bf16.mxu0 0
        %7372 = vmatpush1.bf16.msra.mxu0 0
        %7373 = vmatprep.subr.bf16.mxu0 0
        %7374 = vmatpush1.bf16.msra.mxu0 0
        %7375 = vmatprep.subr.bf16.mxu0 0
        %7376 = vmatpush1.bf16.msra.mxu0 0
        %7377 = vmatprep.subr.bf16.mxu0 0
        %7378 = vmatpush1.bf16.msra.mxu0 0
        %7379 = vmatprep.subr.bf16.mxu0 0
        %7380 = vmatpush1.bf16.msra.mxu0 0
        %7381 = vmatprep.subr.bf16.mxu0 0
        %7382 = vmatpush1.bf16.msra.mxu0 0
        %7383 = vmatprep.subr.bf16.mxu0 0
        %7384 = vmatpush1.bf16.msra.mxu0 0
        %7385 = vmatprep.subr.bf16.mxu0 0
        %7386 = vmatpush1.bf16.msra.mxu0 0
        %7387 = vmatprep.mubr.bf16.mxu0 0
        %7388 = vmatmul.mubr.bf16.gmra.mrb[0].mxu0 %v6472
        %v7389 = vpop.f32.mrb[0].mxu0
        %v7390 = vadd.f32 %v7341, %v7389
        %v7391 = vpop.f32.mrb[0].mxu0
        %v7392 = vpop.f32.mrb[0].mxu0
        %v7393 = vadd.f32 %v7341, %v7392
        %v7394 = vpop.f32.mrb[0].mxu0
        %7395 = vmatprep.mubr.bf16.mxu0 0
        %7396 = vmatmul.mubr.bf16.gmra.mrb[0].mxu0 %v6475
        %v7397 = vpop.f32.mrb[0].mxu0
        %v7398 = vadd.f32 %v7341, %v7397
        %v7399 = vpop.f32.mrb[0].mxu0
        %v7400 = vpop.f32.mrb[0].mxu0
        %v7401 = vadd.f32 %v7341, %v7400
        %v7402 = vpop.f32.mrb[0].mxu0
        %7403 = vmatprep.mubr.bf16.mxu0 0
        %7404 = vmatmul.mubr.bf16.gmra.mrb[0].mxu0 %v6478
        %v7405 = vpop.f32.mrb[0].mxu0
        %v7406 = vadd.f32 %v7341, %v7405
        %v7407 = vpop.f32.mrb[0].mxu0
        %v7408 = vpop.f32.mrb[0].mxu0
        %v7409 = vadd.f32 %v7341, %v7408
        %v7410 = vpop.f32.mrb[0].mxu0
        %7411 = vmatprep.mubr.bf16.mxu0 0
        %7412 = vmatmul.mubr.bf16.gmra.mrb[0].mxu0 %v6481
        %v7413 = vpop.f32.mrb[0].mxu0
        %v7414 = vadd.f32 %v7341, %v7413
        %v7415 = vpop.f32.mrb[0].mxu0
        %v7416 = vpop.f32.mrb[0].mxu0
        %v7417 = vadd.f32 %v7341, %v7416
        %v7418 = vpop.f32.mrb[0].mxu0
        %7419 = vmatprep.mubr.bf16.mxu0 0
        %7420 = vmatmul.mubr.bf16.gmra.mrb[0].mxu0 %v6484
        %v7421 = vpop.f32.mrb[0].mxu0
        %v7422 = vadd.f32 %v7341, %v7421
        %v7423 = vpop.f32.mrb[0].mxu0
        %v7424 = vpop.f32.mrb[0].mxu0
        %v7425 = vadd.f32 %v7341, %v7424
        %v7426 = vpop.f32.mrb[0].mxu0
        %7427 = vdwg.mxu0
        %s7428 = scalar_lea.vmem %s69, 32
        %v7429 = vld [vmem:[%s7428] sm:$0xf]
        %v7430 = vld [vmem:[%s7428 + $0x4] sm:$0xf]
        %v7431 = vld [vmem:[%s7428 + $0x8] sm:$0xf]
        %v7432 = vld [vmem:[%s7428 + $0xc] sm:$0xf]
        %s7433 = scalar_lea.vmem %s71, 2
        %v7434 = vld [vmem:[%s7433] sm:$0x1]
        %v7436 = vlaneseq
        %v7437 = vshrl.u32 %v7436, 7
        %v7438 = vsub.s32 0, %v7437
        %v7439 = vrot.slane %v7434, %v7438
        %v7445 = vunpack.c.l.b16 %v7429
        %v7446 = vunpack.c.l.b16 %v7430
        %v7447 = vunpack.c.l.b16 %v7431
        %v7448 = vunpack.c.l.b16 %v7432
        %v7449 = vpack.c.b16 %v7446, %v7445
        %v7450 = vpack.c.b16 %v7448, %v7447
        %7453 = vmatprep.subr.bf16.mxu0 0
        %7454 = vmatpush1.bf16.msra.mxu0 %v7449
        %7455 = vmatprep.subr.bf16.mxu0 0
        %7456 = vmatpush1.bf16.msra.mxu0 %v7450
        %7457 = vmatprep.subr.bf16.mxu0 0
        %7458 = vmatpush1.bf16.msra.mxu0 0
        %7459 = vmatprep.subr.bf16.mxu0 0
        %7460 = vmatpush1.bf16.msra.mxu0 0
        %7461 = vmatprep.subr.bf16.mxu0 0
        %7462 = vmatpush1.bf16.msra.mxu0 0
        %7463 = vmatprep.subr.bf16.mxu0 0
        %7464 = vmatpush1.bf16.msra.mxu0 0
        %7465 = vmatprep.subr.bf16.mxu0 0
        %7466 = vmatpush1.bf16.msra.mxu0 0
        %7467 = vmatprep.subr.bf16.mxu0 0
        %7468 = vmatpush1.bf16.msra.mxu0 0
        %7469 = vmatprep.subr.bf16.mxu0 0
        %7470 = vmatpush1.bf16.msra.mxu0 0
        %7471 = vmatprep.subr.bf16.mxu0 0
        %7472 = vmatpush1.bf16.msra.mxu0 0
        %7473 = vmatprep.subr.bf16.mxu0 0
        %7474 = vmatpush1.bf16.msra.mxu0 0
        %7475 = vmatprep.subr.bf16.mxu0 0
        %7476 = vmatpush1.bf16.msra.mxu0 0
        %7477 = vmatprep.subr.bf16.mxu0 0
        %7478 = vmatpush1.bf16.msra.mxu0 0
        %7479 = vmatprep.subr.bf16.mxu0 0
        %7480 = vmatpush1.bf16.msra.mxu0 0
        %7481 = vmatprep.subr.bf16.mxu0 0
        %7482 = vmatpush1.bf16.msra.mxu0 0
        %7483 = vmatprep.subr.bf16.mxu0 0
        %7484 = vmatpush1.bf16.msra.mxu0 0
        %7485 = vmatprep.mubr.bf16.mxu0 0
        %7486 = vmatmul.mubr.bf16.gmra.mrb[0].mxu0 %v6583
        %v7487 = vpop.f32.mrb[0].mxu0
        %v7488 = vadd.f32 %v7439, %v7487
        %v7489 = vpop.f32.mrb[0].mxu0
        %v7490 = vpop.f32.mrb[0].mxu0
        %v7491 = vadd.f32 %v7439, %v7490
        %v7492 = vpop.f32.mrb[0].mxu0
        %7493 = vmatprep.mubr.bf16.mxu0 0
        %7494 = vmatmul.mubr.bf16.gmra.mrb[0].mxu0 %v6586
        %v7495 = vpop.f32.mrb[0].mxu0
        %v7496 = vadd.f32 %v7439, %v7495
        %v7497 = vpop.f32.mrb[0].mxu0
        %v7498 = vpop.f32.mrb[0].mxu0
        %v7499 = vadd.f32 %v7439, %v7498
        %v7500 = vpop.f32.mrb[0].mxu0
        %7501 = vmatprep.mubr.bf16.mxu0 0
        %7502 = vmatmul.mubr.bf16.gmra.mrb[0].mxu0 %v6589
        %v7503 = vpop.f32.mrb[0].mxu0
        %v7504 = vadd.f32 %v7439, %v7503
        %v7505 = vpop.f32.mrb[0].mxu0
        %v7506 = vpop.f32.mrb[0].mxu0
        %v7507 = vadd.f32 %v7439, %v7506
        %v7508 = vpop.f32.mrb[0].mxu0
        %7509 = vmatprep.mubr.bf16.mxu0 0
        %7510 = vmatmul.mubr.bf16.gmra.mrb[0].mxu0 %v6592
        %v7511 = vpop.f32.mrb[0].mxu0
        %v7512 = vadd.f32 %v7439, %v7511
        %v7513 = vpop.f32.mrb[0].mxu0
        %v7514 = vpop.f32.mrb[0].mxu0
        %v7515 = vadd.f32 %v7439, %v7514
        %v7516 = vpop.f32.mrb[0].mxu0
        %7517 = vmatprep.mubr.bf16.mxu0 0
        %7518 = vmatmul.mubr.bf16.gmra.mrb[0].mxu0 %v6595
        %v7519 = vpop.f32.mrb[0].mxu0
        %v7520 = vadd.f32 %v7439, %v7519
        %v7521 = vpop.f32.mrb[0].mxu0
        %v7522 = vpop.f32.mrb[0].mxu0
        %v7523 = vadd.f32 %v7439, %v7522
        %v7524 = vpop.f32.mrb[0].mxu0
        %7525 = vdwg.mxu0
        %v7526 = vpack.c.bf16 %v7325, %v7325
        %v7527 = vpack.c.bf16 %v7393, %v7390
        %v7528 = vpack.c.bf16 %v7401, %v7398
        %v7529 = vpack.c.bf16 %v7409, %v7406
        %v7530 = vpack.c.bf16 %v7417, %v7414
        %v7531 = vpack.c.bf16 %v7425, %v7422
        %v7533 = vsel %vm1997, %v7526, 0
        %v7536 = vsel %vm1997, %v7527, 0
        %v7539 = vsel %vm1997, %v7528, 0
        %v7542 = vsel %vm1997, %v7529, 0
        %v7545 = vsel %vm1997, %v7530, 0
        %v7548 = vsel %vm1997, %v7531, 0
        %7550 = vmatprep.subr.bf16.mxu0 0
        %7551 = vmatpush1.bf16.xpose.msra.mxu0 %v7536
        %7552 = vmatprep.subr.bf16.mxu0 0
        %7553 = vmatpush1.bf16.xpose.msra.mxu0 %v7539
        %7554 = vmatprep.subr.bf16.mxu0 0
        %7555 = vmatpush1.bf16.xpose.msra.mxu0 %v7542
        %7556 = vmatprep.subr.bf16.mxu0 0
        %7557 = vmatpush1.bf16.xpose.msra.mxu0 %v7545
        %7558 = vmatprep.subr.bf16.mxu0 0
        %7559 = vmatpush1.bf16.xpose.msra.mxu0 %v7548
        %7560 = vmatprep.subr.bf16.mxu0 0
        %7561 = vmatpush1.bf16.xpose.msra.mxu0 0
        %7562 = vmatprep.subr.bf16.mxu0 0
        %7563 = vmatpush1.bf16.xpose.msra.mxu0 0
        %7564 = vmatprep.subr.bf16.mxu0 0
        %7565 = vmatpush1.bf16.xpose.msra.mxu0 0
        %7566 = vmatprep.subr.bf16.mxu0 0
        %7567 = vmatpush1.bf16.xpose.msra.mxu0 0
        %7568 = vmatprep.subr.bf16.mxu0 0
        %7569 = vmatpush1.bf16.xpose.msra.mxu0 0
        %7570 = vmatprep.subr.bf16.mxu0 0
        %7571 = vmatpush1.bf16.xpose.msra.mxu0 0
        %7572 = vmatprep.subr.bf16.mxu0 0
        %7573 = vmatpush1.bf16.xpose.msra.mxu0 0
        %7574 = vmatprep.subr.bf16.mxu0 0
        %7575 = vmatpush1.bf16.xpose.msra.mxu0 0
        %7576 = vmatprep.subr.bf16.mxu0 0
        %7577 = vmatpush1.bf16.xpose.msra.mxu0 0
        %7578 = vmatprep.subr.bf16.mxu0 0
        %7579 = vmatpush1.bf16.xpose.msra.mxu0 0
        %7580 = vmatprep.subr.bf16.mxu0 0
        %7581 = vmatpush1.bf16.xpose.msra.mxu0 0
        %7582 = vmatprep.mubr.bf16.mxu0 0
        %7583 = vmatmul.mubr.bf16.gmra.mrb[0].mxu0 %v7533
        %v7584 = vpop.f32.mrb[0].mxu0
        %v7585 = vadd.f32 %v1641, %v7584
        %v7586 = vpop.f32.mrb[0].mxu0
        %v7587 = vpop.f32.mrb[0].mxu0
        %v7588 = vpop.f32.mrb[0].mxu0
        %7589 = vdwg.mxu0
        %v7590 = vsel %vm6734, %v7585, -inf
        %7591 = vmax.xlane.f32.xlu0 %v7590
        %v7592 = vpop.xlane.xlu0 %7591
        %v7593 = vsub.f32 %v7585, %v7592
        %v7594 = vmul.f32 %v7593, 1.442695
        %v7595 = vpow.pop %v7594
        %v7596 = vsel %vm6734, %v7595, 0.0
        %7597 = vadd.xlane.f32.xlu0 %v7596
        %v7598 = vpop.xlane.xlu0 %7597
        %v7599 = vrcp.pop %v7598
        %v7600 = vmul.f32 %v7595, %v7599
        %v7601 = vpack.c.bf16 %v7600, %v7600
        %v7602 = vpack.c.bf16 %v7491, %v7488
        %v7603 = vpack.c.bf16 %v7499, %v7496
        %v7604 = vpack.c.bf16 %v7507, %v7504
        %v7605 = vpack.c.bf16 %v7515, %v7512
        %v7606 = vpack.c.bf16 %v7523, %v7520
        %v7608 = vsel %vm2101, %v7601, 0
        %7610 = vmatprep.subr.bf16.mxu0 0
        %7611 = vmatpush1.bf16.msra.mxu0 %v7602
        %7612 = vmatprep.subr.bf16.mxu0 0
        %7613 = vmatpush1.bf16.msra.mxu0 %v7603
        %7614 = vmatprep.subr.bf16.mxu0 0
        %7615 = vmatpush1.bf16.msra.mxu0 %v7604
        %7616 = vmatprep.subr.bf16.mxu0 0
        %7617 = vmatpush1.bf16.msra.mxu0 %v7605
        %7618 = vmatprep.subr.bf16.mxu0 0
        %7619 = vmatpush1.bf16.msra.mxu0 %v7606
        %7620 = vmatprep.subr.bf16.mxu0 0
        %7621 = vmatpush1.bf16.msra.mxu0 0
        %7622 = vmatprep.subr.bf16.mxu0 0
        %7623 = vmatpush1.bf16.msra.mxu0 0
        %7624 = vmatprep.subr.bf16.mxu0 0
        %7625 = vmatpush1.bf16.msra.mxu0 0
        %7626 = vmatprep.subr.bf16.mxu0 0
        %7627 = vmatpush1.bf16.msra.mxu0 0
        %7628 = vmatprep.subr.bf16.mxu0 0
        %7629 = vmatpush1.bf16.msra.mxu0 0
        %7630 = vmatprep.subr.bf16.mxu0 0
        %7631 = vmatpush1.bf16.msra.mxu0 0
        %7632 = vmatprep.subr.bf16.mxu0 0
        %7633 = vmatpush1.bf16.msra.mxu0 0
        %7634 = vmatprep.subr.bf16.mxu0 0
        %7635 = vmatpush1.bf16.msra.mxu0 0
        %7636 = vmatprep.subr.bf16.mxu0 0
        %7637 = vmatpush1.bf16.msra.mxu0 0
        %7638 = vmatprep.subr.bf16.mxu0 0
        %7639 = vmatpush1.bf16.msra.mxu0 0
        %7640 = vmatprep.subr.bf16.mxu0 0
        %7641 = vmatpush1.bf16.msra.mxu0 0
        %7642 = vmatprep.mubr.bf16.mxu0 0
        %7643 = vmatmul.mubr.bf16.gmra.mrb[0].mxu0 %v7608
        %v7644 = vpop.f32.mrb[0].mxu0
        %v7645 = vadd.f32 0.0, %v7644
        %v7646 = vpop.f32.mrb[0].mxu0
        %v7647 = vpop.f32.mrb[0].mxu0
        %v7648 = vpop.f32.mrb[0].mxu0
        %7649 = vdwg.mxu0
        %v7650 = vpack.c.bf16 %v7645, %v7645
        %s7651 = scalar_lea.vmem %s73, 8
        %v7652 = vld [vmem:[%s7651] sm:$0xf]
        %v7654 = vsel %vm1997, %v7650, 0
        %v7657 = vsel %vm2953, %v7652, 0
        %7659 = vmatprep.subr.bf16.mxu0 0
        %7660 = vmatpush1.bf16.msra.mxu0 %v7657
        %7661 = vmatprep.subr.bf16.mxu0 0
        %7662 = vmatpush1.bf16.msra.mxu0 0
        %7663 = vmatprep.subr.bf16.mxu0 0
        %7664 = vmatpush1.bf16.msra.mxu0 0
        %7665 = vmatprep.subr.bf16.mxu0 0
        %7666 = vmatpush1.bf16.msra.mxu0 0
        %7667 = vmatprep.subr.bf16.mxu0 0
        %7668 = vmatpush1.bf16.msra.mxu0 0
        %7669 = vmatprep.subr.bf16.mxu0 0
        %7670 = vmatpush1.bf16.msra.mxu0 0
        %7671 = vmatprep.subr.bf16.mxu0 0
        %7672 = vmatpush1.bf16.msra.mxu0 0
        %7673 = vmatprep.subr.bf16.mxu0 0
        %7674 = vmatpush1.bf16.msra.mxu0 0
        %7675 = vmatprep.subr.bf16.mxu0 0
        %7676 = vmatpush1.bf16.msra.mxu0 0
        %7677 = vmatprep.subr.bf16.mxu0 0
        %7678 = vmatpush1.bf16.msra.mxu0 0
        %7679 = vmatprep.subr.bf16.mxu0 0
        %7680 = vmatpush1.bf16.msra.mxu0 0
        %7681 = vmatprep.subr.bf16.mxu0 0
        %7682 = vmatpush1.bf16.msra.mxu0 0
        %7683 = vmatprep.subr.bf16.mxu0 0
        %7684 = vmatpush1.bf16.msra.mxu0 0
        %7685 = vmatprep.subr.bf16.mxu0 0
        %7686 = vmatpush1.bf16.msra.mxu0 0
        %7687 = vmatprep.subr.bf16.mxu0 0
        %7688 = vmatpush1.bf16.msra.mxu0 0
        %7689 = vmatprep.subr.bf16.mxu0 0
        %7690 = vmatpush1.bf16.msra.mxu0 0
        %7691 = vmatprep.mubr.bf16.mxu0 0
        %7692 = vmatmul.mubr.bf16.gmra.mrb[0].mxu0 %v7654
        %v7693 = vpop.f32.mrb[0].mxu0
        %v7694 = vadd.f32 0.0, %v7693
        %v7695 = vpop.f32.mrb[0].mxu0
        %v7696 = vpop.f32.mrb[0].mxu0
        %v7697 = vpop.f32.mrb[0].mxu0
        %7698 = vdwg.mxu0
        %v7699 = vadd.f32 %v7266, %v7694
        %s7700 = scalar_lea.vmem %s61, 48
        %v7701 = vld [vmem:[%s7700] sm:$0xf]
        %v7702 = vld [vmem:[%s7700 + $0x4] sm:$0xf]
        %v7703 = vld [vmem:[%s7700 + $0x8] sm:$0xf]
        %v7704 = vld [vmem:[%s7700 + $0xc] sm:$0xf]
        %s7705 = scalar_lea.vmem %s63, 3
        %v7706 = vld [vmem:[%s7705] sm:$0x1]
        %v7711 = vunpack.c.l.b16 %v7701
        %v7712 = vunpack.c.l.b16 %v7702
        %v7713 = vunpack.c.l.b16 %v7703
        %v7714 = vunpack.c.l.b16 %v7704
        %v7715 = vpack.c.b16 %v7712, %v7711
        %v7716 = vpack.c.b16 %v7714, %v7713
        %7719 = vmatprep.subr.bf16.mxu0 0
        %7720 = vmatpush1.bf16.msra.mxu0 %v7715
        %7721 = vmatprep.subr.bf16.mxu0 0
        %7722 = vmatpush1.bf16.msra.mxu0 %v7716
        %7723 = vmatprep.subr.bf16.mxu0 0
        %7724 = vmatpush1.bf16.msra.mxu0 0
        %7725 = vmatprep.subr.bf16.mxu0 0
        %7726 = vmatpush1.bf16.msra.mxu0 0
        %7727 = vmatprep.subr.bf16.mxu0 0
        %7728 = vmatpush1.bf16.msra.mxu0 0
        %7729 = vmatprep.subr.bf16.mxu0 0
        %7730 = vmatpush1.bf16.msra.mxu0 0
        %7731 = vmatprep.subr.bf16.mxu0 0
        %7732 = vmatpush1.bf16.msra.mxu0 0
        %7733 = vmatprep.subr.bf16.mxu0 0
        %7734 = vmatpush1.bf16.msra.mxu0 0
        %7735 = vmatprep.subr.bf16.mxu0 0
        %7736 = vmatpush1.bf16.msra.mxu0 0
        %7737 = vmatprep.subr.bf16.mxu0 0
        %7738 = vmatpush1.bf16.msra.mxu0 0
        %7739 = vmatprep.subr.bf16.mxu0 0
        %7740 = vmatpush1.bf16.msra.mxu0 0
        %7741 = vmatprep.subr.bf16.mxu0 0
        %7742 = vmatpush1.bf16.msra.mxu0 0
        %7743 = vmatprep.subr.bf16.mxu0 0
        %7744 = vmatpush1.bf16.msra.mxu0 0
        %7745 = vmatprep.subr.bf16.mxu0 0
        %7746 = vmatpush1.bf16.msra.mxu0 0
        %7747 = vmatprep.subr.bf16.mxu0 0
        %7748 = vmatpush1.bf16.msra.mxu0 0
        %7749 = vmatprep.subr.bf16.mxu0 0
        %7750 = vmatpush1.bf16.msra.mxu0 0
        %7751 = vmatprep.mubr.bf16.mxu0 0
        %7752 = vmatmul.mubr.bf16.gmra.mrb[0].mxu0 %v6406
        %v7753 = vpop.f32.mrb[0].mxu0
        %v7754 = vadd.f32 %v7706, %v7753
        %v7755 = vpop.f32.mrb[0].mxu0
        %v7756 = vpop.f32.mrb[0].mxu0
        %v7757 = vpop.f32.mrb[0].mxu0
        %7758 = vdwg.mxu0
        %s7759 = scalar_lea.vmem %s65, 48
        %v7760 = vld [vmem:[%s7759] sm:$0xf]
        %v7761 = vld [vmem:[%s7759 + $0x4] sm:$0xf]
        %v7762 = vld [vmem:[%s7759 + $0x8] sm:$0xf]
        %v7763 = vld [vmem:[%s7759 + $0xc] sm:$0xf]
        %s7764 = scalar_lea.vmem %s67, 3
        %v7765 = vld [vmem:[%s7764] sm:$0x1]
        %v7767 = vlaneseq
        %v7768 = vshrl.u32 %v7767, 7
        %v7769 = vsub.s32 0, %v7768
        %v7770 = vrot.slane %v7765, %v7769
        %v7776 = vunpack.c.l.b16 %v7760
        %v7777 = vunpack.c.l.b16 %v7761
        %v7778 = vunpack.c.l.b16 %v7762
        %v7779 = vunpack.c.l.b16 %v7763
        %v7780 = vpack.c.b16 %v7777, %v7776
        %v7781 = vpack.c.b16 %v7779, %v7778
        %7784 = vmatprep.subr.bf16.mxu0 0
        %7785 = vmatpush1.bf16.msra.mxu0 %v7780
        %7786 = vmatprep.subr.bf16.mxu0 0
        %7787 = vmatpush1.bf16.msra.mxu0 %v7781
        %7788 = vmatprep.subr.bf16.mxu0 0
        %7789 = vmatpush1.bf16.msra.mxu0 0
        %7790 = vmatprep.subr.bf16.mxu0 0
        %7791 = vmatpush1.bf16.msra.mxu0 0
        %7792 = vmatprep.subr.bf16.mxu0 0
        %7793 = vmatpush1.bf16.msra.mxu0 0
        %7794 = vmatprep.subr.bf16.mxu0 0
        %7795 = vmatpush1.bf16.msra.mxu0 0
        %7796 = vmatprep.subr.bf16.mxu0 0
        %7797 = vmatpush1.bf16.msra.mxu0 0
        %7798 = vmatprep.subr.bf16.mxu0 0
        %7799 = vmatpush1.bf16.msra.mxu0 0
        %7800 = vmatprep.subr.bf16.mxu0 0
        %7801 = vmatpush1.bf16.msra.mxu0 0
        %7802 = vmatprep.subr.bf16.mxu0 0
        %7803 = vmatpush1.bf16.msra.mxu0 0
        %7804 = vmatprep.subr.bf16.mxu0 0
        %7805 = vmatpush1.bf16.msra.mxu0 0
        %7806 = vmatprep.subr.bf16.mxu0 0
        %7807 = vmatpush1.bf16.msra.mxu0 0
        %7808 = vmatprep.subr.bf16.mxu0 0
        %7809 = vmatpush1.bf16.msra.mxu0 0
        %7810 = vmatprep.subr.bf16.mxu0 0
        %7811 = vmatpush1.bf16.msra.mxu0 0
        %7812 = vmatprep.subr.bf16.mxu0 0
        %7813 = vmatpush1.bf16.msra.mxu0 0
        %7814 = vmatprep.subr.bf16.mxu0 0
        %7815 = vmatpush1.bf16.msra.mxu0 0
        %7816 = vmatprep.mubr.bf16.mxu0 0
        %7817 = vmatmul.mubr.bf16.gmra.mrb[0].mxu0 %v6472
        %v7818 = vpop.f32.mrb[0].mxu0
        %v7819 = vadd.f32 %v7770, %v7818
        %v7820 = vpop.f32.mrb[0].mxu0
        %v7821 = vpop.f32.mrb[0].mxu0
        %v7822 = vadd.f32 %v7770, %v7821
        %v7823 = vpop.f32.mrb[0].mxu0
        %7824 = vmatprep.mubr.bf16.mxu0 0
        %7825 = vmatmul.mubr.bf16.gmra.mrb[0].mxu0 %v6475
        %v7826 = vpop.f32.mrb[0].mxu0
        %v7827 = vadd.f32 %v7770, %v7826
        %v7828 = vpop.f32.mrb[0].mxu0
        %v7829 = vpop.f32.mrb[0].mxu0
        %v7830 = vadd.f32 %v7770, %v7829
        %v7831 = vpop.f32.mrb[0].mxu0
        %7832 = vmatprep.mubr.bf16.mxu0 0
        %7833 = vmatmul.mubr.bf16.gmra.mrb[0].mxu0 %v6478
        %v7834 = vpop.f32.mrb[0].mxu0
        %v7835 = vadd.f32 %v7770, %v7834
        %v7836 = vpop.f32.mrb[0].mxu0
        %v7837 = vpop.f32.mrb[0].mxu0
        %v7838 = vadd.f32 %v7770, %v7837
        %v7839 = vpop.f32.mrb[0].mxu0
        %7840 = vmatprep.mubr.bf16.mxu0 0
        %7841 = vmatmul.mubr.bf16.gmra.mrb[0].mxu0 %v6481
        %v7842 = vpop.f32.mrb[0].mxu0
        %v7843 = vadd.f32 %v7770, %v7842
        %v7844 = vpop.f32.mrb[0].mxu0
        %v7845 = vpop.f32.mrb[0].mxu0
        %v7846 = vadd.f32 %v7770, %v7845
        %v7847 = vpop.f32.mrb[0].mxu0
        %7848 = vmatprep.mubr.bf16.mxu0 0
        %7849 = vmatmul.mubr.bf16.gmra.mrb[0].mxu0 %v6484
        %v7850 = vpop.f32.mrb[0].mxu0
        %v7851 = vadd.f32 %v7770, %v7850
        %v7852 = vpop.f32.mrb[0].mxu0
        %v7853 = vpop.f32.mrb[0].mxu0
        %v7854 = vadd.f32 %v7770, %v7853
        %v7855 = vpop.f32.mrb[0].mxu0
        %7856 = vdwg.mxu0
        %s7857 = scalar_lea.vmem %s69, 48
        %v7858 = vld [vmem:[%s7857] sm:$0xf]
        %v7859 = vld [vmem:[%s7857 + $0x4] sm:$0xf]
        %v7860 = vld [vmem:[%s7857 + $0x8] sm:$0xf]
        %v7861 = vld [vmem:[%s7857 + $0xc] sm:$0xf]
        %s7862 = scalar_lea.vmem %s71, 3
        %v7863 = vld [vmem:[%s7862] sm:$0x1]
        %v7865 = vlaneseq
        %v7866 = vshrl.u32 %v7865, 7
        %v7867 = vsub.s32 0, %v7866
        %v7868 = vrot.slane %v7863, %v7867
        %v7874 = vunpack.c.l.b16 %v7858
        %v7875 = vunpack.c.l.b16 %v7859
        %v7876 = vunpack.c.l.b16 %v7860
        %v7877 = vunpack.c.l.b16 %v7861
        %v7878 = vpack.c.b16 %v7875, %v7874
        %v7879 = vpack.c.b16 %v7877, %v7876
        %7882 = vmatprep.subr.bf16.mxu0 0
        %7883 = vmatpush1.bf16.msra.mxu0 %v7878
        %7884 = vmatprep.subr.bf16.mxu0 0
        %7885 = vmatpush1.bf16.msra.mxu0 %v7879
        %7886 = vmatprep.subr.bf16.mxu0 0
        %7887 = vmatpush1.bf16.msra.mxu0 0
        %7888 = vmatprep.subr.bf16.mxu0 0
        %7889 = vmatpush1.bf16.msra.mxu0 0
        %7890 = vmatprep.subr.bf16.mxu0 0
        %7891 = vmatpush1.bf16.msra.mxu0 0
        %7892 = vmatprep.subr.bf16.mxu0 0
        %7893 = vmatpush1.bf16.msra.mxu0 0
        %7894 = vmatprep.subr.bf16.mxu0 0
        %7895 = vmatpush1.bf16.msra.mxu0 0
        %7896 = vmatprep.subr.bf16.mxu0 0
        %7897 = vmatpush1.bf16.msra.mxu0 0
        %7898 = vmatprep.subr.bf16.mxu0 0
        %7899 = vmatpush1.bf16.msra.mxu0 0
        %7900 = vmatprep.subr.bf16.mxu0 0
        %7901 = vmatpush1.bf16.msra.mxu0 0
        %7902 = vmatprep.subr.bf16.mxu0 0
        %7903 = vmatpush1.bf16.msra.mxu0 0
        %7904 = vmatprep.subr.bf16.mxu0 0
        %7905 = vmatpush1.bf16.msra.mxu0 0
        %7906 = vmatprep.subr.bf16.mxu0 0
        %7907 = vmatpush1.bf16.msra.mxu0 0
        %7908 = vmatprep.subr.bf16.mxu0 0
        %7909 = vmatpush1.bf16.msra.mxu0 0
        %7910 = vmatprep.subr.bf16.mxu0 0
        %7911 = vmatpush1.bf16.msra.mxu0 0
        %7912 = vmatprep.subr.bf16.mxu0 0
        %7913 = vmatpush1.bf16.msra.mxu0 0
        %7914 = vmatprep.mubr.bf16.mxu0 0
        %7915 = vmatmul.mubr.bf16.gmra.mrb[0].mxu0 %v6583
        %v7916 = vpop.f32.mrb[0].mxu0
        %v7917 = vadd.f32 %v7868, %v7916
        %v7918 = vpop.f32.mrb[0].mxu0
        %v7919 = vpop.f32.mrb[0].mxu0
        %v7920 = vadd.f32 %v7868, %v7919
        %v7921 = vpop.f32.mrb[0].mxu0
        %7922 = vmatprep.mubr.bf16.mxu0 0
        %7923 = vmatmul.mubr.bf16.gmra.mrb[0].mxu0 %v6586
        %v7924 = vpop.f32.mrb[0].mxu0
        %v7925 = vadd.f32 %v7868, %v7924
        %v7926 = vpop.f32.mrb[0].mxu0
        %v7927 = vpop.f32.mrb[0].mxu0
        %v7928 = vadd.f32 %v7868, %v7927
        %v7929 = vpop.f32.mrb[0].mxu0
        %7930 = vmatprep.mubr.bf16.mxu0 0
        %7931 = vmatmul.mubr.bf16.gmra.mrb[0].mxu0 %v6589
        %v7932 = vpop.f32.mrb[0].mxu0
        %v7933 = vadd.f32 %v7868, %v7932
        %v7934 = vpop.f32.mrb[0].mxu0
        %v7935 = vpop.f32.mrb[0].mxu0
        %v7936 = vadd.f32 %v7868, %v7935
        %v7937 = vpop.f32.mrb[0].mxu0
        %7938 = vmatprep.mubr.bf16.mxu0 0
        %7939 = vmatmul.mubr.bf16.gmra.mrb[0].mxu0 %v6592
        %v7940 = vpop.f32.mrb[0].mxu0
        %v7941 = vadd.f32 %v7868, %v7940
        %v7942 = vpop.f32.mrb[0].mxu0
        %v7943 = vpop.f32.mrb[0].mxu0
        %v7944 = vadd.f32 %v7868, %v7943
        %v7945 = vpop.f32.mrb[0].mxu0
        %7946 = vmatprep.mubr.bf16.mxu0 0
        %7947 = vmatmul.mubr.bf16.gmra.mrb[0].mxu0 %v6595
        %v7948 = vpop.f32.mrb[0].mxu0
        %v7949 = vadd.f32 %v7868, %v7948
        %v7950 = vpop.f32.mrb[0].mxu0
        %v7951 = vpop.f32.mrb[0].mxu0
        %v7952 = vadd.f32 %v7868, %v7951
        %v7953 = vpop.f32.mrb[0].mxu0
        %7954 = vdwg.mxu0
        %v7955 = vpack.c.bf16 %v7754, %v7754
        %v7956 = vpack.c.bf16 %v7822, %v7819
        %v7957 = vpack.c.bf16 %v7830, %v7827
        %v7958 = vpack.c.bf16 %v7838, %v7835
        %v7959 = vpack.c.bf16 %v7846, %v7843
        %v7960 = vpack.c.bf16 %v7854, %v7851
        %v7962 = vsel %vm1997, %v7955, 0
        %v7965 = vsel %vm1997, %v7956, 0
        %v7968 = vsel %vm1997, %v7957, 0
        %v7971 = vsel %vm1997, %v7958, 0
        %v7974 = vsel %vm1997, %v7959, 0
        %v7977 = vsel %vm1997, %v7960, 0
        %7979 = vmatprep.subr.bf16.mxu0 0
        %7980 = vmatpush1.bf16.xpose.msra.mxu0 %v7965
        %7981 = vmatprep.subr.bf16.mxu0 0
        %7982 = vmatpush1.bf16.xpose.msra.mxu0 %v7968
        %7983 = vmatprep.subr.bf16.mxu0 0
        %7984 = vmatpush1.bf16.xpose.msra.mxu0 %v7971
        %7985 = vmatprep.subr.bf16.mxu0 0
        %7986 = vmatpush1.bf16.xpose.msra.mxu0 %v7974
        %7987 = vmatprep.subr.bf16.mxu0 0
        %7988 = vmatpush1.bf16.xpose.msra.mxu0 %v7977
        %7989 = vmatprep.subr.bf16.mxu0 0
        %7990 = vmatpush1.bf16.xpose.msra.mxu0 0
        %7991 = vmatprep.subr.bf16.mxu0 0
        %7992 = vmatpush1.bf16.xpose.msra.mxu0 0
        %7993 = vmatprep.subr.bf16.mxu0 0
        %7994 = vmatpush1.bf16.xpose.msra.mxu0 0
        %7995 = vmatprep.subr.bf16.mxu0 0
        %7996 = vmatpush1.bf16.xpose.msra.mxu0 0
        %7997 = vmatprep.subr.bf16.mxu0 0
        %7998 = vmatpush1.bf16.xpose.msra.mxu0 0
        %7999 = vmatprep.subr.bf16.mxu0 0
        %8000 = vmatpush1.bf16.xpose.msra.mxu0 0
        %8001 = vmatprep.subr.bf16.mxu0 0
        %8002 = vmatpush1.bf16.xpose.msra.mxu0 0
        %8003 = vmatprep.subr.bf16.mxu0 0
        %8004 = vmatpush1.bf16.xpose.msra.mxu0 0
        %8005 = vmatprep.subr.bf16.mxu0 0
        %8006 = vmatpush1.bf16.xpose.msra.mxu0 0
        %8007 = vmatprep.subr.bf16.mxu0 0
        %8008 = vmatpush1.bf16.xpose.msra.mxu0 0
        %8009 = vmatprep.subr.bf16.mxu0 0
        %8010 = vmatpush1.bf16.xpose.msra.mxu0 0
        %8011 = vmatprep.mubr.bf16.mxu0 0
        %8012 = vmatmul.mubr.bf16.gmra.mrb[0].mxu0 %v7962
        %v8013 = vpop.f32.mrb[0].mxu0
        %v8014 = vadd.f32 %v1641, %v8013
        %v8015 = vpop.f32.mrb[0].mxu0
        %v8016 = vpop.f32.mrb[0].mxu0
        %v8017 = vpop.f32.mrb[0].mxu0
        %8018 = vdwg.mxu0
        %v8019 = vsel %vm6734, %v8014, -inf
        %8020 = vmax.xlane.f32.xlu0 %v8019
        %v8021 = vpop.xlane.xlu0 %8020
        %v8022 = vsub.f32 %v8014, %v8021
        %v8023 = vmul.f32 %v8022, 1.442695
        %v8024 = vpow.pop %v8023
        %v8025 = vsel %vm6734, %v8024, 0.0
        %8026 = vadd.xlane.f32.xlu0 %v8025
        %v8027 = vpop.xlane.xlu0 %8026
        %v8028 = vrcp.pop %v8027
        %v8029 = vmul.f32 %v8024, %v8028
        %v8030 = vpack.c.bf16 %v8029, %v8029
        %v8031 = vpack.c.bf16 %v7920, %v7917
        %v8032 = vpack.c.bf16 %v7928, %v7925
        %v8033 = vpack.c.bf16 %v7936, %v7933
        %v8034 = vpack.c.bf16 %v7944, %v7941
        %v8035 = vpack.c.bf16 %v7952, %v7949
        %v8037 = vsel %vm2101, %v8030, 0
        %8039 = vmatprep.subr.bf16.mxu0 0
        %8040 = vmatpush1.bf16.msra.mxu0 %v8031
        %8041 = vmatprep.subr.bf16.mxu0 0
        %8042 = vmatpush1.bf16.msra.mxu0 %v8032
        %8043 = vmatprep.subr.bf16.mxu0 0
        %8044 = vmatpush1.bf16.msra.mxu0 %v8033
        %8045 = vmatprep.subr.bf16.mxu0 0
        %8046 = vmatpush1.bf16.msra.mxu0 %v8034
        %8047 = vmatprep.subr.bf16.mxu0 0
        %8048 = vmatpush1.bf16.msra.mxu0 %v8035
        %8049 = vmatprep.subr.bf16.mxu0 0
        %8050 = vmatpush1.bf16.msra.mxu0 0
        %8051 = vmatprep.subr.bf16.mxu0 0
        %8052 = vmatpush1.bf16.msra.mxu0 0
        %8053 = vmatprep.subr.bf16.mxu0 0
        %8054 = vmatpush1.bf16.msra.mxu0 0
        %8055 = vmatprep.subr.bf16.mxu0 0
        %8056 = vmatpush1.bf16.msra.mxu0 0
        %8057 = vmatprep.subr.bf16.mxu0 0
        %8058 = vmatpush1.bf16.msra.mxu0 0
        %8059 = vmatprep.subr.bf16.mxu0 0
        %8060 = vmatpush1.bf16.msra.mxu0 0
        %8061 = vmatprep.subr.bf16.mxu0 0
        %8062 = vmatpush1.bf16.msra.mxu0 0
        %8063 = vmatprep.subr.bf16.mxu0 0
        %8064 = vmatpush1.bf16.msra.mxu0 0
        %8065 = vmatprep.subr.bf16.mxu0 0
        %8066 = vmatpush1.bf16.msra.mxu0 0
        %8067 = vmatprep.subr.bf16.mxu0 0
        %8068 = vmatpush1.bf16.msra.mxu0 0
        %8069 = vmatprep.subr.bf16.mxu0 0
        %8070 = vmatpush1.bf16.msra.mxu0 0
        %8071 = vmatprep.mubr.bf16.mxu0 0
        %8072 = vmatmul.mubr.bf16.gmra.mrb[0].mxu0 %v8037
        %v8073 = vpop.f32.mrb[0].mxu0
        %v8074 = vadd.f32 0.0, %v8073
        %v8075 = vpop.f32.mrb[0].mxu0
        %v8076 = vpop.f32.mrb[0].mxu0
        %v8077 = vpop.f32.mrb[0].mxu0
        %8078 = vdwg.mxu0
        %v8079 = vpack.c.bf16 %v8074, %v8074
        %s8080 = scalar_lea.vmem %s73, 12
        %v8081 = vld [vmem:[%s8080] sm:$0xf]
        %v8083 = vsel %vm1997, %v8079, 0
        %v8086 = vsel %vm2953, %v8081, 0
        %8088 = vmatprep.subr.bf16.mxu0 0
        %8089 = vmatpush1.bf16.msra.mxu0 %v8086
        %8090 = vmatprep.subr.bf16.mxu0 0
        %8091 = vmatpush1.bf16.msra.mxu0 0
        %8092 = vmatprep.subr.bf16.mxu0 0
        %8093 = vmatpush1.bf16.msra.mxu0 0
        %8094 = vmatprep.subr.bf16.mxu0 0
        %8095 = vmatpush1.bf16.msra.mxu0 0
        %8096 = vmatprep.subr.bf16.mxu0 0
        %8097 = vmatpush1.bf16.msra.mxu0 0
        %8098 = vmatprep.subr.bf16.mxu0 0
        %8099 = vmatpush1.bf16.msra.mxu0 0
        %8100 = vmatprep.subr.bf16.mxu0 0
        %8101 = vmatpush1.bf16.msra.mxu0 0
        %8102 = vmatprep.subr.bf16.mxu0 0
        %8103 = vmatpush1.bf16.msra.mxu0 0
        %8104 = vmatprep.subr.bf16.mxu0 0
        %8105 = vmatpush1.bf16.msra.mxu0 0
        %8106 = vmatprep.subr.bf16.mxu0 0
        %8107 = vmatpush1.bf16.msra.mxu0 0
        %8108 = vmatprep.subr.bf16.mxu0 0
        %8109 = vmatpush1.bf16.msra.mxu0 0
        %8110 = vmatprep.subr.bf16.mxu0 0
        %8111 = vmatpush1.bf16.msra.mxu0 0
        %8112 = vmatprep.subr.bf16.mxu0 0
        %8113 = vmatpush1.bf16.msra.mxu0 0
        %8114 = vmatprep.subr.bf16.mxu0 0
        %8115 = vmatpush1.bf16.msra.mxu0 0
        %8116 = vmatprep.subr.bf16.mxu0 0
        %8117 = vmatpush1.bf16.msra.mxu0 0
        %8118 = vmatprep.subr.bf16.mxu0 0
        %8119 = vmatpush1.bf16.msra.mxu0 0
        %8120 = vmatprep.mubr.bf16.mxu0 0
        %8121 = vmatmul.mubr.bf16.gmra.mrb[0].mxu0 %v8083
        %v8122 = vpop.f32.mrb[0].mxu0
        %v8123 = vadd.f32 0.0, %v8122
        %v8124 = vpop.f32.mrb[0].mxu0
        %v8125 = vpop.f32.mrb[0].mxu0
        %v8126 = vpop.f32.mrb[0].mxu0
        %8127 = vdwg.mxu0
        %v8128 = vadd.f32 %v7699, %v8123
        %v8129 = vld [vmem:[%s75] sm:$0x1]
        %v8130 = vadd.f32 %v8128, %v8129
        %v8131 = vadd.f32 %v6365, %v8130
        %v8132 = vsel %vm6348, %v8131, 0.0
        %8133 = vadd.xlane.f32.xlu0 %v8132
        %v8134 = vpop.xlane.xlu0 %8133
        %v8135 = vmul.f32 %v8134, %v4624
        %v8136 = vsub.f32 %v8131, %v8135
        %v8137 = vmul.f32 %v8136, %v8136
        %v8138 = vsel %vm6348, %v8137, 0.0
        %8139 = vadd.xlane.f32.xlu0 %v8138
        %v8140 = vpop.xlane.xlu0 %8139
        %v8141 = vmul.f32 %v8140, %v4624
        %v8142 = vadd.f32 %v8141, 1e-05
        %v8143 = vrsqrt.pop %v8142
        %v8144 = vmul.f32 %v8136, %v8143
        %v8145 = vld [vmem:[%s77] sm:$0x1]
        %v8146 = vmul.f32 %v8144, %v8145
        %v8147 = vld [vmem:[%s77 + $0x1] sm:$0x1]
        %v8148 = vadd.f32 %v8146, %v8147
        %v8149 = vpack.c.bf16 %v8148, %v8148
        %v8150 = vld [vmem:[%s79] sm:$0xf]
        %v8151 = vld [vmem:[%s79 + $0x4] sm:$0xf]
        %v8152 = vld [vmem:[%s79 + $0x8] sm:$0xf]
        %v8153 = vld [vmem:[%s79 + $0xc] sm:$0xf]
        %v8154 = vld [vmem:[%s81] sm:$0x1]
        %v8159 = vunpack.c.l.b16 %v8150
        %v8160 = vunpack.c.l.b16 %v8151
        %v8161 = vunpack.c.l.b16 %v8152
        %v8162 = vunpack.c.l.b16 %v8153
        %v8163 = vpack.c.b16 %v8160, %v8159
        %v8164 = vpack.c.b16 %v8162, %v8161
        %v8168 = vsel %vm1685, %v8149, 0
        %8170 = vmatprep.subr.bf16.mxu0 0
        %8171 = vmatpush1.bf16.msra.mxu0 %v8163
        %8172 = vmatprep.subr.bf16.mxu0 0
        %8173 = vmatpush1.bf16.msra.mxu0 %v8164
        %8174 = vmatprep.subr.bf16.mxu0 0
        %8175 = vmatpush1.bf16.msra.mxu0 0
        %8176 = vmatprep.subr.bf16.mxu0 0
        %8177 = vmatpush1.bf16.msra.mxu0 0
        %8178 = vmatprep.subr.bf16.mxu0 0
        %8179 = vmatpush1.bf16.msra.mxu0 0
        %8180 = vmatprep.subr.bf16.mxu0 0
        %8181 = vmatpush1.bf16.msra.mxu0 0
        %8182 = vmatprep.subr.bf16.mxu0 0
        %8183 = vmatpush1.bf16.msra.mxu0 0
        %8184 = vmatprep.subr.bf16.mxu0 0
        %8185 = vmatpush1.bf16.msra.mxu0 0
        %8186 = vmatprep.subr.bf16.mxu0 0
        %8187 = vmatpush1.bf16.msra.mxu0 0
        %8188 = vmatprep.subr.bf16.mxu0 0
        %8189 = vmatpush1.bf16.msra.mxu0 0
        %8190 = vmatprep.subr.bf16.mxu0 0
        %8191 = vmatpush1.bf16.msra.mxu0 0
        %8192 = vmatprep.subr.bf16.mxu0 0
        %8193 = vmatpush1.bf16.msra.mxu0 0
        %8194 = vmatprep.subr.bf16.mxu0 0
        %8195 = vmatpush1.bf16.msra.mxu0 0
        %8196 = vmatprep.subr.bf16.mxu0 0
        %8197 = vmatpush1.bf16.msra.mxu0 0
        %8198 = vmatprep.subr.bf16.mxu0 0
        %8199 = vmatpush1.bf16.msra.mxu0 0
        %8200 = vmatprep.subr.bf16.mxu0 0
        %8201 = vmatpush1.bf16.msra.mxu0 0
        %8202 = vmatprep.mubr.bf16.mxu0 0
        %8203 = vmatmul.mubr.bf16.gmra.mrb[0].mxu0 %v8168
        %v8204 = vpop.f32.mrb[0].mxu0
        %v8205 = vadd.f32 %v8154, %v8204
        %v8206 = vpop.f32.mrb[0].mxu0
        %v8207 = vpop.f32.mrb[0].mxu0
        %v8208 = vpop.f32.mrb[0].mxu0
        %8209 = vdwg.mxu0
        %v8210 = vmax.f32 %v8205, 0.0
        %v8211 = vpack.c.bf16 %v8210, %v8210
        %v8212 = vld [vmem:[%s83] sm:$0xf]
        %v8213 = vld [vmem:[%s83 + $0x4] sm:$0xf]
        %v8214 = vld [vmem:[%s83 + $0x8] sm:$0xf]
        %v8215 = vld [vmem:[%s83 + $0xc] sm:$0xf]
        %v8216 = vld [vmem:[%s83 + $0x10] sm:$0xf]
        %v8217 = vld [vmem:[%s83 + $0x14] sm:$0xf]
        %v8218 = vld [vmem:[%s83 + $0x18] sm:$0xf]
        %v8219 = vld [vmem:[%s83 + $0x1c] sm:$0xf]
        %v8220 = vld [vmem:[%s85] sm:$0x1]
        %v8229 = vunpack.c.l.b16 %v8212
        %v8230 = vunpack.c.l.b16 %v8213
        %v8231 = vunpack.c.l.b16 %v8214
        %v8232 = vunpack.c.l.b16 %v8215
        %v8233 = vunpack.c.l.b16 %v8216
        %v8234 = vunpack.c.l.b16 %v8217
        %v8235 = vunpack.c.l.b16 %v8218
        %v8236 = vunpack.c.l.b16 %v8219
        %v8237 = vpack.c.b16 %v8230, %v8229
        %v8238 = vpack.c.b16 %v8232, %v8231
        %v8239 = vpack.c.b16 %v8234, %v8233
        %v8240 = vpack.c.b16 %v8236, %v8235
        %v8246 = vsel %vm4925, %v8211, 0
        %8248 = vmatprep.subr.bf16.mxu0 0
        %8249 = vmatpush1.bf16.msra.mxu0 %v8237
        %8250 = vmatprep.subr.bf16.mxu0 0
        %8251 = vmatpush1.bf16.msra.mxu0 %v8238
        %8252 = vmatprep.subr.bf16.mxu0 0
        %8253 = vmatpush1.bf16.msra.mxu0 %v8239
        %8254 = vmatprep.subr.bf16.mxu0 0
        %8255 = vmatpush1.bf16.msra.mxu0 %v8240
        %8256 = vmatprep.subr.bf16.mxu0 0
        %8257 = vmatpush1.bf16.msra.mxu0 0
        %8258 = vmatprep.subr.bf16.mxu0 0
        %8259 = vmatpush1.bf16.msra.mxu0 0
        %8260 = vmatprep.subr.bf16.mxu0 0
        %8261 = vmatpush1.bf16.msra.mxu0 0
        %8262 = vmatprep.subr.bf16.mxu0 0
        %8263 = vmatpush1.bf16.msra.mxu0 0
        %8264 = vmatprep.subr.bf16.mxu0 0
        %8265 = vmatpush1.bf16.msra.mxu0 0
        %8266 = vmatprep.subr.bf16.mxu0 0
        %8267 = vmatpush1.bf16.msra.mxu0 0
        %8268 = vmatprep.subr.bf16.mxu0 0
        %8269 = vmatpush1.bf16.msra.mxu0 0
        %8270 = vmatprep.subr.bf16.mxu0 0
        %8271 = vmatpush1.bf16.msra.mxu0 0
        %8272 = vmatprep.subr.bf16.mxu0 0
        %8273 = vmatpush1.bf16.msra.mxu0 0
        %8274 = vmatprep.subr.bf16.mxu0 0
        %8275 = vmatpush1.bf16.msra.mxu0 0
        %8276 = vmatprep.subr.bf16.mxu0 0
        %8277 = vmatpush1.bf16.msra.mxu0 0
        %8278 = vmatprep.subr.bf16.mxu0 0
        %8279 = vmatpush1.bf16.msra.mxu0 0
        %8280 = vmatprep.mubr.bf16.mxu0 0
        %8281 = vmatmul.mubr.bf16.gmra.mrb[0].mxu0 %v8246
        %v8282 = vpop.f32.mrb[0].mxu0
        %v8283 = vadd.f32 %v8220, %v8282
        %v8284 = vpop.f32.mrb[0].mxu0
        %v8285 = vpop.f32.mrb[0].mxu0
        %v8286 = vpop.f32.mrb[0].mxu0
        %8287 = vdwg.mxu0
        %v8288 = vadd.f32 %v8148, %v8283
        %v8289 = vsel %vm6348, %v8288, 0.0
        %8290 = vadd.xlane.f32.xlu0 %v8289
        %v8291 = vpop.xlane.xlu0 %8290
        %v8292 = vmul.f32 %v8291, %v4624
        %v8293 = vsub.f32 %v8288, %v8292
        %v8294 = vmul.f32 %v8293, %v8293
        %v8295 = vsel %vm6348, %v8294, 0.0
        %8296 = vadd.xlane.f32.xlu0 %v8295
        %v8297 = vpop.xlane.xlu0 %8296
        %v8298 = vmul.f32 %v8297, %v4624
        %v8299 = vadd.f32 %v8298, 1e-05
        %v8300 = vrsqrt.pop %v8299
        %v8301 = vmul.f32 %v8293, %v8300
        %v8302 = vld [vmem:[%s87] sm:$0x1]
        %v8303 = vmul.f32 %v8301, %v8302
        %v8304 = vld [vmem:[%s87 + $0x1] sm:$0x1]
        %v8305 = vadd.f32 %v8303, %v8304
        %v8306 = vsel %vm6348, %v8305, 0.0
        %8307 = vadd.xlane.f32.xlu0 %v8306
        %v8308 = vpop.xlane.xlu0 %8307
        %v8309 = vmul.f32 %v8308, %v4624
        %v8310 = vsub.f32 %v8305, %v8309
        %v8311 = vmul.f32 %v8310, %v8310
        %v8312 = vsel %vm6348, %v8311, 0.0
        %8313 = vadd.xlane.f32.xlu0 %v8312
        %v8314 = vpop.xlane.xlu0 %8313
        %v8315 = vmul.f32 %v8314, %v4624
        %v8316 = vadd.f32 %v8315, 1e-05
        %v8317 = vrsqrt.pop %v8316
        %v8318 = vmul.f32 %v8310, %v8317
        %v8319 = vld [vmem:[%s89] sm:$0x1]
        %v8320 = vmul.f32 %v8318, %v8319
        %v8321 = vld [vmem:[%s89 + $0x1] sm:$0x1]
        %v8322 = vadd.f32 %v8320, %v8321
        %8323 = vst.msk [vmem:[%s1458] sm:$0x1] %vm6348, %v8322
        %v8324 = vpack.c.bf16 %v8322, %v8322
        %v8326 = vsel %vm1685, %v8324, 0
        %8328 = vmatprep.subr.bf16.mxu0 0
        %8329 = vmatpush1.bf16.xpose.msra.mxu0 %v6586
        %8330 = vmatprep.subr.bf16.mxu0 0
        %8331 = vmatpush1.bf16.xpose.msra.mxu0 %v6589
        %8332 = vmatprep.subr.bf16.mxu0 0
        %8333 = vmatpush1.bf16.xpose.msra.mxu0 %v6592
        %8334 = vmatprep.subr.bf16.mxu0 0
        %8335 = vmatpush1.bf16.xpose.msra.mxu0 %v6595
        %8336 = vmatprep.subr.bf16.mxu0 0
        %8337 = vmatpush1.bf16.xpose.msra.mxu0 0
        %8338 = vmatprep.subr.bf16.mxu0 0
        %8339 = vmatpush1.bf16.xpose.msra.mxu0 0
        %8340 = vmatprep.subr.bf16.mxu0 0
        %8341 = vmatpush1.bf16.xpose.msra.mxu0 0
        %8342 = vmatprep.subr.bf16.mxu0 0
        %8343 = vmatpush1.bf16.xpose.msra.mxu0 0
        %8344 = vmatprep.subr.bf16.mxu0 0
        %8345 = vmatpush1.bf16.xpose.msra.mxu0 0
        %8346 = vmatprep.subr.bf16.mxu0 0
        %8347 = vmatpush1.bf16.xpose.msra.mxu0 0
        %8348 = vmatprep.subr.bf16.mxu0 0
        %8349 = vmatpush1.bf16.xpose.msra.mxu0 0
        %8350 = vmatprep.subr.bf16.mxu0 0
        %8351 = vmatpush1.bf16.xpose.msra.mxu0 0
        %8352 = vmatprep.subr.bf16.mxu0 0
        %8353 = vmatpush1.bf16.xpose.msra.mxu0 0
        %8354 = vmatprep.subr.bf16.mxu0 0
        %8355 = vmatpush1.bf16.xpose.msra.mxu0 0
        %8356 = vmatprep.subr.bf16.mxu0 0
        %8357 = vmatpush1.bf16.xpose.msra.mxu0 0
        %8358 = vmatprep.subr.bf16.mxu0 0
        %8359 = vmatpush1.bf16.xpose.msra.mxu0 0
        %8360 = vmatprep.mubr.bf16.mxu0 0
        %8361 = vmatmul.mubr.bf16.gmra.mrb[0].mxu0 %v8326
        %v8362 = vpop.f32.mrb[0].mxu0
        %v8363 = vadd.f32 0.0, %v8362
        %v8364 = vpop.f32.mrb[0].mxu0
        %v8365 = vpop.f32.mrb[0].mxu0
        %v8366 = vpop.f32.mrb[0].mxu0
        %8367 = vdwg.mxu0
        %v8368 = vld [vmem:[%s91] sm:$0x1]
        %v8370 = vsel %vm1685, %v8368, 0
        %8372 = vmatprep.subr.bf16.mxu0 0
        %8373 = vmatpush1.bf16.xpose.msra.mxu0 %v6586
        %8374 = vmatprep.subr.bf16.mxu0 0
        %8375 = vmatpush1.bf16.xpose.msra.mxu0 %v6589
        %8376 = vmatprep.subr.bf16.mxu0 0
        %8377 = vmatpush1.bf16.xpose.msra.mxu0 %v6592
        %8378 = vmatprep.subr.bf16.mxu0 0
        %8379 = vmatpush1.bf16.xpose.msra.mxu0 %v6595
        %8380 = vmatprep.subr.bf16.mxu0 0
        %8381 = vmatpush1.bf16.xpose.msra.mxu0 0
        %8382 = vmatprep.subr.bf16.mxu0 0
        %8383 = vmatpush1.bf16.xpose.msra.mxu0 0
        %8384 = vmatprep.subr.bf16.mxu0 0
        %8385 = vmatpush1.bf16.xpose.msra.mxu0 0
        %8386 = vmatprep.subr.bf16.mxu0 0
        %8387 = vmatpush1.bf16.xpose.msra.mxu0 0
        %8388 = vmatprep.subr.bf16.mxu0 0
        %8389 = vmatpush1.bf16.xpose.msra.mxu0 0
        %8390 = vmatprep.subr.bf16.mxu0 0
        %8391 = vmatpush1.bf16.xpose.msra.mxu0 0
        %8392 = vmatprep.subr.bf16.mxu0 0
        %8393 = vmatpush1.bf16.xpose.msra.mxu0 0
        %8394 = vmatprep.subr.bf16.mxu0 0
        %8395 = vmatpush1.bf16.xpose.msra.mxu0 0
        %8396 = vmatprep.subr.bf16.mxu0 0
        %8397 = vmatpush1.bf16.xpose.msra.mxu0 0
        %8398 = vmatprep.subr.bf16.mxu0 0
        %8399 = vmatpush1.bf16.xpose.msra.mxu0 0
        %8400 = vmatprep.subr.bf16.mxu0 0
        %8401 = vmatpush1.bf16.xpose.msra.mxu0 0
        %8402 = vmatprep.subr.bf16.mxu0 0
        %8403 = vmatpush1.bf16.xpose.msra.mxu0 0
        %8404 = vmatprep.mubr.bf16.mxu0 0
        %8405 = vmatmul.mubr.bf16.gmra.mrb[0].mxu0 %v8370
        %v8406 = vpop.f32.mrb[0].mxu0
        %v8407 = vadd.f32 0.0, %v8406
        %v8408 = vpop.f32.mrb[0].mxu0
        %v8409 = vpop.f32.mrb[0].mxu0
        %v8410 = vpop.f32.mrb[0].mxu0
        %8411 = vdwg.mxu0
        %v8414 = vunpack.c.l.s4 1966171168
        %v8415 = vunpack.c.0.s8 %v8414
        %v8416 = vlaneseq
        %v8417 = vshrl.u32 %v8416, 7
        %v8418 = vsub.s32 %v8415, %v8417
        %v8419 = vrot.slane %v8368, %v8418
        %v8421 = vunpack.c.l.s4 1966171168
        %v8422 = vunpack.c.0.s8 %v8421
        %v8423 = vlaneseq
        %v8424 = vshrl.u32 %v8423, 7
        %v8425 = vsub.s32 %v8422, %v8424
        %v8426 = vrot.slane %v8419, %v8425
        %v8428 = vshrl.u32 %v8426, 16
        %v8431 = vsel %vm1685, %v8428, 0
        %8433 = vmatprep.subr.bf16.mxu0 0
        %8434 = vmatpush1.bf16.xpose.msra.mxu0 %v6586
        %8435 = vmatprep.subr.bf16.mxu0 0
        %8436 = vmatpush1.bf16.xpose.msra.mxu0 %v6589
        %8437 = vmatprep.subr.bf16.mxu0 0
        %8438 = vmatpush1.bf16.xpose.msra.mxu0 %v6592
        %8439 = vmatprep.subr.bf16.mxu0 0
        %8440 = vmatpush1.bf16.xpose.msra.mxu0 %v6595
        %8441 = vmatprep.subr.bf16.mxu0 0
        %8442 = vmatpush1.bf16.xpose.msra.mxu0 0
        %8443 = vmatprep.subr.bf16.mxu0 0
        %8444 = vmatpush1.bf16.xpose.msra.mxu0 0
        %8445 = vmatprep.subr.bf16.mxu0 0
        %8446 = vmatpush1.bf16.xpose.msra.mxu0 0
        %8447 = vmatprep.subr.bf16.mxu0 0
        %8448 = vmatpush1.bf16.xpose.msra.mxu0 0
        %8449 = vmatprep.subr.bf16.mxu0 0
        %8450 = vmatpush1.bf16.xpose.msra.mxu0 0
        %8451 = vmatprep.subr.bf16.mxu0 0
        %8452 = vmatpush1.bf16.xpose.msra.mxu0 0
        %8453 = vmatprep.subr.bf16.mxu0 0
        %8454 = vmatpush1.bf16.xpose.msra.mxu0 0
        %8455 = vmatprep.subr.bf16.mxu0 0
        %8456 = vmatpush1.bf16.xpose.msra.mxu0 0
        %8457 = vmatprep.subr.bf16.mxu0 0
        %8458 = vmatpush1.bf16.xpose.msra.mxu0 0
        %8459 = vmatprep.subr.bf16.mxu0 0
        %8460 = vmatpush1.bf16.xpose.msra.mxu0 0
        %8461 = vmatprep.subr.bf16.mxu0 0
        %8462 = vmatpush1.bf16.xpose.msra.mxu0 0
        %8463 = vmatprep.subr.bf16.mxu0 0
        %8464 = vmatpush1.bf16.xpose.msra.mxu0 0
        %8465 = vmatprep.mubr.bf16.mxu0 0
        %8466 = vmatmul.mubr.bf16.gmra.mrb[0].mxu0 %v8431
        %v8467 = vpop.f32.mrb[0].mxu0
        %v8468 = vadd.f32 0.0, %v8467
        %v8469 = vpop.f32.mrb[0].mxu0
        %v8470 = vpop.f32.mrb[0].mxu0
        %v8471 = vpop.f32.mrb[0].mxu0
        %8472 = vdwg.mxu0
        %v8473 = vmul.f32 %v8363, %v8407
        %v8474 = vld [vmem:[%s93] sm:$0x1]
        %8476 = vset.pattern.permute.xlu0 0
        %8477 = vperm.xlu0 %8476, %v8474
        %v8478 = vpop.permute.xlu0 %8477
        %v8480 = vadd.f32 %v8473, %v8478
        %v8481 = vmul.f32 %v8363, %v8468
        %v8482 = vld [vmem:[%s93 + $0x1] sm:$0x1]
        %8484 = vset.pattern.permute.xlu0 0
        %8485 = vperm.xlu0 %8484, %v8482
        %v8486 = vpop.permute.xlu0 %8485
        %v8488 = vadd.f32 %v8481, %v8486
        %v8489 = vld [vmem:[%s13] sm:$0x1]
        %v8490 = vld [vmem:[%s13 + $0x1] sm:$0x1]
        %vm8491 = vcmask 516096
        %v8492 = vsel %vm8491, %v8480, -inf
        %8493 = vmax.xlane.f32.xlu0 %v8492
        %v8494 = vpop.xlane.xlu0 %8493
        %v8495 = vsub.f32 %v8480, %v8494
        %v8496 = vmul.f32 %v8495, 1.442695
        %v8497 = vpow.pop %v8496
        %v8498 = vsel %vm8491, %v8497, 0.0
        %8499 = vadd.xlane.f32.xlu0 %v8498
        %v8500 = vpop.xlane.xlu0 %8499
        %v8501 = vrcp.pop %v8500
        %v8502 = vmul.f32 %v8497, %v8501
        %v8503 = vmul.f32 %v8502, %v8489
        %v8504 = vsel %vm8491, %v8503, 0.0
        %8505 = vadd.xlane.f32.xlu0 %v8504
        %v8506 = vpop.xlane.xlu0 %8505
        %v8507 = vmul.f32 %v8502, %v8490
        %v8508 = vsel %vm8491, %v8507, 0.0
        %8509 = vadd.xlane.f32.xlu0 %v8508
        %v8510 = vpop.xlane.xlu0 %8509
        %v8511 = vsel %vm8491, %v8488, -inf
        %8512 = vmax.xlane.f32.xlu0 %v8511
        %v8513 = vpop.xlane.xlu0 %8512
        %v8514 = vsub.f32 %v8488, %v8513
        %v8515 = vmul.f32 %v8514, 1.442695
        %v8516 = vpow.pop %v8515
        %v8517 = vsel %vm8491, %v8516, 0.0
        %8518 = vadd.xlane.f32.xlu0 %v8517
        %v8519 = vpop.xlane.xlu0 %8518
        %v8520 = vrcp.pop %v8519
        %v8521 = vmul.f32 %v8516, %v8520
        %v8522 = vmul.f32 %v8521, %v8489
        %v8523 = vsel %vm8491, %v8522, 0.0
        %8524 = vadd.xlane.f32.xlu0 %v8523
        %v8525 = vpop.xlane.xlu0 %8524
        %v8526 = vmul.f32 %v8521, %v8490
        %v8527 = vsel %vm8491, %v8526, 0.0
        %8528 = vadd.xlane.f32.xlu0 %v8527
        %v8529 = vpop.xlane.xlu0 %8528
        %v8530 = vadd.f32 %v8506, %v8525
        %v8531 = vmul.f32 %v8530, 0.5
        %v8532 = vadd.f32 %v8510, %v8529
        %v8533 = vmul.f32 %v8532, 0.5
        %v8534 = vsub.f32 %v8525, %v8506
        %v8535 = vsub.f32 %v8529, %v8510
        %v8536 = vlaneseq
        %v8537 = vand.u32 %v8536, 127
        %vm8538 = vcmp.eq.s32.totalorder %v8537, 0
        %v8539 = vsel %vm8538, %v8531, 0.0
        %vm8540 = vcmp.eq.s32.totalorder %v8537, 1
        %v8541 = vsel %vm8540, %v8533, 0.0
        %v8542 = vadd.f32 %v8539, %v8541
        %vm8543 = vcmp.eq.s32.totalorder %v8537, 2
        %v8544 = vsel %vm8543, %v8534, 0.0
        %v8545 = vadd.f32 %v8542, %v8544
        %vm8546 = vcmp.eq.s32.totalorder %v8537, 3
        %v8547 = vsel %vm8546, %v8535, 0.0
        %v8548 = vadd.f32 %v8545, %v8547
        %vm8549 = vcmask 24576
        %8550 = vst.msk [vmem:[%s1474] sm:$0x1] %vm8549, %v8548
        %p8551 = scmp.lt.s32.totalorder %s112, 1
        %s8552 = scalar_select %p8551, %s112, 1
        %s8553 = scalar_lea.vmem %s95, %s8552
        %s8554 = sand.u32 %s1148, 1
        %s8555 = scalar_lea.sflag [#allocation3], %s8554
        %s8556 = sand.u32 %s1148, 1
        %s8557 = scalar_lea.vmem [#allocation2], %s8556
        // Predicated region
        $region209: #{stark_forward.1} parent=207 // pred_check
          %p8558 = pneg %p1132
        $region210: #{stark_forward.1} parent=207 // pred_check_branch
          %8560 = sbr.rel (%p8558) target = $region212
        $region211: #{stark_forward.1} parent=207 // pred_region
          _
        $region212: #{stark_forward.1} parent=207 // pred_fallthru
          _
        // Predicated region
        $region213: #{stark_forward.1} parent=207 // pred_check
          %p8561 = pneg %p1158
        $region214: #{stark_forward.1} parent=207 // pred_check_branch
          %8563 = sbr.rel (%p8561) target = $region216
        $region215: #{stark_forward.1} parent=207 // pred_region
          %s8565 = ssub.s32 16, 16
          %8566 = vsyncadd %s8555, %s8565
          %s8567 = smul.addr %s112, 16
          %s8568 = scalar_lea.hbm %s97, %s8567
          %s8570 = sshll.u32 %s8557, 4
          %s8571 = int_to_ptr.vmem [resolvable:$true] %s8570
          %8573 = dma.vmem_to_hbm [thread:$0]  %s8571, 16, %s8568, %s8555
        $region216: #{stark_forward.1} parent=207 // pred_fallthru
          _
      $region208: #{stark_forward.1} parent=5 // pred_fallthru
        _
      %p8574 = scmp.le.s32.totalorder 2, %s107
      // Predicated region
      $region217: #{stark_forward.1} parent=5 // pred_check
        %p8575 = pneg %p8574
      $region218: #{stark_forward.1} parent=5 // pred_check_branch
        %8577 = sbr.rel (%p8575) target = $region220
      $region219: #{stark_forward.1} parent=5 // pred_region
        %s8578 = ssub.s32 %s107, 2
        // Predicated region
        $region221: #{stark_forward.1} parent=219 // pred_check
          %p8579 = pneg %p1138
        $region222: #{stark_forward.1} parent=219 // pred_check_branch
          %8581 = sbr.rel (%p8579) target = $region224
        $region223: #{stark_forward.1} parent=219 // pred_region
          %p8582 = scmp.lt.s32.totalorder %s113, 1
          %s8583 = scalar_select %p8582, %s113, 1
          %s8584 = scalar_lea.vmem %s95, %s8583
        $region224: #{stark_forward.1} parent=219 // pred_fallthru
          _
        // Predicated region
        $region225: #{stark_forward.1} parent=219 // pred_check
          %p8585 = pneg %p1164
        $region226: #{stark_forward.1} parent=219 // pred_check_branch
          %8587 = sbr.rel (%p8585) target = $region228
        $region227: #{stark_forward.1} parent=219 // pred_region
          %s8588 = sand.u32 %s1149, 1
          %s8589 = scalar_lea.sflag [#allocation3], %s8588
          %s8590 = sand.u32 %s1149, 1
          %s8591 = scalar_lea.vmem [#allocation2], %s8590
          %8592 = dma.done %s8589, 16
        $region228: #{stark_forward.1} parent=219 // pred_fallthru
          _
      $region220: #{stark_forward.1} parent=5 // pred_fallthru
        _
    $region6: #{stark_forward.1} parent=1 // loop_footer
      %s111 = sadd.s32 1, %s107
    $region7: #{stark_forward.1} parent=1 // loop_footer_branch
      %106 = sbr.rel target = $region3
    $region8: #{stark_forward.1} parent=1 // loop_exit
      _
    %8593 = vsyncpa [#allocation3], 1
    %s8594 = scalar_lea.sflag [#allocation3], 1
    %8595 = vsyncpa %s8594, 1

</llo_original>
